<compile_context>
chip_gen: v5e
topology: v5e:2x2
jax: 0.10.0
libtpu: 0.0.40
codegen_flags: <defaults>
</compile_context>

<pallas_src>
import functools

import jax
import jax.numpy as jnp
from jax import lax
from jax.experimental import pallas as pl
from jax.experimental.pallas import tpu as pltpu

EPS = 1e-6


# --------------------------- in-kernel VN helpers ---------------------------

def _vn_batchnorm(x3, eps=1e-5):
    """VNBatchNorm (dim=4, train-mode stats, gamma=1, beta=0). x3: (3, M, C)."""
    norm = jnp.sqrt(jnp.sum(x3 * x3, axis=0)) + EPS            # (M, C)
    mean = jnp.mean(norm, axis=0, keepdims=True)               # (1, C)
    var = jnp.mean((norm - mean) ** 2, axis=0, keepdims=True)
    norm_bn = (norm - mean) / jnp.sqrt(var + eps)              # (M, C)
    return x3 * (norm_bn / norm)[None]


def _vn_leaky_relu(p3, d3, negative_slope=0.2):
    """VN leaky-relu via direction projection. p3, d3: (3, M, C)."""
    dot = jnp.sum(p3 * d3, axis=0, keepdims=True)              # (1, M, C)
    dsq = jnp.sum(d3 * d3, axis=0, keepdims=True) + EPS
    proj = p3 - (dot / dsq) * d3
    return jnp.where(dot >= 0.0, p3,
                     negative_slope * p3 + (1.0 - negative_slope) * proj)


def _attention(xf, wqkv, wo, B, N, F, heads):
    """Rotation-equivariant MHSA on the (3*B*N, F) slab; all heads in one batched dot."""
    dh = F // heads
    M = B * N
    qkv = jnp.dot(xf, wqkv, preferred_element_type=jnp.float32)     # (3*M, 3F) fused QKV

    def to_heads(t):                                                 # t: (3*M, F)
        t4 = t.reshape(3, B, N, F)
        per_head = []
        for h in range(heads):
            sl = [t4[p, :, :, h * dh:(h + 1) * dh] for p in range(3)]
            per_head.append(jnp.concatenate(sl, axis=-1))            # (B, N, 3*dh)
        return jnp.stack(per_head, axis=0).reshape(heads * B, N, 3 * dh)

    qh = to_heads(qkv[:, 0 * F:1 * F])
    kh = to_heads(qkv[:, 1 * F:2 * F])
    vh = to_heads(qkv[:, 2 * F:3 * F])

    scale = 1.0 / float((dh * 3) ** 0.5)
    # scores: (G, N, N) with G = heads*B, contraction over dh*3
    s = lax.dot_general(qh, kh, (((2,), (2,)), ((0,), (0,))),
                        preferred_element_type=jnp.float32) * scale
    s = s - jnp.max(s, axis=-1, keepdims=True)
    p = jnp.exp(s)
    p = p / jnp.sum(p, axis=-1, keepdims=True)
    oh = lax.dot_general(p, vh, (((2,), (1,)), ((0,), (0,))),
                         preferred_element_type=jnp.float32)         # (G, N, 3*dh)

    o5 = oh.reshape(heads, B, N, 3 * dh)
    comps = []
    for pax in range(3):
        per_h = [o5[h, :, :, pax * dh:(pax + 1) * dh] for h in range(heads)]
        comps.append(jnp.concatenate(per_h, axis=-1))                # (B, N, F)
    of = jnp.stack(comps, axis=0).reshape(3 * M, F)
    return jnp.dot(of, wo, preferred_element_type=jnp.float32)


# ----------------------------- fused forward kernel -----------------------------

def make_forward_kernel(args, num_class, B, N, K):
    num_layers = args['num_layers']
    heads = args['num_heads']
    F = args['num_features']
    hidden = args['hidden']
    M = B * N

    def kernel(*refs):
        out_ref = refs[-1]
        it = iter(refs[:-1])
        nxt = lambda: next(it)[...]

        x = nxt()                                                    # (3*M, K), lane-dense

        for i in range(num_layers):
            # ---- point-feature "conv" block ----
            if i == 0:
                x = jnp.dot(x, nxt(), preferred_element_type=jnp.float32)   # VNLinear(K, F)
            else:
                wf, wd = nxt(), nxt()                                        # VNLinearLeakyReLU(F, F)
                p3 = _vn_batchnorm(
                    jnp.dot(x, wf, preferred_element_type=jnp.float32).reshape(3, M, F))
                d3 = jnp.dot(x, wd, preferred_element_type=jnp.float32).reshape(3, M, F)
                x = _vn_leaky_relu(p3, d3, 0.2).reshape(3 * M, F)

            # ---- transformer encoder: MHSA + VN feed-forward, residuals ----
            wqkv, wo, wff1, wff1d, wff2 = nxt(), nxt(), nxt(), nxt(), nxt()
            x = x + _attention(x, wqkv, wo, B, N, F, heads)
            p3 = _vn_batchnorm(
                jnp.dot(x, wff1, preferred_element_type=jnp.float32).reshape(3, M, hidden))
            d3 = jnp.dot(x, wff1d, preferred_element_type=jnp.float32).reshape(3, M, hidden)
            h3 = _vn_leaky_relu(p3, d3, 0.2)
            x = x + jnp.dot(h3.reshape(3 * M, hidden), wff2,
                            preferred_element_type=jnp.float32)

        # ---- invariant head: VNLinearAndLeakyReLU(F, F) -> VNLinear(F, 3) ----
        wif, wid, wio = nxt(), nxt(), nxt()
        p3 = _vn_batchnorm(
            jnp.dot(x, wif, preferred_element_type=jnp.float32).reshape(3, M, F))
        d3 = jnp.dot(p3.reshape(3 * M, F), wid,
                     preferred_element_type=jnp.float32).reshape(3, M, F)
        inv = jnp.dot(_vn_leaky_relu(p3, d3, 0.2).reshape(3 * M, F), wio,
                      preferred_element_type=jnp.float32)            # (3*M, 3)

        # ---- invariant features: einsum('...cp,...mp->...cm') + mean over N (VPU) ----
        x4 = x.reshape(3, B, N, F)
        i4 = inv.reshape(3, B, N, 3)
        pieces = []
        for m in range(3):
            acc = x4[0] * i4[0, :, :, m:m + 1]
            acc = acc + x4[1] * i4[1, :, :, m:m + 1]
            acc = acc + x4[2] * i4[2, :, :, m:m + 1]                  # (B, N, F)
            pieces.append(jnp.mean(acc, axis=1))                      # (B, F)
        feat = jnp.concatenate(pieces, axis=-1)                       # (B, 3F)  m-major

        # ---- classifier MLP: Linear -> ReLU -> BatchNorm1d -> Linear ----
        w1, b1, w2, b2 = nxt(), nxt(), nxt(), nxt()
        h = jnp.dot(feat, w1, preferred_element_type=jnp.float32) + b1
        h = jnp.maximum(h, 0.0)
        mu = jnp.mean(h, axis=0, keepdims=True)
        var = jnp.mean((h - mu) ** 2, axis=0, keepdims=True)
        h = (h - mu) / jnp.sqrt(var + 1e-5)
        out_ref[...] = jnp.dot(h, w2, preferred_element_type=jnp.float32) + b2

    return kernel


# ----------------------------- host-side wrapper -----------------------------

def _pack_params(params, args):
    """One-time weight prep: transpose to (Cin, Cout), fuse QKV, permute MLP W1 columns."""
    F = args['num_features']
    flat = []
    for i in range(args['num_layers']):
        c = params['conv'][i]
        if i == 0:
            flat.append(c['W'].T)                                     # (K, F)
        else:
            flat.append(c['W_feat'].T)
            flat.append(c['W_dir'].T)
        t = params['transformers'][i]
        flat.append(jnp.concatenate([t['Wq'].T, t['Wk'].T, t['Wv'].T], axis=1))  # (F, 3F)
        flat += [t['Wo'].T, t['W_ff1'].T, t['W_ff1_dir'].T, t['W_ff2'].T]
    inv = params['inv']
    flat += [inv['W_feat'].T, inv['W_dir'].T, inv['W_out'].T]
    mlp = params['mlp']
    # kernel emits feat ordered j = m*F + c; the PyTorch MLP expects j = c*3 + m.
    perm = jnp.asarray([(j % F) * 3 + (j // F) for j in range(3 * F)], dtype=jnp.int32)
    flat += [mlp['W1'][:, perm].T, mlp['b1'].reshape(1, -1),
             mlp['W2'].T, mlp['b2'].reshape(1, -1)]
    return [w.astype(jnp.float32) for w in flat]


def vn_transformer_cls_forward(x, params, args, num_class=40):
    B, D, N, K = x.shape
    # (B, 3, N, K) -> component-major lane-dense slab (3*B*N, K)
    xf = jnp.transpose(x, (1, 0, 2, 3)).reshape(D * B * N, K).astype(jnp.float32)
    flat = _pack_params(params, args)
    kernel = make_forward_kernel(args, num_class, B, N, K)
    out = pl.pallas_call(
        kernel,
        out_shape=jax.ShapeDtypeStruct((B, num_class), jnp.float32),
        compiler_params=pltpu.CompilerParams(vmem_limit_bytes=32 * 1024 * 1024),
    )(xf, *flat)
    return out, None


# ----------------------------- parameter init -----------------------------

def init_params(key, args, num_class=40):
    F = args['num_features']
    hidden = args['hidden']
    k = args['n_knn']
    keys = jax.random.split(key, 128)
    it = iter(keys)

    def lin(shape, fan_in):
        return jax.random.normal(next(it), shape, jnp.float32) / jnp.sqrt(float(fan_in))

    params = {'conv': [], 'transformers': []}
    for i in range(args['num_layers']):
        if i == 0:
            params['conv'].append({'W': lin((F, k), k)})
        else:
            params['conv'].append({'W_feat': lin((F, F), F), 'W_dir': lin((F, F), F)})
        params['transformers'].append({
            'Wq': lin((F, F), F), 'Wk': lin((F, F), F),
            'Wv': lin((F, F), F), 'Wo': lin((F, F), F),
            'W_ff1': lin((hidden, F), F), 'W_ff1_dir': lin((hidden, F), F),
            'W_ff2': lin((F, hidden), hidden),
        })
    params['inv'] = {'W_feat': lin((F, F), F), 'W_dir': lin((F, F), F),
                     'W_out': lin((3, F), F)}
    params['mlp'] = {'W1': lin((F, F * 3), F * 3), 'b1': jnp.zeros((F,), jnp.float32),
                     'W2': lin((num_class, F), F), 'b2': jnp.zeros((num_class,), jnp.float32)}
    return params


# ----------------------------- main -----------------------------

if __name__ == "__main__":
    args = dict(num_point=16, num_heads=4, num_features=32, hidden=32,
                n_knn=8, num_layers=2)
    num_class = 40

    key = jax.random.PRNGKey(0)
    kx, kp = jax.random.split(key)
    B, D, N, K = 2, 3, 16, 8                       # (batch, vector-dim, points, knn)
    x = jax.random.normal(kx, (B, D, N, K), jnp.float32)

    params = init_params(kp, args, num_class=num_class)

    fwd = jax.jit(functools.partial(vn_transformer_cls_forward,
                                    args=args, num_class=num_class))
    logits, trans_feat = fwd(x, params)
    logits = jax.block_until_ready(logits)

    assert logits.shape == (B, num_class), logits.shape
    assert bool(jnp.all(jnp.isfinite(logits)))
    print("KERNEL_OK")
</pallas_src>

<mosaic_0001>
module attributes {stable_mosaic.version = 11 : i64} {
  func.func @kernel(%arg0: memref<96x8xf32, #tpu.memory_space<vmem>>, %arg1: memref<8x32xf32, #tpu.memory_space<vmem>>, %arg2: memref<32x96xf32, #tpu.memory_space<vmem>>, %arg3: memref<32x32xf32, #tpu.memory_space<vmem>>, %arg4: memref<32x32xf32, #tpu.memory_space<vmem>>, %arg5: memref<32x32xf32, #tpu.memory_space<vmem>>, %arg6: memref<32x32xf32, #tpu.memory_space<vmem>>, %arg7: memref<32x32xf32, #tpu.memory_space<vmem>>, %arg8: memref<32x32xf32, #tpu.memory_space<vmem>>, %arg9: memref<32x96xf32, #tpu.memory_space<vmem>>, %arg10: memref<32x32xf32, #tpu.memory_space<vmem>>, %arg11: memref<32x32xf32, #tpu.memory_space<vmem>>, %arg12: memref<32x32xf32, #tpu.memory_space<vmem>>, %arg13: memref<32x32xf32, #tpu.memory_space<vmem>>, %arg14: memref<32x32xf32, #tpu.memory_space<vmem>>, %arg15: memref<32x32xf32, #tpu.memory_space<vmem>>, %arg16: memref<32x3xf32, #tpu.memory_space<vmem>>, %arg17: memref<96x32xf32, #tpu.memory_space<vmem>>, %arg18: memref<1x32xf32, #tpu.memory_space<vmem>>, %arg19: memref<32x40xf32, #tpu.memory_space<vmem>>, %arg20: memref<1x40xf32, #tpu.memory_space<vmem>>, %arg21: memref<2x40xf32, #tpu.memory_space<vmem>>) attributes {dimension_semantics = [], scalar_prefetch = 0 : i64, scratch_operands = 0 : i64, tpu.core_type = #tpu.core_type<tc>} {
    %c0 = arith.constant 0 : index
    %c0_0 = arith.constant 0 : index
    %0 = vector.load %arg0[%c0, %c0_0] : memref<96x8xf32, #tpu.memory_space<vmem>>, vector<96x8xf32>
    %c0_1 = arith.constant 0 : index
    %c0_2 = arith.constant 0 : index
    %1 = vector.load %arg1[%c0_1, %c0_2] : memref<8x32xf32, #tpu.memory_space<vmem>>, vector<8x32xf32>
    %cst = arith.constant dense<0.000000e+00> : vector<96x32xf32>
    %2 = tpu.matmul %0, %1, %cst {dimension_numbers = #tpu.dot_dimension_numbers<[1], [0], [0], [1], [0, 0, 1, 1], [], []>} : vector<96x8xf32>, vector<8x32xf32>, vector<96x32xf32> -> vector<96x32xf32>
    %c0_3 = arith.constant 0 : index
    %c0_4 = arith.constant 0 : index
    %3 = vector.load %arg2[%c0_3, %c0_4] : memref<32x96xf32, #tpu.memory_space<vmem>>, vector<32x96xf32>
    %c0_5 = arith.constant 0 : index
    %c0_6 = arith.constant 0 : index
    %4 = vector.load %arg3[%c0_5, %c0_6] : memref<32x32xf32, #tpu.memory_space<vmem>>, vector<32x32xf32>
    %c0_7 = arith.constant 0 : index
    %c0_8 = arith.constant 0 : index
    %5 = vector.load %arg4[%c0_7, %c0_8] : memref<32x32xf32, #tpu.memory_space<vmem>>, vector<32x32xf32>
    %c0_9 = arith.constant 0 : index
    %c0_10 = arith.constant 0 : index
    %6 = vector.load %arg5[%c0_9, %c0_10] : memref<32x32xf32, #tpu.memory_space<vmem>>, vector<32x32xf32>
    %c0_11 = arith.constant 0 : index
    %c0_12 = arith.constant 0 : index
    %7 = vector.load %arg6[%c0_11, %c0_12] : memref<32x32xf32, #tpu.memory_space<vmem>>, vector<32x32xf32>
    %cst_13 = arith.constant dense<0.000000e+00> : vector<96x96xf32>
    %8 = tpu.matmul %2, %3, %cst_13 {dimension_numbers = #tpu.dot_dimension_numbers<[1], [0], [0], [1], [0, 0, 1, 1], [], []>} : vector<96x32xf32>, vector<32x96xf32>, vector<96x96xf32> -> vector<96x96xf32>
    %9 = vector.extract_strided_slice %8 {offsets = [0, 0], sizes = [96, 32], strides = [1, 1]} : vector<96x96xf32> to vector<96x32xf32>
    %10 = vector.shape_cast %9 : vector<96x32xf32> to vector<3x2x16x32xf32>
    %11 = vector.extract_strided_slice %10 {offsets = [0, 0, 0, 0], sizes = [1, 2, 16, 8], strides = [1, 1, 1, 1]} : vector<3x2x16x32xf32> to vector<1x2x16x8xf32>
    %12 = vector.shape_cast %11 : vector<1x2x16x8xf32> to vector<2x16x8xf32>
    %13 = vector.extract_strided_slice %10 {offsets = [1, 0, 0, 0], sizes = [1, 2, 16, 8], strides = [1, 1, 1, 1]} : vector<3x2x16x32xf32> to vector<1x2x16x8xf32>
    %14 = vector.shape_cast %13 : vector<1x2x16x8xf32> to vector<2x16x8xf32>
    %15 = vector.extract_strided_slice %10 {offsets = [2, 0, 0, 0], sizes = [1, 2, 16, 8], strides = [1, 1, 1, 1]} : vector<3x2x16x32xf32> to vector<1x2x16x8xf32>
    %16 = vector.shape_cast %15 : vector<1x2x16x8xf32> to vector<2x16x8xf32>
    %17 = tpu.concatenate %12, %14, %16 in 2 : vector<2x16x8xf32>, vector<2x16x8xf32>, vector<2x16x8xf32> -> vector<2x16x24xf32>
    %18 = vector.extract_strided_slice %10 {offsets = [0, 0, 0, 8], sizes = [1, 2, 16, 8], strides = [1, 1, 1, 1]} : vector<3x2x16x32xf32> to vector<1x2x16x8xf32>
    %19 = vector.shape_cast %18 : vector<1x2x16x8xf32> to vector<2x16x8xf32>
    %20 = vector.extract_strided_slice %10 {offsets = [1, 0, 0, 8], sizes = [1, 2, 16, 8], strides = [1, 1, 1, 1]} : vector<3x2x16x32xf32> to vector<1x2x16x8xf32>
    %21 = vector.shape_cast %20 : vector<1x2x16x8xf32> to vector<2x16x8xf32>
    %22 = vector.extract_strided_slice %10 {offsets = [2, 0, 0, 8], sizes = [1, 2, 16, 8], strides = [1, 1, 1, 1]} : vector<3x2x16x32xf32> to vector<1x2x16x8xf32>
    %23 = vector.shape_cast %22 : vector<1x2x16x8xf32> to vector<2x16x8xf32>
    %24 = tpu.concatenate %19, %21, %23 in 2 : vector<2x16x8xf32>, vector<2x16x8xf32>, vector<2x16x8xf32> -> vector<2x16x24xf32>
    %25 = vector.extract_strided_slice %10 {offsets = [0, 0, 0, 16], sizes = [1, 2, 16, 8], strides = [1, 1, 1, 1]} : vector<3x2x16x32xf32> to vector<1x2x16x8xf32>
    %26 = vector.shape_cast %25 : vector<1x2x16x8xf32> to vector<2x16x8xf32>
    %27 = vector.extract_strided_slice %10 {offsets = [1, 0, 0, 16], sizes = [1, 2, 16, 8], strides = [1, 1, 1, 1]} : vector<3x2x16x32xf32> to vector<1x2x16x8xf32>
    %28 = vector.shape_cast %27 : vector<1x2x16x8xf32> to vector<2x16x8xf32>
    %29 = vector.extract_strided_slice %10 {offsets = [2, 0, 0, 16], sizes = [1, 2, 16, 8], strides = [1, 1, 1, 1]} : vector<3x2x16x32xf32> to vector<1x2x16x8xf32>
    %30 = vector.shape_cast %29 : vector<1x2x16x8xf32> to vector<2x16x8xf32>
    %31 = tpu.concatenate %26, %28, %30 in 2 : vector<2x16x8xf32>, vector<2x16x8xf32>, vector<2x16x8xf32> -> vector<2x16x24xf32>
    %32 = vector.extract_strided_slice %10 {offsets = [0, 0, 0, 24], sizes = [1, 2, 16, 8], strides = [1, 1, 1, 1]} : vector<3x2x16x32xf32> to vector<1x2x16x8xf32>
    %33 = vector.shape_cast %32 : vector<1x2x16x8xf32> to vector<2x16x8xf32>
    %34 = vector.extract_strided_slice %10 {offsets = [1, 0, 0, 24], sizes = [1, 2, 16, 8], strides = [1, 1, 1, 1]} : vector<3x2x16x32xf32> to vector<1x2x16x8xf32>
    %35 = vector.shape_cast %34 : vector<1x2x16x8xf32> to vector<2x16x8xf32>
    %36 = vector.extract_strided_slice %10 {offsets = [2, 0, 0, 24], sizes = [1, 2, 16, 8], strides = [1, 1, 1, 1]} : vector<3x2x16x32xf32> to vector<1x2x16x8xf32>
    %37 = vector.shape_cast %36 : vector<1x2x16x8xf32> to vector<2x16x8xf32>
    %38 = tpu.concatenate %33, %35, %37 in 2 : vector<2x16x8xf32>, vector<2x16x8xf32>, vector<2x16x8xf32> -> vector<2x16x24xf32>
    %39 = vector.shape_cast %17 : vector<2x16x24xf32> to vector<1x2x16x24xf32>
    %40 = vector.shape_cast %24 : vector<2x16x24xf32> to vector<1x2x16x24xf32>
    %41 = vector.shape_cast %31 : vector<2x16x24xf32> to vector<1x2x16x24xf32>
    %42 = vector.shape_cast %38 : vector<2x16x24xf32> to vector<1x2x16x24xf32>
    %43 = tpu.concatenate %39, %40, %41, %42 in 0 : vector<1x2x16x24xf32>, vector<1x2x16x24xf32>, vector<1x2x16x24xf32>, vector<1x2x16x24xf32> -> vector<4x2x16x24xf32>
    %44 = vector.shape_cast %43 : vector<4x2x16x24xf32> to vector<8x16x24xf32>
    %45 = vector.extract_strided_slice %8 {offsets = [0, 32], sizes = [96, 32], strides = [1, 1]} : vector<96x96xf32> to vector<96x32xf32>
    %46 = vector.shape_cast %45 : vector<96x32xf32> to vector<3x2x16x32xf32>
    %47 = vector.extract_strided_slice %46 {offsets = [0, 0, 0, 0], sizes = [1, 2, 16, 8], strides = [1, 1, 1, 1]} : vector<3x2x16x32xf32> to vector<1x2x16x8xf32>
    %48 = vector.shape_cast %47 : vector<1x2x16x8xf32> to vector<2x16x8xf32>
    %49 = vector.extract_strided_slice %46 {offsets = [1, 0, 0, 0], sizes = [1, 2, 16, 8], strides = [1, 1, 1, 1]} : vector<3x2x16x32xf32> to vector<1x2x16x8xf32>
    %50 = vector.shape_cast %49 : vector<1x2x16x8xf32> to vector<2x16x8xf32>
    %51 = vector.extract_strided_slice %46 {offsets = [2, 0, 0, 0], sizes = [1, 2, 16, 8], strides = [1, 1, 1, 1]} : vector<3x2x16x32xf32> to vector<1x2x16x8xf32>
    %52 = vector.shape_cast %51 : vector<1x2x16x8xf32> to vector<2x16x8xf32>
    %53 = tpu.concatenate %48, %50, %52 in 2 : vector<2x16x8xf32>, vector<2x16x8xf32>, vector<2x16x8xf32> -> vector<2x16x24xf32>
    %54 = vector.extract_strided_slice %46 {offsets = [0, 0, 0, 8], sizes = [1, 2, 16, 8], strides = [1, 1, 1, 1]} : vector<3x2x16x32xf32> to vector<1x2x16x8xf32>
    %55 = vector.shape_cast %54 : vector<1x2x16x8xf32> to vector<2x16x8xf32>
    %56 = vector.extract_strided_slice %46 {offsets = [1, 0, 0, 8], sizes = [1, 2, 16, 8], strides = [1, 1, 1, 1]} : vector<3x2x16x32xf32> to vector<1x2x16x8xf32>
    %57 = vector.shape_cast %56 : vector<1x2x16x8xf32> to vector<2x16x8xf32>
    %58 = vector.extract_strided_slice %46 {offsets = [2, 0, 0, 8], sizes = [1, 2, 16, 8], strides = [1, 1, 1, 1]} : vector<3x2x16x32xf32> to vector<1x2x16x8xf32>
    %59 = vector.shape_cast %58 : vector<1x2x16x8xf32> to vector<2x16x8xf32>
    %60 = tpu.concatenate %55, %57, %59 in 2 : vector<2x16x8xf32>, vector<2x16x8xf32>, vector<2x16x8xf32> -> vector<2x16x24xf32>
    %61 = vector.extract_strided_slice %46 {offsets = [0, 0, 0, 16], sizes = [1, 2, 16, 8], strides = [1, 1, 1, 1]} : vector<3x2x16x32xf32> to vector<1x2x16x8xf32>
    %62 = vector.shape_cast %61 : vector<1x2x16x8xf32> to vector<2x16x8xf32>
    %63 = vector.extract_strided_slice %46 {offsets = [1, 0, 0, 16], sizes = [1, 2, 16, 8], strides = [1, 1, 1, 1]} : vector<3x2x16x32xf32> to vector<1x2x16x8xf32>
    %64 = vector.shape_cast %63 : vector<1x2x16x8xf32> to vector<2x16x8xf32>
    %65 = vector.extract_strided_slice %46 {offsets = [2, 0, 0, 16], sizes = [1, 2, 16, 8], strides = [1, 1, 1, 1]} : vector<3x2x16x32xf32> to vector<1x2x16x8xf32>
    %66 = vector.shape_cast %65 : vector<1x2x16x8xf32> to vector<2x16x8xf32>
    %67 = tpu.concatenate %62, %64, %66 in 2 : vector<2x16x8xf32>, vector<2x16x8xf32>, vector<2x16x8xf32> -> vector<2x16x24xf32>
    %68 = vector.extract_strided_slice %46 {offsets = [0, 0, 0, 24], sizes = [1, 2, 16, 8], strides = [1, 1, 1, 1]} : vector<3x2x16x32xf32> to vector<1x2x16x8xf32>
    %69 = vector.shape_cast %68 : vector<1x2x16x8xf32> to vector<2x16x8xf32>
    %70 = vector.extract_strided_slice %46 {offsets = [1, 0, 0, 24], sizes = [1, 2, 16, 8], strides = [1, 1, 1, 1]} : vector<3x2x16x32xf32> to vector<1x2x16x8xf32>
    %71 = vector.shape_cast %70 : vector<1x2x16x8xf32> to vector<2x16x8xf32>
    %72 = vector.extract_strided_slice %46 {offsets = [2, 0, 0, 24], sizes = [1, 2, 16, 8], strides = [1, 1, 1, 1]} : vector<3x2x16x32xf32> to vector<1x2x16x8xf32>
    %73 = vector.shape_cast %72 : vector<1x2x16x8xf32> to vector<2x16x8xf32>
    %74 = tpu.concatenate %69, %71, %73 in 2 : vector<2x16x8xf32>, vector<2x16x8xf32>, vector<2x16x8xf32> -> vector<2x16x24xf32>
    %75 = vector.shape_cast %53 : vector<2x16x24xf32> to vector<1x2x16x24xf32>
    %76 = vector.shape_cast %60 : vector<2x16x24xf32> to vector<1x2x16x24xf32>
    %77 = vector.shape_cast %67 : vector<2x16x24xf32> to vector<1x2x16x24xf32>
    %78 = vector.shape_cast %74 : vector<2x16x24xf32> to vector<1x2x16x24xf32>
    %79 = tpu.concatenate %75, %76, %77, %78 in 0 : vector<1x2x16x24xf32>, vector<1x2x16x24xf32>, vector<1x2x16x24xf32>, vector<1x2x16x24xf32> -> vector<4x2x16x24xf32>
    %80 = vector.shape_cast %79 : vector<4x2x16x24xf32> to vector<8x16x24xf32>
    %81 = vector.extract_strided_slice %8 {offsets = [0, 64], sizes = [96, 32], strides = [1, 1]} : vector<96x96xf32> to vector<96x32xf32>
    %82 = vector.shape_cast %81 : vector<96x32xf32> to vector<3x2x16x32xf32>
    %83 = vector.extract_strided_slice %82 {offsets = [0, 0, 0, 0], sizes = [1, 2, 16, 8], strides = [1, 1, 1, 1]} : vector<3x2x16x32xf32> to vector<1x2x16x8xf32>
    %84 = vector.shape_cast %83 : vector<1x2x16x8xf32> to vector<2x16x8xf32>
    %85 = vector.extract_strided_slice %82 {offsets = [1, 0, 0, 0], sizes = [1, 2, 16, 8], strides = [1, 1, 1, 1]} : vector<3x2x16x32xf32> to vector<1x2x16x8xf32>
    %86 = vector.shape_cast %85 : vector<1x2x16x8xf32> to vector<2x16x8xf32>
    %87 = vector.extract_strided_slice %82 {offsets = [2, 0, 0, 0], sizes = [1, 2, 16, 8], strides = [1, 1, 1, 1]} : vector<3x2x16x32xf32> to vector<1x2x16x8xf32>
    %88 = vector.shape_cast %87 : vector<1x2x16x8xf32> to vector<2x16x8xf32>
    %89 = tpu.concatenate %84, %86, %88 in 2 : vector<2x16x8xf32>, vector<2x16x8xf32>, vector<2x16x8xf32> -> vector<2x16x24xf32>
    %90 = vector.extract_strided_slice %82 {offsets = [0, 0, 0, 8], sizes = [1, 2, 16, 8], strides = [1, 1, 1, 1]} : vector<3x2x16x32xf32> to vector<1x2x16x8xf32>
    %91 = vector.shape_cast %90 : vector<1x2x16x8xf32> to vector<2x16x8xf32>
    %92 = vector.extract_strided_slice %82 {offsets = [1, 0, 0, 8], sizes = [1, 2, 16, 8], strides = [1, 1, 1, 1]} : vector<3x2x16x32xf32> to vector<1x2x16x8xf32>
    %93 = vector.shape_cast %92 : vector<1x2x16x8xf32> to vector<2x16x8xf32>
    %94 = vector.extract_strided_slice %82 {offsets = [2, 0, 0, 8], sizes = [1, 2, 16, 8], strides = [1, 1, 1, 1]} : vector<3x2x16x32xf32> to vector<1x2x16x8xf32>
    %95 = vector.shape_cast %94 : vector<1x2x16x8xf32> to vector<2x16x8xf32>
    %96 = tpu.concatenate %91, %93, %95 in 2 : vector<2x16x8xf32>, vector<2x16x8xf32>, vector<2x16x8xf32> -> vector<2x16x24xf32>
    %97 = vector.extract_strided_slice %82 {offsets = [0, 0, 0, 16], sizes = [1, 2, 16, 8], strides = [1, 1, 1, 1]} : vector<3x2x16x32xf32> to vector<1x2x16x8xf32>
    %98 = vector.shape_cast %97 : vector<1x2x16x8xf32> to vector<2x16x8xf32>
    %99 = vector.extract_strided_slice %82 {offsets = [1, 0, 0, 16], sizes = [1, 2, 16, 8], strides = [1, 1, 1, 1]} : vector<3x2x16x32xf32> to vector<1x2x16x8xf32>
    %100 = vector.shape_cast %99 : vector<1x2x16x8xf32> to vector<2x16x8xf32>
    %101 = vector.extract_strided_slice %82 {offsets = [2, 0, 0, 16], sizes = [1, 2, 16, 8], strides = [1, 1, 1, 1]} : vector<3x2x16x32xf32> to vector<1x2x16x8xf32>
    %102 = vector.shape_cast %101 : vector<1x2x16x8xf32> to vector<2x16x8xf32>
    %103 = tpu.concatenate %98, %100, %102 in 2 : vector<2x16x8xf32>, vector<2x16x8xf32>, vector<2x16x8xf32> -> vector<2x16x24xf32>
    %104 = vector.extract_strided_slice %82 {offsets = [0, 0, 0, 24], sizes = [1, 2, 16, 8], strides = [1, 1, 1, 1]} : vector<3x2x16x32xf32> to vector<1x2x16x8xf32>
    %105 = vector.shape_cast %104 : vector<1x2x16x8xf32> to vector<2x16x8xf32>
    %106 = vector.extract_strided_slice %82 {offsets = [1, 0, 0, 24], sizes = [1, 2, 16, 8], strides = [1, 1, 1, 1]} : vector<3x2x16x32xf32> to vector<1x2x16x8xf32>
    %107 = vector.shape_cast %106 : vector<1x2x16x8xf32> to vector<2x16x8xf32>
    %108 = vector.extract_strided_slice %82 {offsets = [2, 0, 0, 24], sizes = [1, 2, 16, 8], strides = [1, 1, 1, 1]} : vector<3x2x16x32xf32> to vector<1x2x16x8xf32>
    %109 = vector.shape_cast %108 : vector<1x2x16x8xf32> to vector<2x16x8xf32>
    %110 = tpu.concatenate %105, %107, %109 in 2 : vector<2x16x8xf32>, vector<2x16x8xf32>, vector<2x16x8xf32> -> vector<2x16x24xf32>
    %111 = vector.shape_cast %89 : vector<2x16x24xf32> to vector<1x2x16x24xf32>
    %112 = vector.shape_cast %96 : vector<2x16x24xf32> to vector<1x2x16x24xf32>
    %113 = vector.shape_cast %103 : vector<2x16x24xf32> to vector<1x2x16x24xf32>
    %114 = vector.shape_cast %110 : vector<2x16x24xf32> to vector<1x2x16x24xf32>
    %115 = tpu.concatenate %111, %112, %113, %114 in 0 : vector<1x2x16x24xf32>, vector<1x2x16x24xf32>, vector<1x2x16x24xf32>, vector<1x2x16x24xf32> -> vector<4x2x16x24xf32>
    %116 = vector.shape_cast %115 : vector<4x2x16x24xf32> to vector<8x16x24xf32>
    %cst_14 = arith.constant dense<0.000000e+00> : vector<8x16x16xf32>
    %117 = tpu.matmul %44, %80, %cst_14 {dimension_numbers = #tpu.dot_dimension_numbers<[2], [2], [1], [1], [0, 0, 0, 1, 1, 1], [0], [0]>} : vector<8x16x24xf32>, vector<8x16x24xf32>, vector<8x16x16xf32> -> vector<8x16x16xf32>
    %cst_15 = arith.constant 0.204124153 : f32
    %118 = vector.broadcast %cst_15 : f32 to vector<8x16x16xf32>
    %119 = arith.mulf %117, %118 : vector<8x16x16xf32>
    %cst_16 = arith.constant dense<0xFF800000> : vector<8x16xf32>
    %120 = vector.multi_reduction <maximumf>, %119, %cst_16 [2] : vector<8x16x16xf32> to vector<8x16xf32>
    %121 = vector.shape_cast %120 : vector<8x16xf32> to vector<8x16x1xf32>
    %122 = vector.broadcast %121 : vector<8x16x1xf32> to vector<8x16x16xf32>
    %123 = arith.subf %119, %122 : vector<8x16x16xf32>
    %124 = math.exp %123 : vector<8x16x16xf32>
    %cst_17 = arith.constant dense<0.000000e+00> : vector<8x16xf32>
    %125 = vector.multi_reduction <add>, %124, %cst_17 [2] : vector<8x16x16xf32> to vector<8x16xf32>
    %126 = vector.shape_cast %125 : vector<8x16xf32> to vector<8x16x1xf32>
    %127 = vector.broadcast %126 : vector<8x16x1xf32> to vector<8x16x16xf32>
    %128 = arith.divf %124, %127 : vector<8x16x16xf32>
    %cst_18 = arith.constant dense<0.000000e+00> : vector<8x16x24xf32>
    %129 = tpu.matmul %128, %116, %cst_18 {dimension_numbers = #tpu.dot_dimension_numbers<[2], [1], [1], [2], [0, 0, 0, 1, 1, 2], [0], [0]>} : vector<8x16x16xf32>, vector<8x16x24xf32>, vector<8x16x24xf32> -> vector<8x16x24xf32>
    %130 = vector.shape_cast %129 : vector<8x16x24xf32> to vector<4x2x16x24xf32>
    %131 = vector.extract_strided_slice %130 {offsets = [0, 0, 0, 0], sizes = [1, 2, 16, 8], strides = [1, 1, 1, 1]} : vector<4x2x16x24xf32> to vector<1x2x16x8xf32>
    %132 = vector.shape_cast %131 : vector<1x2x16x8xf32> to vector<2x16x8xf32>
    %133 = vector.extract_strided_slice %130 {offsets = [1, 0, 0, 0], sizes = [1, 2, 16, 8], strides = [1, 1, 1, 1]} : vector<4x2x16x24xf32> to vector<1x2x16x8xf32>
    %134 = vector.shape_cast %133 : vector<1x2x16x8xf32> to vector<2x16x8xf32>
    %135 = vector.extract_strided_slice %130 {offsets = [2, 0, 0, 0], sizes = [1, 2, 16, 8], strides = [1, 1, 1, 1]} : vector<4x2x16x24xf32> to vector<1x2x16x8xf32>
    %136 = vector.shape_cast %135 : vector<1x2x16x8xf32> to vector<2x16x8xf32>
    %137 = vector.extract_strided_slice %130 {offsets = [3, 0, 0, 0], sizes = [1, 2, 16, 8], strides = [1, 1, 1, 1]} : vector<4x2x16x24xf32> to vector<1x2x16x8xf32>
    %138 = vector.shape_cast %137 : vector<1x2x16x8xf32> to vector<2x16x8xf32>
    %139 = tpu.concatenate %132, %134, %136, %138 in 2 : vector<2x16x8xf32>, vector<2x16x8xf32>, vector<2x16x8xf32>, vector<2x16x8xf32> -> vector<2x16x32xf32>
    %140 = vector.extract_strided_slice %130 {offsets = [0, 0, 0, 8], sizes = [1, 2, 16, 8], strides = [1, 1, 1, 1]} : vector<4x2x16x24xf32> to vector<1x2x16x8xf32>
    %141 = vector.shape_cast %140 : vector<1x2x16x8xf32> to vector<2x16x8xf32>
    %142 = vector.extract_strided_slice %130 {offsets = [1, 0, 0, 8], sizes = [1, 2, 16, 8], strides = [1, 1, 1, 1]} : vector<4x2x16x24xf32> to vector<1x2x16x8xf32>
    %143 = vector.shape_cast %142 : vector<1x2x16x8xf32> to vector<2x16x8xf32>
    %144 = vector.extract_strided_slice %130 {offsets = [2, 0, 0, 8], sizes = [1, 2, 16, 8], strides = [1, 1, 1, 1]} : vector<4x2x16x24xf32> to vector<1x2x16x8xf32>
    %145 = vector.shape_cast %144 : vector<1x2x16x8xf32> to vector<2x16x8xf32>
    %146 = vector.extract_strided_slice %130 {offsets = [3, 0, 0, 8], sizes = [1, 2, 16, 8], strides = [1, 1, 1, 1]} : vector<4x2x16x24xf32> to vector<1x2x16x8xf32>
    %147 = vector.shape_cast %146 : vector<1x2x16x8xf32> to vector<2x16x8xf32>
    %148 = tpu.concatenate %141, %143, %145, %147 in 2 : vector<2x16x8xf32>, vector<2x16x8xf32>, vector<2x16x8xf32>, vector<2x16x8xf32> -> vector<2x16x32xf32>
    %149 = vector.extract_strided_slice %130 {offsets = [0, 0, 0, 16], sizes = [1, 2, 16, 8], strides = [1, 1, 1, 1]} : vector<4x2x16x24xf32> to vector<1x2x16x8xf32>
    %150 = vector.shape_cast %149 : vector<1x2x16x8xf32> to vector<2x16x8xf32>
    %151 = vector.extract_strided_slice %130 {offsets = [1, 0, 0, 16], sizes = [1, 2, 16, 8], strides = [1, 1, 1, 1]} : vector<4x2x16x24xf32> to vector<1x2x16x8xf32>
    %152 = vector.shape_cast %151 : vector<1x2x16x8xf32> to vector<2x16x8xf32>
    %153 = vector.extract_strided_slice %130 {offsets = [2, 0, 0, 16], sizes = [1, 2, 16, 8], strides = [1, 1, 1, 1]} : vector<4x2x16x24xf32> to vector<1x2x16x8xf32>
    %154 = vector.shape_cast %153 : vector<1x2x16x8xf32> to vector<2x16x8xf32>
    %155 = vector.extract_strided_slice %130 {offsets = [3, 0, 0, 16], sizes = [1, 2, 16, 8], strides = [1, 1, 1, 1]} : vector<4x2x16x24xf32> to vector<1x2x16x8xf32>
    %156 = vector.shape_cast %155 : vector<1x2x16x8xf32> to vector<2x16x8xf32>
    %157 = tpu.concatenate %150, %152, %154, %156 in 2 : vector<2x16x8xf32>, vector<2x16x8xf32>, vector<2x16x8xf32>, vector<2x16x8xf32> -> vector<2x16x32xf32>
    %158 = vector.shape_cast %139 : vector<2x16x32xf32> to vector<1x2x16x32xf32>
    %159 = vector.shape_cast %148 : vector<2x16x32xf32> to vector<1x2x16x32xf32>
    %160 = vector.shape_cast %157 : vector<2x16x32xf32> to vector<1x2x16x32xf32>
    %161 = tpu.concatenate %158, %159, %160 in 0 : vector<1x2x16x32xf32>, vector<1x2x16x32xf32>, vector<1x2x16x32xf32> -> vector<3x2x16x32xf32>
    %162 = vector.shape_cast %161 : vector<3x2x16x32xf32> to vector<96x32xf32>
    %cst_19 = arith.constant dense<0.000000e+00> : vector<96x32xf32>
    %163 = tpu.matmul %162, %4, %cst_19 {dimension_numbers = #tpu.dot_dimension_numbers<[1], [0], [0], [1], [0, 0, 1, 1], [], []>} : vector<96x32xf32>, vector<32x32xf32>, vector<96x32xf32> -> vector<96x32xf32>
    %164 = arith.addf %2, %163 : vector<96x32xf32>
    %cst_20 = arith.constant dense<0.000000e+00> : vector<96x32xf32>
    %165 = tpu.matmul %164, %5, %cst_20 {dimension_numbers = #tpu.dot_dimension_numbers<[1], [0], [0], [1], [0, 0, 1, 1], [], []>} : vector<96x32xf32>, vector<32x32xf32>, vector<96x32xf32> -> vector<96x32xf32>
    %166 = vector.shape_cast %165 : vector<96x32xf32> to vector<3x32x32xf32>
    %167 = arith.mulf %166, %166 : vector<3x32x32xf32>
    %cst_21 = arith.constant dense<0.000000e+00> : vector<32x32xf32>
    %168 = vector.multi_reduction <add>, %167, %cst_21 [0] : vector<3x32x32xf32> to vector<32x32xf32>
    %169 = math.sqrt %168 : vector<32x32xf32>
    %cst_22 = arith.constant 9.99999997E-7 : f32
    %170 = vector.broadcast %cst_22 : f32 to vector<32x32xf32>
    %171 = arith.addf %169, %170 : vector<32x32xf32>
    %cst_23 = arith.constant dense<0.000000e+00> : vector<32xf32>
    %172 = vector.multi_reduction <add>, %171, %cst_23 [0] : vector<32x32xf32> to vector<32xf32>
    %173 = vector.shape_cast %172 : vector<32xf32> to vector<1x32xf32>
    %cst_24 = arith.constant 3.200000e+01 : f32
    %174 = vector.broadcast %cst_24 : f32 to vector<1x32xf32>
    %175 = arith.divf %173, %174 : vector<1x32xf32>
    %176 = vector.broadcast %175 : vector<1x32xf32> to vector<32x32xf32>
    %177 = arith.subf %171, %176 : vector<32x32xf32>
    %178 = arith.mulf %177, %177 : vector<32x32xf32>
    %cst_25 = arith.constant dense<0.000000e+00> : vector<32xf32>
    %179 = vector.multi_reduction <add>, %178, %cst_25 [0] : vector<32x32xf32> to vector<32xf32>
    %180 = vector.shape_cast %179 : vector<32xf32> to vector<1x32xf32>
    %cst_26 = arith.constant 3.200000e+01 : f32
    %181 = vector.broadcast %cst_26 : f32 to vector<1x32xf32>
    %182 = arith.divf %180, %181 : vector<1x32xf32>
    %183 = vector.broadcast %175 : vector<1x32xf32> to vector<32x32xf32>
    %184 = arith.subf %171, %183 : vector<32x32xf32>
    %cst_27 = arith.constant 9.99999974E-6 : f32
    %185 = vector.broadcast %cst_27 : f32 to vector<1x32xf32>
    %186 = arith.addf %182, %185 : vector<1x32xf32>
    %187 = math.sqrt %186 : vector<1x32xf32>
    %188 = vector.broadcast %187 : vector<1x32xf32> to vector<32x32xf32>
    %189 = arith.divf %184, %188 : vector<32x32xf32>
    %190 = arith.divf %189, %171 : vector<32x32xf32>
    %191 = vector.shape_cast %190 : vector<32x32xf32> to vector<1x32x32xf32>
    %192 = vector.broadcast %191 : vector<1x32x32xf32> to vector<3x32x32xf32>
    %193 = arith.mulf %166, %192 : vector<3x32x32xf32>
    %cst_28 = arith.constant dense<0.000000e+00> : vector<96x32xf32>
    %194 = tpu.matmul %164, %6, %cst_28 {dimension_numbers = #tpu.dot_dimension_numbers<[1], [0], [0], [1], [0, 0, 1, 1], [], []>} : vector<96x32xf32>, vector<32x32xf32>, vector<96x32xf32> -> vector<96x32xf32>
    %195 = vector.shape_cast %194 : vector<96x32xf32> to vector<3x32x32xf32>
    %196 = arith.mulf %193, %195 : vector<3x32x32xf32>
    %cst_29 = arith.constant dense<0.000000e+00> : vector<32x32xf32>
    %197 = vector.multi_reduction <add>, %196, %cst_29 [0] : vector<3x32x32xf32> to vector<32x32xf32>
    %198 = vector.shape_cast %197 : vector<32x32xf32> to vector<1x32x32xf32>
    %199 = arith.mulf %195, %195 : vector<3x32x32xf32>
    %cst_30 = arith.constant dense<0.000000e+00> : vector<32x32xf32>
    %200 = vector.multi_reduction <add>, %199, %cst_30 [0] : vector<3x32x32xf32> to vector<32x32xf32>
    %201 = vector.shape_cast %200 : vector<32x32xf32> to vector<1x32x32xf32>
    %cst_31 = arith.constant 9.99999997E-7 : f32
    %202 = vector.broadcast %cst_31 : f32 to vector<1x32x32xf32>
    %203 = arith.addf %201, %202 : vector<1x32x32xf32>
    %204 = arith.divf %198, %203 : vector<1x32x32xf32>
    %205 = vector.broadcast %204 : vector<1x32x32xf32> to vector<3x32x32xf32>
    %206 = arith.mulf %205, %195 : vector<3x32x32xf32>
    %207 = arith.subf %193, %206 : vector<3x32x32xf32>
    %cst_32 = arith.constant 0.000000e+00 : f32
    %208 = vector.broadcast %cst_32 : f32 to vector<1x32x32xf32>
    %209 = arith.cmpf oge, %198, %208 : vector<1x32x32xf32>
    %cst_33 = arith.constant 2.000000e-01 : f32
    %210 = vector.broadcast %cst_33 : f32 to vector<3x32x32xf32>
    %211 = arith.mulf %210, %193 : vector<3x32x32xf32>
    %cst_34 = arith.constant 8.000000e-01 : f32
    %212 = vector.broadcast %cst_34 : f32 to vector<3x32x32xf32>
    %213 = arith.mulf %212, %207 : vector<3x32x32xf32>
    %214 = arith.addf %211, %213 : vector<3x32x32xf32>
    %215 = vector.shape_cast %209 : vector<1x32x32xi1> to vector<1x32x32xi1>
    %216 = vector.broadcast %215 : vector<1x32x32xi1> to vector<3x32x32xi1>
    %217 = arith.select %216, %193, %214 : vector<3x32x32xi1>, vector<3x32x32xf32>
    %218 = vector.shape_cast %217 : vector<3x32x32xf32> to vector<96x32xf32>
    %cst_35 = arith.constant dense<0.000000e+00> : vector<96x32xf32>
    %219 = tpu.matmul %218, %7, %cst_35 {dimension_numbers = #tpu.dot_dimension_numbers<[1], [0], [0], [1], [0, 0, 1, 1], [], []>} : vector<96x32xf32>, vector<32x32xf32>, vector<96x32xf32> -> vector<96x32xf32>
    %220 = arith.addf %164, %219 : vector<96x32xf32>
    %c0_36 = arith.constant 0 : index
    %c0_37 = arith.constant 0 : index
    %221 = vector.load %arg7[%c0_36, %c0_37] : memref<32x32xf32, #tpu.memory_space<vmem>>, vector<32x32xf32>
    %c0_38 = arith.constant 0 : index
    %c0_39 = arith.constant 0 : index
    %222 = vector.load %arg8[%c0_38, %c0_39] : memref<32x32xf32, #tpu.memory_space<vmem>>, vector<32x32xf32>
    %cst_40 = arith.constant dense<0.000000e+00> : vector<96x32xf32>
    %223 = tpu.matmul %220, %221, %cst_40 {dimension_numbers = #tpu.dot_dimension_numbers<[1], [0], [0], [1], [0, 0, 1, 1], [], []>} : vector<96x32xf32>, vector<32x32xf32>, vector<96x32xf32> -> vector<96x32xf32>
    %224 = vector.shape_cast %223 : vector<96x32xf32> to vector<3x32x32xf32>
    %225 = arith.mulf %224, %224 : vector<3x32x32xf32>
    %cst_41 = arith.constant dense<0.000000e+00> : vector<32x32xf32>
    %226 = vector.multi_reduction <add>, %225, %cst_41 [0] : vector<3x32x32xf32> to vector<32x32xf32>
    %227 = math.sqrt %226 : vector<32x32xf32>
    %cst_42 = arith.constant 9.99999997E-7 : f32
    %228 = vector.broadcast %cst_42 : f32 to vector<32x32xf32>
    %229 = arith.addf %227, %228 : vector<32x32xf32>
    %cst_43 = arith.constant dense<0.000000e+00> : vector<32xf32>
    %230 = vector.multi_reduction <add>, %229, %cst_43 [0] : vector<32x32xf32> to vector<32xf32>
    %231 = vector.shape_cast %230 : vector<32xf32> to vector<1x32xf32>
    %cst_44 = arith.constant 3.200000e+01 : f32
    %232 = vector.broadcast %cst_44 : f32 to vector<1x32xf32>
    %233 = arith.divf %231, %232 : vector<1x32xf32>
    %234 = vector.broadcast %233 : vector<1x32xf32> to vector<32x32xf32>
    %235 = arith.subf %229, %234 : vector<32x32xf32>
    %236 = arith.mulf %235, %235 : vector<32x32xf32>
    %cst_45 = arith.constant dense<0.000000e+00> : vector<32xf32>
    %237 = vector.multi_reduction <add>, %236, %cst_45 [0] : vector<32x32xf32> to vector<32xf32>
    %238 = vector.shape_cast %237 : vector<32xf32> to vector<1x32xf32>
    %cst_46 = arith.constant 3.200000e+01 : f32
    %239 = vector.broadcast %cst_46 : f32 to vector<1x32xf32>
    %240 = arith.divf %238, %239 : vector<1x32xf32>
    %241 = vector.broadcast %233 : vector<1x32xf32> to vector<32x32xf32>
    %242 = arith.subf %229, %241 : vector<32x32xf32>
    %cst_47 = arith.constant 9.99999974E-6 : f32
    %243 = vector.broadcast %cst_47 : f32 to vector<1x32xf32>
    %244 = arith.addf %240, %243 : vector<1x32xf32>
    %245 = math.sqrt %244 : vector<1x32xf32>
    %246 = vector.broadcast %245 : vector<1x32xf32> to vector<32x32xf32>
    %247 = arith.divf %242, %246 : vector<32x32xf32>
    %248 = arith.divf %247, %229 : vector<32x32xf32>
    %249 = vector.shape_cast %248 : vector<32x32xf32> to vector<1x32x32xf32>
    %250 = vector.broadcast %249 : vector<1x32x32xf32> to vector<3x32x32xf32>
    %251 = arith.mulf %224, %250 : vector<3x32x32xf32>
    %cst_48 = arith.constant dense<0.000000e+00> : vector<96x32xf32>
    %252 = tpu.matmul %220, %222, %cst_48 {dimension_numbers = #tpu.dot_dimension_numbers<[1], [0], [0], [1], [0, 0, 1, 1], [], []>} : vector<96x32xf32>, vector<32x32xf32>, vector<96x32xf32> -> vector<96x32xf32>
    %253 = vector.shape_cast %252 : vector<96x32xf32> to vector<3x32x32xf32>
    %254 = arith.mulf %251, %253 : vector<3x32x32xf32>
    %cst_49 = arith.constant dense<0.000000e+00> : vector<32x32xf32>
    %255 = vector.multi_reduction <add>, %254, %cst_49 [0] : vector<3x32x32xf32> to vector<32x32xf32>
    %256 = vector.shape_cast %255 : vector<32x32xf32> to vector<1x32x32xf32>
    %257 = arith.mulf %253, %253 : vector<3x32x32xf32>
    %cst_50 = arith.constant dense<0.000000e+00> : vector<32x32xf32>
    %258 = vector.multi_reduction <add>, %257, %cst_50 [0] : vector<3x32x32xf32> to vector<32x32xf32>
    %259 = vector.shape_cast %258 : vector<32x32xf32> to vector<1x32x32xf32>
    %cst_51 = arith.constant 9.99999997E-7 : f32
    %260 = vector.broadcast %cst_51 : f32 to vector<1x32x32xf32>
    %261 = arith.addf %259, %260 : vector<1x32x32xf32>
    %262 = arith.divf %256, %261 : vector<1x32x32xf32>
    %263 = vector.broadcast %262 : vector<1x32x32xf32> to vector<3x32x32xf32>
    %264 = arith.mulf %263, %253 : vector<3x32x32xf32>
    %265 = arith.subf %251, %264 : vector<3x32x32xf32>
    %cst_52 = arith.constant 0.000000e+00 : f32
    %266 = vector.broadcast %cst_52 : f32 to vector<1x32x32xf32>
    %267 = arith.cmpf oge, %256, %266 : vector<1x32x32xf32>
    %cst_53 = arith.constant 2.000000e-01 : f32
    %268 = vector.broadcast %cst_53 : f32 to vector<3x32x32xf32>
    %269 = arith.mulf %268, %251 : vector<3x32x32xf32>
    %cst_54 = arith.constant 8.000000e-01 : f32
    %270 = vector.broadcast %cst_54 : f32 to vector<3x32x32xf32>
    %271 = arith.mulf %270, %265 : vector<3x32x32xf32>
    %272 = arith.addf %269, %271 : vector<3x32x32xf32>
    %273 = vector.shape_cast %267 : vector<1x32x32xi1> to vector<1x32x32xi1>
    %274 = vector.broadcast %273 : vector<1x32x32xi1> to vector<3x32x32xi1>
    %275 = arith.select %274, %251, %272 : vector<3x32x32xi1>, vector<3x32x32xf32>
    %276 = vector.shape_cast %275 : vector<3x32x32xf32> to vector<96x32xf32>
    %c0_55 = arith.constant 0 : index
    %c0_56 = arith.constant 0 : index
    %277 = vector.load %arg9[%c0_55, %c0_56] : memref<32x96xf32, #tpu.memory_space<vmem>>, vector<32x96xf32>
    %c0_57 = arith.constant 0 : index
    %c0_58 = arith.constant 0 : index
    %278 = vector.load %arg10[%c0_57, %c0_58] : memref<32x32xf32, #tpu.memory_space<vmem>>, vector<32x32xf32>
    %c0_59 = arith.constant 0 : index
    %c0_60 = arith.constant 0 : index
    %279 = vector.load %arg11[%c0_59, %c0_60] : memref<32x32xf32, #tpu.memory_space<vmem>>, vector<32x32xf32>
    %c0_61 = arith.constant 0 : index
    %c0_62 = arith.constant 0 : index
    %280 = vector.load %arg12[%c0_61, %c0_62] : memref<32x32xf32, #tpu.memory_space<vmem>>, vector<32x32xf32>
    %c0_63 = arith.constant 0 : index
    %c0_64 = arith.constant 0 : index
    %281 = vector.load %arg13[%c0_63, %c0_64] : memref<32x32xf32, #tpu.memory_space<vmem>>, vector<32x32xf32>
    %cst_65 = arith.constant dense<0.000000e+00> : vector<96x96xf32>
    %282 = tpu.matmul %276, %277, %cst_65 {dimension_numbers = #tpu.dot_dimension_numbers<[1], [0], [0], [1], [0, 0, 1, 1], [], []>} : vector<96x32xf32>, vector<32x96xf32>, vector<96x96xf32> -> vector<96x96xf32>
    %283 = vector.extract_strided_slice %282 {offsets = [0, 0], sizes = [96, 32], strides = [1, 1]} : vector<96x96xf32> to vector<96x32xf32>
    %284 = vector.shape_cast %283 : vector<96x32xf32> to vector<3x2x16x32xf32>
    %285 = vector.extract_strided_slice %284 {offsets = [0, 0, 0, 0], sizes = [1, 2, 16, 8], strides = [1, 1, 1, 1]} : vector<3x2x16x32xf32> to vector<1x2x16x8xf32>
    %286 = vector.shape_cast %285 : vector<1x2x16x8xf32> to vector<2x16x8xf32>
    %287 = vector.extract_strided_slice %284 {offsets = [1, 0, 0, 0], sizes = [1, 2, 16, 8], strides = [1, 1, 1, 1]} : vector<3x2x16x32xf32> to vector<1x2x16x8xf32>
    %288 = vector.shape_cast %287 : vector<1x2x16x8xf32> to vector<2x16x8xf32>
    %289 = vector.extract_strided_slice %284 {offsets = [2, 0, 0, 0], sizes = [1, 2, 16, 8], strides = [1, 1, 1, 1]} : vector<3x2x16x32xf32> to vector<1x2x16x8xf32>
    %290 = vector.shape_cast %289 : vector<1x2x16x8xf32> to vector<2x16x8xf32>
    %291 = tpu.concatenate %286, %288, %290 in 2 : vector<2x16x8xf32>, vector<2x16x8xf32>, vector<2x16x8xf32> -> vector<2x16x24xf32>
    %292 = vector.extract_strided_slice %284 {offsets = [0, 0, 0, 8], sizes = [1, 2, 16, 8], strides = [1, 1, 1, 1]} : vector<3x2x16x32xf32> to vector<1x2x16x8xf32>
    %293 = vector.shape_cast %292 : vector<1x2x16x8xf32> to vector<2x16x8xf32>
    %294 = vector.extract_strided_slice %284 {offsets = [1, 0, 0, 8], sizes = [1, 2, 16, 8], strides = [1, 1, 1, 1]} : vector<3x2x16x32xf32> to vector<1x2x16x8xf32>
    %295 = vector.shape_cast %294 : vector<1x2x16x8xf32> to vector<2x16x8xf32>
    %296 = vector.extract_strided_slice %284 {offsets = [2, 0, 0, 8], sizes = [1, 2, 16, 8], strides = [1, 1, 1, 1]} : vector<3x2x16x32xf32> to vector<1x2x16x8xf32>
    %297 = vector.shape_cast %296 : vector<1x2x16x8xf32> to vector<2x16x8xf32>
    %298 = tpu.concatenate %293, %295, %297 in 2 : vector<2x16x8xf32>, vector<2x16x8xf32>, vector<2x16x8xf32> -> vector<2x16x24xf32>
    %299 = vector.extract_strided_slice %284 {offsets = [0, 0, 0, 16], sizes = [1, 2, 16, 8], strides = [1, 1, 1, 1]} : vector<3x2x16x32xf32> to vector<1x2x16x8xf32>
    %300 = vector.shape_cast %299 : vector<1x2x16x8xf32> to vector<2x16x8xf32>
    %301 = vector.extract_strided_slice %284 {offsets = [1, 0, 0, 16], sizes = [1, 2, 16, 8], strides = [1, 1, 1, 1]} : vector<3x2x16x32xf32> to vector<1x2x16x8xf32>
    %302 = vector.shape_cast %301 : vector<1x2x16x8xf32> to vector<2x16x8xf32>
    %303 = vector.extract_strided_slice %284 {offsets = [2, 0, 0, 16], sizes = [1, 2, 16, 8], strides = [1, 1, 1, 1]} : vector<3x2x16x32xf32> to vector<1x2x16x8xf32>
    %304 = vector.shape_cast %303 : vector<1x2x16x8xf32> to vector<2x16x8xf32>
    %305 = tpu.concatenate %300, %302, %304 in 2 : vector<2x16x8xf32>, vector<2x16x8xf32>, vector<2x16x8xf32> -> vector<2x16x24xf32>
    %306 = vector.extract_strided_slice %284 {offsets = [0, 0, 0, 24], sizes = [1, 2, 16, 8], strides = [1, 1, 1, 1]} : vector<3x2x16x32xf32> to vector<1x2x16x8xf32>
    %307 = vector.shape_cast %306 : vector<1x2x16x8xf32> to vector<2x16x8xf32>
    %308 = vector.extract_strided_slice %284 {offsets = [1, 0, 0, 24], sizes = [1, 2, 16, 8], strides = [1, 1, 1, 1]} : vector<3x2x16x32xf32> to vector<1x2x16x8xf32>
    %309 = vector.shape_cast %308 : vector<1x2x16x8xf32> to vector<2x16x8xf32>
    %310 = vector.extract_strided_slice %284 {offsets = [2, 0, 0, 24], sizes = [1, 2, 16, 8], strides = [1, 1, 1, 1]} : vector<3x2x16x32xf32> to vector<1x2x16x8xf32>
    %311 = vector.shape_cast %310 : vector<1x2x16x8xf32> to vector<2x16x8xf32>
    %312 = tpu.concatenate %307, %309, %311 in 2 : vector<2x16x8xf32>, vector<2x16x8xf32>, vector<2x16x8xf32> -> vector<2x16x24xf32>
    %313 = vector.shape_cast %291 : vector<2x16x24xf32> to vector<1x2x16x24xf32>
    %314 = vector.shape_cast %298 : vector<2x16x24xf32> to vector<1x2x16x24xf32>
    %315 = vector.shape_cast %305 : vector<2x16x24xf32> to vector<1x2x16x24xf32>
    %316 = vector.shape_cast %312 : vector<2x16x24xf32> to vector<1x2x16x24xf32>
    %317 = tpu.concatenate %313, %314, %315, %316 in 0 : vector<1x2x16x24xf32>, vector<1x2x16x24xf32>, vector<1x2x16x24xf32>, vector<1x2x16x24xf32> -> vector<4x2x16x24xf32>
    %318 = vector.shape_cast %317 : vector<4x2x16x24xf32> to vector<8x16x24xf32>
    %319 = vector.extract_strided_slice %282 {offsets = [0, 32], sizes = [96, 32], strides = [1, 1]} : vector<96x96xf32> to vector<96x32xf32>
    %320 = vector.shape_cast %319 : vector<96x32xf32> to vector<3x2x16x32xf32>
    %321 = vector.extract_strided_slice %320 {offsets = [0, 0, 0, 0], sizes = [1, 2, 16, 8], strides = [1, 1, 1, 1]} : vector<3x2x16x32xf32> to vector<1x2x16x8xf32>
    %322 = vector.shape_cast %321 : vector<1x2x16x8xf32> to vector<2x16x8xf32>
    %323 = vector.extract_strided_slice %320 {offsets = [1, 0, 0, 0], sizes = [1, 2, 16, 8], strides = [1, 1, 1, 1]} : vector<3x2x16x32xf32> to vector<1x2x16x8xf32>
    %324 = vector.shape_cast %323 : vector<1x2x16x8xf32> to vector<2x16x8xf32>
    %325 = vector.extract_strided_slice %320 {offsets = [2, 0, 0, 0], sizes = [1, 2, 16, 8], strides = [1, 1, 1, 1]} : vector<3x2x16x32xf32> to vector<1x2x16x8xf32>
    %326 = vector.shape_cast %325 : vector<1x2x16x8xf32> to vector<2x16x8xf32>
    %327 = tpu.concatenate %322, %324, %326 in 2 : vector<2x16x8xf32>, vector<2x16x8xf32>, vector<2x16x8xf32> -> vector<2x16x24xf32>
    %328 = vector.extract_strided_slice %320 {offsets = [0, 0, 0, 8], sizes = [1, 2, 16, 8], strides = [1, 1, 1, 1]} : vector<3x2x16x32xf32> to vector<1x2x16x8xf32>
    %329 = vector.shape_cast %328 : vector<1x2x16x8xf32> to vector<2x16x8xf32>
    %330 = vector.extract_strided_slice %320 {offsets = [1, 0, 0, 8], sizes = [1, 2, 16, 8], strides = [1, 1, 1, 1]} : vector<3x2x16x32xf32> to vector<1x2x16x8xf32>
    %331 = vector.shape_cast %330 : vector<1x2x16x8xf32> to vector<2x16x8xf32>
    %332 = vector.extract_strided_slice %320 {offsets = [2, 0, 0, 8], sizes = [1, 2, 16, 8], strides = [1, 1, 1, 1]} : vector<3x2x16x32xf32> to vector<1x2x16x8xf32>
    %333 = vector.shape_cast %332 : vector<1x2x16x8xf32> to vector<2x16x8xf32>
    %334 = tpu.concatenate %329, %331, %333 in 2 : vector<2x16x8xf32>, vector<2x16x8xf32>, vector<2x16x8xf32> -> vector<2x16x24xf32>
    %335 = vector.extract_strided_slice %320 {offsets = [0, 0, 0, 16], sizes = [1, 2, 16, 8], strides = [1, 1, 1, 1]} : vector<3x2x16x32xf32> to vector<1x2x16x8xf32>
    %336 = vector.shape_cast %335 : vector<1x2x16x8xf32> to vector<2x16x8xf32>
    %337 = vector.extract_strided_slice %320 {offsets = [1, 0, 0, 16], sizes = [1, 2, 16, 8], strides = [1, 1, 1, 1]} : vector<3x2x16x32xf32> to vector<1x2x16x8xf32>
    %338 = vector.shape_cast %337 : vector<1x2x16x8xf32> to vector<2x16x8xf32>
    %339 = vector.extract_strided_slice %320 {offsets = [2, 0, 0, 16], sizes = [1, 2, 16, 8], strides = [1, 1, 1, 1]} : vector<3x2x16x32xf32> to vector<1x2x16x8xf32>
    %340 = vector.shape_cast %339 : vector<1x2x16x8xf32> to vector<2x16x8xf32>
    %341 = tpu.concatenate %336, %338, %340 in 2 : vector<2x16x8xf32>, vector<2x16x8xf32>, vector<2x16x8xf32> -> vector<2x16x24xf32>
    %342 = vector.extract_strided_slice %320 {offsets = [0, 0, 0, 24], sizes = [1, 2, 16, 8], strides = [1, 1, 1, 1]} : vector<3x2x16x32xf32> to vector<1x2x16x8xf32>
    %343 = vector.shape_cast %342 : vector<1x2x16x8xf32> to vector<2x16x8xf32>
    %344 = vector.extract_strided_slice %320 {offsets = [1, 0, 0, 24], sizes = [1, 2, 16, 8], strides = [1, 1, 1, 1]} : vector<3x2x16x32xf32> to vector<1x2x16x8xf32>
    %345 = vector.shape_cast %344 : vector<1x2x16x8xf32> to vector<2x16x8xf32>
    %346 = vector.extract_strided_slice %320 {offsets = [2, 0, 0, 24], sizes = [1, 2, 16, 8], strides = [1, 1, 1, 1]} : vector<3x2x16x32xf32> to vector<1x2x16x8xf32>
    %347 = vector.shape_cast %346 : vector<1x2x16x8xf32> to vector<2x16x8xf32>
    %348 = tpu.concatenate %343, %345, %347 in 2 : vector<2x16x8xf32>, vector<2x16x8xf32>, vector<2x16x8xf32> -> vector<2x16x24xf32>
    %349 = vector.shape_cast %327 : vector<2x16x24xf32> to vector<1x2x16x24xf32>
    %350 = vector.shape_cast %334 : vector<2x16x24xf32> to vector<1x2x16x24xf32>
    %351 = vector.shape_cast %341 : vector<2x16x24xf32> to vector<1x2x16x24xf32>
    %352 = vector.shape_cast %348 : vector<2x16x24xf32> to vector<1x2x16x24xf32>
    %353 = tpu.concatenate %349, %350, %351, %352 in 0 : vector<1x2x16x24xf32>, vector<1x2x16x24xf32>, vector<1x2x16x24xf32>, vector<1x2x16x24xf32> -> vector<4x2x16x24xf32>
    %354 = vector.shape_cast %353 : vector<4x2x16x24xf32> to vector<8x16x24xf32>
    %355 = vector.extract_strided_slice %282 {offsets = [0, 64], sizes = [96, 32], strides = [1, 1]} : vector<96x96xf32> to vector<96x32xf32>
    %356 = vector.shape_cast %355 : vector<96x32xf32> to vector<3x2x16x32xf32>
    %357 = vector.extract_strided_slice %356 {offsets = [0, 0, 0, 0], sizes = [1, 2, 16, 8], strides = [1, 1, 1, 1]} : vector<3x2x16x32xf32> to vector<1x2x16x8xf32>
    %358 = vector.shape_cast %357 : vector<1x2x16x8xf32> to vector<2x16x8xf32>
    %359 = vector.extract_strided_slice %356 {offsets = [1, 0, 0, 0], sizes = [1, 2, 16, 8], strides = [1, 1, 1, 1]} : vector<3x2x16x32xf32> to vector<1x2x16x8xf32>
    %360 = vector.shape_cast %359 : vector<1x2x16x8xf32> to vector<2x16x8xf32>
    %361 = vector.extract_strided_slice %356 {offsets = [2, 0, 0, 0], sizes = [1, 2, 16, 8], strides = [1, 1, 1, 1]} : vector<3x2x16x32xf32> to vector<1x2x16x8xf32>
    %362 = vector.shape_cast %361 : vector<1x2x16x8xf32> to vector<2x16x8xf32>
    %363 = tpu.concatenate %358, %360, %362 in 2 : vector<2x16x8xf32>, vector<2x16x8xf32>, vector<2x16x8xf32> -> vector<2x16x24xf32>
    %364 = vector.extract_strided_slice %356 {offsets = [0, 0, 0, 8], sizes = [1, 2, 16, 8], strides = [1, 1, 1, 1]} : vector<3x2x16x32xf32> to vector<1x2x16x8xf32>
    %365 = vector.shape_cast %364 : vector<1x2x16x8xf32> to vector<2x16x8xf32>
    %366 = vector.extract_strided_slice %356 {offsets = [1, 0, 0, 8], sizes = [1, 2, 16, 8], strides = [1, 1, 1, 1]} : vector<3x2x16x32xf32> to vector<1x2x16x8xf32>
    %367 = vector.shape_cast %366 : vector<1x2x16x8xf32> to vector<2x16x8xf32>
    %368 = vector.extract_strided_slice %356 {offsets = [2, 0, 0, 8], sizes = [1, 2, 16, 8], strides = [1, 1, 1, 1]} : vector<3x2x16x32xf32> to vector<1x2x16x8xf32>
    %369 = vector.shape_cast %368 : vector<1x2x16x8xf32> to vector<2x16x8xf32>
    %370 = tpu.concatenate %365, %367, %369 in 2 : vector<2x16x8xf32>, vector<2x16x8xf32>, vector<2x16x8xf32> -> vector<2x16x24xf32>
    %371 = vector.extract_strided_slice %356 {offsets = [0, 0, 0, 16], sizes = [1, 2, 16, 8], strides = [1, 1, 1, 1]} : vector<3x2x16x32xf32> to vector<1x2x16x8xf32>
    %372 = vector.shape_cast %371 : vector<1x2x16x8xf32> to vector<2x16x8xf32>
    %373 = vector.extract_strided_slice %356 {offsets = [1, 0, 0, 16], sizes = [1, 2, 16, 8], strides = [1, 1, 1, 1]} : vector<3x2x16x32xf32> to vector<1x2x16x8xf32>
    %374 = vector.shape_cast %373 : vector<1x2x16x8xf32> to vector<2x16x8xf32>
    %375 = vector.extract_strided_slice %356 {offsets = [2, 0, 0, 16], sizes = [1, 2, 16, 8], strides = [1, 1, 1, 1]} : vector<3x2x16x32xf32> to vector<1x2x16x8xf32>
    %376 = vector.shape_cast %375 : vector<1x2x16x8xf32> to vector<2x16x8xf32>
    %377 = tpu.concatenate %372, %374, %376 in 2 : vector<2x16x8xf32>, vector<2x16x8xf32>, vector<2x16x8xf32> -> vector<2x16x24xf32>
    %378 = vector.extract_strided_slice %356 {offsets = [0, 0, 0, 24], sizes = [1, 2, 16, 8], strides = [1, 1, 1, 1]} : vector<3x2x16x32xf32> to vector<1x2x16x8xf32>
    %379 = vector.shape_cast %378 : vector<1x2x16x8xf32> to vector<2x16x8xf32>
    %380 = vector.extract_strided_slice %356 {offsets = [1, 0, 0, 24], sizes = [1, 2, 16, 8], strides = [1, 1, 1, 1]} : vector<3x2x16x32xf32> to vector<1x2x16x8xf32>
    %381 = vector.shape_cast %380 : vector<1x2x16x8xf32> to vector<2x16x8xf32>
    %382 = vector.extract_strided_slice %356 {offsets = [2, 0, 0, 24], sizes = [1, 2, 16, 8], strides = [1, 1, 1, 1]} : vector<3x2x16x32xf32> to vector<1x2x16x8xf32>
    %383 = vector.shape_cast %382 : vector<1x2x16x8xf32> to vector<2x16x8xf32>
    %384 = tpu.concatenate %379, %381, %383 in 2 : vector<2x16x8xf32>, vector<2x16x8xf32>, vector<2x16x8xf32> -> vector<2x16x24xf32>
    %385 = vector.shape_cast %363 : vector<2x16x24xf32> to vector<1x2x16x24xf32>
    %386 = vector.shape_cast %370 : vector<2x16x24xf32> to vector<1x2x16x24xf32>
    %387 = vector.shape_cast %377 : vector<2x16x24xf32> to vector<1x2x16x24xf32>
    %388 = vector.shape_cast %384 : vector<2x16x24xf32> to vector<1x2x16x24xf32>
    %389 = tpu.concatenate %385, %386, %387, %388 in 0 : vector<1x2x16x24xf32>, vector<1x2x16x24xf32>, vector<1x2x16x24xf32>, vector<1x2x16x24xf32> -> vector<4x2x16x24xf32>
    %390 = vector.shape_cast %389 : vector<4x2x16x24xf32> to vector<8x16x24xf32>
    %cst_66 = arith.constant dense<0.000000e+00> : vector<8x16x16xf32>
    %391 = tpu.matmul %318, %354, %cst_66 {dimension_numbers = #tpu.dot_dimension_numbers<[2], [2], [1], [1], [0, 0, 0, 1, 1, 1], [0], [0]>} : vector<8x16x24xf32>, vector<8x16x24xf32>, vector<8x16x16xf32> -> vector<8x16x16xf32>
    %cst_67 = arith.constant 0.204124153 : f32
    %392 = vector.broadcast %cst_67 : f32 to vector<8x16x16xf32>
    %393 = arith.mulf %391, %392 : vector<8x16x16xf32>
    %cst_68 = arith.constant dense<0xFF800000> : vector<8x16xf32>
    %394 = vector.multi_reduction <maximumf>, %393, %cst_68 [2] : vector<8x16x16xf32> to vector<8x16xf32>
    %395 = vector.shape_cast %394 : vector<8x16xf32> to vector<8x16x1xf32>
    %396 = vector.broadcast %395 : vector<8x16x1xf32> to vector<8x16x16xf32>
    %397 = arith.subf %393, %396 : vector<8x16x16xf32>
    %398 = math.exp %397 : vector<8x16x16xf32>
    %cst_69 = arith.constant dense<0.000000e+00> : vector<8x16xf32>
    %399 = vector.multi_reduction <add>, %398, %cst_69 [2] : vector<8x16x16xf32> to vector<8x16xf32>
    %400 = vector.shape_cast %399 : vector<8x16xf32> to vector<8x16x1xf32>
    %401 = vector.broadcast %400 : vector<8x16x1xf32> to vector<8x16x16xf32>
    %402 = arith.divf %398, %401 : vector<8x16x16xf32>
    %cst_70 = arith.constant dense<0.000000e+00> : vector<8x16x24xf32>
    %403 = tpu.matmul %402, %390, %cst_70 {dimension_numbers = #tpu.dot_dimension_numbers<[2], [1], [1], [2], [0, 0, 0, 1, 1, 2], [0], [0]>} : vector<8x16x16xf32>, vector<8x16x24xf32>, vector<8x16x24xf32> -> vector<8x16x24xf32>
    %404 = vector.shape_cast %403 : vector<8x16x24xf32> to vector<4x2x16x24xf32>
    %405 = vector.extract_strided_slice %404 {offsets = [0, 0, 0, 0], sizes = [1, 2, 16, 8], strides = [1, 1, 1, 1]} : vector<4x2x16x24xf32> to vector<1x2x16x8xf32>
    %406 = vector.shape_cast %405 : vector<1x2x16x8xf32> to vector<2x16x8xf32>
    %407 = vector.extract_strided_slice %404 {offsets = [1, 0, 0, 0], sizes = [1, 2, 16, 8], strides = [1, 1, 1, 1]} : vector<4x2x16x24xf32> to vector<1x2x16x8xf32>
    %408 = vector.shape_cast %407 : vector<1x2x16x8xf32> to vector<2x16x8xf32>
    %409 = vector.extract_strided_slice %404 {offsets = [2, 0, 0, 0], sizes = [1, 2, 16, 8], strides = [1, 1, 1, 1]} : vector<4x2x16x24xf32> to vector<1x2x16x8xf32>
    %410 = vector.shape_cast %409 : vector<1x2x16x8xf32> to vector<2x16x8xf32>
    %411 = vector.extract_strided_slice %404 {offsets = [3, 0, 0, 0], sizes = [1, 2, 16, 8], strides = [1, 1, 1, 1]} : vector<4x2x16x24xf32> to vector<1x2x16x8xf32>
    %412 = vector.shape_cast %411 : vector<1x2x16x8xf32> to vector<2x16x8xf32>
    %413 = tpu.concatenate %406, %408, %410, %412 in 2 : vector<2x16x8xf32>, vector<2x16x8xf32>, vector<2x16x8xf32>, vector<2x16x8xf32> -> vector<2x16x32xf32>
    %414 = vector.extract_strided_slice %404 {offsets = [0, 0, 0, 8], sizes = [1, 2, 16, 8], strides = [1, 1, 1, 1]} : vector<4x2x16x24xf32> to vector<1x2x16x8xf32>
    %415 = vector.shape_cast %414 : vector<1x2x16x8xf32> to vector<2x16x8xf32>
    %416 = vector.extract_strided_slice %404 {offsets = [1, 0, 0, 8], sizes = [1, 2, 16, 8], strides = [1, 1, 1, 1]} : vector<4x2x16x24xf32> to vector<1x2x16x8xf32>
    %417 = vector.shape_cast %416 : vector<1x2x16x8xf32> to vector<2x16x8xf32>
    %418 = vector.extract_strided_slice %404 {offsets = [2, 0, 0, 8], sizes = [1, 2, 16, 8], strides = [1, 1, 1, 1]} : vector<4x2x16x24xf32> to vector<1x2x16x8xf32>
    %419 = vector.shape_cast %418 : vector<1x2x16x8xf32> to vector<2x16x8xf32>
    %420 = vector.extract_strided_slice %404 {offsets = [3, 0, 0, 8], sizes = [1, 2, 16, 8], strides = [1, 1, 1, 1]} : vector<4x2x16x24xf32> to vector<1x2x16x8xf32>
    %421 = vector.shape_cast %420 : vector<1x2x16x8xf32> to vector<2x16x8xf32>
    %422 = tpu.concatenate %415, %417, %419, %421 in 2 : vector<2x16x8xf32>, vector<2x16x8xf32>, vector<2x16x8xf32>, vector<2x16x8xf32> -> vector<2x16x32xf32>
    %423 = vector.extract_strided_slice %404 {offsets = [0, 0, 0, 16], sizes = [1, 2, 16, 8], strides = [1, 1, 1, 1]} : vector<4x2x16x24xf32> to vector<1x2x16x8xf32>
    %424 = vector.shape_cast %423 : vector<1x2x16x8xf32> to vector<2x16x8xf32>
    %425 = vector.extract_strided_slice %404 {offsets = [1, 0, 0, 16], sizes = [1, 2, 16, 8], strides = [1, 1, 1, 1]} : vector<4x2x16x24xf32> to vector<1x2x16x8xf32>
    %426 = vector.shape_cast %425 : vector<1x2x16x8xf32> to vector<2x16x8xf32>
    %427 = vector.extract_strided_slice %404 {offsets = [2, 0, 0, 16], sizes = [1, 2, 16, 8], strides = [1, 1, 1, 1]} : vector<4x2x16x24xf32> to vector<1x2x16x8xf32>
    %428 = vector.shape_cast %427 : vector<1x2x16x8xf32> to vector<2x16x8xf32>
    %429 = vector.extract_strided_slice %404 {offsets = [3, 0, 0, 16], sizes = [1, 2, 16, 8], strides = [1, 1, 1, 1]} : vector<4x2x16x24xf32> to vector<1x2x16x8xf32>
    %430 = vector.shape_cast %429 : vector<1x2x16x8xf32> to vector<2x16x8xf32>
    %431 = tpu.concatenate %424, %426, %428, %430 in 2 : vector<2x16x8xf32>, vector<2x16x8xf32>, vector<2x16x8xf32>, vector<2x16x8xf32> -> vector<2x16x32xf32>
    %432 = vector.shape_cast %413 : vector<2x16x32xf32> to vector<1x2x16x32xf32>
    %433 = vector.shape_cast %422 : vector<2x16x32xf32> to vector<1x2x16x32xf32>
    %434 = vector.shape_cast %431 : vector<2x16x32xf32> to vector<1x2x16x32xf32>
    %435 = tpu.concatenate %432, %433, %434 in 0 : vector<1x2x16x32xf32>, vector<1x2x16x32xf32>, vector<1x2x16x32xf32> -> vector<3x2x16x32xf32>
    %436 = vector.shape_cast %435 : vector<3x2x16x32xf32> to vector<96x32xf32>
    %cst_71 = arith.constant dense<0.000000e+00> : vector<96x32xf32>
    %437 = tpu.matmul %436, %278, %cst_71 {dimension_numbers = #tpu.dot_dimension_numbers<[1], [0], [0], [1], [0, 0, 1, 1], [], []>} : vector<96x32xf32>, vector<32x32xf32>, vector<96x32xf32> -> vector<96x32xf32>
    %438 = arith.addf %276, %437 : vector<96x32xf32>
    %cst_72 = arith.constant dense<0.000000e+00> : vector<96x32xf32>
    %439 = tpu.matmul %438, %279, %cst_72 {dimension_numbers = #tpu.dot_dimension_numbers<[1], [0], [0], [1], [0, 0, 1, 1], [], []>} : vector<96x32xf32>, vector<32x32xf32>, vector<96x32xf32> -> vector<96x32xf32>
    %440 = vector.shape_cast %439 : vector<96x32xf32> to vector<3x32x32xf32>
    %441 = arith.mulf %440, %440 : vector<3x32x32xf32>
    %cst_73 = arith.constant dense<0.000000e+00> : vector<32x32xf32>
    %442 = vector.multi_reduction <add>, %441, %cst_73 [0] : vector<3x32x32xf32> to vector<32x32xf32>
    %443 = math.sqrt %442 : vector<32x32xf32>
    %cst_74 = arith.constant 9.99999997E-7 : f32
    %444 = vector.broadcast %cst_74 : f32 to vector<32x32xf32>
    %445 = arith.addf %443, %444 : vector<32x32xf32>
    %cst_75 = arith.constant dense<0.000000e+00> : vector<32xf32>
    %446 = vector.multi_reduction <add>, %445, %cst_75 [0] : vector<32x32xf32> to vector<32xf32>
    %447 = vector.shape_cast %446 : vector<32xf32> to vector<1x32xf32>
    %cst_76 = arith.constant 3.200000e+01 : f32
    %448 = vector.broadcast %cst_76 : f32 to vector<1x32xf32>
    %449 = arith.divf %447, %448 : vector<1x32xf32>
    %450 = vector.broadcast %449 : vector<1x32xf32> to vector<32x32xf32>
    %451 = arith.subf %445, %450 : vector<32x32xf32>
    %452 = arith.mulf %451, %451 : vector<32x32xf32>
    %cst_77 = arith.constant dense<0.000000e+00> : vector<32xf32>
    %453 = vector.multi_reduction <add>, %452, %cst_77 [0] : vector<32x32xf32> to vector<32xf32>
    %454 = vector.shape_cast %453 : vector<32xf32> to vector<1x32xf32>
    %cst_78 = arith.constant 3.200000e+01 : f32
    %455 = vector.broadcast %cst_78 : f32 to vector<1x32xf32>
    %456 = arith.divf %454, %455 : vector<1x32xf32>
    %457 = vector.broadcast %449 : vector<1x32xf32> to vector<32x32xf32>
    %458 = arith.subf %445, %457 : vector<32x32xf32>
    %cst_79 = arith.constant 9.99999974E-6 : f32
    %459 = vector.broadcast %cst_79 : f32 to vector<1x32xf32>
    %460 = arith.addf %456, %459 : vector<1x32xf32>
    %461 = math.sqrt %460 : vector<1x32xf32>
    %462 = vector.broadcast %461 : vector<1x32xf32> to vector<32x32xf32>
    %463 = arith.divf %458, %462 : vector<32x32xf32>
    %464 = arith.divf %463, %445 : vector<32x32xf32>
    %465 = vector.shape_cast %464 : vector<32x32xf32> to vector<1x32x32xf32>
    %466 = vector.broadcast %465 : vector<1x32x32xf32> to vector<3x32x32xf32>
    %467 = arith.mulf %440, %466 : vector<3x32x32xf32>
    %cst_80 = arith.constant dense<0.000000e+00> : vector<96x32xf32>
    %468 = tpu.matmul %438, %280, %cst_80 {dimension_numbers = #tpu.dot_dimension_numbers<[1], [0], [0], [1], [0, 0, 1, 1], [], []>} : vector<96x32xf32>, vector<32x32xf32>, vector<96x32xf32> -> vector<96x32xf32>
    %469 = vector.shape_cast %468 : vector<96x32xf32> to vector<3x32x32xf32>
    %470 = arith.mulf %467, %469 : vector<3x32x32xf32>
    %cst_81 = arith.constant dense<0.000000e+00> : vector<32x32xf32>
    %471 = vector.multi_reduction <add>, %470, %cst_81 [0] : vector<3x32x32xf32> to vector<32x32xf32>
    %472 = vector.shape_cast %471 : vector<32x32xf32> to vector<1x32x32xf32>
    %473 = arith.mulf %469, %469 : vector<3x32x32xf32>
    %cst_82 = arith.constant dense<0.000000e+00> : vector<32x32xf32>
    %474 = vector.multi_reduction <add>, %473, %cst_82 [0] : vector<3x32x32xf32> to vector<32x32xf32>
    %475 = vector.shape_cast %474 : vector<32x32xf32> to vector<1x32x32xf32>
    %cst_83 = arith.constant 9.99999997E-7 : f32
    %476 = vector.broadcast %cst_83 : f32 to vector<1x32x32xf32>
    %477 = arith.addf %475, %476 : vector<1x32x32xf32>
    %478 = arith.divf %472, %477 : vector<1x32x32xf32>
    %479 = vector.broadcast %478 : vector<1x32x32xf32> to vector<3x32x32xf32>
    %480 = arith.mulf %479, %469 : vector<3x32x32xf32>
    %481 = arith.subf %467, %480 : vector<3x32x32xf32>
    %cst_84 = arith.constant 0.000000e+00 : f32
    %482 = vector.broadcast %cst_84 : f32 to vector<1x32x32xf32>
    %483 = arith.cmpf oge, %472, %482 : vector<1x32x32xf32>
    %cst_85 = arith.constant 2.000000e-01 : f32
    %484 = vector.broadcast %cst_85 : f32 to vector<3x32x32xf32>
    %485 = arith.mulf %484, %467 : vector<3x32x32xf32>
    %cst_86 = arith.constant 8.000000e-01 : f32
    %486 = vector.broadcast %cst_86 : f32 to vector<3x32x32xf32>
    %487 = arith.mulf %486, %481 : vector<3x32x32xf32>
    %488 = arith.addf %485, %487 : vector<3x32x32xf32>
    %489 = vector.shape_cast %483 : vector<1x32x32xi1> to vector<1x32x32xi1>
    %490 = vector.broadcast %489 : vector<1x32x32xi1> to vector<3x32x32xi1>
    %491 = arith.select %490, %467, %488 : vector<3x32x32xi1>, vector<3x32x32xf32>
    %492 = vector.shape_cast %491 : vector<3x32x32xf32> to vector<96x32xf32>
    %cst_87 = arith.constant dense<0.000000e+00> : vector<96x32xf32>
    %493 = tpu.matmul %492, %281, %cst_87 {dimension_numbers = #tpu.dot_dimension_numbers<[1], [0], [0], [1], [0, 0, 1, 1], [], []>} : vector<96x32xf32>, vector<32x32xf32>, vector<96x32xf32> -> vector<96x32xf32>
    %494 = arith.addf %438, %493 : vector<96x32xf32>
    %c0_88 = arith.constant 0 : index
    %c0_89 = arith.constant 0 : index
    %495 = vector.load %arg14[%c0_88, %c0_89] : memref<32x32xf32, #tpu.memory_space<vmem>>, vector<32x32xf32>
    %c0_90 = arith.constant 0 : index
    %c0_91 = arith.constant 0 : index
    %496 = vector.load %arg15[%c0_90, %c0_91] : memref<32x32xf32, #tpu.memory_space<vmem>>, vector<32x32xf32>
    %c0_92 = arith.constant 0 : index
    %c0_93 = arith.constant 0 : index
    %497 = vector.load %arg16[%c0_92, %c0_93] : memref<32x3xf32, #tpu.memory_space<vmem>>, vector<32x3xf32>
    %cst_94 = arith.constant dense<0.000000e+00> : vector<96x32xf32>
    %498 = tpu.matmul %494, %495, %cst_94 {dimension_numbers = #tpu.dot_dimension_numbers<[1], [0], [0], [1], [0, 0, 1, 1], [], []>} : vector<96x32xf32>, vector<32x32xf32>, vector<96x32xf32> -> vector<96x32xf32>
    %499 = vector.shape_cast %498 : vector<96x32xf32> to vector<3x32x32xf32>
    %500 = arith.mulf %499, %499 : vector<3x32x32xf32>
    %cst_95 = arith.constant dense<0.000000e+00> : vector<32x32xf32>
    %501 = vector.multi_reduction <add>, %500, %cst_95 [0] : vector<3x32x32xf32> to vector<32x32xf32>
    %502 = math.sqrt %501 : vector<32x32xf32>
    %cst_96 = arith.constant 9.99999997E-7 : f32
    %503 = vector.broadcast %cst_96 : f32 to vector<32x32xf32>
    %504 = arith.addf %502, %503 : vector<32x32xf32>
    %cst_97 = arith.constant dense<0.000000e+00> : vector<32xf32>
    %505 = vector.multi_reduction <add>, %504, %cst_97 [0] : vector<32x32xf32> to vector<32xf32>
    %506 = vector.shape_cast %505 : vector<32xf32> to vector<1x32xf32>
    %cst_98 = arith.constant 3.200000e+01 : f32
    %507 = vector.broadcast %cst_98 : f32 to vector<1x32xf32>
    %508 = arith.divf %506, %507 : vector<1x32xf32>
    %509 = vector.broadcast %508 : vector<1x32xf32> to vector<32x32xf32>
    %510 = arith.subf %504, %509 : vector<32x32xf32>
    %511 = arith.mulf %510, %510 : vector<32x32xf32>
    %cst_99 = arith.constant dense<0.000000e+00> : vector<32xf32>
    %512 = vector.multi_reduction <add>, %511, %cst_99 [0] : vector<32x32xf32> to vector<32xf32>
    %513 = vector.shape_cast %512 : vector<32xf32> to vector<1x32xf32>
    %cst_100 = arith.constant 3.200000e+01 : f32
    %514 = vector.broadcast %cst_100 : f32 to vector<1x32xf32>
    %515 = arith.divf %513, %514 : vector<1x32xf32>
    %516 = vector.broadcast %508 : vector<1x32xf32> to vector<32x32xf32>
    %517 = arith.subf %504, %516 : vector<32x32xf32>
    %cst_101 = arith.constant 9.99999974E-6 : f32
    %518 = vector.broadcast %cst_101 : f32 to vector<1x32xf32>
    %519 = arith.addf %515, %518 : vector<1x32xf32>
    %520 = math.sqrt %519 : vector<1x32xf32>
    %521 = vector.broadcast %520 : vector<1x32xf32> to vector<32x32xf32>
    %522 = arith.divf %517, %521 : vector<32x32xf32>
    %523 = arith.divf %522, %504 : vector<32x32xf32>
    %524 = vector.shape_cast %523 : vector<32x32xf32> to vector<1x32x32xf32>
    %525 = vector.broadcast %524 : vector<1x32x32xf32> to vector<3x32x32xf32>
    %526 = arith.mulf %499, %525 : vector<3x32x32xf32>
    %527 = vector.shape_cast %526 : vector<3x32x32xf32> to vector<96x32xf32>
    %cst_102 = arith.constant dense<0.000000e+00> : vector<96x32xf32>
    %528 = tpu.matmul %527, %496, %cst_102 {dimension_numbers = #tpu.dot_dimension_numbers<[1], [0], [0], [1], [0, 0, 1, 1], [], []>} : vector<96x32xf32>, vector<32x32xf32>, vector<96x32xf32> -> vector<96x32xf32>
    %529 = vector.shape_cast %528 : vector<96x32xf32> to vector<3x32x32xf32>
    %530 = arith.mulf %526, %529 : vector<3x32x32xf32>
    %cst_103 = arith.constant dense<0.000000e+00> : vector<32x32xf32>
    %531 = vector.multi_reduction <add>, %530, %cst_103 [0] : vector<3x32x32xf32> to vector<32x32xf32>
    %532 = vector.shape_cast %531 : vector<32x32xf32> to vector<1x32x32xf32>
    %533 = arith.mulf %529, %529 : vector<3x32x32xf32>
    %cst_104 = arith.constant dense<0.000000e+00> : vector<32x32xf32>
    %534 = vector.multi_reduction <add>, %533, %cst_104 [0] : vector<3x32x32xf32> to vector<32x32xf32>
    %535 = vector.shape_cast %534 : vector<32x32xf32> to vector<1x32x32xf32>
    %cst_105 = arith.constant 9.99999997E-7 : f32
    %536 = vector.broadcast %cst_105 : f32 to vector<1x32x32xf32>
    %537 = arith.addf %535, %536 : vector<1x32x32xf32>
    %538 = arith.divf %532, %537 : vector<1x32x32xf32>
    %539 = vector.broadcast %538 : vector<1x32x32xf32> to vector<3x32x32xf32>
    %540 = arith.mulf %539, %529 : vector<3x32x32xf32>
    %541 = arith.subf %526, %540 : vector<3x32x32xf32>
    %cst_106 = arith.constant 0.000000e+00 : f32
    %542 = vector.broadcast %cst_106 : f32 to vector<1x32x32xf32>
    %543 = arith.cmpf oge, %532, %542 : vector<1x32x32xf32>
    %cst_107 = arith.constant 2.000000e-01 : f32
    %544 = vector.broadcast %cst_107 : f32 to vector<3x32x32xf32>
    %545 = arith.mulf %544, %526 : vector<3x32x32xf32>
    %cst_108 = arith.constant 8.000000e-01 : f32
    %546 = vector.broadcast %cst_108 : f32 to vector<3x32x32xf32>
    %547 = arith.mulf %546, %541 : vector<3x32x32xf32>
    %548 = arith.addf %545, %547 : vector<3x32x32xf32>
    %549 = vector.shape_cast %543 : vector<1x32x32xi1> to vector<1x32x32xi1>
    %550 = vector.broadcast %549 : vector<1x32x32xi1> to vector<3x32x32xi1>
    %551 = arith.select %550, %526, %548 : vector<3x32x32xi1>, vector<3x32x32xf32>
    %552 = vector.shape_cast %551 : vector<3x32x32xf32> to vector<96x32xf32>
    %cst_109 = arith.constant dense<0.000000e+00> : vector<96x3xf32>
    %553 = tpu.matmul %552, %497, %cst_109 {dimension_numbers = #tpu.dot_dimension_numbers<[1], [0], [0], [1], [0, 0, 1, 1], [], []>} : vector<96x32xf32>, vector<32x3xf32>, vector<96x3xf32> -> vector<96x3xf32>
    %554 = vector.shape_cast %494 : vector<96x32xf32> to vector<3x2x16x32xf32>
    %555 = vector.shape_cast %553 : vector<96x3xf32> to vector<3x2x16x3xf32>
    %556 = vector.extract_strided_slice %554 {offsets = [0, 0, 0, 0], sizes = [1, 2, 16, 32], strides = [1, 1, 1, 1]} : vector<3x2x16x32xf32> to vector<1x2x16x32xf32>
    %557 = vector.shape_cast %556 : vector<1x2x16x32xf32> to vector<2x16x32xf32>
    %558 = vector.extract_strided_slice %555 {offsets = [0, 0, 0, 0], sizes = [1, 2, 16, 1], strides = [1, 1, 1, 1]} : vector<3x2x16x3xf32> to vector<1x2x16x1xf32>
    %559 = vector.shape_cast %558 : vector<1x2x16x1xf32> to vector<2x16x1xf32>
    %560 = vector.broadcast %559 : vector<2x16x1xf32> to vector<2x16x32xf32>
    %561 = arith.mulf %557, %560 : vector<2x16x32xf32>
    %562 = vector.extract_strided_slice %554 {offsets = [1, 0, 0, 0], sizes = [1, 2, 16, 32], strides = [1, 1, 1, 1]} : vector<3x2x16x32xf32> to vector<1x2x16x32xf32>
    %563 = vector.shape_cast %562 : vector<1x2x16x32xf32> to vector<2x16x32xf32>
    %564 = vector.extract_strided_slice %555 {offsets = [1, 0, 0, 0], sizes = [1, 2, 16, 1], strides = [1, 1, 1, 1]} : vector<3x2x16x3xf32> to vector<1x2x16x1xf32>
    %565 = vector.shape_cast %564 : vector<1x2x16x1xf32> to vector<2x16x1xf32>
    %566 = vector.broadcast %565 : vector<2x16x1xf32> to vector<2x16x32xf32>
    %567 = arith.mulf %563, %566 : vector<2x16x32xf32>
    %568 = arith.addf %561, %567 : vector<2x16x32xf32>
    %569 = vector.extract_strided_slice %554 {offsets = [2, 0, 0, 0], sizes = [1, 2, 16, 32], strides = [1, 1, 1, 1]} : vector<3x2x16x32xf32> to vector<1x2x16x32xf32>
    %570 = vector.shape_cast %569 : vector<1x2x16x32xf32> to vector<2x16x32xf32>
    %571 = vector.extract_strided_slice %555 {offsets = [2, 0, 0, 0], sizes = [1, 2, 16, 1], strides = [1, 1, 1, 1]} : vector<3x2x16x3xf32> to vector<1x2x16x1xf32>
    %572 = vector.shape_cast %571 : vector<1x2x16x1xf32> to vector<2x16x1xf32>
    %573 = vector.broadcast %572 : vector<2x16x1xf32> to vector<2x16x32xf32>
    %574 = arith.mulf %570, %573 : vector<2x16x32xf32>
    %575 = arith.addf %568, %574 : vector<2x16x32xf32>
    %cst_110 = arith.constant dense<0.000000e+00> : vector<2x32xf32>
    %576 = vector.multi_reduction <add>, %575, %cst_110 [1] : vector<2x16x32xf32> to vector<2x32xf32>
    %cst_111 = arith.constant 1.600000e+01 : f32
    %577 = vector.broadcast %cst_111 : f32 to vector<2x32xf32>
    %578 = arith.divf %576, %577 : vector<2x32xf32>
    %579 = vector.extract_strided_slice %554 {offsets = [0, 0, 0, 0], sizes = [1, 2, 16, 32], strides = [1, 1, 1, 1]} : vector<3x2x16x32xf32> to vector<1x2x16x32xf32>
    %580 = vector.shape_cast %579 : vector<1x2x16x32xf32> to vector<2x16x32xf32>
    %581 = vector.extract_strided_slice %555 {offsets = [0, 0, 0, 1], sizes = [1, 2, 16, 1], strides = [1, 1, 1, 1]} : vector<3x2x16x3xf32> to vector<1x2x16x1xf32>
    %582 = vector.shape_cast %581 : vector<1x2x16x1xf32> to vector<2x16x1xf32>
    %583 = vector.broadcast %582 : vector<2x16x1xf32> to vector<2x16x32xf32>
    %584 = arith.mulf %580, %583 : vector<2x16x32xf32>
    %585 = vector.extract_strided_slice %554 {offsets = [1, 0, 0, 0], sizes = [1, 2, 16, 32], strides = [1, 1, 1, 1]} : vector<3x2x16x32xf32> to vector<1x2x16x32xf32>
    %586 = vector.shape_cast %585 : vector<1x2x16x32xf32> to vector<2x16x32xf32>
    %587 = vector.extract_strided_slice %555 {offsets = [1, 0, 0, 1], sizes = [1, 2, 16, 1], strides = [1, 1, 1, 1]} : vector<3x2x16x3xf32> to vector<1x2x16x1xf32>
    %588 = vector.shape_cast %587 : vector<1x2x16x1xf32> to vector<2x16x1xf32>
    %589 = vector.broadcast %588 : vector<2x16x1xf32> to vector<2x16x32xf32>
    %590 = arith.mulf %586, %589 : vector<2x16x32xf32>
    %591 = arith.addf %584, %590 : vector<2x16x32xf32>
    %592 = vector.extract_strided_slice %554 {offsets = [2, 0, 0, 0], sizes = [1, 2, 16, 32], strides = [1, 1, 1, 1]} : vector<3x2x16x32xf32> to vector<1x2x16x32xf32>
    %593 = vector.shape_cast %592 : vector<1x2x16x32xf32> to vector<2x16x32xf32>
    %594 = vector.extract_strided_slice %555 {offsets = [2, 0, 0, 1], sizes = [1, 2, 16, 1], strides = [1, 1, 1, 1]} : vector<3x2x16x3xf32> to vector<1x2x16x1xf32>
    %595 = vector.shape_cast %594 : vector<1x2x16x1xf32> to vector<2x16x1xf32>
    %596 = vector.broadcast %595 : vector<2x16x1xf32> to vector<2x16x32xf32>
    %597 = arith.mulf %593, %596 : vector<2x16x32xf32>
    %598 = arith.addf %591, %597 : vector<2x16x32xf32>
    %cst_112 = arith.constant dense<0.000000e+00> : vector<2x32xf32>
    %599 = vector.multi_reduction <add>, %598, %cst_112 [1] : vector<2x16x32xf32> to vector<2x32xf32>
    %cst_113 = arith.constant 1.600000e+01 : f32
    %600 = vector.broadcast %cst_113 : f32 to vector<2x32xf32>
    %601 = arith.divf %599, %600 : vector<2x32xf32>
    %602 = vector.extract_strided_slice %554 {offsets = [0, 0, 0, 0], sizes = [1, 2, 16, 32], strides = [1, 1, 1, 1]} : vector<3x2x16x32xf32> to vector<1x2x16x32xf32>
    %603 = vector.shape_cast %602 : vector<1x2x16x32xf32> to vector<2x16x32xf32>
    %604 = vector.extract_strided_slice %555 {offsets = [0, 0, 0, 2], sizes = [1, 2, 16, 1], strides = [1, 1, 1, 1]} : vector<3x2x16x3xf32> to vector<1x2x16x1xf32>
    %605 = vector.shape_cast %604 : vector<1x2x16x1xf32> to vector<2x16x1xf32>
    %606 = vector.broadcast %605 : vector<2x16x1xf32> to vector<2x16x32xf32>
    %607 = arith.mulf %603, %606 : vector<2x16x32xf32>
    %608 = vector.extract_strided_slice %554 {offsets = [1, 0, 0, 0], sizes = [1, 2, 16, 32], strides = [1, 1, 1, 1]} : vector<3x2x16x32xf32> to vector<1x2x16x32xf32>
    %609 = vector.shape_cast %608 : vector<1x2x16x32xf32> to vector<2x16x32xf32>
    %610 = vector.extract_strided_slice %555 {offsets = [1, 0, 0, 2], sizes = [1, 2, 16, 1], strides = [1, 1, 1, 1]} : vector<3x2x16x3xf32> to vector<1x2x16x1xf32>
    %611 = vector.shape_cast %610 : vector<1x2x16x1xf32> to vector<2x16x1xf32>
    %612 = vector.broadcast %611 : vector<2x16x1xf32> to vector<2x16x32xf32>
    %613 = arith.mulf %609, %612 : vector<2x16x32xf32>
    %614 = arith.addf %607, %613 : vector<2x16x32xf32>
    %615 = vector.extract_strided_slice %554 {offsets = [2, 0, 0, 0], sizes = [1, 2, 16, 32], strides = [1, 1, 1, 1]} : vector<3x2x16x32xf32> to vector<1x2x16x32xf32>
    %616 = vector.shape_cast %615 : vector<1x2x16x32xf32> to vector<2x16x32xf32>
    %617 = vector.extract_strided_slice %555 {offsets = [2, 0, 0, 2], sizes = [1, 2, 16, 1], strides = [1, 1, 1, 1]} : vector<3x2x16x3xf32> to vector<1x2x16x1xf32>
    %618 = vector.shape_cast %617 : vector<1x2x16x1xf32> to vector<2x16x1xf32>
    %619 = vector.broadcast %618 : vector<2x16x1xf32> to vector<2x16x32xf32>
    %620 = arith.mulf %616, %619 : vector<2x16x32xf32>
    %621 = arith.addf %614, %620 : vector<2x16x32xf32>
    %cst_114 = arith.constant dense<0.000000e+00> : vector<2x32xf32>
    %622 = vector.multi_reduction <add>, %621, %cst_114 [1] : vector<2x16x32xf32> to vector<2x32xf32>
    %cst_115 = arith.constant 1.600000e+01 : f32
    %623 = vector.broadcast %cst_115 : f32 to vector<2x32xf32>
    %624 = arith.divf %622, %623 : vector<2x32xf32>
    %625 = tpu.concatenate %578, %601, %624 in 1 : vector<2x32xf32>, vector<2x32xf32>, vector<2x32xf32> -> vector<2x96xf32>
    %c0_116 = arith.constant 0 : index
    %c0_117 = arith.constant 0 : index
    %626 = vector.load %arg17[%c0_116, %c0_117] : memref<96x32xf32, #tpu.memory_space<vmem>>, vector<96x32xf32>
    %c0_118 = arith.constant 0 : index
    %c0_119 = arith.constant 0 : index
    %627 = vector.load %arg18[%c0_118, %c0_119] : memref<1x32xf32, #tpu.memory_space<vmem>>, vector<1x32xf32>
    %c0_120 = arith.constant 0 : index
    %c0_121 = arith.constant 0 : index
    %628 = vector.load %arg19[%c0_120, %c0_121] : memref<32x40xf32, #tpu.memory_space<vmem>>, vector<32x40xf32>
    %c0_122 = arith.constant 0 : index
    %c0_123 = arith.constant 0 : index
    %629 = vector.load %arg20[%c0_122, %c0_123] : memref<1x40xf32, #tpu.memory_space<vmem>>, vector<1x40xf32>
    %cst_124 = arith.constant dense<0.000000e+00> : vector<2x32xf32>
    %630 = tpu.matmul %625, %626, %cst_124 {dimension_numbers = #tpu.dot_dimension_numbers<[1], [0], [0], [1], [0, 0, 1, 1], [], []>} : vector<2x96xf32>, vector<96x32xf32>, vector<2x32xf32> -> vector<2x32xf32>
    %631 = vector.broadcast %627 : vector<1x32xf32> to vector<2x32xf32>
    %632 = arith.addf %630, %631 : vector<2x32xf32>
    %cst_125 = arith.constant 0.000000e+00 : f32
    %633 = vector.broadcast %cst_125 : f32 to vector<2x32xf32>
    %634 = arith.maximumf %632, %633 : vector<2x32xf32>
    %cst_126 = arith.constant dense<0.000000e+00> : vector<32xf32>
    %635 = vector.multi_reduction <add>, %634, %cst_126 [0] : vector<2x32xf32> to vector<32xf32>
    %636 = vector.shape_cast %635 : vector<32xf32> to vector<1x32xf32>
    %cst_127 = arith.constant 2.000000e+00 : f32
    %637 = vector.broadcast %cst_127 : f32 to vector<1x32xf32>
    %638 = arith.divf %636, %637 : vector<1x32xf32>
    %639 = vector.broadcast %638 : vector<1x32xf32> to vector<2x32xf32>
    %640 = arith.subf %634, %639 : vector<2x32xf32>
    %641 = arith.mulf %640, %640 : vector<2x32xf32>
    %cst_128 = arith.constant dense<0.000000e+00> : vector<32xf32>
    %642 = vector.multi_reduction <add>, %641, %cst_128 [0] : vector<2x32xf32> to vector<32xf32>
    %643 = vector.shape_cast %642 : vector<32xf32> to vector<1x32xf32>
    %cst_129 = arith.constant 2.000000e+00 : f32
    %644 = vector.broadcast %cst_129 : f32 to vector<1x32xf32>
    %645 = arith.divf %643, %644 : vector<1x32xf32>
    %646 = vector.broadcast %638 : vector<1x32xf32> to vector<2x32xf32>
    %647 = arith.subf %634, %646 : vector<2x32xf32>
    %cst_130 = arith.constant 9.99999974E-6 : f32
    %648 = vector.broadcast %cst_130 : f32 to vector<1x32xf32>
    %649 = arith.addf %645, %648 : vector<1x32xf32>
    %650 = math.sqrt %649 : vector<1x32xf32>
    %651 = vector.broadcast %650 : vector<1x32xf32> to vector<2x32xf32>
    %652 = arith.divf %647, %651 : vector<2x32xf32>
    %cst_131 = arith.constant dense<0.000000e+00> : vector<2x40xf32>
    %653 = tpu.matmul %652, %628, %cst_131 {dimension_numbers = #tpu.dot_dimension_numbers<[1], [0], [0], [1], [0, 0, 1, 1], [], []>} : vector<2x32xf32>, vector<32x40xf32>, vector<2x40xf32> -> vector<2x40xf32>
    %654 = vector.broadcast %629 : vector<1x40xf32> to vector<2x40xf32>
    %655 = arith.addf %653, %654 : vector<2x40xf32>
    %c0_132 = arith.constant 0 : index
    %c0_133 = arith.constant 0 : index
    %656 = vector.load %arg21[%c0_132, %c0_133] : memref<2x40xf32, #tpu.memory_space<vmem>>, vector<2x40xf32>
    tpu.vector_store %arg21[%c0_132, %c0_133], %655 {strides = array<i32>} : memref<2x40xf32, #tpu.memory_space<vmem>>, vector<2x40xf32>,
    return
  }
}

</mosaic_0001>

<llo_original>
// kernel: vn_transformer_cls_forward.1
$region0: #{vn_transformer_cls_forward.1}
  #allocation0 [shape = 'u32[]', space=smem, size = 0x4, offset = 0x4, fixed_abs, tag = 'smem constant byte address 0x4 - core index']
  #allocation1 [shape = 'u32[72,128]{1,0:T(1,128)}', space=vmem, size = 0x9000, scoped, tag = 'internal scratch']
  %s0 = inlined_call_operand.vmem [shape: f32[96,8], index: 0, kind: input, shape index: {}]
  %s1 = inlined_call_operand.vmem [shape: f32[8,32], index: 1, kind: input, shape index: {}]
  %s2 = inlined_call_operand.vmem [shape: f32[32,96], index: 2, kind: input, shape index: {}]
  %s3 = inlined_call_operand.vmem [shape: f32[32,32], index: 3, kind: input, shape index: {}]
  %s4 = inlined_call_operand.vmem [shape: f32[32,32], index: 4, kind: input, shape index: {}]
  %s5 = inlined_call_operand.vmem [shape: f32[32,32], index: 5, kind: input, shape index: {}]
  %s6 = inlined_call_operand.vmem [shape: f32[32,32], index: 6, kind: input, shape index: {}]
  %s7 = inlined_call_operand.vmem [shape: f32[32,32], index: 7, kind: input, shape index: {}]
  %s8 = inlined_call_operand.vmem [shape: f32[32,32], index: 8, kind: input, shape index: {}]
  %s9 = inlined_call_operand.vmem [shape: f32[32,96], index: 9, kind: input, shape index: {}]
  %s10 = inlined_call_operand.vmem [shape: f32[32,32], index: 10, kind: input, shape index: {}]
  %s11 = inlined_call_operand.vmem [shape: f32[32,32], index: 11, kind: input, shape index: {}]
  %s12 = inlined_call_operand.vmem [shape: f32[32,32], index: 12, kind: input, shape index: {}]
  %s13 = inlined_call_operand.vmem [shape: f32[32,32], index: 13, kind: input, shape index: {}]
  %s14 = inlined_call_operand.vmem [shape: f32[32,32], index: 14, kind: input, shape index: {}]
  %s15 = inlined_call_operand.vmem [shape: f32[32,32], index: 15, kind: input, shape index: {}]
  %s16 = inlined_call_operand.vmem [shape: f32[32,3], index: 16, kind: input, shape index: {}]
  %s17 = inlined_call_operand.vmem [shape: f32[96,32], index: 17, kind: input, shape index: {}]
  %s18 = inlined_call_operand.vmem [shape: f32[1,32], index: 18, kind: input, shape index: {}]
  %s19 = inlined_call_operand.vmem [shape: f32[32,40], index: 19, kind: input, shape index: {}]
  %s20 = inlined_call_operand.vmem [shape: f32[1,40], index: 20, kind: input, shape index: {}]
  %s21 = inlined_call_operand.hbm [shape: f32[2,40], index: 21, kind: output, shape index: {}]
  %s22 = sld [smem:[#allocation0]]
  $region94: #{vn_transformer_cls_forward.1} parent=0
    _
  %s24 = ssub.s32 1, %s22
  %s25 = scalar_select 0, %s24, %s22
  $region1: #{vn_transformer_cls_forward.1} parent=0
    #allocation2 [shape = 'u8[1024]{0}', space=vmem, size = 0x400, scoped, tag = 'output window, operand 0, single buffered']
    #allocation3 [shape = 's32[1]{0}', space=sflag, size = 0x4, scoped, tag = 'scoped memory for vn_transformer_cls_forward.1']
    %26 = vsyncpa [#allocation3], 0
    // Predicated region
    $region2: #{vn_transformer_cls_forward.1} parent=1 // pred_check
      _
    $region3: #{vn_transformer_cls_forward.1} parent=1 // pred_check_branch
      %28 = sbr.rel (0) target = $region5
    $region4: #{vn_transformer_cls_forward.1} parent=1 // pred_region
      _
    $region5: #{vn_transformer_cls_forward.1} parent=1 // pred_fallthru
      _
    // Predicated region
    $region6: #{vn_transformer_cls_forward.1} parent=1 // pred_check
      _
    $region7: #{vn_transformer_cls_forward.1} parent=1 // pred_check_branch
      %30 = sbr.rel (0) target = $region9
    $region8: #{vn_transformer_cls_forward.1} parent=1 // pred_region
      _
    $region9: #{vn_transformer_cls_forward.1} parent=1 // pred_fallthru
      _
    // Predicated region
    $region10: #{vn_transformer_cls_forward.1} parent=1 // pred_check
      _
    $region11: #{vn_transformer_cls_forward.1} parent=1 // pred_check_branch
      %32 = sbr.rel (0) target = $region13
    $region12: #{vn_transformer_cls_forward.1} parent=1 // pred_region
      _
    $region13: #{vn_transformer_cls_forward.1} parent=1 // pred_fallthru
      _
    // Predicated region
    $region14: #{vn_transformer_cls_forward.1} parent=1 // pred_check
      _
    $region15: #{vn_transformer_cls_forward.1} parent=1 // pred_check_branch
      %34 = sbr.rel (0) target = $region17
    $region16: #{vn_transformer_cls_forward.1} parent=1 // pred_region
      _
    $region17: #{vn_transformer_cls_forward.1} parent=1 // pred_fallthru
      _
    // Predicated region
    $region18: #{vn_transformer_cls_forward.1} parent=1 // pred_check
      _
    $region19: #{vn_transformer_cls_forward.1} parent=1 // pred_check_branch
      %36 = sbr.rel (0) target = $region21
    $region20: #{vn_transformer_cls_forward.1} parent=1 // pred_region
      _
    $region21: #{vn_transformer_cls_forward.1} parent=1 // pred_fallthru
      _
    // Predicated region
    $region22: #{vn_transformer_cls_forward.1} parent=1 // pred_check
      _
    $region23: #{vn_transformer_cls_forward.1} parent=1 // pred_check_branch
      %38 = sbr.rel (0) target = $region25
    $region24: #{vn_transformer_cls_forward.1} parent=1 // pred_region
      _
    $region25: #{vn_transformer_cls_forward.1} parent=1 // pred_fallthru
      _
    // Predicated region
    $region26: #{vn_transformer_cls_forward.1} parent=1 // pred_check
      _
    $region27: #{vn_transformer_cls_forward.1} parent=1 // pred_check_branch
      %40 = sbr.rel (0) target = $region29
    $region28: #{vn_transformer_cls_forward.1} parent=1 // pred_region
      _
    $region29: #{vn_transformer_cls_forward.1} parent=1 // pred_fallthru
      _
    // Predicated region
    $region30: #{vn_transformer_cls_forward.1} parent=1 // pred_check
      _
    $region31: #{vn_transformer_cls_forward.1} parent=1 // pred_check_branch
      %42 = sbr.rel (0) target = $region33
    $region32: #{vn_transformer_cls_forward.1} parent=1 // pred_region
      _
    $region33: #{vn_transformer_cls_forward.1} parent=1 // pred_fallthru
      _
    // Predicated region
    $region34: #{vn_transformer_cls_forward.1} parent=1 // pred_check
      _
    $region35: #{vn_transformer_cls_forward.1} parent=1 // pred_check_branch
      %44 = sbr.rel (0) target = $region37
    $region36: #{vn_transformer_cls_forward.1} parent=1 // pred_region
      _
    $region37: #{vn_transformer_cls_forward.1} parent=1 // pred_fallthru
      _
    // Predicated region
    $region38: #{vn_transformer_cls_forward.1} parent=1 // pred_check
      _
    $region39: #{vn_transformer_cls_forward.1} parent=1 // pred_check_branch
      %46 = sbr.rel (0) target = $region41
    $region40: #{vn_transformer_cls_forward.1} parent=1 // pred_region
      _
    $region41: #{vn_transformer_cls_forward.1} parent=1 // pred_fallthru
      _
    // Predicated region
    $region42: #{vn_transformer_cls_forward.1} parent=1 // pred_check
      _
    $region43: #{vn_transformer_cls_forward.1} parent=1 // pred_check_branch
      %48 = sbr.rel (0) target = $region45
    $region44: #{vn_transformer_cls_forward.1} parent=1 // pred_region
      _
    $region45: #{vn_transformer_cls_forward.1} parent=1 // pred_fallthru
      _
    // Predicated region
    $region46: #{vn_transformer_cls_forward.1} parent=1 // pred_check
      _
    $region47: #{vn_transformer_cls_forward.1} parent=1 // pred_check_branch
      %50 = sbr.rel (0) target = $region49
    $region48: #{vn_transformer_cls_forward.1} parent=1 // pred_region
      _
    $region49: #{vn_transformer_cls_forward.1} parent=1 // pred_fallthru
      _
    // Predicated region
    $region50: #{vn_transformer_cls_forward.1} parent=1 // pred_check
      _
    $region51: #{vn_transformer_cls_forward.1} parent=1 // pred_check_branch
      %52 = sbr.rel (0) target = $region53
    $region52: #{vn_transformer_cls_forward.1} parent=1 // pred_region
      _
    $region53: #{vn_transformer_cls_forward.1} parent=1 // pred_fallthru
      _
    // Predicated region
    $region54: #{vn_transformer_cls_forward.1} parent=1 // pred_check
      _
    $region55: #{vn_transformer_cls_forward.1} parent=1 // pred_check_branch
      %54 = sbr.rel (0) target = $region57
    $region56: #{vn_transformer_cls_forward.1} parent=1 // pred_region
      _
    $region57: #{vn_transformer_cls_forward.1} parent=1 // pred_fallthru
      _
    // Predicated region
    $region58: #{vn_transformer_cls_forward.1} parent=1 // pred_check
      _
    $region59: #{vn_transformer_cls_forward.1} parent=1 // pred_check_branch
      %56 = sbr.rel (0) target = $region61
    $region60: #{vn_transformer_cls_forward.1} parent=1 // pred_region
      _
    $region61: #{vn_transformer_cls_forward.1} parent=1 // pred_fallthru
      _
    // Predicated region
    $region62: #{vn_transformer_cls_forward.1} parent=1 // pred_check
      _
    $region63: #{vn_transformer_cls_forward.1} parent=1 // pred_check_branch
      %58 = sbr.rel (0) target = $region65
    $region64: #{vn_transformer_cls_forward.1} parent=1 // pred_region
      _
    $region65: #{vn_transformer_cls_forward.1} parent=1 // pred_fallthru
      _
    // Predicated region
    $region66: #{vn_transformer_cls_forward.1} parent=1 // pred_check
      _
    $region67: #{vn_transformer_cls_forward.1} parent=1 // pred_check_branch
      %60 = sbr.rel (0) target = $region69
    $region68: #{vn_transformer_cls_forward.1} parent=1 // pred_region
      _
    $region69: #{vn_transformer_cls_forward.1} parent=1 // pred_fallthru
      _
    // Predicated region
    $region70: #{vn_transformer_cls_forward.1} parent=1 // pred_check
      _
    $region71: #{vn_transformer_cls_forward.1} parent=1 // pred_check_branch
      %62 = sbr.rel (0) target = $region73
    $region72: #{vn_transformer_cls_forward.1} parent=1 // pred_region
      _
    $region73: #{vn_transformer_cls_forward.1} parent=1 // pred_fallthru
      _
    // Predicated region
    $region74: #{vn_transformer_cls_forward.1} parent=1 // pred_check
      _
    $region75: #{vn_transformer_cls_forward.1} parent=1 // pred_check_branch
      %64 = sbr.rel (0) target = $region77
    $region76: #{vn_transformer_cls_forward.1} parent=1 // pred_region
      _
    $region77: #{vn_transformer_cls_forward.1} parent=1 // pred_fallthru
      _
    // Predicated region
    $region78: #{vn_transformer_cls_forward.1} parent=1 // pred_check
      _
    $region79: #{vn_transformer_cls_forward.1} parent=1 // pred_check_branch
      %66 = sbr.rel (0) target = $region81
    $region80: #{vn_transformer_cls_forward.1} parent=1 // pred_region
      _
    $region81: #{vn_transformer_cls_forward.1} parent=1 // pred_fallthru
      _
    // Predicated region
    $region82: #{vn_transformer_cls_forward.1} parent=1 // pred_check
      _
    $region83: #{vn_transformer_cls_forward.1} parent=1 // pred_check_branch
      %68 = sbr.rel (0) target = $region85
    $region84: #{vn_transformer_cls_forward.1} parent=1 // pred_region
      _
    $region85: #{vn_transformer_cls_forward.1} parent=1 // pred_fallthru
      _
    %v69 = vld [vmem:[%s0] sm:$0xff]
    %v70 = vld [vmem:[%s0 + $0x8] sm:$0xff]
    %v71 = vld [vmem:[%s0 + $0x10] sm:$0xff]
    %v72 = vld [vmem:[%s0 + $0x18] sm:$0xff]
    %v73 = vld [vmem:[%s0 + $0x20] sm:$0xff]
    %v74 = vld [vmem:[%s0 + $0x28] sm:$0xff]
    %v75 = vld [vmem:[%s0 + $0x30] sm:$0xff]
    %v76 = vld [vmem:[%s0 + $0x38] sm:$0xff]
    %v77 = vld [vmem:[%s0 + $0x40] sm:$0xff]
    %v78 = vld [vmem:[%s0 + $0x48] sm:$0xff]
    %v79 = vld [vmem:[%s0 + $0x50] sm:$0xff]
    %v80 = vld [vmem:[%s0 + $0x58] sm:$0xff]
    %v81 = vld [vmem:[%s1] sm:$0xff]
    %vm82 = vcmask 64512
    %v84 = vsel %vm82, %v69, 0
    %v87 = vsel %vm82, %v70, 0
    %v90 = vsel %vm82, %v71, 0
    %v93 = vsel %vm82, %v72, 0
    %v96 = vsel %vm82, %v73, 0
    %v99 = vsel %vm82, %v74, 0
    %v102 = vsel %vm82, %v75, 0
    %v105 = vsel %vm82, %v76, 0
    %v108 = vsel %vm82, %v77, 0
    %v111 = vsel %vm82, %v78, 0
    %v114 = vsel %vm82, %v79, 0
    %v117 = vsel %vm82, %v80, 0
    %119 = vmatpush.msra.mxu0 0.0
    %120 = vmatpush.msra.mxu0 0.0
    %121 = vmatpush.msra.mxu0 0.0
    %122 = vmatpush.msra.mxu0 0.0
    %123 = vmatpush.msra.mxu0 0.0
    %124 = vmatpush.msra.mxu0 0.0
    %125 = vmatpush.msra.mxu0 0.0
    %126 = vmatpush.msra.mxu0 0.0
    %127 = vmatpush.msra.mxu0 0.0
    %128 = vmatpush.msra.mxu0 0.0
    %129 = vmatpush.msra.mxu0 0.0
    %130 = vmatpush.msra.mxu0 0.0
    %131 = vmatpush.msra.mxu0 0.0
    %132 = vmatpush.msra.mxu0 0.0
    %133 = vmatpush.msra.mxu0 0.0
    %134 = vmatpush.msra.mxu0 %v81
    %135 = vmatmul.f32.gmra.mxu0 %v84
    %v136 = vpop.f32.mrf.mxu0
    %v137 = vadd.f32 0.0, %v136
    %138 = vmatmul.f32.gmra.mxu0 %v87
    %v139 = vpop.f32.mrf.mxu0
    %v140 = vadd.f32 0.0, %v139
    %141 = vmatmul.f32.gmra.mxu0 %v90
    %v142 = vpop.f32.mrf.mxu0
    %v143 = vadd.f32 0.0, %v142
    %144 = vmatmul.f32.gmra.mxu0 %v93
    %v145 = vpop.f32.mrf.mxu0
    %v146 = vadd.f32 0.0, %v145
    %147 = vmatmul.f32.gmra.mxu0 %v96
    %v148 = vpop.f32.mrf.mxu0
    %v149 = vadd.f32 0.0, %v148
    %150 = vmatmul.f32.gmra.mxu0 %v99
    %v151 = vpop.f32.mrf.mxu0
    %v152 = vadd.f32 0.0, %v151
    %153 = vmatmul.f32.gmra.mxu0 %v102
    %v154 = vpop.f32.mrf.mxu0
    %v155 = vadd.f32 0.0, %v154
    %156 = vmatmul.f32.gmra.mxu0 %v105
    %v157 = vpop.f32.mrf.mxu0
    %v158 = vadd.f32 0.0, %v157
    %159 = vmatmul.f32.gmra.mxu0 %v108
    %v160 = vpop.f32.mrf.mxu0
    %v161 = vadd.f32 0.0, %v160
    %162 = vmatmul.f32.gmra.mxu0 %v111
    %v163 = vpop.f32.mrf.mxu0
    %v164 = vadd.f32 0.0, %v163
    %165 = vmatmul.f32.gmra.mxu0 %v114
    %v166 = vpop.f32.mrf.mxu0
    %v167 = vadd.f32 0.0, %v166
    %168 = vmatmul.f32.gmra.mxu0 %v117
    %v169 = vpop.f32.mrf.mxu0
    %v170 = vadd.f32 0.0, %v169
    %171 = vdwg.mxu0
    %v172 = vld [vmem:[%s2] sm:$0xff]
    %v173 = vld [vmem:[%s2 + $0x8] sm:$0xff]
    %v174 = vld [vmem:[%s2 + $0x10] sm:$0xff]
    %v175 = vld [vmem:[%s2 + $0x18] sm:$0xff]
    %v176 = vld [vmem:[%s3] sm:$0xff]
    %v177 = vld [vmem:[%s3 + $0x8] sm:$0xff]
    %v178 = vld [vmem:[%s3 + $0x10] sm:$0xff]
    %v179 = vld [vmem:[%s3 + $0x18] sm:$0xff]
    %v180 = vld [vmem:[%s4] sm:$0xff]
    %v181 = vld [vmem:[%s4 + $0x8] sm:$0xff]
    %v182 = vld [vmem:[%s4 + $0x10] sm:$0xff]
    %v183 = vld [vmem:[%s4 + $0x18] sm:$0xff]
    %v184 = vld [vmem:[%s5] sm:$0xff]
    %v185 = vld [vmem:[%s5 + $0x8] sm:$0xff]
    %v186 = vld [vmem:[%s5 + $0x10] sm:$0xff]
    %v187 = vld [vmem:[%s5 + $0x18] sm:$0xff]
    %v188 = vld [vmem:[%s6] sm:$0xff]
    %v189 = vld [vmem:[%s6 + $0x8] sm:$0xff]
    %v190 = vld [vmem:[%s6 + $0x10] sm:$0xff]
    %v191 = vld [vmem:[%s6 + $0x18] sm:$0xff]
    %vm192 = vcmask 261120
    %v194 = vsel %vm192, %v137, 0
    %v197 = vsel %vm192, %v140, 0
    %v200 = vsel %vm192, %v143, 0
    %v203 = vsel %vm192, %v146, 0
    %v206 = vsel %vm192, %v149, 0
    %v209 = vsel %vm192, %v152, 0
    %v212 = vsel %vm192, %v155, 0
    %v215 = vsel %vm192, %v158, 0
    %v218 = vsel %vm192, %v161, 0
    %v221 = vsel %vm192, %v164, 0
    %v224 = vsel %vm192, %v167, 0
    %v227 = vsel %vm192, %v170, 0
    %229 = vmatpush.msra.mxu0 0.0
    %230 = vmatpush.msra.mxu0 0.0
    %231 = vmatpush.msra.mxu0 0.0
    %232 = vmatpush.msra.mxu0 0.0
    %233 = vmatpush.msra.mxu0 0.0
    %234 = vmatpush.msra.mxu0 0.0
    %235 = vmatpush.msra.mxu0 0.0
    %236 = vmatpush.msra.mxu0 0.0
    %237 = vmatpush.msra.mxu0 0.0
    %238 = vmatpush.msra.mxu0 0.0
    %239 = vmatpush.msra.mxu0 0.0
    %240 = vmatpush.msra.mxu0 0.0
    %241 = vmatpush.msra.mxu0 %v175
    %242 = vmatpush.msra.mxu0 %v174
    %243 = vmatpush.msra.mxu0 %v173
    %244 = vmatpush.msra.mxu0 %v172
    %245 = vmatmul.f32.gmra.mxu0 %v194
    %v246 = vpop.f32.mrf.mxu0
    %v247 = vadd.f32 0.0, %v246
    %248 = vmatmul.f32.gmra.mxu0 %v197
    %v249 = vpop.f32.mrf.mxu0
    %v250 = vadd.f32 0.0, %v249
    %251 = vmatmul.f32.gmra.mxu0 %v200
    %v252 = vpop.f32.mrf.mxu0
    %v253 = vadd.f32 0.0, %v252
    %254 = vmatmul.f32.gmra.mxu0 %v203
    %v255 = vpop.f32.mrf.mxu0
    %v256 = vadd.f32 0.0, %v255
    %257 = vmatmul.f32.gmra.mxu0 %v206
    %v258 = vpop.f32.mrf.mxu0
    %v259 = vadd.f32 0.0, %v258
    %260 = vmatmul.f32.gmra.mxu0 %v209
    %v261 = vpop.f32.mrf.mxu0
    %v262 = vadd.f32 0.0, %v261
    %263 = vmatmul.f32.gmra.mxu0 %v212
    %v264 = vpop.f32.mrf.mxu0
    %v265 = vadd.f32 0.0, %v264
    %266 = vmatmul.f32.gmra.mxu0 %v215
    %v267 = vpop.f32.mrf.mxu0
    %v268 = vadd.f32 0.0, %v267
    %269 = vmatmul.f32.gmra.mxu0 %v218
    %v270 = vpop.f32.mrf.mxu0
    %v271 = vadd.f32 0.0, %v270
    %272 = vmatmul.f32.gmra.mxu0 %v221
    %v273 = vpop.f32.mrf.mxu0
    %v274 = vadd.f32 0.0, %v273
    %275 = vmatmul.f32.gmra.mxu0 %v224
    %v276 = vpop.f32.mrf.mxu0
    %v277 = vadd.f32 0.0, %v276
    %278 = vmatmul.f32.gmra.mxu0 %v227
    %v279 = vpop.f32.mrf.mxu0
    %v280 = vadd.f32 0.0, %v279
    %281 = vdwg.mxu0
    %286 = vrot.lane.b32.xlu0 %v259, 8
    %v287 = vpop.permute.xlu0 %286
    %288 = vrot.lane.b32.xlu0 %v262, 8
    %v289 = vpop.permute.xlu0 %288
    %290 = vrot.lane.b32.xlu0 %v265, 8
    %v291 = vpop.permute.xlu0 %290
    %292 = vrot.lane.b32.xlu0 %v268, 8
    %v293 = vpop.permute.xlu0 %292
    %302 = vrot.lane.b32.xlu0 %v271, 16
    %v303 = vpop.permute.xlu0 %302
    %304 = vrot.lane.b32.xlu0 %v274, 16
    %v305 = vpop.permute.xlu0 %304
    %306 = vrot.lane.b32.xlu0 %v277, 16
    %v307 = vpop.permute.xlu0 %306
    %308 = vrot.lane.b32.xlu0 %v280, 16
    %v309 = vpop.permute.xlu0 %308
    %v314 = vsel %vm82, %v247, %v287
    %v315 = vsel %vm82, %v250, %v289
    %v316 = vsel %vm82, %v253, %v291
    %v317 = vsel %vm82, %v256, %v293
    %vm318 = vcmask 130048
    %v319 = vsel %vm318, %v314, %v303
    %v320 = vsel %vm318, %v315, %v305
    %v321 = vsel %vm318, %v316, %v307
    %v322 = vsel %vm318, %v317, %v309
    %327 = vrot.lane.b32.xlu0 %v247, 120
    %v328 = vpop.permute.xlu0 %327
    %329 = vrot.lane.b32.xlu0 %v250, 120
    %v330 = vpop.permute.xlu0 %329
    %331 = vrot.lane.b32.xlu0 %v253, 120
    %v332 = vpop.permute.xlu0 %331
    %333 = vrot.lane.b32.xlu0 %v256, 120
    %v334 = vpop.permute.xlu0 %333
    %339 = vrot.lane.b32.xlu0 %v271, 8
    %v340 = vpop.permute.xlu0 %339
    %341 = vrot.lane.b32.xlu0 %v274, 8
    %v342 = vpop.permute.xlu0 %341
    %343 = vrot.lane.b32.xlu0 %v277, 8
    %v344 = vpop.permute.xlu0 %343
    %345 = vrot.lane.b32.xlu0 %v280, 8
    %v346 = vpop.permute.xlu0 %345
    %v351 = vsel %vm82, %v328, %v259
    %v352 = vsel %vm82, %v330, %v262
    %v353 = vsel %vm82, %v332, %v265
    %v354 = vsel %vm82, %v334, %v268
    %v355 = vsel %vm318, %v351, %v340
    %v356 = vsel %vm318, %v352, %v342
    %v357 = vsel %vm318, %v353, %v344
    %v358 = vsel %vm318, %v354, %v346
    %359 = vrot.lane.b32.xlu0 %v247, 112
    %v360 = vpop.permute.xlu0 %359
    %361 = vrot.lane.b32.xlu0 %v250, 112
    %v362 = vpop.permute.xlu0 %361
    %363 = vrot.lane.b32.xlu0 %v253, 112
    %v364 = vpop.permute.xlu0 %363
    %365 = vrot.lane.b32.xlu0 %v256, 112
    %v366 = vpop.permute.xlu0 %365
    %371 = vrot.lane.b32.xlu0 %v259, 120
    %v372 = vpop.permute.xlu0 %371
    %373 = vrot.lane.b32.xlu0 %v262, 120
    %v374 = vpop.permute.xlu0 %373
    %375 = vrot.lane.b32.xlu0 %v265, 120
    %v376 = vpop.permute.xlu0 %375
    %377 = vrot.lane.b32.xlu0 %v268, 120
    %v378 = vpop.permute.xlu0 %377
    %v383 = vsel %vm82, %v360, %v372
    %v384 = vsel %vm82, %v362, %v374
    %v385 = vsel %vm82, %v364, %v376
    %v386 = vsel %vm82, %v366, %v378
    %v387 = vsel %vm318, %v383, %v271
    %v388 = vsel %vm318, %v384, %v274
    %v389 = vsel %vm318, %v385, %v277
    %v390 = vsel %vm318, %v386, %v280
    %391 = vrot.lane.b32.xlu0 %v247, 104
    %v392 = vpop.permute.xlu0 %391
    %393 = vrot.lane.b32.xlu0 %v250, 104
    %v394 = vpop.permute.xlu0 %393
    %395 = vrot.lane.b32.xlu0 %v253, 104
    %v396 = vpop.permute.xlu0 %395
    %397 = vrot.lane.b32.xlu0 %v256, 104
    %v398 = vpop.permute.xlu0 %397
    %403 = vrot.lane.b32.xlu0 %v259, 112
    %v404 = vpop.permute.xlu0 %403
    %405 = vrot.lane.b32.xlu0 %v262, 112
    %v406 = vpop.permute.xlu0 %405
    %407 = vrot.lane.b32.xlu0 %v265, 112
    %v408 = vpop.permute.xlu0 %407
    %409 = vrot.lane.b32.xlu0 %v268, 112
    %v410 = vpop.permute.xlu0 %409
    %415 = vrot.lane.b32.xlu0 %v271, 120
    %v416 = vpop.permute.xlu0 %415
    %417 = vrot.lane.b32.xlu0 %v274, 120
    %v418 = vpop.permute.xlu0 %417
    %419 = vrot.lane.b32.xlu0 %v277, 120
    %v420 = vpop.permute.xlu0 %419
    %421 = vrot.lane.b32.xlu0 %v280, 120
    %v422 = vpop.permute.xlu0 %421
    %v427 = vsel %vm82, %v392, %v404
    %v428 = vsel %vm82, %v394, %v406
    %v429 = vsel %vm82, %v396, %v408
    %v430 = vsel %vm82, %v398, %v410
    %v431 = vsel %vm318, %v427, %v416
    %v432 = vsel %vm318, %v428, %v418
    %v433 = vsel %vm318, %v429, %v420
    %v434 = vsel %vm318, %v430, %v422
    %435 = vrot.lane.b32.xlu0 %v247, 96
    %v436 = vpop.permute.xlu0 %435
    %437 = vrot.lane.b32.xlu0 %v250, 96
    %v438 = vpop.permute.xlu0 %437
    %439 = vrot.lane.b32.xlu0 %v253, 96
    %v440 = vpop.permute.xlu0 %439
    %441 = vrot.lane.b32.xlu0 %v256, 96
    %v442 = vpop.permute.xlu0 %441
    %447 = vrot.lane.b32.xlu0 %v259, 104
    %v448 = vpop.permute.xlu0 %447
    %449 = vrot.lane.b32.xlu0 %v262, 104
    %v450 = vpop.permute.xlu0 %449
    %451 = vrot.lane.b32.xlu0 %v265, 104
    %v452 = vpop.permute.xlu0 %451
    %453 = vrot.lane.b32.xlu0 %v268, 104
    %v454 = vpop.permute.xlu0 %453
    %459 = vrot.lane.b32.xlu0 %v271, 112
    %v460 = vpop.permute.xlu0 %459
    %461 = vrot.lane.b32.xlu0 %v274, 112
    %v462 = vpop.permute.xlu0 %461
    %463 = vrot.lane.b32.xlu0 %v277, 112
    %v464 = vpop.permute.xlu0 %463
    %465 = vrot.lane.b32.xlu0 %v280, 112
    %v466 = vpop.permute.xlu0 %465
    %v471 = vsel %vm82, %v436, %v448
    %v472 = vsel %vm82, %v438, %v450
    %v473 = vsel %vm82, %v440, %v452
    %v474 = vsel %vm82, %v442, %v454
    %v475 = vsel %vm318, %v471, %v460
    %v476 = vsel %vm318, %v472, %v462
    %v477 = vsel %vm318, %v473, %v464
    %v478 = vsel %vm318, %v474, %v466
    %479 = vrot.lane.b32.xlu0 %v247, 88
    %v480 = vpop.permute.xlu0 %479
    %481 = vrot.lane.b32.xlu0 %v250, 88
    %v482 = vpop.permute.xlu0 %481
    %483 = vrot.lane.b32.xlu0 %v253, 88
    %v484 = vpop.permute.xlu0 %483
    %485 = vrot.lane.b32.xlu0 %v256, 88
    %v486 = vpop.permute.xlu0 %485
    %491 = vrot.lane.b32.xlu0 %v259, 96
    %v492 = vpop.permute.xlu0 %491
    %493 = vrot.lane.b32.xlu0 %v262, 96
    %v494 = vpop.permute.xlu0 %493
    %495 = vrot.lane.b32.xlu0 %v265, 96
    %v496 = vpop.permute.xlu0 %495
    %497 = vrot.lane.b32.xlu0 %v268, 96
    %v498 = vpop.permute.xlu0 %497
    %503 = vrot.lane.b32.xlu0 %v271, 104
    %v504 = vpop.permute.xlu0 %503
    %505 = vrot.lane.b32.xlu0 %v274, 104
    %v506 = vpop.permute.xlu0 %505
    %507 = vrot.lane.b32.xlu0 %v277, 104
    %v508 = vpop.permute.xlu0 %507
    %509 = vrot.lane.b32.xlu0 %v280, 104
    %v510 = vpop.permute.xlu0 %509
    %v515 = vsel %vm82, %v480, %v492
    %v516 = vsel %vm82, %v482, %v494
    %v517 = vsel %vm82, %v484, %v496
    %v518 = vsel %vm82, %v486, %v498
    %v519 = vsel %vm318, %v515, %v504
    %v520 = vsel %vm318, %v516, %v506
    %v521 = vsel %vm318, %v517, %v508
    %v522 = vsel %vm318, %v518, %v510
    %523 = vrot.lane.b32.xlu0 %v247, 80
    %v524 = vpop.permute.xlu0 %523
    %525 = vrot.lane.b32.xlu0 %v250, 80
    %v526 = vpop.permute.xlu0 %525
    %527 = vrot.lane.b32.xlu0 %v253, 80
    %v528 = vpop.permute.xlu0 %527
    %529 = vrot.lane.b32.xlu0 %v256, 80
    %v530 = vpop.permute.xlu0 %529
    %535 = vrot.lane.b32.xlu0 %v259, 88
    %v536 = vpop.permute.xlu0 %535
    %537 = vrot.lane.b32.xlu0 %v262, 88
    %v538 = vpop.permute.xlu0 %537
    %539 = vrot.lane.b32.xlu0 %v265, 88
    %v540 = vpop.permute.xlu0 %539
    %541 = vrot.lane.b32.xlu0 %v268, 88
    %v542 = vpop.permute.xlu0 %541
    %547 = vrot.lane.b32.xlu0 %v271, 96
    %v548 = vpop.permute.xlu0 %547
    %549 = vrot.lane.b32.xlu0 %v274, 96
    %v550 = vpop.permute.xlu0 %549
    %551 = vrot.lane.b32.xlu0 %v277, 96
    %v552 = vpop.permute.xlu0 %551
    %553 = vrot.lane.b32.xlu0 %v280, 96
    %v554 = vpop.permute.xlu0 %553
    %v559 = vsel %vm82, %v524, %v536
    %v560 = vsel %vm82, %v526, %v538
    %v561 = vsel %vm82, %v528, %v540
    %v562 = vsel %vm82, %v530, %v542
    %v563 = vsel %vm318, %v559, %v548
    %v564 = vsel %vm318, %v560, %v550
    %v565 = vsel %vm318, %v561, %v552
    %v566 = vsel %vm318, %v562, %v554
    %567 = vrot.lane.b32.xlu0 %v247, 72
    %v568 = vpop.permute.xlu0 %567
    %569 = vrot.lane.b32.xlu0 %v250, 72
    %v570 = vpop.permute.xlu0 %569
    %571 = vrot.lane.b32.xlu0 %v253, 72
    %v572 = vpop.permute.xlu0 %571
    %573 = vrot.lane.b32.xlu0 %v256, 72
    %v574 = vpop.permute.xlu0 %573
    %579 = vrot.lane.b32.xlu0 %v259, 80
    %v580 = vpop.permute.xlu0 %579
    %581 = vrot.lane.b32.xlu0 %v262, 80
    %v582 = vpop.permute.xlu0 %581
    %583 = vrot.lane.b32.xlu0 %v265, 80
    %v584 = vpop.permute.xlu0 %583
    %585 = vrot.lane.b32.xlu0 %v268, 80
    %v586 = vpop.permute.xlu0 %585
    %591 = vrot.lane.b32.xlu0 %v271, 88
    %v592 = vpop.permute.xlu0 %591
    %593 = vrot.lane.b32.xlu0 %v274, 88
    %v594 = vpop.permute.xlu0 %593
    %595 = vrot.lane.b32.xlu0 %v277, 88
    %v596 = vpop.permute.xlu0 %595
    %597 = vrot.lane.b32.xlu0 %v280, 88
    %v598 = vpop.permute.xlu0 %597
    %v603 = vsel %vm82, %v568, %v580
    %v604 = vsel %vm82, %v570, %v582
    %v605 = vsel %vm82, %v572, %v584
    %v606 = vsel %vm82, %v574, %v586
    %v607 = vsel %vm318, %v603, %v592
    %v608 = vsel %vm318, %v604, %v594
    %v609 = vsel %vm318, %v605, %v596
    %v610 = vsel %vm318, %v606, %v598
    %611 = vrot.lane.b32.xlu0 %v247, 64
    %v612 = vpop.permute.xlu0 %611
    %613 = vrot.lane.b32.xlu0 %v250, 64
    %v614 = vpop.permute.xlu0 %613
    %615 = vrot.lane.b32.xlu0 %v253, 64
    %v616 = vpop.permute.xlu0 %615
    %617 = vrot.lane.b32.xlu0 %v256, 64
    %v618 = vpop.permute.xlu0 %617
    %623 = vrot.lane.b32.xlu0 %v259, 72
    %v624 = vpop.permute.xlu0 %623
    %625 = vrot.lane.b32.xlu0 %v262, 72
    %v626 = vpop.permute.xlu0 %625
    %627 = vrot.lane.b32.xlu0 %v265, 72
    %v628 = vpop.permute.xlu0 %627
    %629 = vrot.lane.b32.xlu0 %v268, 72
    %v630 = vpop.permute.xlu0 %629
    %635 = vrot.lane.b32.xlu0 %v271, 80
    %v636 = vpop.permute.xlu0 %635
    %637 = vrot.lane.b32.xlu0 %v274, 80
    %v638 = vpop.permute.xlu0 %637
    %639 = vrot.lane.b32.xlu0 %v277, 80
    %v640 = vpop.permute.xlu0 %639
    %641 = vrot.lane.b32.xlu0 %v280, 80
    %v642 = vpop.permute.xlu0 %641
    %v647 = vsel %vm82, %v612, %v624
    %v648 = vsel %vm82, %v614, %v626
    %v649 = vsel %vm82, %v616, %v628
    %v650 = vsel %vm82, %v618, %v630
    %v651 = vsel %vm318, %v647, %v636
    %v652 = vsel %vm318, %v648, %v638
    %v653 = vsel %vm318, %v649, %v640
    %v654 = vsel %vm318, %v650, %v642
    %655 = vrot.lane.b32.xlu0 %v247, 56
    %v656 = vpop.permute.xlu0 %655
    %657 = vrot.lane.b32.xlu0 %v250, 56
    %v658 = vpop.permute.xlu0 %657
    %659 = vrot.lane.b32.xlu0 %v253, 56
    %v660 = vpop.permute.xlu0 %659
    %661 = vrot.lane.b32.xlu0 %v256, 56
    %v662 = vpop.permute.xlu0 %661
    %667 = vrot.lane.b32.xlu0 %v259, 64
    %v668 = vpop.permute.xlu0 %667
    %669 = vrot.lane.b32.xlu0 %v262, 64
    %v670 = vpop.permute.xlu0 %669
    %671 = vrot.lane.b32.xlu0 %v265, 64
    %v672 = vpop.permute.xlu0 %671
    %673 = vrot.lane.b32.xlu0 %v268, 64
    %v674 = vpop.permute.xlu0 %673
    %679 = vrot.lane.b32.xlu0 %v271, 72
    %v680 = vpop.permute.xlu0 %679
    %681 = vrot.lane.b32.xlu0 %v274, 72
    %v682 = vpop.permute.xlu0 %681
    %683 = vrot.lane.b32.xlu0 %v277, 72
    %v684 = vpop.permute.xlu0 %683
    %685 = vrot.lane.b32.xlu0 %v280, 72
    %v686 = vpop.permute.xlu0 %685
    %v691 = vsel %vm82, %v656, %v668
    %v692 = vsel %vm82, %v658, %v670
    %v693 = vsel %vm82, %v660, %v672
    %v694 = vsel %vm82, %v662, %v674
    %v695 = vsel %vm318, %v691, %v680
    %v696 = vsel %vm318, %v692, %v682
    %v697 = vsel %vm318, %v693, %v684
    %v698 = vsel %vm318, %v694, %v686
    %699 = vrot.lane.b32.xlu0 %v247, 48
    %v700 = vpop.permute.xlu0 %699
    %701 = vrot.lane.b32.xlu0 %v250, 48
    %v702 = vpop.permute.xlu0 %701
    %703 = vrot.lane.b32.xlu0 %v253, 48
    %v704 = vpop.permute.xlu0 %703
    %705 = vrot.lane.b32.xlu0 %v256, 48
    %v706 = vpop.permute.xlu0 %705
    %711 = vrot.lane.b32.xlu0 %v259, 56
    %v712 = vpop.permute.xlu0 %711
    %713 = vrot.lane.b32.xlu0 %v262, 56
    %v714 = vpop.permute.xlu0 %713
    %715 = vrot.lane.b32.xlu0 %v265, 56
    %v716 = vpop.permute.xlu0 %715
    %717 = vrot.lane.b32.xlu0 %v268, 56
    %v718 = vpop.permute.xlu0 %717
    %723 = vrot.lane.b32.xlu0 %v271, 64
    %v724 = vpop.permute.xlu0 %723
    %725 = vrot.lane.b32.xlu0 %v274, 64
    %v726 = vpop.permute.xlu0 %725
    %727 = vrot.lane.b32.xlu0 %v277, 64
    %v728 = vpop.permute.xlu0 %727
    %729 = vrot.lane.b32.xlu0 %v280, 64
    %v730 = vpop.permute.xlu0 %729
    %v735 = vsel %vm82, %v700, %v712
    %v736 = vsel %vm82, %v702, %v714
    %v737 = vsel %vm82, %v704, %v716
    %v738 = vsel %vm82, %v706, %v718
    %v739 = vsel %vm318, %v735, %v724
    %v740 = vsel %vm318, %v736, %v726
    %v741 = vsel %vm318, %v737, %v728
    %v742 = vsel %vm318, %v738, %v730
    %743 = vrot.lane.b32.xlu0 %v247, 40
    %v744 = vpop.permute.xlu0 %743
    %745 = vrot.lane.b32.xlu0 %v250, 40
    %v746 = vpop.permute.xlu0 %745
    %747 = vrot.lane.b32.xlu0 %v253, 40
    %v748 = vpop.permute.xlu0 %747
    %749 = vrot.lane.b32.xlu0 %v256, 40
    %v750 = vpop.permute.xlu0 %749
    %755 = vrot.lane.b32.xlu0 %v259, 48
    %v756 = vpop.permute.xlu0 %755
    %757 = vrot.lane.b32.xlu0 %v262, 48
    %v758 = vpop.permute.xlu0 %757
    %759 = vrot.lane.b32.xlu0 %v265, 48
    %v760 = vpop.permute.xlu0 %759
    %761 = vrot.lane.b32.xlu0 %v268, 48
    %v762 = vpop.permute.xlu0 %761
    %767 = vrot.lane.b32.xlu0 %v271, 56
    %v768 = vpop.permute.xlu0 %767
    %769 = vrot.lane.b32.xlu0 %v274, 56
    %v770 = vpop.permute.xlu0 %769
    %771 = vrot.lane.b32.xlu0 %v277, 56
    %v772 = vpop.permute.xlu0 %771
    %773 = vrot.lane.b32.xlu0 %v280, 56
    %v774 = vpop.permute.xlu0 %773
    %v779 = vsel %vm82, %v744, %v756
    %v780 = vsel %vm82, %v746, %v758
    %v781 = vsel %vm82, %v748, %v760
    %v782 = vsel %vm82, %v750, %v762
    %v783 = vsel %vm318, %v779, %v768
    %v784 = vsel %vm318, %v780, %v770
    %v785 = vsel %vm318, %v781, %v772
    %v786 = vsel %vm318, %v782, %v774
    %vm787 = vcmask 195584
    %v789 = vsel %vm787, %v319, 0
    %v792 = vsel %vm787, %v320, 0
    %v795 = vsel %vm787, %v475, 0
    %v798 = vsel %vm787, %v476, 0
    %800 = vmatpush.xpose.msra.mxu0 0.0
    %801 = vmatpush.xpose.msra.mxu0 0.0
    %802 = vmatpush.xpose.msra.mxu0 0.0
    %803 = vmatpush.xpose.msra.mxu0 0.0
    %804 = vmatpush.xpose.msra.mxu0 0.0
    %805 = vmatpush.xpose.msra.mxu0 0.0
    %806 = vmatpush.xpose.msra.mxu0 0.0
    %807 = vmatpush.xpose.msra.mxu0 0.0
    %808 = vmatpush.xpose.msra.mxu0 0.0
    %809 = vmatpush.xpose.msra.mxu0 0.0
    %810 = vmatpush.xpose.msra.mxu0 0.0
    %811 = vmatpush.xpose.msra.mxu0 0.0
    %812 = vmatpush.xpose.msra.mxu0 0.0
    %813 = vmatpush.xpose.msra.mxu0 0.0
    %814 = vmatpush.xpose.msra.mxu0 %v798
    %815 = vmatpush.xpose.msra.mxu0 %v795
    %816 = vmatmul.f32.gmra.mxu0 %v789
    %v817 = vpop.f32.mrf.mxu0
    %v818 = vadd.f32 0.0, %v817
    %819 = vmatmul.f32.gmra.mxu0 %v792
    %v820 = vpop.f32.mrf.mxu0
    %v821 = vadd.f32 0.0, %v820
    %822 = vdwg.mxu0
    %v824 = vsel %vm787, %v321, 0
    %v827 = vsel %vm787, %v322, 0
    %v830 = vsel %vm787, %v477, 0
    %v833 = vsel %vm787, %v478, 0
    %835 = vmatpush.xpose.msra.mxu0 0.0
    %836 = vmatpush.xpose.msra.mxu0 0.0
    %837 = vmatpush.xpose.msra.mxu0 0.0
    %838 = vmatpush.xpose.msra.mxu0 0.0
    %839 = vmatpush.xpose.msra.mxu0 0.0
    %840 = vmatpush.xpose.msra.mxu0 0.0
    %841 = vmatpush.xpose.msra.mxu0 0.0
    %842 = vmatpush.xpose.msra.mxu0 0.0
    %843 = vmatpush.xpose.msra.mxu0 0.0
    %844 = vmatpush.xpose.msra.mxu0 0.0
    %845 = vmatpush.xpose.msra.mxu0 0.0
    %846 = vmatpush.xpose.msra.mxu0 0.0
    %847 = vmatpush.xpose.msra.mxu0 0.0
    %848 = vmatpush.xpose.msra.mxu0 0.0
    %849 = vmatpush.xpose.msra.mxu0 %v833
    %850 = vmatpush.xpose.msra.mxu0 %v830
    %851 = vmatmul.f32.gmra.mxu0 %v824
    %v852 = vpop.f32.mrf.mxu0
    %v853 = vadd.f32 0.0, %v852
    %854 = vmatmul.f32.gmra.mxu0 %v827
    %v855 = vpop.f32.mrf.mxu0
    %v856 = vadd.f32 0.0, %v855
    %857 = vdwg.mxu0
    %v859 = vsel %vm787, %v355, 0
    %v862 = vsel %vm787, %v356, 0
    %v865 = vsel %vm787, %v519, 0
    %v868 = vsel %vm787, %v520, 0
    %870 = vmatpush.xpose.msra.mxu0 0.0
    %871 = vmatpush.xpose.msra.mxu0 0.0
    %872 = vmatpush.xpose.msra.mxu0 0.0
    %873 = vmatpush.xpose.msra.mxu0 0.0
    %874 = vmatpush.xpose.msra.mxu0 0.0
    %875 = vmatpush.xpose.msra.mxu0 0.0
    %876 = vmatpush.xpose.msra.mxu0 0.0
    %877 = vmatpush.xpose.msra.mxu0 0.0
    %878 = vmatpush.xpose.msra.mxu0 0.0
    %879 = vmatpush.xpose.msra.mxu0 0.0
    %880 = vmatpush.xpose.msra.mxu0 0.0
    %881 = vmatpush.xpose.msra.mxu0 0.0
    %882 = vmatpush.xpose.msra.mxu0 0.0
    %883 = vmatpush.xpose.msra.mxu0 0.0
    %884 = vmatpush.xpose.msra.mxu0 %v868
    %885 = vmatpush.xpose.msra.mxu0 %v865
    %886 = vmatmul.f32.gmra.mxu0 %v859
    %v887 = vpop.f32.mrf.mxu0
    %v888 = vadd.f32 0.0, %v887
    %889 = vmatmul.f32.gmra.mxu0 %v862
    %v890 = vpop.f32.mrf.mxu0
    %v891 = vadd.f32 0.0, %v890
    %892 = vdwg.mxu0
    %v894 = vsel %vm787, %v357, 0
    %v897 = vsel %vm787, %v358, 0
    %v900 = vsel %vm787, %v521, 0
    %v903 = vsel %vm787, %v522, 0
    %905 = vmatpush.xpose.msra.mxu0 0.0
    %906 = vmatpush.xpose.msra.mxu0 0.0
    %907 = vmatpush.xpose.msra.mxu0 0.0
    %908 = vmatpush.xpose.msra.mxu0 0.0
    %909 = vmatpush.xpose.msra.mxu0 0.0
    %910 = vmatpush.xpose.msra.mxu0 0.0
    %911 = vmatpush.xpose.msra.mxu0 0.0
    %912 = vmatpush.xpose.msra.mxu0 0.0
    %913 = vmatpush.xpose.msra.mxu0 0.0
    %914 = vmatpush.xpose.msra.mxu0 0.0
    %915 = vmatpush.xpose.msra.mxu0 0.0
    %916 = vmatpush.xpose.msra.mxu0 0.0
    %917 = vmatpush.xpose.msra.mxu0 0.0
    %918 = vmatpush.xpose.msra.mxu0 0.0
    %919 = vmatpush.xpose.msra.mxu0 %v903
    %920 = vmatpush.xpose.msra.mxu0 %v900
    %921 = vmatmul.f32.gmra.mxu0 %v894
    %v922 = vpop.f32.mrf.mxu0
    %v923 = vadd.f32 0.0, %v922
    %924 = vmatmul.f32.gmra.mxu0 %v897
    %v925 = vpop.f32.mrf.mxu0
    %v926 = vadd.f32 0.0, %v925
    %927 = vdwg.mxu0
    %v929 = vsel %vm787, %v387, 0
    %v932 = vsel %vm787, %v388, 0
    %v935 = vsel %vm787, %v563, 0
    %v938 = vsel %vm787, %v564, 0
    %940 = vmatpush.xpose.msra.mxu0 0.0
    %941 = vmatpush.xpose.msra.mxu0 0.0
    %942 = vmatpush.xpose.msra.mxu0 0.0
    %943 = vmatpush.xpose.msra.mxu0 0.0
    %944 = vmatpush.xpose.msra.mxu0 0.0
    %945 = vmatpush.xpose.msra.mxu0 0.0
    %946 = vmatpush.xpose.msra.mxu0 0.0
    %947 = vmatpush.xpose.msra.mxu0 0.0
    %948 = vmatpush.xpose.msra.mxu0 0.0
    %949 = vmatpush.xpose.msra.mxu0 0.0
    %950 = vmatpush.xpose.msra.mxu0 0.0
    %951 = vmatpush.xpose.msra.mxu0 0.0
    %952 = vmatpush.xpose.msra.mxu0 0.0
    %953 = vmatpush.xpose.msra.mxu0 0.0
    %954 = vmatpush.xpose.msra.mxu0 %v938
    %955 = vmatpush.xpose.msra.mxu0 %v935
    %956 = vmatmul.f32.gmra.mxu0 %v929
    %v957 = vpop.f32.mrf.mxu0
    %v958 = vadd.f32 0.0, %v957
    %959 = vmatmul.f32.gmra.mxu0 %v932
    %v960 = vpop.f32.mrf.mxu0
    %v961 = vadd.f32 0.0, %v960
    %962 = vdwg.mxu0
    %v964 = vsel %vm787, %v389, 0
    %v967 = vsel %vm787, %v390, 0
    %v970 = vsel %vm787, %v565, 0
    %v973 = vsel %vm787, %v566, 0
    %975 = vmatpush.xpose.msra.mxu0 0.0
    %976 = vmatpush.xpose.msra.mxu0 0.0
    %977 = vmatpush.xpose.msra.mxu0 0.0
    %978 = vmatpush.xpose.msra.mxu0 0.0
    %979 = vmatpush.xpose.msra.mxu0 0.0
    %980 = vmatpush.xpose.msra.mxu0 0.0
    %981 = vmatpush.xpose.msra.mxu0 0.0
    %982 = vmatpush.xpose.msra.mxu0 0.0
    %983 = vmatpush.xpose.msra.mxu0 0.0
    %984 = vmatpush.xpose.msra.mxu0 0.0
    %985 = vmatpush.xpose.msra.mxu0 0.0
    %986 = vmatpush.xpose.msra.mxu0 0.0
    %987 = vmatpush.xpose.msra.mxu0 0.0
    %988 = vmatpush.xpose.msra.mxu0 0.0
    %989 = vmatpush.xpose.msra.mxu0 %v973
    %990 = vmatpush.xpose.msra.mxu0 %v970
    %991 = vmatmul.f32.gmra.mxu0 %v964
    %v992 = vpop.f32.mrf.mxu0
    %v993 = vadd.f32 0.0, %v992
    %994 = vmatmul.f32.gmra.mxu0 %v967
    %v995 = vpop.f32.mrf.mxu0
    %v996 = vadd.f32 0.0, %v995
    %997 = vdwg.mxu0
    %v999 = vsel %vm787, %v431, 0
    %v1002 = vsel %vm787, %v432, 0
    %v1005 = vsel %vm787, %v607, 0
    %v1008 = vsel %vm787, %v608, 0
    %1010 = vmatpush.xpose.msra.mxu0 0.0
    %1011 = vmatpush.xpose.msra.mxu0 0.0
    %1012 = vmatpush.xpose.msra.mxu0 0.0
    %1013 = vmatpush.xpose.msra.mxu0 0.0
    %1014 = vmatpush.xpose.msra.mxu0 0.0
    %1015 = vmatpush.xpose.msra.mxu0 0.0
    %1016 = vmatpush.xpose.msra.mxu0 0.0
    %1017 = vmatpush.xpose.msra.mxu0 0.0
    %1018 = vmatpush.xpose.msra.mxu0 0.0
    %1019 = vmatpush.xpose.msra.mxu0 0.0
    %1020 = vmatpush.xpose.msra.mxu0 0.0
    %1021 = vmatpush.xpose.msra.mxu0 0.0
    %1022 = vmatpush.xpose.msra.mxu0 0.0
    %1023 = vmatpush.xpose.msra.mxu0 0.0
    %1024 = vmatpush.xpose.msra.mxu0 %v1008
    %1025 = vmatpush.xpose.msra.mxu0 %v1005
    %1026 = vmatmul.f32.gmra.mxu0 %v999
    %v1027 = vpop.f32.mrf.mxu0
    %v1028 = vadd.f32 0.0, %v1027
    %1029 = vmatmul.f32.gmra.mxu0 %v1002
    %v1030 = vpop.f32.mrf.mxu0
    %v1031 = vadd.f32 0.0, %v1030
    %1032 = vdwg.mxu0
    %v1034 = vsel %vm787, %v433, 0
    %v1037 = vsel %vm787, %v434, 0
    %v1040 = vsel %vm787, %v609, 0
    %v1043 = vsel %vm787, %v610, 0
    %1045 = vmatpush.xpose.msra.mxu0 0.0
    %1046 = vmatpush.xpose.msra.mxu0 0.0
    %1047 = vmatpush.xpose.msra.mxu0 0.0
    %1048 = vmatpush.xpose.msra.mxu0 0.0
    %1049 = vmatpush.xpose.msra.mxu0 0.0
    %1050 = vmatpush.xpose.msra.mxu0 0.0
    %1051 = vmatpush.xpose.msra.mxu0 0.0
    %1052 = vmatpush.xpose.msra.mxu0 0.0
    %1053 = vmatpush.xpose.msra.mxu0 0.0
    %1054 = vmatpush.xpose.msra.mxu0 0.0
    %1055 = vmatpush.xpose.msra.mxu0 0.0
    %1056 = vmatpush.xpose.msra.mxu0 0.0
    %1057 = vmatpush.xpose.msra.mxu0 0.0
    %1058 = vmatpush.xpose.msra.mxu0 0.0
    %1059 = vmatpush.xpose.msra.mxu0 %v1043
    %1060 = vmatpush.xpose.msra.mxu0 %v1040
    %1061 = vmatmul.f32.gmra.mxu0 %v1034
    %v1062 = vpop.f32.mrf.mxu0
    %v1063 = vadd.f32 0.0, %v1062
    %1064 = vmatmul.f32.gmra.mxu0 %v1037
    %v1065 = vpop.f32.mrf.mxu0
    %v1066 = vadd.f32 0.0, %v1065
    %1067 = vdwg.mxu0
    %v1068 = vmul.f32 %v818, 0.20412415
    %v1069 = vmul.f32 %v821, 0.20412415
    %v1070 = vmul.f32 %v853, 0.20412415
    %v1071 = vmul.f32 %v856, 0.20412415
    %v1072 = vmul.f32 %v888, 0.20412415
    %v1073 = vmul.f32 %v891, 0.20412415
    %v1074 = vmul.f32 %v923, 0.20412415
    %v1075 = vmul.f32 %v926, 0.20412415
    %v1076 = vmul.f32 %v958, 0.20412415
    %v1077 = vmul.f32 %v961, 0.20412415
    %v1078 = vmul.f32 %v993, 0.20412415
    %v1079 = vmul.f32 %v996, 0.20412415
    %v1080 = vmul.f32 %v1028, 0.20412415
    %v1081 = vmul.f32 %v1031, 0.20412415
    %v1082 = vmul.f32 %v1063, 0.20412415
    %v1083 = vmul.f32 %v1066, 0.20412415
    %v1084 = vsel %vm318, %v1068, -inf
    %1085 = vmax.xlane.f32.xlu0 %v1084
    %v1086 = vpop.xlane.xlu0 %1085
    %v1087 = vsel %vm318, %v1069, -inf
    %1088 = vmax.xlane.f32.xlu0 %v1087
    %v1089 = vpop.xlane.xlu0 %1088
    %v1090 = vsel %vm318, %v1070, -inf
    %1091 = vmax.xlane.f32.xlu0 %v1090
    %v1092 = vpop.xlane.xlu0 %1091
    %v1093 = vsel %vm318, %v1071, -inf
    %1094 = vmax.xlane.f32.xlu0 %v1093
    %v1095 = vpop.xlane.xlu0 %1094
    %v1096 = vsel %vm318, %v1072, -inf
    %1097 = vmax.xlane.f32.xlu0 %v1096
    %v1098 = vpop.xlane.xlu0 %1097
    %v1099 = vsel %vm318, %v1073, -inf
    %1100 = vmax.xlane.f32.xlu0 %v1099
    %v1101 = vpop.xlane.xlu0 %1100
    %v1102 = vsel %vm318, %v1074, -inf
    %1103 = vmax.xlane.f32.xlu0 %v1102
    %v1104 = vpop.xlane.xlu0 %1103
    %v1105 = vsel %vm318, %v1075, -inf
    %1106 = vmax.xlane.f32.xlu0 %v1105
    %v1107 = vpop.xlane.xlu0 %1106
    %v1108 = vsel %vm318, %v1076, -inf
    %1109 = vmax.xlane.f32.xlu0 %v1108
    %v1110 = vpop.xlane.xlu0 %1109
    %v1111 = vsel %vm318, %v1077, -inf
    %1112 = vmax.xlane.f32.xlu0 %v1111
    %v1113 = vpop.xlane.xlu0 %1112
    %v1114 = vsel %vm318, %v1078, -inf
    %1115 = vmax.xlane.f32.xlu0 %v1114
    %v1116 = vpop.xlane.xlu0 %1115
    %v1117 = vsel %vm318, %v1079, -inf
    %1118 = vmax.xlane.f32.xlu0 %v1117
    %v1119 = vpop.xlane.xlu0 %1118
    %v1120 = vsel %vm318, %v1080, -inf
    %1121 = vmax.xlane.f32.xlu0 %v1120
    %v1122 = vpop.xlane.xlu0 %1121
    %v1123 = vsel %vm318, %v1081, -inf
    %1124 = vmax.xlane.f32.xlu0 %v1123
    %v1125 = vpop.xlane.xlu0 %1124
    %v1126 = vsel %vm318, %v1082, -inf
    %1127 = vmax.xlane.f32.xlu0 %v1126
    %v1128 = vpop.xlane.xlu0 %1127
    %v1129 = vsel %vm318, %v1083, -inf
    %1130 = vmax.xlane.f32.xlu0 %v1129
    %v1131 = vpop.xlane.xlu0 %1130
    %v1132 = vsub.f32 %v1068, %v1086
    %v1133 = vsub.f32 %v1069, %v1089
    %v1134 = vsub.f32 %v1070, %v1092
    %v1135 = vsub.f32 %v1071, %v1095
    %v1136 = vsub.f32 %v1072, %v1098
    %v1137 = vsub.f32 %v1073, %v1101
    %v1138 = vsub.f32 %v1074, %v1104
    %v1139 = vsub.f32 %v1075, %v1107
    %v1140 = vsub.f32 %v1076, %v1110
    %v1141 = vsub.f32 %v1077, %v1113
    %v1142 = vsub.f32 %v1078, %v1116
    %v1143 = vsub.f32 %v1079, %v1119
    %v1144 = vsub.f32 %v1080, %v1122
    %v1145 = vsub.f32 %v1081, %v1125
    %v1146 = vsub.f32 %v1082, %v1128
    %v1147 = vsub.f32 %v1083, %v1131
    %v1148 = vmul.f32 %v1132, 1.442695
    %v1149 = vpow.pop %v1148
    %v1150 = vmul.f32 %v1133, 1.442695
    %v1151 = vpow.pop %v1150
    %v1152 = vmul.f32 %v1134, 1.442695
    %v1153 = vpow.pop %v1152
    %v1154 = vmul.f32 %v1135, 1.442695
    %v1155 = vpow.pop %v1154
    %v1156 = vmul.f32 %v1136, 1.442695
    %v1157 = vpow.pop %v1156
    %v1158 = vmul.f32 %v1137, 1.442695
    %v1159 = vpow.pop %v1158
    %v1160 = vmul.f32 %v1138, 1.442695
    %v1161 = vpow.pop %v1160
    %v1162 = vmul.f32 %v1139, 1.442695
    %v1163 = vpow.pop %v1162
    %v1164 = vmul.f32 %v1140, 1.442695
    %v1165 = vpow.pop %v1164
    %v1166 = vmul.f32 %v1141, 1.442695
    %v1167 = vpow.pop %v1166
    %v1168 = vmul.f32 %v1142, 1.442695
    %v1169 = vpow.pop %v1168
    %v1170 = vmul.f32 %v1143, 1.442695
    %v1171 = vpow.pop %v1170
    %v1172 = vmul.f32 %v1144, 1.442695
    %v1173 = vpow.pop %v1172
    %v1174 = vmul.f32 %v1145, 1.442695
    %v1175 = vpow.pop %v1174
    %v1176 = vmul.f32 %v1146, 1.442695
    %v1177 = vpow.pop %v1176
    %v1178 = vmul.f32 %v1147, 1.442695
    %v1179 = vpow.pop %v1178
    %v1180 = vsel %vm318, %v1149, 0.0
    %1181 = vadd.xlane.f32.xlu0 %v1180
    %v1182 = vpop.xlane.xlu0 %1181
    %v1183 = vsel %vm318, %v1151, 0.0
    %1184 = vadd.xlane.f32.xlu0 %v1183
    %v1185 = vpop.xlane.xlu0 %1184
    %v1186 = vsel %vm318, %v1153, 0.0
    %1187 = vadd.xlane.f32.xlu0 %v1186
    %v1188 = vpop.xlane.xlu0 %1187
    %v1189 = vsel %vm318, %v1155, 0.0
    %1190 = vadd.xlane.f32.xlu0 %v1189
    %v1191 = vpop.xlane.xlu0 %1190
    %v1192 = vsel %vm318, %v1157, 0.0
    %1193 = vadd.xlane.f32.xlu0 %v1192
    %v1194 = vpop.xlane.xlu0 %1193
    %v1195 = vsel %vm318, %v1159, 0.0
    %1196 = vadd.xlane.f32.xlu0 %v1195
    %v1197 = vpop.xlane.xlu0 %1196
    %v1198 = vsel %vm318, %v1161, 0.0
    %1199 = vadd.xlane.f32.xlu0 %v1198
    %v1200 = vpop.xlane.xlu0 %1199
    %v1201 = vsel %vm318, %v1163, 0.0
    %1202 = vadd.xlane.f32.xlu0 %v1201
    %v1203 = vpop.xlane.xlu0 %1202
    %v1204 = vsel %vm318, %v1165, 0.0
    %1205 = vadd.xlane.f32.xlu0 %v1204
    %v1206 = vpop.xlane.xlu0 %1205
    %v1207 = vsel %vm318, %v1167, 0.0
    %1208 = vadd.xlane.f32.xlu0 %v1207
    %v1209 = vpop.xlane.xlu0 %1208
    %v1210 = vsel %vm318, %v1169, 0.0
    %1211 = vadd.xlane.f32.xlu0 %v1210
    %v1212 = vpop.xlane.xlu0 %1211
    %v1213 = vsel %vm318, %v1171, 0.0
    %1214 = vadd.xlane.f32.xlu0 %v1213
    %v1215 = vpop.xlane.xlu0 %1214
    %v1216 = vsel %vm318, %v1173, 0.0
    %1217 = vadd.xlane.f32.xlu0 %v1216
    %v1218 = vpop.xlane.xlu0 %1217
    %v1219 = vsel %vm318, %v1175, 0.0
    %1220 = vadd.xlane.f32.xlu0 %v1219
    %v1221 = vpop.xlane.xlu0 %1220
    %v1222 = vsel %vm318, %v1177, 0.0
    %1223 = vadd.xlane.f32.xlu0 %v1222
    %v1224 = vpop.xlane.xlu0 %1223
    %v1225 = vsel %vm318, %v1179, 0.0
    %1226 = vadd.xlane.f32.xlu0 %v1225
    %v1227 = vpop.xlane.xlu0 %1226
    %v1228 = vrcp.pop %v1182
    %v1229 = vmul.f32 %v1182, %v1228
    %v1230 = vsub.f32 1.0, %v1229
    %v1231 = vmul.f32 %v1228, %v1230
    %v1232 = vadd.f32 %v1228, %v1231
    %vm1233 = vweird.f32 %v1182
    %vm1234 = vweird.f32 %v1228
    %vm1235 = vmor %vm1233, %vm1234
    %v1236 = vsel %vm1235, %v1228, %v1232
    %v1237 = vand.u32 2147483647, %v1182
    %vm1238 = vcmp.eq.f32.partialorder %v1237, 8.507059e+37
    %v1239 = vand.u32 %v1182, 2147483648
    %v1240 = vor.u32 1.1754944e-38, %v1239
    %v1241 = vsel %vm1238, %v1240, %v1236
    %v1242 = vmul.f32 %v1149, %v1241
    %v1243 = vrcp.pop %v1185
    %v1244 = vmul.f32 %v1185, %v1243
    %v1245 = vsub.f32 1.0, %v1244
    %v1246 = vmul.f32 %v1243, %v1245
    %v1247 = vadd.f32 %v1243, %v1246
    %vm1248 = vweird.f32 %v1185
    %vm1249 = vweird.f32 %v1243
    %vm1250 = vmor %vm1248, %vm1249
    %v1251 = vsel %vm1250, %v1243, %v1247
    %v1252 = vand.u32 2147483647, %v1185
    %vm1253 = vcmp.eq.f32.partialorder %v1252, 8.507059e+37
    %v1254 = vand.u32 %v1185, 2147483648
    %v1255 = vor.u32 1.1754944e-38, %v1254
    %v1256 = vsel %vm1253, %v1255, %v1251
    %v1257 = vmul.f32 %v1151, %v1256
    %v1258 = vrcp.pop %v1188
    %v1259 = vmul.f32 %v1188, %v1258
    %v1260 = vsub.f32 1.0, %v1259
    %v1261 = vmul.f32 %v1258, %v1260
    %v1262 = vadd.f32 %v1258, %v1261
    %vm1263 = vweird.f32 %v1188
    %vm1264 = vweird.f32 %v1258
    %vm1265 = vmor %vm1263, %vm1264
    %v1266 = vsel %vm1265, %v1258, %v1262
    %v1267 = vand.u32 2147483647, %v1188
    %vm1268 = vcmp.eq.f32.partialorder %v1267, 8.507059e+37
    %v1269 = vand.u32 %v1188, 2147483648
    %v1270 = vor.u32 1.1754944e-38, %v1269
    %v1271 = vsel %vm1268, %v1270, %v1266
    %v1272 = vmul.f32 %v1153, %v1271
    %v1273 = vrcp.pop %v1191
    %v1274 = vmul.f32 %v1191, %v1273
    %v1275 = vsub.f32 1.0, %v1274
    %v1276 = vmul.f32 %v1273, %v1275
    %v1277 = vadd.f32 %v1273, %v1276
    %vm1278 = vweird.f32 %v1191
    %vm1279 = vweird.f32 %v1273
    %vm1280 = vmor %vm1278, %vm1279
    %v1281 = vsel %vm1280, %v1273, %v1277
    %v1282 = vand.u32 2147483647, %v1191
    %vm1283 = vcmp.eq.f32.partialorder %v1282, 8.507059e+37
    %v1284 = vand.u32 %v1191, 2147483648
    %v1285 = vor.u32 1.1754944e-38, %v1284
    %v1286 = vsel %vm1283, %v1285, %v1281
    %v1287 = vmul.f32 %v1155, %v1286
    %v1288 = vrcp.pop %v1194
    %v1289 = vmul.f32 %v1194, %v1288
    %v1290 = vsub.f32 1.0, %v1289
    %v1291 = vmul.f32 %v1288, %v1290
    %v1292 = vadd.f32 %v1288, %v1291
    %vm1293 = vweird.f32 %v1194
    %vm1294 = vweird.f32 %v1288
    %vm1295 = vmor %vm1293, %vm1294
    %v1296 = vsel %vm1295, %v1288, %v1292
    %v1297 = vand.u32 2147483647, %v1194
    %vm1298 = vcmp.eq.f32.partialorder %v1297, 8.507059e+37
    %v1299 = vand.u32 %v1194, 2147483648
    %v1300 = vor.u32 1.1754944e-38, %v1299
    %v1301 = vsel %vm1298, %v1300, %v1296
    %v1302 = vmul.f32 %v1157, %v1301
    %v1303 = vrcp.pop %v1197
    %v1304 = vmul.f32 %v1197, %v1303
    %v1305 = vsub.f32 1.0, %v1304
    %v1306 = vmul.f32 %v1303, %v1305
    %v1307 = vadd.f32 %v1303, %v1306
    %vm1308 = vweird.f32 %v1197
    %vm1309 = vweird.f32 %v1303
    %vm1310 = vmor %vm1308, %vm1309
    %v1311 = vsel %vm1310, %v1303, %v1307
    %v1312 = vand.u32 2147483647, %v1197
    %vm1313 = vcmp.eq.f32.partialorder %v1312, 8.507059e+37
    %v1314 = vand.u32 %v1197, 2147483648
    %v1315 = vor.u32 1.1754944e-38, %v1314
    %v1316 = vsel %vm1313, %v1315, %v1311
    %v1317 = vmul.f32 %v1159, %v1316
    %v1318 = vrcp.pop %v1200
    %v1319 = vmul.f32 %v1200, %v1318
    %v1320 = vsub.f32 1.0, %v1319
    %v1321 = vmul.f32 %v1318, %v1320
    %v1322 = vadd.f32 %v1318, %v1321
    %vm1323 = vweird.f32 %v1200
    %vm1324 = vweird.f32 %v1318
    %vm1325 = vmor %vm1323, %vm1324
    %v1326 = vsel %vm1325, %v1318, %v1322
    %v1327 = vand.u32 2147483647, %v1200
    %vm1328 = vcmp.eq.f32.partialorder %v1327, 8.507059e+37
    %v1329 = vand.u32 %v1200, 2147483648
    %v1330 = vor.u32 1.1754944e-38, %v1329
    %v1331 = vsel %vm1328, %v1330, %v1326
    %v1332 = vmul.f32 %v1161, %v1331
    %v1333 = vrcp.pop %v1203
    %v1334 = vmul.f32 %v1203, %v1333
    %v1335 = vsub.f32 1.0, %v1334
    %v1336 = vmul.f32 %v1333, %v1335
    %v1337 = vadd.f32 %v1333, %v1336
    %vm1338 = vweird.f32 %v1203
    %vm1339 = vweird.f32 %v1333
    %vm1340 = vmor %vm1338, %vm1339
    %v1341 = vsel %vm1340, %v1333, %v1337
    %v1342 = vand.u32 2147483647, %v1203
    %vm1343 = vcmp.eq.f32.partialorder %v1342, 8.507059e+37
    %v1344 = vand.u32 %v1203, 2147483648
    %v1345 = vor.u32 1.1754944e-38, %v1344
    %v1346 = vsel %vm1343, %v1345, %v1341
    %v1347 = vmul.f32 %v1163, %v1346
    %v1348 = vrcp.pop %v1206
    %v1349 = vmul.f32 %v1206, %v1348
    %v1350 = vsub.f32 1.0, %v1349
    %v1351 = vmul.f32 %v1348, %v1350
    %v1352 = vadd.f32 %v1348, %v1351
    %vm1353 = vweird.f32 %v1206
    %vm1354 = vweird.f32 %v1348
    %vm1355 = vmor %vm1353, %vm1354
    %v1356 = vsel %vm1355, %v1348, %v1352
    %v1357 = vand.u32 2147483647, %v1206
    %vm1358 = vcmp.eq.f32.partialorder %v1357, 8.507059e+37
    %v1359 = vand.u32 %v1206, 2147483648
    %v1360 = vor.u32 1.1754944e-38, %v1359
    %v1361 = vsel %vm1358, %v1360, %v1356
    %v1362 = vmul.f32 %v1165, %v1361
    %v1363 = vrcp.pop %v1209
    %v1364 = vmul.f32 %v1209, %v1363
    %v1365 = vsub.f32 1.0, %v1364
    %v1366 = vmul.f32 %v1363, %v1365
    %v1367 = vadd.f32 %v1363, %v1366
    %vm1368 = vweird.f32 %v1209
    %vm1369 = vweird.f32 %v1363
    %vm1370 = vmor %vm1368, %vm1369
    %v1371 = vsel %vm1370, %v1363, %v1367
    %v1372 = vand.u32 2147483647, %v1209
    %vm1373 = vcmp.eq.f32.partialorder %v1372, 8.507059e+37
    %v1374 = vand.u32 %v1209, 2147483648
    %v1375 = vor.u32 1.1754944e-38, %v1374
    %v1376 = vsel %vm1373, %v1375, %v1371
    %v1377 = vmul.f32 %v1167, %v1376
    %v1378 = vrcp.pop %v1212
    %v1379 = vmul.f32 %v1212, %v1378
    %v1380 = vsub.f32 1.0, %v1379
    %v1381 = vmul.f32 %v1378, %v1380
    %v1382 = vadd.f32 %v1378, %v1381
    %vm1383 = vweird.f32 %v1212
    %vm1384 = vweird.f32 %v1378
    %vm1385 = vmor %vm1383, %vm1384
    %v1386 = vsel %vm1385, %v1378, %v1382
    %v1387 = vand.u32 2147483647, %v1212
    %vm1388 = vcmp.eq.f32.partialorder %v1387, 8.507059e+37
    %v1389 = vand.u32 %v1212, 2147483648
    %v1390 = vor.u32 1.1754944e-38, %v1389
    %v1391 = vsel %vm1388, %v1390, %v1386
    %v1392 = vmul.f32 %v1169, %v1391
    %v1393 = vrcp.pop %v1215
    %v1394 = vmul.f32 %v1215, %v1393
    %v1395 = vsub.f32 1.0, %v1394
    %v1396 = vmul.f32 %v1393, %v1395
    %v1397 = vadd.f32 %v1393, %v1396
    %vm1398 = vweird.f32 %v1215
    %vm1399 = vweird.f32 %v1393
    %vm1400 = vmor %vm1398, %vm1399
    %v1401 = vsel %vm1400, %v1393, %v1397
    %v1402 = vand.u32 2147483647, %v1215
    %vm1403 = vcmp.eq.f32.partialorder %v1402, 8.507059e+37
    %v1404 = vand.u32 %v1215, 2147483648
    %v1405 = vor.u32 1.1754944e-38, %v1404
    %v1406 = vsel %vm1403, %v1405, %v1401
    %v1407 = vmul.f32 %v1171, %v1406
    %v1408 = vrcp.pop %v1218
    %v1409 = vmul.f32 %v1218, %v1408
    %v1410 = vsub.f32 1.0, %v1409
    %v1411 = vmul.f32 %v1408, %v1410
    %v1412 = vadd.f32 %v1408, %v1411
    %vm1413 = vweird.f32 %v1218
    %vm1414 = vweird.f32 %v1408
    %vm1415 = vmor %vm1413, %vm1414
    %v1416 = vsel %vm1415, %v1408, %v1412
    %v1417 = vand.u32 2147483647, %v1218
    %vm1418 = vcmp.eq.f32.partialorder %v1417, 8.507059e+37
    %v1419 = vand.u32 %v1218, 2147483648
    %v1420 = vor.u32 1.1754944e-38, %v1419
    %v1421 = vsel %vm1418, %v1420, %v1416
    %v1422 = vmul.f32 %v1173, %v1421
    %v1423 = vrcp.pop %v1221
    %v1424 = vmul.f32 %v1221, %v1423
    %v1425 = vsub.f32 1.0, %v1424
    %v1426 = vmul.f32 %v1423, %v1425
    %v1427 = vadd.f32 %v1423, %v1426
    %vm1428 = vweird.f32 %v1221
    %vm1429 = vweird.f32 %v1423
    %vm1430 = vmor %vm1428, %vm1429
    %v1431 = vsel %vm1430, %v1423, %v1427
    %v1432 = vand.u32 2147483647, %v1221
    %vm1433 = vcmp.eq.f32.partialorder %v1432, 8.507059e+37
    %v1434 = vand.u32 %v1221, 2147483648
    %v1435 = vor.u32 1.1754944e-38, %v1434
    %v1436 = vsel %vm1433, %v1435, %v1431
    %v1437 = vmul.f32 %v1175, %v1436
    %v1438 = vrcp.pop %v1224
    %v1439 = vmul.f32 %v1224, %v1438
    %v1440 = vsub.f32 1.0, %v1439
    %v1441 = vmul.f32 %v1438, %v1440
    %v1442 = vadd.f32 %v1438, %v1441
    %vm1443 = vweird.f32 %v1224
    %vm1444 = vweird.f32 %v1438
    %vm1445 = vmor %vm1443, %vm1444
    %v1446 = vsel %vm1445, %v1438, %v1442
    %v1447 = vand.u32 2147483647, %v1224
    %vm1448 = vcmp.eq.f32.partialorder %v1447, 8.507059e+37
    %v1449 = vand.u32 %v1224, 2147483648
    %v1450 = vor.u32 1.1754944e-38, %v1449
    %v1451 = vsel %vm1448, %v1450, %v1446
    %v1452 = vmul.f32 %v1177, %v1451
    %v1453 = vrcp.pop %v1227
    %v1454 = vmul.f32 %v1227, %v1453
    %v1455 = vsub.f32 1.0, %v1454
    %v1456 = vmul.f32 %v1453, %v1455
    %v1457 = vadd.f32 %v1453, %v1456
    %vm1458 = vweird.f32 %v1227
    %vm1459 = vweird.f32 %v1453
    %vm1460 = vmor %vm1458, %vm1459
    %v1461 = vsel %vm1460, %v1453, %v1457
    %v1462 = vand.u32 2147483647, %v1227
    %vm1463 = vcmp.eq.f32.partialorder %v1462, 8.507059e+37
    %v1464 = vand.u32 %v1227, 2147483648
    %v1465 = vor.u32 1.1754944e-38, %v1464
    %v1466 = vsel %vm1463, %v1465, %v1461
    %v1467 = vmul.f32 %v1179, %v1466
    %v1469 = vsel %vm318, %v1242, 0
    %v1472 = vsel %vm318, %v1257, 0
    %1474 = vmatpush.msra.mxu0 0.0
    %1475 = vmatpush.msra.mxu0 0.0
    %1476 = vmatpush.msra.mxu0 0.0
    %1477 = vmatpush.msra.mxu0 0.0
    %1478 = vmatpush.msra.mxu0 0.0
    %1479 = vmatpush.msra.mxu0 0.0
    %1480 = vmatpush.msra.mxu0 0.0
    %1481 = vmatpush.msra.mxu0 0.0
    %1482 = vmatpush.msra.mxu0 0.0
    %1483 = vmatpush.msra.mxu0 0.0
    %1484 = vmatpush.msra.mxu0 0.0
    %1485 = vmatpush.msra.mxu0 0.0
    %1486 = vmatpush.msra.mxu0 0.0
    %1487 = vmatpush.msra.mxu0 0.0
    %1488 = vmatpush.msra.mxu0 %v652
    %1489 = vmatpush.msra.mxu0 %v651
    %1490 = vmatmul.f32.gmra.mxu0 %v1469
    %v1491 = vpop.f32.mrf.mxu0
    %v1492 = vadd.f32 0.0, %v1491
    %1493 = vmatmul.f32.gmra.mxu0 %v1472
    %v1494 = vpop.f32.mrf.mxu0
    %v1495 = vadd.f32 0.0, %v1494
    %1496 = vdwg.mxu0
    %v1498 = vsel %vm318, %v1272, 0
    %v1501 = vsel %vm318, %v1287, 0
    %1503 = vmatpush.msra.mxu0 0.0
    %1504 = vmatpush.msra.mxu0 0.0
    %1505 = vmatpush.msra.mxu0 0.0
    %1506 = vmatpush.msra.mxu0 0.0
    %1507 = vmatpush.msra.mxu0 0.0
    %1508 = vmatpush.msra.mxu0 0.0
    %1509 = vmatpush.msra.mxu0 0.0
    %1510 = vmatpush.msra.mxu0 0.0
    %1511 = vmatpush.msra.mxu0 0.0
    %1512 = vmatpush.msra.mxu0 0.0
    %1513 = vmatpush.msra.mxu0 0.0
    %1514 = vmatpush.msra.mxu0 0.0
    %1515 = vmatpush.msra.mxu0 0.0
    %1516 = vmatpush.msra.mxu0 0.0
    %1517 = vmatpush.msra.mxu0 %v654
    %1518 = vmatpush.msra.mxu0 %v653
    %1519 = vmatmul.f32.gmra.mxu0 %v1498
    %v1520 = vpop.f32.mrf.mxu0
    %v1521 = vadd.f32 0.0, %v1520
    %1522 = vmatmul.f32.gmra.mxu0 %v1501
    %v1523 = vpop.f32.mrf.mxu0
    %v1524 = vadd.f32 0.0, %v1523
    %1525 = vdwg.mxu0
    %v1527 = vsel %vm318, %v1302, 0
    %v1530 = vsel %vm318, %v1317, 0
    %1532 = vmatpush.msra.mxu0 0.0
    %1533 = vmatpush.msra.mxu0 0.0
    %1534 = vmatpush.msra.mxu0 0.0
    %1535 = vmatpush.msra.mxu0 0.0
    %1536 = vmatpush.msra.mxu0 0.0
    %1537 = vmatpush.msra.mxu0 0.0
    %1538 = vmatpush.msra.mxu0 0.0
    %1539 = vmatpush.msra.mxu0 0.0
    %1540 = vmatpush.msra.mxu0 0.0
    %1541 = vmatpush.msra.mxu0 0.0
    %1542 = vmatpush.msra.mxu0 0.0
    %1543 = vmatpush.msra.mxu0 0.0
    %1544 = vmatpush.msra.mxu0 0.0
    %1545 = vmatpush.msra.mxu0 0.0
    %1546 = vmatpush.msra.mxu0 %v696
    %1547 = vmatpush.msra.mxu0 %v695
    %1548 = vmatmul.f32.gmra.mxu0 %v1527
    %v1549 = vpop.f32.mrf.mxu0
    %v1550 = vadd.f32 0.0, %v1549
    %1551 = vmatmul.f32.gmra.mxu0 %v1530
    %v1552 = vpop.f32.mrf.mxu0
    %v1553 = vadd.f32 0.0, %v1552
    %1554 = vdwg.mxu0
    %v1556 = vsel %vm318, %v1332, 0
    %v1559 = vsel %vm318, %v1347, 0
    %1561 = vmatpush.msra.mxu0 0.0
    %1562 = vmatpush.msra.mxu0 0.0
    %1563 = vmatpush.msra.mxu0 0.0
    %1564 = vmatpush.msra.mxu0 0.0
    %1565 = vmatpush.msra.mxu0 0.0
    %1566 = vmatpush.msra.mxu0 0.0
    %1567 = vmatpush.msra.mxu0 0.0
    %1568 = vmatpush.msra.mxu0 0.0
    %1569 = vmatpush.msra.mxu0 0.0
    %1570 = vmatpush.msra.mxu0 0.0
    %1571 = vmatpush.msra.mxu0 0.0
    %1572 = vmatpush.msra.mxu0 0.0
    %1573 = vmatpush.msra.mxu0 0.0
    %1574 = vmatpush.msra.mxu0 0.0
    %1575 = vmatpush.msra.mxu0 %v698
    %1576 = vmatpush.msra.mxu0 %v697
    %1577 = vmatmul.f32.gmra.mxu0 %v1556
    %v1578 = vpop.f32.mrf.mxu0
    %v1579 = vadd.f32 0.0, %v1578
    %1580 = vmatmul.f32.gmra.mxu0 %v1559
    %v1581 = vpop.f32.mrf.mxu0
    %v1582 = vadd.f32 0.0, %v1581
    %1583 = vdwg.mxu0
    %v1585 = vsel %vm318, %v1362, 0
    %v1588 = vsel %vm318, %v1377, 0
    %1590 = vmatpush.msra.mxu0 0.0
    %1591 = vmatpush.msra.mxu0 0.0
    %1592 = vmatpush.msra.mxu0 0.0
    %1593 = vmatpush.msra.mxu0 0.0
    %1594 = vmatpush.msra.mxu0 0.0
    %1595 = vmatpush.msra.mxu0 0.0
    %1596 = vmatpush.msra.mxu0 0.0
    %1597 = vmatpush.msra.mxu0 0.0
    %1598 = vmatpush.msra.mxu0 0.0
    %1599 = vmatpush.msra.mxu0 0.0
    %1600 = vmatpush.msra.mxu0 0.0
    %1601 = vmatpush.msra.mxu0 0.0
    %1602 = vmatpush.msra.mxu0 0.0
    %1603 = vmatpush.msra.mxu0 0.0
    %1604 = vmatpush.msra.mxu0 %v740
    %1605 = vmatpush.msra.mxu0 %v739
    %1606 = vmatmul.f32.gmra.mxu0 %v1585
    %v1607 = vpop.f32.mrf.mxu0
    %v1608 = vadd.f32 0.0, %v1607
    %1609 = vmatmul.f32.gmra.mxu0 %v1588
    %v1610 = vpop.f32.mrf.mxu0
    %v1611 = vadd.f32 0.0, %v1610
    %1612 = vdwg.mxu0
    %v1614 = vsel %vm318, %v1392, 0
    %v1617 = vsel %vm318, %v1407, 0
    %1619 = vmatpush.msra.mxu0 0.0
    %1620 = vmatpush.msra.mxu0 0.0
    %1621 = vmatpush.msra.mxu0 0.0
    %1622 = vmatpush.msra.mxu0 0.0
    %1623 = vmatpush.msra.mxu0 0.0
    %1624 = vmatpush.msra.mxu0 0.0
    %1625 = vmatpush.msra.mxu0 0.0
    %1626 = vmatpush.msra.mxu0 0.0
    %1627 = vmatpush.msra.mxu0 0.0
    %1628 = vmatpush.msra.mxu0 0.0
    %1629 = vmatpush.msra.mxu0 0.0
    %1630 = vmatpush.msra.mxu0 0.0
    %1631 = vmatpush.msra.mxu0 0.0
    %1632 = vmatpush.msra.mxu0 0.0
    %1633 = vmatpush.msra.mxu0 %v742
    %1634 = vmatpush.msra.mxu0 %v741
    %1635 = vmatmul.f32.gmra.mxu0 %v1614
    %v1636 = vpop.f32.mrf.mxu0
    %v1637 = vadd.f32 0.0, %v1636
    %1638 = vmatmul.f32.gmra.mxu0 %v1617
    %v1639 = vpop.f32.mrf.mxu0
    %v1640 = vadd.f32 0.0, %v1639
    %1641 = vdwg.mxu0
    %v1643 = vsel %vm318, %v1422, 0
    %v1646 = vsel %vm318, %v1437, 0
    %1648 = vmatpush.msra.mxu0 0.0
    %1649 = vmatpush.msra.mxu0 0.0
    %1650 = vmatpush.msra.mxu0 0.0
    %1651 = vmatpush.msra.mxu0 0.0
    %1652 = vmatpush.msra.mxu0 0.0
    %1653 = vmatpush.msra.mxu0 0.0
    %1654 = vmatpush.msra.mxu0 0.0
    %1655 = vmatpush.msra.mxu0 0.0
    %1656 = vmatpush.msra.mxu0 0.0
    %1657 = vmatpush.msra.mxu0 0.0
    %1658 = vmatpush.msra.mxu0 0.0
    %1659 = vmatpush.msra.mxu0 0.0
    %1660 = vmatpush.msra.mxu0 0.0
    %1661 = vmatpush.msra.mxu0 0.0
    %1662 = vmatpush.msra.mxu0 %v784
    %1663 = vmatpush.msra.mxu0 %v783
    %1664 = vmatmul.f32.gmra.mxu0 %v1643
    %v1665 = vpop.f32.mrf.mxu0
    %v1666 = vadd.f32 0.0, %v1665
    %1667 = vmatmul.f32.gmra.mxu0 %v1646
    %v1668 = vpop.f32.mrf.mxu0
    %v1669 = vadd.f32 0.0, %v1668
    %1670 = vdwg.mxu0
    %v1672 = vsel %vm318, %v1452, 0
    %v1675 = vsel %vm318, %v1467, 0
    %1677 = vmatpush.msra.mxu0 0.0
    %1678 = vmatpush.msra.mxu0 0.0
    %1679 = vmatpush.msra.mxu0 0.0
    %1680 = vmatpush.msra.mxu0 0.0
    %1681 = vmatpush.msra.mxu0 0.0
    %1682 = vmatpush.msra.mxu0 0.0
    %1683 = vmatpush.msra.mxu0 0.0
    %1684 = vmatpush.msra.mxu0 0.0
    %1685 = vmatpush.msra.mxu0 0.0
    %1686 = vmatpush.msra.mxu0 0.0
    %1687 = vmatpush.msra.mxu0 0.0
    %1688 = vmatpush.msra.mxu0 0.0
    %1689 = vmatpush.msra.mxu0 0.0
    %1690 = vmatpush.msra.mxu0 0.0
    %1691 = vmatpush.msra.mxu0 %v786
    %1692 = vmatpush.msra.mxu0 %v785
    %1693 = vmatmul.f32.gmra.mxu0 %v1672
    %v1694 = vpop.f32.mrf.mxu0
    %v1695 = vadd.f32 0.0, %v1694
    %1696 = vmatmul.f32.gmra.mxu0 %v1675
    %v1697 = vpop.f32.mrf.mxu0
    %v1698 = vadd.f32 0.0, %v1697
    %1699 = vdwg.mxu0
    %1704 = vrot.lane.b32.xlu0 %v1550, 8
    %v1705 = vpop.permute.xlu0 %1704
    %1706 = vrot.lane.b32.xlu0 %v1553, 8
    %v1707 = vpop.permute.xlu0 %1706
    %1708 = vrot.lane.b32.xlu0 %v1579, 8
    %v1709 = vpop.permute.xlu0 %1708
    %1710 = vrot.lane.b32.xlu0 %v1582, 8
    %v1711 = vpop.permute.xlu0 %1710
    %1720 = vrot.lane.b32.xlu0 %v1608, 16
    %v1721 = vpop.permute.xlu0 %1720
    %1722 = vrot.lane.b32.xlu0 %v1611, 16
    %v1723 = vpop.permute.xlu0 %1722
    %1724 = vrot.lane.b32.xlu0 %v1637, 16
    %v1725 = vpop.permute.xlu0 %1724
    %1726 = vrot.lane.b32.xlu0 %v1640, 16
    %v1727 = vpop.permute.xlu0 %1726
    %1736 = vrot.lane.b32.xlu0 %v1666, 24
    %v1737 = vpop.permute.xlu0 %1736
    %1738 = vrot.lane.b32.xlu0 %v1669, 24
    %v1739 = vpop.permute.xlu0 %1738
    %1740 = vrot.lane.b32.xlu0 %v1695, 24
    %v1741 = vpop.permute.xlu0 %1740
    %1742 = vrot.lane.b32.xlu0 %v1698, 24
    %v1743 = vpop.permute.xlu0 %1742
    %v1748 = vsel %vm82, %v1492, %v1705
    %v1749 = vsel %vm82, %v1495, %v1707
    %v1750 = vsel %vm82, %v1521, %v1709
    %v1751 = vsel %vm82, %v1524, %v1711
    %v1752 = vsel %vm318, %v1748, %v1721
    %v1753 = vsel %vm318, %v1749, %v1723
    %v1754 = vsel %vm318, %v1750, %v1725
    %v1755 = vsel %vm318, %v1751, %v1727
    %v1756 = vsel %vm787, %v1752, %v1737
    %v1757 = vsel %vm787, %v1753, %v1739
    %v1758 = vsel %vm787, %v1754, %v1741
    %v1759 = vsel %vm787, %v1755, %v1743
    %1764 = vrot.lane.b32.xlu0 %v1492, 120
    %v1765 = vpop.permute.xlu0 %1764
    %1766 = vrot.lane.b32.xlu0 %v1495, 120
    %v1767 = vpop.permute.xlu0 %1766
    %1768 = vrot.lane.b32.xlu0 %v1521, 120
    %v1769 = vpop.permute.xlu0 %1768
    %1770 = vrot.lane.b32.xlu0 %v1524, 120
    %v1771 = vpop.permute.xlu0 %1770
    %1776 = vrot.lane.b32.xlu0 %v1608, 8
    %v1777 = vpop.permute.xlu0 %1776
    %1778 = vrot.lane.b32.xlu0 %v1611, 8
    %v1779 = vpop.permute.xlu0 %1778
    %1780 = vrot.lane.b32.xlu0 %v1637, 8
    %v1781 = vpop.permute.xlu0 %1780
    %1782 = vrot.lane.b32.xlu0 %v1640, 8
    %v1783 = vpop.permute.xlu0 %1782
    %1788 = vrot.lane.b32.xlu0 %v1666, 16
    %v1789 = vpop.permute.xlu0 %1788
    %1790 = vrot.lane.b32.xlu0 %v1669, 16
    %v1791 = vpop.permute.xlu0 %1790
    %1792 = vrot.lane.b32.xlu0 %v1695, 16
    %v1793 = vpop.permute.xlu0 %1792
    %1794 = vrot.lane.b32.xlu0 %v1698, 16
    %v1795 = vpop.permute.xlu0 %1794
    %v1800 = vsel %vm82, %v1765, %v1550
    %v1801 = vsel %vm82, %v1767, %v1553
    %v1802 = vsel %vm82, %v1769, %v1579
    %v1803 = vsel %vm82, %v1771, %v1582
    %v1804 = vsel %vm318, %v1800, %v1777
    %v1805 = vsel %vm318, %v1801, %v1779
    %v1806 = vsel %vm318, %v1802, %v1781
    %v1807 = vsel %vm318, %v1803, %v1783
    %v1808 = vsel %vm787, %v1804, %v1789
    %v1809 = vsel %vm787, %v1805, %v1791
    %v1810 = vsel %vm787, %v1806, %v1793
    %v1811 = vsel %vm787, %v1807, %v1795
    %1812 = vrot.lane.b32.xlu0 %v1492, 112
    %v1813 = vpop.permute.xlu0 %1812
    %1814 = vrot.lane.b32.xlu0 %v1495, 112
    %v1815 = vpop.permute.xlu0 %1814
    %1816 = vrot.lane.b32.xlu0 %v1521, 112
    %v1817 = vpop.permute.xlu0 %1816
    %1818 = vrot.lane.b32.xlu0 %v1524, 112
    %v1819 = vpop.permute.xlu0 %1818
    %1824 = vrot.lane.b32.xlu0 %v1550, 120
    %v1825 = vpop.permute.xlu0 %1824
    %1826 = vrot.lane.b32.xlu0 %v1553, 120
    %v1827 = vpop.permute.xlu0 %1826
    %1828 = vrot.lane.b32.xlu0 %v1579, 120
    %v1829 = vpop.permute.xlu0 %1828
    %1830 = vrot.lane.b32.xlu0 %v1582, 120
    %v1831 = vpop.permute.xlu0 %1830
    %1836 = vrot.lane.b32.xlu0 %v1666, 8
    %v1837 = vpop.permute.xlu0 %1836
    %1838 = vrot.lane.b32.xlu0 %v1669, 8
    %v1839 = vpop.permute.xlu0 %1838
    %1840 = vrot.lane.b32.xlu0 %v1695, 8
    %v1841 = vpop.permute.xlu0 %1840
    %1842 = vrot.lane.b32.xlu0 %v1698, 8
    %v1843 = vpop.permute.xlu0 %1842
    %v1848 = vsel %vm82, %v1813, %v1825
    %v1849 = vsel %vm82, %v1815, %v1827
    %v1850 = vsel %vm82, %v1817, %v1829
    %v1851 = vsel %vm82, %v1819, %v1831
    %v1852 = vsel %vm318, %v1848, %v1608
    %v1853 = vsel %vm318, %v1849, %v1611
    %v1854 = vsel %vm318, %v1850, %v1637
    %v1855 = vsel %vm318, %v1851, %v1640
    %v1856 = vsel %vm787, %v1852, %v1837
    %v1857 = vsel %vm787, %v1853, %v1839
    %v1858 = vsel %vm787, %v1854, %v1841
    %v1859 = vsel %vm787, %v1855, %v1843
    %v1861 = vsel %vm192, %v1756, 0
    %v1864 = vsel %vm192, %v1757, 0
    %v1867 = vsel %vm192, %v1758, 0
    %v1870 = vsel %vm192, %v1759, 0
    %v1873 = vsel %vm192, %v1808, 0
    %v1876 = vsel %vm192, %v1809, 0
    %v1879 = vsel %vm192, %v1810, 0
    %v1882 = vsel %vm192, %v1811, 0
    %v1885 = vsel %vm192, %v1856, 0
    %v1888 = vsel %vm192, %v1857, 0
    %v1891 = vsel %vm192, %v1858, 0
    %v1894 = vsel %vm192, %v1859, 0
    %1896 = vmatpush.msra.mxu0 0.0
    %1897 = vmatpush.msra.mxu0 0.0
    %1898 = vmatpush.msra.mxu0 0.0
    %1899 = vmatpush.msra.mxu0 0.0
    %1900 = vmatpush.msra.mxu0 0.0
    %1901 = vmatpush.msra.mxu0 0.0
    %1902 = vmatpush.msra.mxu0 0.0
    %1903 = vmatpush.msra.mxu0 0.0
    %1904 = vmatpush.msra.mxu0 0.0
    %1905 = vmatpush.msra.mxu0 0.0
    %1906 = vmatpush.msra.mxu0 0.0
    %1907 = vmatpush.msra.mxu0 0.0
    %1908 = vmatpush.msra.mxu0 %v179
    %1909 = vmatpush.msra.mxu0 %v178
    %1910 = vmatpush.msra.mxu0 %v177
    %1911 = vmatpush.msra.mxu0 %v176
    %1912 = vmatmul.f32.gmra.mxu0 %v1861
    %v1913 = vpop.f32.mrf.mxu0
    %v1914 = vadd.f32 0.0, %v1913
    %1915 = vmatmul.f32.gmra.mxu0 %v1864
    %v1916 = vpop.f32.mrf.mxu0
    %v1917 = vadd.f32 0.0, %v1916
    %1918 = vmatmul.f32.gmra.mxu0 %v1867
    %v1919 = vpop.f32.mrf.mxu0
    %v1920 = vadd.f32 0.0, %v1919
    %1921 = vmatmul.f32.gmra.mxu0 %v1870
    %v1922 = vpop.f32.mrf.mxu0
    %v1923 = vadd.f32 0.0, %v1922
    %1924 = vmatmul.f32.gmra.mxu0 %v1873
    %v1925 = vpop.f32.mrf.mxu0
    %v1926 = vadd.f32 0.0, %v1925
    %1927 = vmatmul.f32.gmra.mxu0 %v1876
    %v1928 = vpop.f32.mrf.mxu0
    %v1929 = vadd.f32 0.0, %v1928
    %1930 = vmatmul.f32.gmra.mxu0 %v1879
    %v1931 = vpop.f32.mrf.mxu0
    %v1932 = vadd.f32 0.0, %v1931
    %1933 = vmatmul.f32.gmra.mxu0 %v1882
    %v1934 = vpop.f32.mrf.mxu0
    %v1935 = vadd.f32 0.0, %v1934
    %1936 = vmatmul.f32.gmra.mxu0 %v1885
    %v1937 = vpop.f32.mrf.mxu0
    %v1938 = vadd.f32 0.0, %v1937
    %1939 = vmatmul.f32.gmra.mxu0 %v1888
    %v1940 = vpop.f32.mrf.mxu0
    %v1941 = vadd.f32 0.0, %v1940
    %1942 = vmatmul.f32.gmra.mxu0 %v1891
    %v1943 = vpop.f32.mrf.mxu0
    %v1944 = vadd.f32 0.0, %v1943
    %1945 = vmatmul.f32.gmra.mxu0 %v1894
    %v1946 = vpop.f32.mrf.mxu0
    %v1947 = vadd.f32 0.0, %v1946
    %1948 = vdwg.mxu0
    %v1949 = vadd.f32 %v137, %v1914
    %v1950 = vadd.f32 %v140, %v1917
    %v1951 = vadd.f32 %v143, %v1920
    %v1952 = vadd.f32 %v146, %v1923
    %v1953 = vadd.f32 %v149, %v1926
    %v1954 = vadd.f32 %v152, %v1929
    %v1955 = vadd.f32 %v155, %v1932
    %v1956 = vadd.f32 %v158, %v1935
    %v1957 = vadd.f32 %v161, %v1938
    %v1958 = vadd.f32 %v164, %v1941
    %v1959 = vadd.f32 %v167, %v1944
    %v1960 = vadd.f32 %v170, %v1947
    %v1962 = vsel %vm192, %v1949, 0
    %v1965 = vsel %vm192, %v1950, 0
    %v1968 = vsel %vm192, %v1951, 0
    %v1971 = vsel %vm192, %v1952, 0
    %v1974 = vsel %vm192, %v1953, 0
    %v1977 = vsel %vm192, %v1954, 0
    %v1980 = vsel %vm192, %v1955, 0
    %v1983 = vsel %vm192, %v1956, 0
    %v1986 = vsel %vm192, %v1957, 0
    %v1989 = vsel %vm192, %v1958, 0
    %v1992 = vsel %vm192, %v1959, 0
    %v1995 = vsel %vm192, %v1960, 0
    %1997 = vmatpush.msra.mxu0 0.0
    %1998 = vmatpush.msra.mxu0 0.0
    %1999 = vmatpush.msra.mxu0 0.0
    %2000 = vmatpush.msra.mxu0 0.0
    %2001 = vmatpush.msra.mxu0 0.0
    %2002 = vmatpush.msra.mxu0 0.0
    %2003 = vmatpush.msra.mxu0 0.0
    %2004 = vmatpush.msra.mxu0 0.0
    %2005 = vmatpush.msra.mxu0 0.0
    %2006 = vmatpush.msra.mxu0 0.0
    %2007 = vmatpush.msra.mxu0 0.0
    %2008 = vmatpush.msra.mxu0 0.0
    %2009 = vmatpush.msra.mxu0 %v183
    %2010 = vmatpush.msra.mxu0 %v182
    %2011 = vmatpush.msra.mxu0 %v181
    %2012 = vmatpush.msra.mxu0 %v180
    %2013 = vmatmul.f32.gmra.mxu0 %v1962
    %v2014 = vpop.f32.mrf.mxu0
    %v2015 = vadd.f32 0.0, %v2014
    %2016 = vmatmul.f32.gmra.mxu0 %v1965
    %v2017 = vpop.f32.mrf.mxu0
    %v2018 = vadd.f32 0.0, %v2017
    %2019 = vmatmul.f32.gmra.mxu0 %v1968
    %v2020 = vpop.f32.mrf.mxu0
    %v2021 = vadd.f32 0.0, %v2020
    %2022 = vmatmul.f32.gmra.mxu0 %v1971
    %v2023 = vpop.f32.mrf.mxu0
    %v2024 = vadd.f32 0.0, %v2023
    %2025 = vmatmul.f32.gmra.mxu0 %v1974
    %v2026 = vpop.f32.mrf.mxu0
    %v2027 = vadd.f32 0.0, %v2026
    %2028 = vmatmul.f32.gmra.mxu0 %v1977
    %v2029 = vpop.f32.mrf.mxu0
    %v2030 = vadd.f32 0.0, %v2029
    %2031 = vmatmul.f32.gmra.mxu0 %v1980
    %v2032 = vpop.f32.mrf.mxu0
    %v2033 = vadd.f32 0.0, %v2032
    %2034 = vmatmul.f32.gmra.mxu0 %v1983
    %v2035 = vpop.f32.mrf.mxu0
    %v2036 = vadd.f32 0.0, %v2035
    %2037 = vmatmul.f32.gmra.mxu0 %v1986
    %v2038 = vpop.f32.mrf.mxu0
    %v2039 = vadd.f32 0.0, %v2038
    %2040 = vmatmul.f32.gmra.mxu0 %v1989
    %v2041 = vpop.f32.mrf.mxu0
    %v2042 = vadd.f32 0.0, %v2041
    %2043 = vmatmul.f32.gmra.mxu0 %v1992
    %v2044 = vpop.f32.mrf.mxu0
    %v2045 = vadd.f32 0.0, %v2044
    %2046 = vmatmul.f32.gmra.mxu0 %v1995
    %v2047 = vpop.f32.mrf.mxu0
    %v2048 = vadd.f32 0.0, %v2047
    %2049 = vdwg.mxu0
    %v2050 = vmul.f32 %v2015, %v2015
    %v2051 = vmul.f32 %v2018, %v2018
    %v2052 = vmul.f32 %v2021, %v2021
    %v2053 = vmul.f32 %v2024, %v2024
    %v2054 = vmul.f32 %v2027, %v2027
    %v2055 = vmul.f32 %v2030, %v2030
    %v2056 = vmul.f32 %v2033, %v2033
    %v2057 = vmul.f32 %v2036, %v2036
    %v2058 = vmul.f32 %v2039, %v2039
    %v2059 = vmul.f32 %v2042, %v2042
    %v2060 = vmul.f32 %v2045, %v2045
    %v2061 = vmul.f32 %v2048, %v2048
    %v2062 = vsel %vm192, %v2050, 0.0
    %v2063 = vsel %vm192, %v2054, 0.0
    %v2064 = vadd.f32 %v2062, %v2063
    %v2065 = vsel %vm192, %v2058, 0.0
    %v2066 = vadd.f32 %v2064, %v2065
    %v2067 = vsel %vm192, %v2051, 0.0
    %v2068 = vsel %vm192, %v2055, 0.0
    %v2069 = vadd.f32 %v2067, %v2068
    %v2070 = vsel %vm192, %v2059, 0.0
    %v2071 = vadd.f32 %v2069, %v2070
    %v2072 = vsel %vm192, %v2052, 0.0
    %v2073 = vsel %vm192, %v2056, 0.0
    %v2074 = vadd.f32 %v2072, %v2073
    %v2075 = vsel %vm192, %v2060, 0.0
    %v2076 = vadd.f32 %v2074, %v2075
    %v2077 = vsel %vm192, %v2053, 0.0
    %v2078 = vsel %vm192, %v2057, 0.0
    %v2079 = vadd.f32 %v2077, %v2078
    %v2080 = vsel %vm192, %v2061, 0.0
    %v2081 = vadd.f32 %v2079, %v2080
    %v2082 = vrsqrt.pop %v2066
    %v2083 = vmul.f32 %v2082, %v2066
    %v2084 = vmul.f32 %v2083, %v2082
    %v2085 = vmul.f32 0.5, %v2084
    %v2086 = vsub.f32 1.5, %v2085
    %v2087 = vmul.f32 %v2082, %v2086
    %v2088 = vmul.f32 %v2066, %v2087
    %vm2089 = vcmp.eq.f32.partialorder %v2066, inf
    %v2090 = vsel %vm2089, %v2066, %v2088
    %vm2091 = vcmp.eq.f32.partialorder %v2066, 0.0
    %v2092 = vand.u32 %v2066, 2147483648
    %v2093 = vsel %vm2091, %v2092, %v2090
    %v2094 = vrsqrt.pop %v2071
    %v2095 = vmul.f32 %v2094, %v2071
    %v2096 = vmul.f32 %v2095, %v2094
    %v2097 = vmul.f32 0.5, %v2096
    %v2098 = vsub.f32 1.5, %v2097
    %v2099 = vmul.f32 %v2094, %v2098
    %v2100 = vmul.f32 %v2071, %v2099
    %vm2101 = vcmp.eq.f32.partialorder %v2071, inf
    %v2102 = vsel %vm2101, %v2071, %v2100
    %vm2103 = vcmp.eq.f32.partialorder %v2071, 0.0
    %v2104 = vand.u32 %v2071, 2147483648
    %v2105 = vsel %vm2103, %v2104, %v2102
    %v2106 = vrsqrt.pop %v2076
    %v2107 = vmul.f32 %v2106, %v2076
    %v2108 = vmul.f32 %v2107, %v2106
    %v2109 = vmul.f32 0.5, %v2108
    %v2110 = vsub.f32 1.5, %v2109
    %v2111 = vmul.f32 %v2106, %v2110
    %v2112 = vmul.f32 %v2076, %v2111
    %vm2113 = vcmp.eq.f32.partialorder %v2076, inf
    %v2114 = vsel %vm2113, %v2076, %v2112
    %vm2115 = vcmp.eq.f32.partialorder %v2076, 0.0
    %v2116 = vand.u32 %v2076, 2147483648
    %v2117 = vsel %vm2115, %v2116, %v2114
    %v2118 = vrsqrt.pop %v2081
    %v2119 = vmul.f32 %v2118, %v2081
    %v2120 = vmul.f32 %v2119, %v2118
    %v2121 = vmul.f32 0.5, %v2120
    %v2122 = vsub.f32 1.5, %v2121
    %v2123 = vmul.f32 %v2118, %v2122
    %v2124 = vmul.f32 %v2081, %v2123
    %vm2125 = vcmp.eq.f32.partialorder %v2081, inf
    %v2126 = vsel %vm2125, %v2081, %v2124
    %vm2127 = vcmp.eq.f32.partialorder %v2081, 0.0
    %v2128 = vand.u32 %v2081, 2147483648
    %v2129 = vsel %vm2127, %v2128, %v2126
    %v2130 = vadd.f32 %v2093, 1e-06
    %v2131 = vadd.f32 %v2105, 1e-06
    %v2132 = vadd.f32 %v2117, 1e-06
    %v2133 = vadd.f32 %v2129, 1e-06
    %v2134 = vsel %vm192, %v2130, 0.0
    %v2135 = vsel %vm192, %v2131, 0.0
    %v2136 = vadd.f32 %v2134, %v2135
    %v2137 = vsel %vm192, %v2132, 0.0
    %v2138 = vadd.f32 %v2136, %v2137
    %v2139 = vsel %vm192, %v2133, 0.0
    %v2140 = vadd.f32 %v2138, %v2139
    %v2141 = vrot.slane %v2140, 4
    %v2142 = vadd.f32 %v2140, %v2141
    %v2143 = vrot.slane %v2142, 2
    %v2144 = vadd.f32 %v2142, %v2143
    %v2145 = vrot.slane %v2144, 1
    %v2146 = vadd.f32 %v2144, %v2145
    %v2147 = vrcp.pop 32.0
    %v2148 = vmul.f32 32.0, %v2147
    %v2149 = vsub.f32 1.0, %v2148
    %v2150 = vmul.f32 %v2147, %v2149
    %v2151 = vadd.f32 %v2147, %v2150
    %vm2152 = vweird.f32 %v2147
    %v2153 = vsel %vm2152, %v2147, %v2151
    %v2154 = vmul.f32 %v2146, %v2153
    %v2155 = vsub.f32 %v2130, %v2154
    %v2156 = vsub.f32 %v2131, %v2154
    %v2157 = vsub.f32 %v2132, %v2154
    %v2158 = vsub.f32 %v2133, %v2154
    %v2159 = vmul.f32 %v2155, %v2155
    %v2160 = vmul.f32 %v2156, %v2156
    %v2161 = vmul.f32 %v2157, %v2157
    %v2162 = vmul.f32 %v2158, %v2158
    %v2163 = vsel %vm192, %v2159, 0.0
    %v2164 = vsel %vm192, %v2160, 0.0
    %v2165 = vadd.f32 %v2163, %v2164
    %v2166 = vsel %vm192, %v2161, 0.0
    %v2167 = vadd.f32 %v2165, %v2166
    %v2168 = vsel %vm192, %v2162, 0.0
    %v2169 = vadd.f32 %v2167, %v2168
    %v2170 = vrot.slane %v2169, 4
    %v2171 = vadd.f32 %v2169, %v2170
    %v2172 = vrot.slane %v2171, 2
    %v2173 = vadd.f32 %v2171, %v2172
    %v2174 = vrot.slane %v2173, 1
    %v2175 = vadd.f32 %v2173, %v2174
    %v2176 = vmul.f32 %v2175, %v2153
    %v2177 = vadd.f32 %v2176, 1e-05
    %v2178 = vrsqrt.pop %v2177
    %v2179 = vmul.f32 %v2178, %v2177
    %v2180 = vmul.f32 %v2179, %v2178
    %v2181 = vmul.f32 0.5, %v2180
    %v2182 = vsub.f32 1.5, %v2181
    %v2183 = vmul.f32 %v2178, %v2182
    %v2184 = vmul.f32 %v2177, %v2183
    %vm2185 = vcmp.eq.f32.partialorder %v2177, inf
    %v2186 = vsel %vm2185, %v2177, %v2184
    %vm2187 = vcmp.eq.f32.partialorder %v2177, 0.0
    %v2188 = vand.u32 %v2177, 2147483648
    %v2189 = vsel %vm2187, %v2188, %v2186
    %v2190 = vrcp.pop %v2189
    %v2191 = vmul.f32 %v2189, %v2190
    %v2192 = vsub.f32 1.0, %v2191
    %v2193 = vmul.f32 %v2190, %v2192
    %v2194 = vadd.f32 %v2190, %v2193
    %vm2195 = vweird.f32 %v2189
    %vm2196 = vweird.f32 %v2190
    %vm2197 = vmor %vm2195, %vm2196
    %v2198 = vsel %vm2197, %v2190, %v2194
    %v2199 = vand.u32 2147483647, %v2189
    %vm2200 = vcmp.eq.f32.partialorder %v2199, 8.507059e+37
    %v2201 = vand.u32 %v2189, 2147483648
    %v2202 = vor.u32 1.1754944e-38, %v2201
    %v2203 = vsel %vm2200, %v2202, %v2198
    %v2204 = vmul.f32 %v2155, %v2203
    %v2205 = vmul.f32 %v2156, %v2203
    %v2206 = vmul.f32 %v2157, %v2203
    %v2207 = vmul.f32 %v2158, %v2203
    %v2208 = vrcp.pop %v2130
    %v2209 = vmul.f32 %v2130, %v2208
    %v2210 = vsub.f32 1.0, %v2209
    %v2211 = vmul.f32 %v2208, %v2210
    %v2212 = vadd.f32 %v2208, %v2211
    %vm2213 = vweird.f32 %v2130
    %vm2214 = vweird.f32 %v2208
    %vm2215 = vmor %vm2213, %vm2214
    %v2216 = vsel %vm2215, %v2208, %v2212
    %v2217 = vand.u32 2147483647, %v2130
    %vm2218 = vcmp.eq.f32.partialorder %v2217, 8.507059e+37
    %v2219 = vand.u32 %v2130, 2147483648
    %v2220 = vor.u32 1.1754944e-38, %v2219
    %v2221 = vsel %vm2218, %v2220, %v2216
    %v2222 = vmul.f32 %v2204, %v2221
    %v2223 = vrcp.pop %v2131
    %v2224 = vmul.f32 %v2131, %v2223
    %v2225 = vsub.f32 1.0, %v2224
    %v2226 = vmul.f32 %v2223, %v2225
    %v2227 = vadd.f32 %v2223, %v2226
    %vm2228 = vweird.f32 %v2131
    %vm2229 = vweird.f32 %v2223
    %vm2230 = vmor %vm2228, %vm2229
    %v2231 = vsel %vm2230, %v2223, %v2227
    %v2232 = vand.u32 2147483647, %v2131
    %vm2233 = vcmp.eq.f32.partialorder %v2232, 8.507059e+37
    %v2234 = vand.u32 %v2131, 2147483648
    %v2235 = vor.u32 1.1754944e-38, %v2234
    %v2236 = vsel %vm2233, %v2235, %v2231
    %v2237 = vmul.f32 %v2205, %v2236
    %v2238 = vrcp.pop %v2132
    %v2239 = vmul.f32 %v2132, %v2238
    %v2240 = vsub.f32 1.0, %v2239
    %v2241 = vmul.f32 %v2238, %v2240
    %v2242 = vadd.f32 %v2238, %v2241
    %vm2243 = vweird.f32 %v2132
    %vm2244 = vweird.f32 %v2238
    %vm2245 = vmor %vm2243, %vm2244
    %v2246 = vsel %vm2245, %v2238, %v2242
    %v2247 = vand.u32 2147483647, %v2132
    %vm2248 = vcmp.eq.f32.partialorder %v2247, 8.507059e+37
    %v2249 = vand.u32 %v2132, 2147483648
    %v2250 = vor.u32 1.1754944e-38, %v2249
    %v2251 = vsel %vm2248, %v2250, %v2246
    %v2252 = vmul.f32 %v2206, %v2251
    %v2253 = vrcp.pop %v2133
    %v2254 = vmul.f32 %v2133, %v2253
    %v2255 = vsub.f32 1.0, %v2254
    %v2256 = vmul.f32 %v2253, %v2255
    %v2257 = vadd.f32 %v2253, %v2256
    %vm2258 = vweird.f32 %v2133
    %vm2259 = vweird.f32 %v2253
    %vm2260 = vmor %vm2258, %vm2259
    %v2261 = vsel %vm2260, %v2253, %v2257
    %v2262 = vand.u32 2147483647, %v2133
    %vm2263 = vcmp.eq.f32.partialorder %v2262, 8.507059e+37
    %v2264 = vand.u32 %v2133, 2147483648
    %v2265 = vor.u32 1.1754944e-38, %v2264
    %v2266 = vsel %vm2263, %v2265, %v2261
    %v2267 = vmul.f32 %v2207, %v2266
    %v2268 = vmul.f32 %v2015, %v2222
    %v2269 = vmul.f32 %v2018, %v2237
    %v2270 = vmul.f32 %v2021, %v2252
    %v2271 = vmul.f32 %v2024, %v2267
    %v2272 = vmul.f32 %v2027, %v2222
    %v2273 = vmul.f32 %v2030, %v2237
    %v2274 = vmul.f32 %v2033, %v2252
    %v2275 = vmul.f32 %v2036, %v2267
    %v2276 = vmul.f32 %v2039, %v2222
    %v2277 = vmul.f32 %v2042, %v2237
    %v2278 = vmul.f32 %v2045, %v2252
    %v2279 = vmul.f32 %v2048, %v2267
    %2280 = vmatpush.msra.mxu0 0.0
    %2281 = vmatpush.msra.mxu0 0.0
    %2282 = vmatpush.msra.mxu0 0.0
    %2283 = vmatpush.msra.mxu0 0.0
    %2284 = vmatpush.msra.mxu0 0.0
    %2285 = vmatpush.msra.mxu0 0.0
    %2286 = vmatpush.msra.mxu0 0.0
    %2287 = vmatpush.msra.mxu0 0.0
    %2288 = vmatpush.msra.mxu0 0.0
    %2289 = vmatpush.msra.mxu0 0.0
    %2290 = vmatpush.msra.mxu0 0.0
    %2291 = vmatpush.msra.mxu0 0.0
    %2292 = vmatpush.msra.mxu0 %v187
    %2293 = vmatpush.msra.mxu0 %v186
    %2294 = vmatpush.msra.mxu0 %v185
    %2295 = vmatpush.msra.mxu0 %v184
    %2296 = vmatmul.f32.gmra.mxu0 %v1962
    %v2297 = vpop.f32.mrf.mxu0
    %v2298 = vadd.f32 0.0, %v2297
    %2299 = vmatmul.f32.gmra.mxu0 %v1965
    %v2300 = vpop.f32.mrf.mxu0
    %v2301 = vadd.f32 0.0, %v2300
    %2302 = vmatmul.f32.gmra.mxu0 %v1968
    %v2303 = vpop.f32.mrf.mxu0
    %v2304 = vadd.f32 0.0, %v2303
    %2305 = vmatmul.f32.gmra.mxu0 %v1971
    %v2306 = vpop.f32.mrf.mxu0
    %v2307 = vadd.f32 0.0, %v2306
    %2308 = vmatmul.f32.gmra.mxu0 %v1974
    %v2309 = vpop.f32.mrf.mxu0
    %v2310 = vadd.f32 0.0, %v2309
    %2311 = vmatmul.f32.gmra.mxu0 %v1977
    %v2312 = vpop.f32.mrf.mxu0
    %v2313 = vadd.f32 0.0, %v2312
    %2314 = vmatmul.f32.gmra.mxu0 %v1980
    %v2315 = vpop.f32.mrf.mxu0
    %v2316 = vadd.f32 0.0, %v2315
    %2317 = vmatmul.f32.gmra.mxu0 %v1983
    %v2318 = vpop.f32.mrf.mxu0
    %v2319 = vadd.f32 0.0, %v2318
    %2320 = vmatmul.f32.gmra.mxu0 %v1986
    %v2321 = vpop.f32.mrf.mxu0
    %v2322 = vadd.f32 0.0, %v2321
    %2323 = vmatmul.f32.gmra.mxu0 %v1989
    %v2324 = vpop.f32.mrf.mxu0
    %v2325 = vadd.f32 0.0, %v2324
    %2326 = vmatmul.f32.gmra.mxu0 %v1992
    %v2327 = vpop.f32.mrf.mxu0
    %v2328 = vadd.f32 0.0, %v2327
    %2329 = vmatmul.f32.gmra.mxu0 %v1995
    %v2330 = vpop.f32.mrf.mxu0
    %v2331 = vadd.f32 0.0, %v2330
    %2332 = vdwg.mxu0
    %v2333 = vmul.f32 %v2268, %v2298
    %v2334 = vmul.f32 %v2269, %v2301
    %v2335 = vmul.f32 %v2270, %v2304
    %v2336 = vmul.f32 %v2271, %v2307
    %v2337 = vmul.f32 %v2272, %v2310
    %v2338 = vmul.f32 %v2273, %v2313
    %v2339 = vmul.f32 %v2274, %v2316
    %v2340 = vmul.f32 %v2275, %v2319
    %v2341 = vmul.f32 %v2276, %v2322
    %v2342 = vmul.f32 %v2277, %v2325
    %v2343 = vmul.f32 %v2278, %v2328
    %v2344 = vmul.f32 %v2279, %v2331
    %v2345 = vsel %vm192, %v2333, 0.0
    %v2346 = vsel %vm192, %v2337, 0.0
    %v2347 = vadd.f32 %v2345, %v2346
    %v2348 = vsel %vm192, %v2341, 0.0
    %v2349 = vadd.f32 %v2347, %v2348
    %v2350 = vsel %vm192, %v2334, 0.0
    %v2351 = vsel %vm192, %v2338, 0.0
    %v2352 = vadd.f32 %v2350, %v2351
    %v2353 = vsel %vm192, %v2342, 0.0
    %v2354 = vadd.f32 %v2352, %v2353
    %v2355 = vsel %vm192, %v2335, 0.0
    %v2356 = vsel %vm192, %v2339, 0.0
    %v2357 = vadd.f32 %v2355, %v2356
    %v2358 = vsel %vm192, %v2343, 0.0
    %v2359 = vadd.f32 %v2357, %v2358
    %v2360 = vsel %vm192, %v2336, 0.0
    %v2361 = vsel %vm192, %v2340, 0.0
    %v2362 = vadd.f32 %v2360, %v2361
    %v2363 = vsel %vm192, %v2344, 0.0
    %v2364 = vadd.f32 %v2362, %v2363
    %v2365 = vmul.f32 %v2298, %v2298
    %v2366 = vmul.f32 %v2301, %v2301
    %v2367 = vmul.f32 %v2304, %v2304
    %v2368 = vmul.f32 %v2307, %v2307
    %v2369 = vmul.f32 %v2310, %v2310
    %v2370 = vmul.f32 %v2313, %v2313
    %v2371 = vmul.f32 %v2316, %v2316
    %v2372 = vmul.f32 %v2319, %v2319
    %v2373 = vmul.f32 %v2322, %v2322
    %v2374 = vmul.f32 %v2325, %v2325
    %v2375 = vmul.f32 %v2328, %v2328
    %v2376 = vmul.f32 %v2331, %v2331
    %v2377 = vsel %vm192, %v2365, 0.0
    %v2378 = vsel %vm192, %v2369, 0.0
    %v2379 = vadd.f32 %v2377, %v2378
    %v2380 = vsel %vm192, %v2373, 0.0
    %v2381 = vadd.f32 %v2379, %v2380
    %v2382 = vsel %vm192, %v2366, 0.0
    %v2383 = vsel %vm192, %v2370, 0.0
    %v2384 = vadd.f32 %v2382, %v2383
    %v2385 = vsel %vm192, %v2374, 0.0
    %v2386 = vadd.f32 %v2384, %v2385
    %v2387 = vsel %vm192, %v2367, 0.0
    %v2388 = vsel %vm192, %v2371, 0.0
    %v2389 = vadd.f32 %v2387, %v2388
    %v2390 = vsel %vm192, %v2375, 0.0
    %v2391 = vadd.f32 %v2389, %v2390
    %v2392 = vsel %vm192, %v2368, 0.0
    %v2393 = vsel %vm192, %v2372, 0.0
    %v2394 = vadd.f32 %v2392, %v2393
    %v2395 = vsel %vm192, %v2376, 0.0
    %v2396 = vadd.f32 %v2394, %v2395
    %v2397 = vadd.f32 %v2381, 1e-06
    %v2398 = vadd.f32 %v2386, 1e-06
    %v2399 = vadd.f32 %v2391, 1e-06
    %v2400 = vadd.f32 %v2396, 1e-06
    %v2401 = vrcp.pop %v2397
    %v2402 = vmul.f32 %v2397, %v2401
    %v2403 = vsub.f32 1.0, %v2402
    %v2404 = vmul.f32 %v2401, %v2403
    %v2405 = vadd.f32 %v2401, %v2404
    %vm2406 = vweird.f32 %v2397
    %vm2407 = vweird.f32 %v2401
    %vm2408 = vmor %vm2406, %vm2407
    %v2409 = vsel %vm2408, %v2401, %v2405
    %v2410 = vand.u32 2147483647, %v2397
    %vm2411 = vcmp.eq.f32.partialorder %v2410, 8.507059e+37
    %v2412 = vand.u32 %v2397, 2147483648
    %v2413 = vor.u32 1.1754944e-38, %v2412
    %v2414 = vsel %vm2411, %v2413, %v2409
    %v2415 = vmul.f32 %v2349, %v2414
    %v2416 = vrcp.pop %v2398
    %v2417 = vmul.f32 %v2398, %v2416
    %v2418 = vsub.f32 1.0, %v2417
    %v2419 = vmul.f32 %v2416, %v2418
    %v2420 = vadd.f32 %v2416, %v2419
    %vm2421 = vweird.f32 %v2398
    %vm2422 = vweird.f32 %v2416
    %vm2423 = vmor %vm2421, %vm2422
    %v2424 = vsel %vm2423, %v2416, %v2420
    %v2425 = vand.u32 2147483647, %v2398
    %vm2426 = vcmp.eq.f32.partialorder %v2425, 8.507059e+37
    %v2427 = vand.u32 %v2398, 2147483648
    %v2428 = vor.u32 1.1754944e-38, %v2427
    %v2429 = vsel %vm2426, %v2428, %v2424
    %v2430 = vmul.f32 %v2354, %v2429
    %v2431 = vrcp.pop %v2399
    %v2432 = vmul.f32 %v2399, %v2431
    %v2433 = vsub.f32 1.0, %v2432
    %v2434 = vmul.f32 %v2431, %v2433
    %v2435 = vadd.f32 %v2431, %v2434
    %vm2436 = vweird.f32 %v2399
    %vm2437 = vweird.f32 %v2431
    %vm2438 = vmor %vm2436, %vm2437
    %v2439 = vsel %vm2438, %v2431, %v2435
    %v2440 = vand.u32 2147483647, %v2399
    %vm2441 = vcmp.eq.f32.partialorder %v2440, 8.507059e+37
    %v2442 = vand.u32 %v2399, 2147483648
    %v2443 = vor.u32 1.1754944e-38, %v2442
    %v2444 = vsel %vm2441, %v2443, %v2439
    %v2445 = vmul.f32 %v2359, %v2444
    %v2446 = vrcp.pop %v2400
    %v2447 = vmul.f32 %v2400, %v2446
    %v2448 = vsub.f32 1.0, %v2447
    %v2449 = vmul.f32 %v2446, %v2448
    %v2450 = vadd.f32 %v2446, %v2449
    %vm2451 = vweird.f32 %v2400
    %vm2452 = vweird.f32 %v2446
    %vm2453 = vmor %vm2451, %vm2452
    %v2454 = vsel %vm2453, %v2446, %v2450
    %v2455 = vand.u32 2147483647, %v2400
    %vm2456 = vcmp.eq.f32.partialorder %v2455, 8.507059e+37
    %v2457 = vand.u32 %v2400, 2147483648
    %v2458 = vor.u32 1.1754944e-38, %v2457
    %v2459 = vsel %vm2456, %v2458, %v2454
    %v2460 = vmul.f32 %v2364, %v2459
    %v2461 = vmul.f32 %v2415, %v2298
    %v2462 = vmul.f32 %v2430, %v2301
    %v2463 = vmul.f32 %v2445, %v2304
    %v2464 = vmul.f32 %v2460, %v2307
    %v2465 = vmul.f32 %v2415, %v2310
    %v2466 = vmul.f32 %v2430, %v2313
    %v2467 = vmul.f32 %v2445, %v2316
    %v2468 = vmul.f32 %v2460, %v2319
    %v2469 = vmul.f32 %v2415, %v2322
    %v2470 = vmul.f32 %v2430, %v2325
    %v2471 = vmul.f32 %v2445, %v2328
    %v2472 = vmul.f32 %v2460, %v2331
    %v2473 = vsub.f32 %v2268, %v2461
    %v2474 = vsub.f32 %v2269, %v2462
    %v2475 = vsub.f32 %v2270, %v2463
    %v2476 = vsub.f32 %v2271, %v2464
    %v2477 = vsub.f32 %v2272, %v2465
    %v2478 = vsub.f32 %v2273, %v2466
    %v2479 = vsub.f32 %v2274, %v2467
    %v2480 = vsub.f32 %v2275, %v2468
    %v2481 = vsub.f32 %v2276, %v2469
    %v2482 = vsub.f32 %v2277, %v2470
    %v2483 = vsub.f32 %v2278, %v2471
    %v2484 = vsub.f32 %v2279, %v2472
    %vm2485 = vcmp.ge.f32.partialorder %v2349, 0.0
    %vm2486 = vcmp.ge.f32.partialorder %v2354, 0.0
    %vm2487 = vcmp.ge.f32.partialorder %v2359, 0.0
    %vm2488 = vcmp.ge.f32.partialorder %v2364, 0.0
    %v2489 = vmul.f32 %v2268, 0.2
    %v2490 = vmul.f32 %v2269, 0.2
    %v2491 = vmul.f32 %v2270, 0.2
    %v2492 = vmul.f32 %v2271, 0.2
    %v2493 = vmul.f32 %v2272, 0.2
    %v2494 = vmul.f32 %v2273, 0.2
    %v2495 = vmul.f32 %v2274, 0.2
    %v2496 = vmul.f32 %v2275, 0.2
    %v2497 = vmul.f32 %v2276, 0.2
    %v2498 = vmul.f32 %v2277, 0.2
    %v2499 = vmul.f32 %v2278, 0.2
    %v2500 = vmul.f32 %v2279, 0.2
    %v2501 = vmul.f32 %v2473, 0.8
    %v2502 = vmul.f32 %v2474, 0.8
    %v2503 = vmul.f32 %v2475, 0.8
    %v2504 = vmul.f32 %v2476, 0.8
    %v2505 = vmul.f32 %v2477, 0.8
    %v2506 = vmul.f32 %v2478, 0.8
    %v2507 = vmul.f32 %v2479, 0.8
    %v2508 = vmul.f32 %v2480, 0.8
    %v2509 = vmul.f32 %v2481, 0.8
    %v2510 = vmul.f32 %v2482, 0.8
    %v2511 = vmul.f32 %v2483, 0.8
    %v2512 = vmul.f32 %v2484, 0.8
    %v2513 = vadd.f32 %v2489, %v2501
    %v2514 = vadd.f32 %v2490, %v2502
    %v2515 = vadd.f32 %v2491, %v2503
    %v2516 = vadd.f32 %v2492, %v2504
    %v2517 = vadd.f32 %v2493, %v2505
    %v2518 = vadd.f32 %v2494, %v2506
    %v2519 = vadd.f32 %v2495, %v2507
    %v2520 = vadd.f32 %v2496, %v2508
    %v2521 = vadd.f32 %v2497, %v2509
    %v2522 = vadd.f32 %v2498, %v2510
    %v2523 = vadd.f32 %v2499, %v2511
    %v2524 = vadd.f32 %v2500, %v2512
    %v2525 = vsel %vm2485, 1, 0
    %v2526 = vsel %vm2486, 1, 0
    %v2527 = vsel %vm2487, 1, 0
    %v2528 = vsel %vm2488, 1, 0
    %vm2529 = vcmp.eq.s32.totalorder %v2525, 1
    %vm2530 = vcmp.eq.s32.totalorder %v2526, 1
    %vm2531 = vcmp.eq.s32.totalorder %v2527, 1
    %vm2532 = vcmp.eq.s32.totalorder %v2528, 1
    %v2533 = vsel %vm2529, %v2268, %v2513
    %v2534 = vsel %vm2530, %v2269, %v2514
    %v2535 = vsel %vm2531, %v2270, %v2515
    %v2536 = vsel %vm2532, %v2271, %v2516
    %v2537 = vsel %vm2529, %v2272, %v2517
    %v2538 = vsel %vm2530, %v2273, %v2518
    %v2539 = vsel %vm2531, %v2274, %v2519
    %v2540 = vsel %vm2532, %v2275, %v2520
    %v2541 = vsel %vm2529, %v2276, %v2521
    %v2542 = vsel %vm2530, %v2277, %v2522
    %v2543 = vsel %vm2531, %v2278, %v2523
    %v2544 = vsel %vm2532, %v2279, %v2524
    %v2546 = vsel %vm192, %v2533, 0
    %v2549 = vsel %vm192, %v2534, 0
    %v2552 = vsel %vm192, %v2535, 0
    %v2555 = vsel %vm192, %v2536, 0
    %v2558 = vsel %vm192, %v2537, 0
    %v2561 = vsel %vm192, %v2538, 0
    %v2564 = vsel %vm192, %v2539, 0
    %v2567 = vsel %vm192, %v2540, 0
    %v2570 = vsel %vm192, %v2541, 0
    %v2573 = vsel %vm192, %v2542, 0
    %v2576 = vsel %vm192, %v2543, 0
    %v2579 = vsel %vm192, %v2544, 0
    %2581 = vmatpush.msra.mxu0 0.0
    %2582 = vmatpush.msra.mxu0 0.0
    %2583 = vmatpush.msra.mxu0 0.0
    %2584 = vmatpush.msra.mxu0 0.0
    %2585 = vmatpush.msra.mxu0 0.0
    %2586 = vmatpush.msra.mxu0 0.0
    %2587 = vmatpush.msra.mxu0 0.0
    %2588 = vmatpush.msra.mxu0 0.0
    %2589 = vmatpush.msra.mxu0 0.0
    %2590 = vmatpush.msra.mxu0 0.0
    %2591 = vmatpush.msra.mxu0 0.0
    %2592 = vmatpush.msra.mxu0 0.0
    %2593 = vmatpush.msra.mxu0 %v191
    %2594 = vmatpush.msra.mxu0 %v190
    %2595 = vmatpush.msra.mxu0 %v189
    %2596 = vmatpush.msra.mxu0 %v188
    %2597 = vmatmul.f32.gmra.mxu0 %v2546
    %v2598 = vpop.f32.mrf.mxu0
    %v2599 = vadd.f32 0.0, %v2598
    %2600 = vmatmul.f32.gmra.mxu0 %v2549
    %v2601 = vpop.f32.mrf.mxu0
    %v2602 = vadd.f32 0.0, %v2601
    %2603 = vmatmul.f32.gmra.mxu0 %v2552
    %v2604 = vpop.f32.mrf.mxu0
    %v2605 = vadd.f32 0.0, %v2604
    %2606 = vmatmul.f32.gmra.mxu0 %v2555
    %v2607 = vpop.f32.mrf.mxu0
    %v2608 = vadd.f32 0.0, %v2607
    %2609 = vmatmul.f32.gmra.mxu0 %v2558
    %v2610 = vpop.f32.mrf.mxu0
    %v2611 = vadd.f32 0.0, %v2610
    %2612 = vmatmul.f32.gmra.mxu0 %v2561
    %v2613 = vpop.f32.mrf.mxu0
    %v2614 = vadd.f32 0.0, %v2613
    %2615 = vmatmul.f32.gmra.mxu0 %v2564
    %v2616 = vpop.f32.mrf.mxu0
    %v2617 = vadd.f32 0.0, %v2616
    %2618 = vmatmul.f32.gmra.mxu0 %v2567
    %v2619 = vpop.f32.mrf.mxu0
    %v2620 = vadd.f32 0.0, %v2619
    %2621 = vmatmul.f32.gmra.mxu0 %v2570
    %v2622 = vpop.f32.mrf.mxu0
    %v2623 = vadd.f32 0.0, %v2622
    %2624 = vmatmul.f32.gmra.mxu0 %v2573
    %v2625 = vpop.f32.mrf.mxu0
    %v2626 = vadd.f32 0.0, %v2625
    %2627 = vmatmul.f32.gmra.mxu0 %v2576
    %v2628 = vpop.f32.mrf.mxu0
    %v2629 = vadd.f32 0.0, %v2628
    %2630 = vmatmul.f32.gmra.mxu0 %v2579
    %v2631 = vpop.f32.mrf.mxu0
    %v2632 = vadd.f32 0.0, %v2631
    %2633 = vdwg.mxu0
    %v2634 = vadd.f32 %v1949, %v2599
    %v2635 = vadd.f32 %v1950, %v2602
    %v2636 = vadd.f32 %v1951, %v2605
    %v2637 = vadd.f32 %v1952, %v2608
    %v2638 = vadd.f32 %v1953, %v2611
    %v2639 = vadd.f32 %v1954, %v2614
    %v2640 = vadd.f32 %v1955, %v2617
    %v2641 = vadd.f32 %v1956, %v2620
    %v2642 = vadd.f32 %v1957, %v2623
    %v2643 = vadd.f32 %v1958, %v2626
    %v2644 = vadd.f32 %v1959, %v2629
    %v2645 = vadd.f32 %v1960, %v2632
    %v2646 = vld [vmem:[%s7] sm:$0xff]
    %v2647 = vld [vmem:[%s7 + $0x8] sm:$0xff]
    %v2648 = vld [vmem:[%s7 + $0x10] sm:$0xff]
    %v2649 = vld [vmem:[%s7 + $0x18] sm:$0xff]
    %v2650 = vld [vmem:[%s8] sm:$0xff]
    %v2651 = vld [vmem:[%s8 + $0x8] sm:$0xff]
    %v2652 = vld [vmem:[%s8 + $0x10] sm:$0xff]
    %v2653 = vld [vmem:[%s8 + $0x18] sm:$0xff]
    %v2655 = vsel %vm192, %v2634, 0
    %v2658 = vsel %vm192, %v2635, 0
    %v2661 = vsel %vm192, %v2636, 0
    %v2664 = vsel %vm192, %v2637, 0
    %v2667 = vsel %vm192, %v2638, 0
    %v2670 = vsel %vm192, %v2639, 0
    %v2673 = vsel %vm192, %v2640, 0
    %v2676 = vsel %vm192, %v2641, 0
    %v2679 = vsel %vm192, %v2642, 0
    %v2682 = vsel %vm192, %v2643, 0
    %v2685 = vsel %vm192, %v2644, 0
    %v2688 = vsel %vm192, %v2645, 0
    %2690 = vmatpush.msra.mxu0 0.0
    %2691 = vmatpush.msra.mxu0 0.0
    %2692 = vmatpush.msra.mxu0 0.0
    %2693 = vmatpush.msra.mxu0 0.0
    %2694 = vmatpush.msra.mxu0 0.0
    %2695 = vmatpush.msra.mxu0 0.0
    %2696 = vmatpush.msra.mxu0 0.0
    %2697 = vmatpush.msra.mxu0 0.0
    %2698 = vmatpush.msra.mxu0 0.0
    %2699 = vmatpush.msra.mxu0 0.0
    %2700 = vmatpush.msra.mxu0 0.0
    %2701 = vmatpush.msra.mxu0 0.0
    %2702 = vmatpush.msra.mxu0 %v2649
    %2703 = vmatpush.msra.mxu0 %v2648
    %2704 = vmatpush.msra.mxu0 %v2647
    %2705 = vmatpush.msra.mxu0 %v2646
    %2706 = vmatmul.f32.gmra.mxu0 %v2655
    %v2707 = vpop.f32.mrf.mxu0
    %v2708 = vadd.f32 0.0, %v2707
    %2709 = vmatmul.f32.gmra.mxu0 %v2658
    %v2710 = vpop.f32.mrf.mxu0
    %v2711 = vadd.f32 0.0, %v2710
    %2712 = vmatmul.f32.gmra.mxu0 %v2661
    %v2713 = vpop.f32.mrf.mxu0
    %v2714 = vadd.f32 0.0, %v2713
    %2715 = vmatmul.f32.gmra.mxu0 %v2664
    %v2716 = vpop.f32.mrf.mxu0
    %v2717 = vadd.f32 0.0, %v2716
    %2718 = vmatmul.f32.gmra.mxu0 %v2667
    %v2719 = vpop.f32.mrf.mxu0
    %v2720 = vadd.f32 0.0, %v2719
    %2721 = vmatmul.f32.gmra.mxu0 %v2670
    %v2722 = vpop.f32.mrf.mxu0
    %v2723 = vadd.f32 0.0, %v2722
    %2724 = vmatmul.f32.gmra.mxu0 %v2673
    %v2725 = vpop.f32.mrf.mxu0
    %v2726 = vadd.f32 0.0, %v2725
    %2727 = vmatmul.f32.gmra.mxu0 %v2676
    %v2728 = vpop.f32.mrf.mxu0
    %v2729 = vadd.f32 0.0, %v2728
    %2730 = vmatmul.f32.gmra.mxu0 %v2679
    %v2731 = vpop.f32.mrf.mxu0
    %v2732 = vadd.f32 0.0, %v2731
    %2733 = vmatmul.f32.gmra.mxu0 %v2682
    %v2734 = vpop.f32.mrf.mxu0
    %v2735 = vadd.f32 0.0, %v2734
    %2736 = vmatmul.f32.gmra.mxu0 %v2685
    %v2737 = vpop.f32.mrf.mxu0
    %v2738 = vadd.f32 0.0, %v2737
    %2739 = vmatmul.f32.gmra.mxu0 %v2688
    %v2740 = vpop.f32.mrf.mxu0
    %v2741 = vadd.f32 0.0, %v2740
    %2742 = vdwg.mxu0
    %v2743 = vmul.f32 %v2708, %v2708
    %v2744 = vmul.f32 %v2711, %v2711
    %v2745 = vmul.f32 %v2714, %v2714
    %v2746 = vmul.f32 %v2717, %v2717
    %v2747 = vmul.f32 %v2720, %v2720
    %v2748 = vmul.f32 %v2723, %v2723
    %v2749 = vmul.f32 %v2726, %v2726
    %v2750 = vmul.f32 %v2729, %v2729
    %v2751 = vmul.f32 %v2732, %v2732
    %v2752 = vmul.f32 %v2735, %v2735
    %v2753 = vmul.f32 %v2738, %v2738
    %v2754 = vmul.f32 %v2741, %v2741
    %v2755 = vsel %vm192, %v2743, 0.0
    %v2756 = vsel %vm192, %v2747, 0.0
    %v2757 = vadd.f32 %v2755, %v2756
    %v2758 = vsel %vm192, %v2751, 0.0
    %v2759 = vadd.f32 %v2757, %v2758
    %v2760 = vsel %vm192, %v2744, 0.0
    %v2761 = vsel %vm192, %v2748, 0.0
    %v2762 = vadd.f32 %v2760, %v2761
    %v2763 = vsel %vm192, %v2752, 0.0
    %v2764 = vadd.f32 %v2762, %v2763
    %v2765 = vsel %vm192, %v2745, 0.0
    %v2766 = vsel %vm192, %v2749, 0.0
    %v2767 = vadd.f32 %v2765, %v2766
    %v2768 = vsel %vm192, %v2753, 0.0
    %v2769 = vadd.f32 %v2767, %v2768
    %v2770 = vsel %vm192, %v2746, 0.0
    %v2771 = vsel %vm192, %v2750, 0.0
    %v2772 = vadd.f32 %v2770, %v2771
    %v2773 = vsel %vm192, %v2754, 0.0
    %v2774 = vadd.f32 %v2772, %v2773
    %v2775 = vrsqrt.pop %v2759
    %v2776 = vmul.f32 %v2775, %v2759
    %v2777 = vmul.f32 %v2776, %v2775
    %v2778 = vmul.f32 0.5, %v2777
    %v2779 = vsub.f32 1.5, %v2778
    %v2780 = vmul.f32 %v2775, %v2779
    %v2781 = vmul.f32 %v2759, %v2780
    %vm2782 = vcmp.eq.f32.partialorder %v2759, inf
    %v2783 = vsel %vm2782, %v2759, %v2781
    %vm2784 = vcmp.eq.f32.partialorder %v2759, 0.0
    %v2785 = vand.u32 %v2759, 2147483648
    %v2786 = vsel %vm2784, %v2785, %v2783
    %v2787 = vrsqrt.pop %v2764
    %v2788 = vmul.f32 %v2787, %v2764
    %v2789 = vmul.f32 %v2788, %v2787
    %v2790 = vmul.f32 0.5, %v2789
    %v2791 = vsub.f32 1.5, %v2790
    %v2792 = vmul.f32 %v2787, %v2791
    %v2793 = vmul.f32 %v2764, %v2792
    %vm2794 = vcmp.eq.f32.partialorder %v2764, inf
    %v2795 = vsel %vm2794, %v2764, %v2793
    %vm2796 = vcmp.eq.f32.partialorder %v2764, 0.0
    %v2797 = vand.u32 %v2764, 2147483648
    %v2798 = vsel %vm2796, %v2797, %v2795
    %v2799 = vrsqrt.pop %v2769
    %v2800 = vmul.f32 %v2799, %v2769
    %v2801 = vmul.f32 %v2800, %v2799
    %v2802 = vmul.f32 0.5, %v2801
    %v2803 = vsub.f32 1.5, %v2802
    %v2804 = vmul.f32 %v2799, %v2803
    %v2805 = vmul.f32 %v2769, %v2804
    %vm2806 = vcmp.eq.f32.partialorder %v2769, inf
    %v2807 = vsel %vm2806, %v2769, %v2805
    %vm2808 = vcmp.eq.f32.partialorder %v2769, 0.0
    %v2809 = vand.u32 %v2769, 2147483648
    %v2810 = vsel %vm2808, %v2809, %v2807
    %v2811 = vrsqrt.pop %v2774
    %v2812 = vmul.f32 %v2811, %v2774
    %v2813 = vmul.f32 %v2812, %v2811
    %v2814 = vmul.f32 0.5, %v2813
    %v2815 = vsub.f32 1.5, %v2814
    %v2816 = vmul.f32 %v2811, %v2815
    %v2817 = vmul.f32 %v2774, %v2816
    %vm2818 = vcmp.eq.f32.partialorder %v2774, inf
    %v2819 = vsel %vm2818, %v2774, %v2817
    %vm2820 = vcmp.eq.f32.partialorder %v2774, 0.0
    %v2821 = vand.u32 %v2774, 2147483648
    %v2822 = vsel %vm2820, %v2821, %v2819
    %v2823 = vadd.f32 %v2786, 1e-06
    %v2824 = vadd.f32 %v2798, 1e-06
    %v2825 = vadd.f32 %v2810, 1e-06
    %v2826 = vadd.f32 %v2822, 1e-06
    %v2827 = vsel %vm192, %v2823, 0.0
    %v2828 = vsel %vm192, %v2824, 0.0
    %v2829 = vadd.f32 %v2827, %v2828
    %v2830 = vsel %vm192, %v2825, 0.0
    %v2831 = vadd.f32 %v2829, %v2830
    %v2832 = vsel %vm192, %v2826, 0.0
    %v2833 = vadd.f32 %v2831, %v2832
    %v2834 = vrot.slane %v2833, 4
    %v2835 = vadd.f32 %v2833, %v2834
    %v2836 = vrot.slane %v2835, 2
    %v2837 = vadd.f32 %v2835, %v2836
    %v2838 = vrot.slane %v2837, 1
    %v2839 = vadd.f32 %v2837, %v2838
    %v2840 = vmul.f32 %v2839, %v2153
    %v2841 = vsub.f32 %v2823, %v2840
    %v2842 = vsub.f32 %v2824, %v2840
    %v2843 = vsub.f32 %v2825, %v2840
    %v2844 = vsub.f32 %v2826, %v2840
    %v2845 = vmul.f32 %v2841, %v2841
    %v2846 = vmul.f32 %v2842, %v2842
    %v2847 = vmul.f32 %v2843, %v2843
    %v2848 = vmul.f32 %v2844, %v2844
    %v2849 = vsel %vm192, %v2845, 0.0
    %v2850 = vsel %vm192, %v2846, 0.0
    %v2851 = vadd.f32 %v2849, %v2850
    %v2852 = vsel %vm192, %v2847, 0.0
    %v2853 = vadd.f32 %v2851, %v2852
    %v2854 = vsel %vm192, %v2848, 0.0
    %v2855 = vadd.f32 %v2853, %v2854
    %v2856 = vrot.slane %v2855, 4
    %v2857 = vadd.f32 %v2855, %v2856
    %v2858 = vrot.slane %v2857, 2
    %v2859 = vadd.f32 %v2857, %v2858
    %v2860 = vrot.slane %v2859, 1
    %v2861 = vadd.f32 %v2859, %v2860
    %v2862 = vmul.f32 %v2861, %v2153
    %v2863 = vadd.f32 %v2862, 1e-05
    %v2864 = vrsqrt.pop %v2863
    %v2865 = vmul.f32 %v2864, %v2863
    %v2866 = vmul.f32 %v2865, %v2864
    %v2867 = vmul.f32 0.5, %v2866
    %v2868 = vsub.f32 1.5, %v2867
    %v2869 = vmul.f32 %v2864, %v2868
    %v2870 = vmul.f32 %v2863, %v2869
    %vm2871 = vcmp.eq.f32.partialorder %v2863, inf
    %v2872 = vsel %vm2871, %v2863, %v2870
    %vm2873 = vcmp.eq.f32.partialorder %v2863, 0.0
    %v2874 = vand.u32 %v2863, 2147483648
    %v2875 = vsel %vm2873, %v2874, %v2872
    %v2876 = vrcp.pop %v2875
    %v2877 = vmul.f32 %v2875, %v2876
    %v2878 = vsub.f32 1.0, %v2877
    %v2879 = vmul.f32 %v2876, %v2878
    %v2880 = vadd.f32 %v2876, %v2879
    %vm2881 = vweird.f32 %v2875
    %vm2882 = vweird.f32 %v2876
    %vm2883 = vmor %vm2881, %vm2882
    %v2884 = vsel %vm2883, %v2876, %v2880
    %v2885 = vand.u32 2147483647, %v2875
    %vm2886 = vcmp.eq.f32.partialorder %v2885, 8.507059e+37
    %v2887 = vand.u32 %v2875, 2147483648
    %v2888 = vor.u32 1.1754944e-38, %v2887
    %v2889 = vsel %vm2886, %v2888, %v2884
    %v2890 = vmul.f32 %v2841, %v2889
    %v2891 = vmul.f32 %v2842, %v2889
    %v2892 = vmul.f32 %v2843, %v2889
    %v2893 = vmul.f32 %v2844, %v2889
    %v2894 = vrcp.pop %v2823
    %v2895 = vmul.f32 %v2823, %v2894
    %v2896 = vsub.f32 1.0, %v2895
    %v2897 = vmul.f32 %v2894, %v2896
    %v2898 = vadd.f32 %v2894, %v2897
    %vm2899 = vweird.f32 %v2823
    %vm2900 = vweird.f32 %v2894
    %vm2901 = vmor %vm2899, %vm2900
    %v2902 = vsel %vm2901, %v2894, %v2898
    %v2903 = vand.u32 2147483647, %v2823
    %vm2904 = vcmp.eq.f32.partialorder %v2903, 8.507059e+37
    %v2905 = vand.u32 %v2823, 2147483648
    %v2906 = vor.u32 1.1754944e-38, %v2905
    %v2907 = vsel %vm2904, %v2906, %v2902
    %v2908 = vmul.f32 %v2890, %v2907
    %v2909 = vrcp.pop %v2824
    %v2910 = vmul.f32 %v2824, %v2909
    %v2911 = vsub.f32 1.0, %v2910
    %v2912 = vmul.f32 %v2909, %v2911
    %v2913 = vadd.f32 %v2909, %v2912
    %vm2914 = vweird.f32 %v2824
    %vm2915 = vweird.f32 %v2909
    %vm2916 = vmor %vm2914, %vm2915
    %v2917 = vsel %vm2916, %v2909, %v2913
    %v2918 = vand.u32 2147483647, %v2824
    %vm2919 = vcmp.eq.f32.partialorder %v2918, 8.507059e+37
    %v2920 = vand.u32 %v2824, 2147483648
    %v2921 = vor.u32 1.1754944e-38, %v2920
    %v2922 = vsel %vm2919, %v2921, %v2917
    %v2923 = vmul.f32 %v2891, %v2922
    %v2924 = vrcp.pop %v2825
    %v2925 = vmul.f32 %v2825, %v2924
    %v2926 = vsub.f32 1.0, %v2925
    %v2927 = vmul.f32 %v2924, %v2926
    %v2928 = vadd.f32 %v2924, %v2927
    %vm2929 = vweird.f32 %v2825
    %vm2930 = vweird.f32 %v2924
    %vm2931 = vmor %vm2929, %vm2930
    %v2932 = vsel %vm2931, %v2924, %v2928
    %v2933 = vand.u32 2147483647, %v2825
    %vm2934 = vcmp.eq.f32.partialorder %v2933, 8.507059e+37
    %v2935 = vand.u32 %v2825, 2147483648
    %v2936 = vor.u32 1.1754944e-38, %v2935
    %v2937 = vsel %vm2934, %v2936, %v2932
    %v2938 = vmul.f32 %v2892, %v2937
    %v2939 = vrcp.pop %v2826
    %v2940 = vmul.f32 %v2826, %v2939
    %v2941 = vsub.f32 1.0, %v2940
    %v2942 = vmul.f32 %v2939, %v2941
    %v2943 = vadd.f32 %v2939, %v2942
    %vm2944 = vweird.f32 %v2826
    %vm2945 = vweird.f32 %v2939
    %vm2946 = vmor %vm2944, %vm2945
    %v2947 = vsel %vm2946, %v2939, %v2943
    %v2948 = vand.u32 2147483647, %v2826
    %vm2949 = vcmp.eq.f32.partialorder %v2948, 8.507059e+37
    %v2950 = vand.u32 %v2826, 2147483648
    %v2951 = vor.u32 1.1754944e-38, %v2950
    %v2952 = vsel %vm2949, %v2951, %v2947
    %v2953 = vmul.f32 %v2893, %v2952
    %v2954 = vmul.f32 %v2708, %v2908
    %v2955 = vmul.f32 %v2711, %v2923
    %v2956 = vmul.f32 %v2714, %v2938
    %v2957 = vmul.f32 %v2717, %v2953
    %v2958 = vmul.f32 %v2720, %v2908
    %v2959 = vmul.f32 %v2723, %v2923
    %v2960 = vmul.f32 %v2726, %v2938
    %v2961 = vmul.f32 %v2729, %v2953
    %v2962 = vmul.f32 %v2732, %v2908
    %v2963 = vmul.f32 %v2735, %v2923
    %v2964 = vmul.f32 %v2738, %v2938
    %v2965 = vmul.f32 %v2741, %v2953
    %2966 = vmatpush.msra.mxu0 0.0
    %2967 = vmatpush.msra.mxu0 0.0
    %2968 = vmatpush.msra.mxu0 0.0
    %2969 = vmatpush.msra.mxu0 0.0
    %2970 = vmatpush.msra.mxu0 0.0
    %2971 = vmatpush.msra.mxu0 0.0
    %2972 = vmatpush.msra.mxu0 0.0
    %2973 = vmatpush.msra.mxu0 0.0
    %2974 = vmatpush.msra.mxu0 0.0
    %2975 = vmatpush.msra.mxu0 0.0
    %2976 = vmatpush.msra.mxu0 0.0
    %2977 = vmatpush.msra.mxu0 0.0
    %2978 = vmatpush.msra.mxu0 %v2653
    %2979 = vmatpush.msra.mxu0 %v2652
    %2980 = vmatpush.msra.mxu0 %v2651
    %2981 = vmatpush.msra.mxu0 %v2650
    %2982 = vmatmul.f32.gmra.mxu0 %v2655
    %v2983 = vpop.f32.mrf.mxu0
    %v2984 = vadd.f32 0.0, %v2983
    %2985 = vmatmul.f32.gmra.mxu0 %v2658
    %v2986 = vpop.f32.mrf.mxu0
    %v2987 = vadd.f32 0.0, %v2986
    %2988 = vmatmul.f32.gmra.mxu0 %v2661
    %v2989 = vpop.f32.mrf.mxu0
    %v2990 = vadd.f32 0.0, %v2989
    %2991 = vmatmul.f32.gmra.mxu0 %v2664
    %v2992 = vpop.f32.mrf.mxu0
    %v2993 = vadd.f32 0.0, %v2992
    %2994 = vmatmul.f32.gmra.mxu0 %v2667
    %v2995 = vpop.f32.mrf.mxu0
    %v2996 = vadd.f32 0.0, %v2995
    %2997 = vmatmul.f32.gmra.mxu0 %v2670
    %v2998 = vpop.f32.mrf.mxu0
    %v2999 = vadd.f32 0.0, %v2998
    %3000 = vmatmul.f32.gmra.mxu0 %v2673
    %v3001 = vpop.f32.mrf.mxu0
    %v3002 = vadd.f32 0.0, %v3001
    %3003 = vmatmul.f32.gmra.mxu0 %v2676
    %v3004 = vpop.f32.mrf.mxu0
    %v3005 = vadd.f32 0.0, %v3004
    %3006 = vmatmul.f32.gmra.mxu0 %v2679
    %v3007 = vpop.f32.mrf.mxu0
    %v3008 = vadd.f32 0.0, %v3007
    %3009 = vmatmul.f32.gmra.mxu0 %v2682
    %v3010 = vpop.f32.mrf.mxu0
    %v3011 = vadd.f32 0.0, %v3010
    %3012 = vmatmul.f32.gmra.mxu0 %v2685
    %v3013 = vpop.f32.mrf.mxu0
    %v3014 = vadd.f32 0.0, %v3013
    %3015 = vmatmul.f32.gmra.mxu0 %v2688
    %v3016 = vpop.f32.mrf.mxu0
    %v3017 = vadd.f32 0.0, %v3016
    %3018 = vdwg.mxu0
    %v3019 = vmul.f32 %v2954, %v2984
    %v3020 = vmul.f32 %v2955, %v2987
    %v3021 = vmul.f32 %v2956, %v2990
    %v3022 = vmul.f32 %v2957, %v2993
    %v3023 = vmul.f32 %v2958, %v2996
    %v3024 = vmul.f32 %v2959, %v2999
    %v3025 = vmul.f32 %v2960, %v3002
    %v3026 = vmul.f32 %v2961, %v3005
    %v3027 = vmul.f32 %v2962, %v3008
    %v3028 = vmul.f32 %v2963, %v3011
    %v3029 = vmul.f32 %v2964, %v3014
    %v3030 = vmul.f32 %v2965, %v3017
    %v3031 = vsel %vm192, %v3019, 0.0
    %v3032 = vsel %vm192, %v3023, 0.0
    %v3033 = vadd.f32 %v3031, %v3032
    %v3034 = vsel %vm192, %v3027, 0.0
    %v3035 = vadd.f32 %v3033, %v3034
    %v3036 = vsel %vm192, %v3020, 0.0
    %v3037 = vsel %vm192, %v3024, 0.0
    %v3038 = vadd.f32 %v3036, %v3037
    %v3039 = vsel %vm192, %v3028, 0.0
    %v3040 = vadd.f32 %v3038, %v3039
    %v3041 = vsel %vm192, %v3021, 0.0
    %v3042 = vsel %vm192, %v3025, 0.0
    %v3043 = vadd.f32 %v3041, %v3042
    %v3044 = vsel %vm192, %v3029, 0.0
    %v3045 = vadd.f32 %v3043, %v3044
    %v3046 = vsel %vm192, %v3022, 0.0
    %v3047 = vsel %vm192, %v3026, 0.0
    %v3048 = vadd.f32 %v3046, %v3047
    %v3049 = vsel %vm192, %v3030, 0.0
    %v3050 = vadd.f32 %v3048, %v3049
    %v3051 = vmul.f32 %v2984, %v2984
    %v3052 = vmul.f32 %v2987, %v2987
    %v3053 = vmul.f32 %v2990, %v2990
    %v3054 = vmul.f32 %v2993, %v2993
    %v3055 = vmul.f32 %v2996, %v2996
    %v3056 = vmul.f32 %v2999, %v2999
    %v3057 = vmul.f32 %v3002, %v3002
    %v3058 = vmul.f32 %v3005, %v3005
    %v3059 = vmul.f32 %v3008, %v3008
    %v3060 = vmul.f32 %v3011, %v3011
    %v3061 = vmul.f32 %v3014, %v3014
    %v3062 = vmul.f32 %v3017, %v3017
    %v3063 = vsel %vm192, %v3051, 0.0
    %v3064 = vsel %vm192, %v3055, 0.0
    %v3065 = vadd.f32 %v3063, %v3064
    %v3066 = vsel %vm192, %v3059, 0.0
    %v3067 = vadd.f32 %v3065, %v3066
    %v3068 = vsel %vm192, %v3052, 0.0
    %v3069 = vsel %vm192, %v3056, 0.0
    %v3070 = vadd.f32 %v3068, %v3069
    %v3071 = vsel %vm192, %v3060, 0.0
    %v3072 = vadd.f32 %v3070, %v3071
    %v3073 = vsel %vm192, %v3053, 0.0
    %v3074 = vsel %vm192, %v3057, 0.0
    %v3075 = vadd.f32 %v3073, %v3074
    %v3076 = vsel %vm192, %v3061, 0.0
    %v3077 = vadd.f32 %v3075, %v3076
    %v3078 = vsel %vm192, %v3054, 0.0
    %v3079 = vsel %vm192, %v3058, 0.0
    %v3080 = vadd.f32 %v3078, %v3079
    %v3081 = vsel %vm192, %v3062, 0.0
    %v3082 = vadd.f32 %v3080, %v3081
    %v3083 = vadd.f32 %v3067, 1e-06
    %v3084 = vadd.f32 %v3072, 1e-06
    %v3085 = vadd.f32 %v3077, 1e-06
    %v3086 = vadd.f32 %v3082, 1e-06
    %v3087 = vrcp.pop %v3083
    %v3088 = vmul.f32 %v3083, %v3087
    %v3089 = vsub.f32 1.0, %v3088
    %v3090 = vmul.f32 %v3087, %v3089
    %v3091 = vadd.f32 %v3087, %v3090
    %vm3092 = vweird.f32 %v3083
    %vm3093 = vweird.f32 %v3087
    %vm3094 = vmor %vm3092, %vm3093
    %v3095 = vsel %vm3094, %v3087, %v3091
    %v3096 = vand.u32 2147483647, %v3083
    %vm3097 = vcmp.eq.f32.partialorder %v3096, 8.507059e+37
    %v3098 = vand.u32 %v3083, 2147483648
    %v3099 = vor.u32 1.1754944e-38, %v3098
    %v3100 = vsel %vm3097, %v3099, %v3095
    %v3101 = vmul.f32 %v3035, %v3100
    %v3102 = vrcp.pop %v3084
    %v3103 = vmul.f32 %v3084, %v3102
    %v3104 = vsub.f32 1.0, %v3103
    %v3105 = vmul.f32 %v3102, %v3104
    %v3106 = vadd.f32 %v3102, %v3105
    %vm3107 = vweird.f32 %v3084
    %vm3108 = vweird.f32 %v3102
    %vm3109 = vmor %vm3107, %vm3108
    %v3110 = vsel %vm3109, %v3102, %v3106
    %v3111 = vand.u32 2147483647, %v3084
    %vm3112 = vcmp.eq.f32.partialorder %v3111, 8.507059e+37
    %v3113 = vand.u32 %v3084, 2147483648
    %v3114 = vor.u32 1.1754944e-38, %v3113
    %v3115 = vsel %vm3112, %v3114, %v3110
    %v3116 = vmul.f32 %v3040, %v3115
    %v3117 = vrcp.pop %v3085
    %v3118 = vmul.f32 %v3085, %v3117
    %v3119 = vsub.f32 1.0, %v3118
    %v3120 = vmul.f32 %v3117, %v3119
    %v3121 = vadd.f32 %v3117, %v3120
    %vm3122 = vweird.f32 %v3085
    %vm3123 = vweird.f32 %v3117
    %vm3124 = vmor %vm3122, %vm3123
    %v3125 = vsel %vm3124, %v3117, %v3121
    %v3126 = vand.u32 2147483647, %v3085
    %vm3127 = vcmp.eq.f32.partialorder %v3126, 8.507059e+37
    %v3128 = vand.u32 %v3085, 2147483648
    %v3129 = vor.u32 1.1754944e-38, %v3128
    %v3130 = vsel %vm3127, %v3129, %v3125
    %v3131 = vmul.f32 %v3045, %v3130
    %v3132 = vrcp.pop %v3086
    %v3133 = vmul.f32 %v3086, %v3132
    %v3134 = vsub.f32 1.0, %v3133
    %v3135 = vmul.f32 %v3132, %v3134
    %v3136 = vadd.f32 %v3132, %v3135
    %vm3137 = vweird.f32 %v3086
    %vm3138 = vweird.f32 %v3132
    %vm3139 = vmor %vm3137, %vm3138
    %v3140 = vsel %vm3139, %v3132, %v3136
    %v3141 = vand.u32 2147483647, %v3086
    %vm3142 = vcmp.eq.f32.partialorder %v3141, 8.507059e+37
    %v3143 = vand.u32 %v3086, 2147483648
    %v3144 = vor.u32 1.1754944e-38, %v3143
    %v3145 = vsel %vm3142, %v3144, %v3140
    %v3146 = vmul.f32 %v3050, %v3145
    %v3147 = vmul.f32 %v3101, %v2984
    %v3148 = vmul.f32 %v3116, %v2987
    %v3149 = vmul.f32 %v3131, %v2990
    %v3150 = vmul.f32 %v3146, %v2993
    %v3151 = vmul.f32 %v3101, %v2996
    %v3152 = vmul.f32 %v3116, %v2999
    %v3153 = vmul.f32 %v3131, %v3002
    %v3154 = vmul.f32 %v3146, %v3005
    %v3155 = vmul.f32 %v3101, %v3008
    %v3156 = vmul.f32 %v3116, %v3011
    %v3157 = vmul.f32 %v3131, %v3014
    %v3158 = vmul.f32 %v3146, %v3017
    %v3159 = vsub.f32 %v2954, %v3147
    %v3160 = vsub.f32 %v2955, %v3148
    %v3161 = vsub.f32 %v2956, %v3149
    %v3162 = vsub.f32 %v2957, %v3150
    %v3163 = vsub.f32 %v2958, %v3151
    %v3164 = vsub.f32 %v2959, %v3152
    %v3165 = vsub.f32 %v2960, %v3153
    %v3166 = vsub.f32 %v2961, %v3154
    %v3167 = vsub.f32 %v2962, %v3155
    %v3168 = vsub.f32 %v2963, %v3156
    %v3169 = vsub.f32 %v2964, %v3157
    %v3170 = vsub.f32 %v2965, %v3158
    %vm3171 = vcmp.ge.f32.partialorder %v3035, 0.0
    %vm3172 = vcmp.ge.f32.partialorder %v3040, 0.0
    %vm3173 = vcmp.ge.f32.partialorder %v3045, 0.0
    %vm3174 = vcmp.ge.f32.partialorder %v3050, 0.0
    %v3175 = vmul.f32 %v2954, 0.2
    %v3176 = vmul.f32 %v2955, 0.2
    %v3177 = vmul.f32 %v2956, 0.2
    %v3178 = vmul.f32 %v2957, 0.2
    %v3179 = vmul.f32 %v2958, 0.2
    %v3180 = vmul.f32 %v2959, 0.2
    %v3181 = vmul.f32 %v2960, 0.2
    %v3182 = vmul.f32 %v2961, 0.2
    %v3183 = vmul.f32 %v2962, 0.2
    %v3184 = vmul.f32 %v2963, 0.2
    %v3185 = vmul.f32 %v2964, 0.2
    %v3186 = vmul.f32 %v2965, 0.2
    %v3187 = vmul.f32 %v3159, 0.8
    %v3188 = vmul.f32 %v3160, 0.8
    %v3189 = vmul.f32 %v3161, 0.8
    %v3190 = vmul.f32 %v3162, 0.8
    %v3191 = vmul.f32 %v3163, 0.8
    %v3192 = vmul.f32 %v3164, 0.8
    %v3193 = vmul.f32 %v3165, 0.8
    %v3194 = vmul.f32 %v3166, 0.8
    %v3195 = vmul.f32 %v3167, 0.8
    %v3196 = vmul.f32 %v3168, 0.8
    %v3197 = vmul.f32 %v3169, 0.8
    %v3198 = vmul.f32 %v3170, 0.8
    %v3199 = vadd.f32 %v3175, %v3187
    %v3200 = vadd.f32 %v3176, %v3188
    %v3201 = vadd.f32 %v3177, %v3189
    %v3202 = vadd.f32 %v3178, %v3190
    %v3203 = vadd.f32 %v3179, %v3191
    %v3204 = vadd.f32 %v3180, %v3192
    %v3205 = vadd.f32 %v3181, %v3193
    %v3206 = vadd.f32 %v3182, %v3194
    %v3207 = vadd.f32 %v3183, %v3195
    %v3208 = vadd.f32 %v3184, %v3196
    %v3209 = vadd.f32 %v3185, %v3197
    %v3210 = vadd.f32 %v3186, %v3198
    %v3211 = vsel %vm3171, 1, 0
    %v3212 = vsel %vm3172, 1, 0
    %v3213 = vsel %vm3173, 1, 0
    %v3214 = vsel %vm3174, 1, 0
    %vm3215 = vcmp.eq.s32.totalorder %v3211, 1
    %vm3216 = vcmp.eq.s32.totalorder %v3212, 1
    %vm3217 = vcmp.eq.s32.totalorder %v3213, 1
    %vm3218 = vcmp.eq.s32.totalorder %v3214, 1
    %v3219 = vsel %vm3215, %v2954, %v3199
    %v3220 = vsel %vm3216, %v2955, %v3200
    %v3221 = vsel %vm3217, %v2956, %v3201
    %v3222 = vsel %vm3218, %v2957, %v3202
    %v3223 = vsel %vm3215, %v2958, %v3203
    %v3224 = vsel %vm3216, %v2959, %v3204
    %v3225 = vsel %vm3217, %v2960, %v3205
    %v3226 = vsel %vm3218, %v2961, %v3206
    %v3227 = vsel %vm3215, %v2962, %v3207
    %v3228 = vsel %vm3216, %v2963, %v3208
    %v3229 = vsel %vm3217, %v2964, %v3209
    %v3230 = vsel %vm3218, %v2965, %v3210
    %v3231 = vld [vmem:[%s9] sm:$0xff]
    %v3232 = vld [vmem:[%s9 + $0x8] sm:$0xff]
    %v3233 = vld [vmem:[%s9 + $0x10] sm:$0xff]
    %v3234 = vld [vmem:[%s9 + $0x18] sm:$0xff]
    %v3235 = vld [vmem:[%s10] sm:$0xff]
    %v3236 = vld [vmem:[%s10 + $0x8] sm:$0xff]
    %v3237 = vld [vmem:[%s10 + $0x10] sm:$0xff]
    %v3238 = vld [vmem:[%s10 + $0x18] sm:$0xff]
    %v3239 = vld [vmem:[%s11] sm:$0xff]
    %v3240 = vld [vmem:[%s11 + $0x8] sm:$0xff]
    %v3241 = vld [vmem:[%s11 + $0x10] sm:$0xff]
    %v3242 = vld [vmem:[%s11 + $0x18] sm:$0xff]
    %v3243 = vld [vmem:[%s12] sm:$0xff]
    %v3244 = vld [vmem:[%s12 + $0x8] sm:$0xff]
    %v3245 = vld [vmem:[%s12 + $0x10] sm:$0xff]
    %v3246 = vld [vmem:[%s12 + $0x18] sm:$0xff]
    %v3247 = vld [vmem:[%s13] sm:$0xff]
    %v3248 = vld [vmem:[%s13 + $0x8] sm:$0xff]
    %v3249 = vld [vmem:[%s13 + $0x10] sm:$0xff]
    %v3250 = vld [vmem:[%s13 + $0x18] sm:$0xff]
    %v3252 = vsel %vm192, %v3219, 0
    %v3255 = vsel %vm192, %v3220, 0
    %v3258 = vsel %vm192, %v3221, 0
    %v3261 = vsel %vm192, %v3222, 0
    %v3264 = vsel %vm192, %v3223, 0
    %v3267 = vsel %vm192, %v3224, 0
    %v3270 = vsel %vm192, %v3225, 0
    %v3273 = vsel %vm192, %v3226, 0
    %v3276 = vsel %vm192, %v3227, 0
    %v3279 = vsel %vm192, %v3228, 0
    %v3282 = vsel %vm192, %v3229, 0
    %v3285 = vsel %vm192, %v3230, 0
    %3287 = vmatpush.msra.mxu0 0.0
    %3288 = vmatpush.msra.mxu0 0.0
    %3289 = vmatpush.msra.mxu0 0.0
    %3290 = vmatpush.msra.mxu0 0.0
    %3291 = vmatpush.msra.mxu0 0.0
    %3292 = vmatpush.msra.mxu0 0.0
    %3293 = vmatpush.msra.mxu0 0.0
    %3294 = vmatpush.msra.mxu0 0.0
    %3295 = vmatpush.msra.mxu0 0.0
    %3296 = vmatpush.msra.mxu0 0.0
    %3297 = vmatpush.msra.mxu0 0.0
    %3298 = vmatpush.msra.mxu0 0.0
    %3299 = vmatpush.msra.mxu0 %v3234
    %3300 = vmatpush.msra.mxu0 %v3233
    %3301 = vmatpush.msra.mxu0 %v3232
    %3302 = vmatpush.msra.mxu0 %v3231
    %3303 = vmatmul.f32.gmra.mxu0 %v3252
    %v3304 = vpop.f32.mrf.mxu0
    %v3305 = vadd.f32 0.0, %v3304
    %3306 = vmatmul.f32.gmra.mxu0 %v3255
    %v3307 = vpop.f32.mrf.mxu0
    %v3308 = vadd.f32 0.0, %v3307
    %3309 = vmatmul.f32.gmra.mxu0 %v3258
    %v3310 = vpop.f32.mrf.mxu0
    %v3311 = vadd.f32 0.0, %v3310
    %3312 = vmatmul.f32.gmra.mxu0 %v3261
    %v3313 = vpop.f32.mrf.mxu0
    %v3314 = vadd.f32 0.0, %v3313
    %3315 = vmatmul.f32.gmra.mxu0 %v3264
    %v3316 = vpop.f32.mrf.mxu0
    %v3317 = vadd.f32 0.0, %v3316
    %3318 = vmatmul.f32.gmra.mxu0 %v3267
    %v3319 = vpop.f32.mrf.mxu0
    %v3320 = vadd.f32 0.0, %v3319
    %3321 = vmatmul.f32.gmra.mxu0 %v3270
    %v3322 = vpop.f32.mrf.mxu0
    %v3323 = vadd.f32 0.0, %v3322
    %3324 = vmatmul.f32.gmra.mxu0 %v3273
    %v3325 = vpop.f32.mrf.mxu0
    %v3326 = vadd.f32 0.0, %v3325
    %3327 = vmatmul.f32.gmra.mxu0 %v3276
    %v3328 = vpop.f32.mrf.mxu0
    %v3329 = vadd.f32 0.0, %v3328
    %3330 = vmatmul.f32.gmra.mxu0 %v3279
    %v3331 = vpop.f32.mrf.mxu0
    %v3332 = vadd.f32 0.0, %v3331
    %3333 = vmatmul.f32.gmra.mxu0 %v3282
    %v3334 = vpop.f32.mrf.mxu0
    %v3335 = vadd.f32 0.0, %v3334
    %3336 = vmatmul.f32.gmra.mxu0 %v3285
    %v3337 = vpop.f32.mrf.mxu0
    %v3338 = vadd.f32 0.0, %v3337
    %3339 = vdwg.mxu0
    %3344 = vrot.lane.b32.xlu0 %v3317, 8
    %v3345 = vpop.permute.xlu0 %3344
    %3346 = vrot.lane.b32.xlu0 %v3320, 8
    %v3347 = vpop.permute.xlu0 %3346
    %3348 = vrot.lane.b32.xlu0 %v3323, 8
    %v3349 = vpop.permute.xlu0 %3348
    %3350 = vrot.lane.b32.xlu0 %v3326, 8
    %v3351 = vpop.permute.xlu0 %3350
    %3360 = vrot.lane.b32.xlu0 %v3329, 16
    %v3361 = vpop.permute.xlu0 %3360
    %3362 = vrot.lane.b32.xlu0 %v3332, 16
    %v3363 = vpop.permute.xlu0 %3362
    %3364 = vrot.lane.b32.xlu0 %v3335, 16
    %v3365 = vpop.permute.xlu0 %3364
    %3366 = vrot.lane.b32.xlu0 %v3338, 16
    %v3367 = vpop.permute.xlu0 %3366
    %v3372 = vsel %vm82, %v3305, %v3345
    %v3373 = vsel %vm82, %v3308, %v3347
    %v3374 = vsel %vm82, %v3311, %v3349
    %v3375 = vsel %vm82, %v3314, %v3351
    %v3376 = vsel %vm318, %v3372, %v3361
    %v3377 = vsel %vm318, %v3373, %v3363
    %v3378 = vsel %vm318, %v3374, %v3365
    %v3379 = vsel %vm318, %v3375, %v3367
    %3384 = vrot.lane.b32.xlu0 %v3305, 120
    %v3385 = vpop.permute.xlu0 %3384
    %3386 = vrot.lane.b32.xlu0 %v3308, 120
    %v3387 = vpop.permute.xlu0 %3386
    %3388 = vrot.lane.b32.xlu0 %v3311, 120
    %v3389 = vpop.permute.xlu0 %3388
    %3390 = vrot.lane.b32.xlu0 %v3314, 120
    %v3391 = vpop.permute.xlu0 %3390
    %3396 = vrot.lane.b32.xlu0 %v3329, 8
    %v3397 = vpop.permute.xlu0 %3396
    %3398 = vrot.lane.b32.xlu0 %v3332, 8
    %v3399 = vpop.permute.xlu0 %3398
    %3400 = vrot.lane.b32.xlu0 %v3335, 8
    %v3401 = vpop.permute.xlu0 %3400
    %3402 = vrot.lane.b32.xlu0 %v3338, 8
    %v3403 = vpop.permute.xlu0 %3402
    %v3408 = vsel %vm82, %v3385, %v3317
    %v3409 = vsel %vm82, %v3387, %v3320
    %v3410 = vsel %vm82, %v3389, %v3323
    %v3411 = vsel %vm82, %v3391, %v3326
    %v3412 = vsel %vm318, %v3408, %v3397
    %v3413 = vsel %vm318, %v3409, %v3399
    %v3414 = vsel %vm318, %v3410, %v3401
    %v3415 = vsel %vm318, %v3411, %v3403
    %3416 = vrot.lane.b32.xlu0 %v3305, 112
    %v3417 = vpop.permute.xlu0 %3416
    %3418 = vrot.lane.b32.xlu0 %v3308, 112
    %v3419 = vpop.permute.xlu0 %3418
    %3420 = vrot.lane.b32.xlu0 %v3311, 112
    %v3421 = vpop.permute.xlu0 %3420
    %3422 = vrot.lane.b32.xlu0 %v3314, 112
    %v3423 = vpop.permute.xlu0 %3422
    %3428 = vrot.lane.b32.xlu0 %v3317, 120
    %v3429 = vpop.permute.xlu0 %3428
    %3430 = vrot.lane.b32.xlu0 %v3320, 120
    %v3431 = vpop.permute.xlu0 %3430
    %3432 = vrot.lane.b32.xlu0 %v3323, 120
    %v3433 = vpop.permute.xlu0 %3432
    %3434 = vrot.lane.b32.xlu0 %v3326, 120
    %v3435 = vpop.permute.xlu0 %3434
    %v3440 = vsel %vm82, %v3417, %v3429
    %v3441 = vsel %vm82, %v3419, %v3431
    %v3442 = vsel %vm82, %v3421, %v3433
    %v3443 = vsel %vm82, %v3423, %v3435
    %v3444 = vsel %vm318, %v3440, %v3329
    %v3445 = vsel %vm318, %v3441, %v3332
    %v3446 = vsel %vm318, %v3442, %v3335
    %v3447 = vsel %vm318, %v3443, %v3338
    %3448 = vrot.lane.b32.xlu0 %v3305, 104
    %v3449 = vpop.permute.xlu0 %3448
    %3450 = vrot.lane.b32.xlu0 %v3308, 104
    %v3451 = vpop.permute.xlu0 %3450
    %3452 = vrot.lane.b32.xlu0 %v3311, 104
    %v3453 = vpop.permute.xlu0 %3452
    %3454 = vrot.lane.b32.xlu0 %v3314, 104
    %v3455 = vpop.permute.xlu0 %3454
    %3460 = vrot.lane.b32.xlu0 %v3317, 112
    %v3461 = vpop.permute.xlu0 %3460
    %3462 = vrot.lane.b32.xlu0 %v3320, 112
    %v3463 = vpop.permute.xlu0 %3462
    %3464 = vrot.lane.b32.xlu0 %v3323, 112
    %v3465 = vpop.permute.xlu0 %3464
    %3466 = vrot.lane.b32.xlu0 %v3326, 112
    %v3467 = vpop.permute.xlu0 %3466
    %3472 = vrot.lane.b32.xlu0 %v3329, 120
    %v3473 = vpop.permute.xlu0 %3472
    %3474 = vrot.lane.b32.xlu0 %v3332, 120
    %v3475 = vpop.permute.xlu0 %3474
    %3476 = vrot.lane.b32.xlu0 %v3335, 120
    %v3477 = vpop.permute.xlu0 %3476
    %3478 = vrot.lane.b32.xlu0 %v3338, 120
    %v3479 = vpop.permute.xlu0 %3478
    %v3484 = vsel %vm82, %v3449, %v3461
    %v3485 = vsel %vm82, %v3451, %v3463
    %v3486 = vsel %vm82, %v3453, %v3465
    %v3487 = vsel %vm82, %v3455, %v3467
    %v3488 = vsel %vm318, %v3484, %v3473
    %v3489 = vsel %vm318, %v3485, %v3475
    %v3490 = vsel %vm318, %v3486, %v3477
    %v3491 = vsel %vm318, %v3487, %v3479
    %3492 = vrot.lane.b32.xlu0 %v3305, 96
    %v3493 = vpop.permute.xlu0 %3492
    %3494 = vrot.lane.b32.xlu0 %v3308, 96
    %v3495 = vpop.permute.xlu0 %3494
    %3496 = vrot.lane.b32.xlu0 %v3311, 96
    %v3497 = vpop.permute.xlu0 %3496
    %3498 = vrot.lane.b32.xlu0 %v3314, 96
    %v3499 = vpop.permute.xlu0 %3498
    %3504 = vrot.lane.b32.xlu0 %v3317, 104
    %v3505 = vpop.permute.xlu0 %3504
    %3506 = vrot.lane.b32.xlu0 %v3320, 104
    %v3507 = vpop.permute.xlu0 %3506
    %3508 = vrot.lane.b32.xlu0 %v3323, 104
    %v3509 = vpop.permute.xlu0 %3508
    %3510 = vrot.lane.b32.xlu0 %v3326, 104
    %v3511 = vpop.permute.xlu0 %3510
    %3516 = vrot.lane.b32.xlu0 %v3329, 112
    %v3517 = vpop.permute.xlu0 %3516
    %3518 = vrot.lane.b32.xlu0 %v3332, 112
    %v3519 = vpop.permute.xlu0 %3518
    %3520 = vrot.lane.b32.xlu0 %v3335, 112
    %v3521 = vpop.permute.xlu0 %3520
    %3522 = vrot.lane.b32.xlu0 %v3338, 112
    %v3523 = vpop.permute.xlu0 %3522
    %v3528 = vsel %vm82, %v3493, %v3505
    %v3529 = vsel %vm82, %v3495, %v3507
    %v3530 = vsel %vm82, %v3497, %v3509
    %v3531 = vsel %vm82, %v3499, %v3511
    %v3532 = vsel %vm318, %v3528, %v3517
    %v3533 = vsel %vm318, %v3529, %v3519
    %v3534 = vsel %vm318, %v3530, %v3521
    %v3535 = vsel %vm318, %v3531, %v3523
    %3536 = vrot.lane.b32.xlu0 %v3305, 88
    %v3537 = vpop.permute.xlu0 %3536
    %3538 = vrot.lane.b32.xlu0 %v3308, 88
    %v3539 = vpop.permute.xlu0 %3538
    %3540 = vrot.lane.b32.xlu0 %v3311, 88
    %v3541 = vpop.permute.xlu0 %3540
    %3542 = vrot.lane.b32.xlu0 %v3314, 88
    %v3543 = vpop.permute.xlu0 %3542
    %3548 = vrot.lane.b32.xlu0 %v3317, 96
    %v3549 = vpop.permute.xlu0 %3548
    %3550 = vrot.lane.b32.xlu0 %v3320, 96
    %v3551 = vpop.permute.xlu0 %3550
    %3552 = vrot.lane.b32.xlu0 %v3323, 96
    %v3553 = vpop.permute.xlu0 %3552
    %3554 = vrot.lane.b32.xlu0 %v3326, 96
    %v3555 = vpop.permute.xlu0 %3554
    %3560 = vrot.lane.b32.xlu0 %v3329, 104
    %v3561 = vpop.permute.xlu0 %3560
    %3562 = vrot.lane.b32.xlu0 %v3332, 104
    %v3563 = vpop.permute.xlu0 %3562
    %3564 = vrot.lane.b32.xlu0 %v3335, 104
    %v3565 = vpop.permute.xlu0 %3564
    %3566 = vrot.lane.b32.xlu0 %v3338, 104
    %v3567 = vpop.permute.xlu0 %3566
    %v3572 = vsel %vm82, %v3537, %v3549
    %v3573 = vsel %vm82, %v3539, %v3551
    %v3574 = vsel %vm82, %v3541, %v3553
    %v3575 = vsel %vm82, %v3543, %v3555
    %v3576 = vsel %vm318, %v3572, %v3561
    %v3577 = vsel %vm318, %v3573, %v3563
    %v3578 = vsel %vm318, %v3574, %v3565
    %v3579 = vsel %vm318, %v3575, %v3567
    %3580 = vrot.lane.b32.xlu0 %v3305, 80
    %v3581 = vpop.permute.xlu0 %3580
    %3582 = vrot.lane.b32.xlu0 %v3308, 80
    %v3583 = vpop.permute.xlu0 %3582
    %3584 = vrot.lane.b32.xlu0 %v3311, 80
    %v3585 = vpop.permute.xlu0 %3584
    %3586 = vrot.lane.b32.xlu0 %v3314, 80
    %v3587 = vpop.permute.xlu0 %3586
    %3592 = vrot.lane.b32.xlu0 %v3317, 88
    %v3593 = vpop.permute.xlu0 %3592
    %3594 = vrot.lane.b32.xlu0 %v3320, 88
    %v3595 = vpop.permute.xlu0 %3594
    %3596 = vrot.lane.b32.xlu0 %v3323, 88
    %v3597 = vpop.permute.xlu0 %3596
    %3598 = vrot.lane.b32.xlu0 %v3326, 88
    %v3599 = vpop.permute.xlu0 %3598
    %3604 = vrot.lane.b32.xlu0 %v3329, 96
    %v3605 = vpop.permute.xlu0 %3604
    %3606 = vrot.lane.b32.xlu0 %v3332, 96
    %v3607 = vpop.permute.xlu0 %3606
    %3608 = vrot.lane.b32.xlu0 %v3335, 96
    %v3609 = vpop.permute.xlu0 %3608
    %3610 = vrot.lane.b32.xlu0 %v3338, 96
    %v3611 = vpop.permute.xlu0 %3610
    %v3616 = vsel %vm82, %v3581, %v3593
    %v3617 = vsel %vm82, %v3583, %v3595
    %v3618 = vsel %vm82, %v3585, %v3597
    %v3619 = vsel %vm82, %v3587, %v3599
    %v3620 = vsel %vm318, %v3616, %v3605
    %v3621 = vsel %vm318, %v3617, %v3607
    %v3622 = vsel %vm318, %v3618, %v3609
    %v3623 = vsel %vm318, %v3619, %v3611
    %3624 = vrot.lane.b32.xlu0 %v3305, 72
    %v3625 = vpop.permute.xlu0 %3624
    %3626 = vrot.lane.b32.xlu0 %v3308, 72
    %v3627 = vpop.permute.xlu0 %3626
    %3628 = vrot.lane.b32.xlu0 %v3311, 72
    %v3629 = vpop.permute.xlu0 %3628
    %3630 = vrot.lane.b32.xlu0 %v3314, 72
    %v3631 = vpop.permute.xlu0 %3630
    %3636 = vrot.lane.b32.xlu0 %v3317, 80
    %v3637 = vpop.permute.xlu0 %3636
    %3638 = vrot.lane.b32.xlu0 %v3320, 80
    %v3639 = vpop.permute.xlu0 %3638
    %3640 = vrot.lane.b32.xlu0 %v3323, 80
    %v3641 = vpop.permute.xlu0 %3640
    %3642 = vrot.lane.b32.xlu0 %v3326, 80
    %v3643 = vpop.permute.xlu0 %3642
    %3648 = vrot.lane.b32.xlu0 %v3329, 88
    %v3649 = vpop.permute.xlu0 %3648
    %3650 = vrot.lane.b32.xlu0 %v3332, 88
    %v3651 = vpop.permute.xlu0 %3650
    %3652 = vrot.lane.b32.xlu0 %v3335, 88
    %v3653 = vpop.permute.xlu0 %3652
    %3654 = vrot.lane.b32.xlu0 %v3338, 88
    %v3655 = vpop.permute.xlu0 %3654
    %v3660 = vsel %vm82, %v3625, %v3637
    %v3661 = vsel %vm82, %v3627, %v3639
    %v3662 = vsel %vm82, %v3629, %v3641
    %v3663 = vsel %vm82, %v3631, %v3643
    %v3664 = vsel %vm318, %v3660, %v3649
    %v3665 = vsel %vm318, %v3661, %v3651
    %v3666 = vsel %vm318, %v3662, %v3653
    %v3667 = vsel %vm318, %v3663, %v3655
    %3668 = vrot.lane.b32.xlu0 %v3305, 64
    %v3669 = vpop.permute.xlu0 %3668
    %3670 = vrot.lane.b32.xlu0 %v3308, 64
    %v3671 = vpop.permute.xlu0 %3670
    %3672 = vrot.lane.b32.xlu0 %v3311, 64
    %v3673 = vpop.permute.xlu0 %3672
    %3674 = vrot.lane.b32.xlu0 %v3314, 64
    %v3675 = vpop.permute.xlu0 %3674
    %3680 = vrot.lane.b32.xlu0 %v3317, 72
    %v3681 = vpop.permute.xlu0 %3680
    %3682 = vrot.lane.b32.xlu0 %v3320, 72
    %v3683 = vpop.permute.xlu0 %3682
    %3684 = vrot.lane.b32.xlu0 %v3323, 72
    %v3685 = vpop.permute.xlu0 %3684
    %3686 = vrot.lane.b32.xlu0 %v3326, 72
    %v3687 = vpop.permute.xlu0 %3686
    %3692 = vrot.lane.b32.xlu0 %v3329, 80
    %v3693 = vpop.permute.xlu0 %3692
    %3694 = vrot.lane.b32.xlu0 %v3332, 80
    %v3695 = vpop.permute.xlu0 %3694
    %3696 = vrot.lane.b32.xlu0 %v3335, 80
    %v3697 = vpop.permute.xlu0 %3696
    %3698 = vrot.lane.b32.xlu0 %v3338, 80
    %v3699 = vpop.permute.xlu0 %3698
    %v3704 = vsel %vm82, %v3669, %v3681
    %v3705 = vsel %vm82, %v3671, %v3683
    %v3706 = vsel %vm82, %v3673, %v3685
    %v3707 = vsel %vm82, %v3675, %v3687
    %v3708 = vsel %vm318, %v3704, %v3693
    %v3709 = vsel %vm318, %v3705, %v3695
    %v3710 = vsel %vm318, %v3706, %v3697
    %v3711 = vsel %vm318, %v3707, %v3699
    %3712 = vrot.lane.b32.xlu0 %v3305, 56
    %v3713 = vpop.permute.xlu0 %3712
    %3714 = vrot.lane.b32.xlu0 %v3308, 56
    %v3715 = vpop.permute.xlu0 %3714
    %3716 = vrot.lane.b32.xlu0 %v3311, 56
    %v3717 = vpop.permute.xlu0 %3716
    %3718 = vrot.lane.b32.xlu0 %v3314, 56
    %v3719 = vpop.permute.xlu0 %3718
    %3724 = vrot.lane.b32.xlu0 %v3317, 64
    %v3725 = vpop.permute.xlu0 %3724
    %3726 = vrot.lane.b32.xlu0 %v3320, 64
    %v3727 = vpop.permute.xlu0 %3726
    %3728 = vrot.lane.b32.xlu0 %v3323, 64
    %v3729 = vpop.permute.xlu0 %3728
    %3730 = vrot.lane.b32.xlu0 %v3326, 64
    %v3731 = vpop.permute.xlu0 %3730
    %3736 = vrot.lane.b32.xlu0 %v3329, 72
    %v3737 = vpop.permute.xlu0 %3736
    %3738 = vrot.lane.b32.xlu0 %v3332, 72
    %v3739 = vpop.permute.xlu0 %3738
    %3740 = vrot.lane.b32.xlu0 %v3335, 72
    %v3741 = vpop.permute.xlu0 %3740
    %3742 = vrot.lane.b32.xlu0 %v3338, 72
    %v3743 = vpop.permute.xlu0 %3742
    %v3748 = vsel %vm82, %v3713, %v3725
    %v3749 = vsel %vm82, %v3715, %v3727
    %v3750 = vsel %vm82, %v3717, %v3729
    %v3751 = vsel %vm82, %v3719, %v3731
    %v3752 = vsel %vm318, %v3748, %v3737
    %v3753 = vsel %vm318, %v3749, %v3739
    %v3754 = vsel %vm318, %v3750, %v3741
    %v3755 = vsel %vm318, %v3751, %v3743
    %3756 = vrot.lane.b32.xlu0 %v3305, 48
    %v3757 = vpop.permute.xlu0 %3756
    %3758 = vrot.lane.b32.xlu0 %v3308, 48
    %v3759 = vpop.permute.xlu0 %3758
    %3760 = vrot.lane.b32.xlu0 %v3311, 48
    %v3761 = vpop.permute.xlu0 %3760
    %3762 = vrot.lane.b32.xlu0 %v3314, 48
    %v3763 = vpop.permute.xlu0 %3762
    %3768 = vrot.lane.b32.xlu0 %v3317, 56
    %v3769 = vpop.permute.xlu0 %3768
    %3770 = vrot.lane.b32.xlu0 %v3320, 56
    %v3771 = vpop.permute.xlu0 %3770
    %3772 = vrot.lane.b32.xlu0 %v3323, 56
    %v3773 = vpop.permute.xlu0 %3772
    %3774 = vrot.lane.b32.xlu0 %v3326, 56
    %v3775 = vpop.permute.xlu0 %3774
    %3780 = vrot.lane.b32.xlu0 %v3329, 64
    %v3781 = vpop.permute.xlu0 %3780
    %3782 = vrot.lane.b32.xlu0 %v3332, 64
    %v3783 = vpop.permute.xlu0 %3782
    %3784 = vrot.lane.b32.xlu0 %v3335, 64
    %v3785 = vpop.permute.xlu0 %3784
    %3786 = vrot.lane.b32.xlu0 %v3338, 64
    %v3787 = vpop.permute.xlu0 %3786
    %v3792 = vsel %vm82, %v3757, %v3769
    %v3793 = vsel %vm82, %v3759, %v3771
    %v3794 = vsel %vm82, %v3761, %v3773
    %v3795 = vsel %vm82, %v3763, %v3775
    %v3796 = vsel %vm318, %v3792, %v3781
    %v3797 = vsel %vm318, %v3793, %v3783
    %v3798 = vsel %vm318, %v3794, %v3785
    %v3799 = vsel %vm318, %v3795, %v3787
    %3800 = vrot.lane.b32.xlu0 %v3305, 40
    %v3801 = vpop.permute.xlu0 %3800
    %3802 = vrot.lane.b32.xlu0 %v3308, 40
    %v3803 = vpop.permute.xlu0 %3802
    %3804 = vrot.lane.b32.xlu0 %v3311, 40
    %v3805 = vpop.permute.xlu0 %3804
    %3806 = vrot.lane.b32.xlu0 %v3314, 40
    %v3807 = vpop.permute.xlu0 %3806
    %3812 = vrot.lane.b32.xlu0 %v3317, 48
    %v3813 = vpop.permute.xlu0 %3812
    %3814 = vrot.lane.b32.xlu0 %v3320, 48
    %v3815 = vpop.permute.xlu0 %3814
    %3816 = vrot.lane.b32.xlu0 %v3323, 48
    %v3817 = vpop.permute.xlu0 %3816
    %3818 = vrot.lane.b32.xlu0 %v3326, 48
    %v3819 = vpop.permute.xlu0 %3818
    %3824 = vrot.lane.b32.xlu0 %v3329, 56
    %v3825 = vpop.permute.xlu0 %3824
    %3826 = vrot.lane.b32.xlu0 %v3332, 56
    %v3827 = vpop.permute.xlu0 %3826
    %3828 = vrot.lane.b32.xlu0 %v3335, 56
    %v3829 = vpop.permute.xlu0 %3828
    %3830 = vrot.lane.b32.xlu0 %v3338, 56
    %v3831 = vpop.permute.xlu0 %3830
    %v3836 = vsel %vm82, %v3801, %v3813
    %v3837 = vsel %vm82, %v3803, %v3815
    %v3838 = vsel %vm82, %v3805, %v3817
    %v3839 = vsel %vm82, %v3807, %v3819
    %v3840 = vsel %vm318, %v3836, %v3825
    %v3841 = vsel %vm318, %v3837, %v3827
    %v3842 = vsel %vm318, %v3838, %v3829
    %v3843 = vsel %vm318, %v3839, %v3831
    %v3845 = vsel %vm787, %v3376, 0
    %v3848 = vsel %vm787, %v3377, 0
    %v3851 = vsel %vm787, %v3532, 0
    %v3854 = vsel %vm787, %v3533, 0
    %3856 = vmatpush.xpose.msra.mxu0 0.0
    %3857 = vmatpush.xpose.msra.mxu0 0.0
    %3858 = vmatpush.xpose.msra.mxu0 0.0
    %3859 = vmatpush.xpose.msra.mxu0 0.0
    %3860 = vmatpush.xpose.msra.mxu0 0.0
    %3861 = vmatpush.xpose.msra.mxu0 0.0
    %3862 = vmatpush.xpose.msra.mxu0 0.0
    %3863 = vmatpush.xpose.msra.mxu0 0.0
    %3864 = vmatpush.xpose.msra.mxu0 0.0
    %3865 = vmatpush.xpose.msra.mxu0 0.0
    %3866 = vmatpush.xpose.msra.mxu0 0.0
    %3867 = vmatpush.xpose.msra.mxu0 0.0
    %3868 = vmatpush.xpose.msra.mxu0 0.0
    %3869 = vmatpush.xpose.msra.mxu0 0.0
    %3870 = vmatpush.xpose.msra.mxu0 %v3854
    %3871 = vmatpush.xpose.msra.mxu0 %v3851
    %3872 = vmatmul.f32.gmra.mxu0 %v3845
    %v3873 = vpop.f32.mrf.mxu0
    %v3874 = vadd.f32 0.0, %v3873
    %3875 = vmatmul.f32.gmra.mxu0 %v3848
    %v3876 = vpop.f32.mrf.mxu0
    %v3877 = vadd.f32 0.0, %v3876
    %3878 = vdwg.mxu0
    %v3880 = vsel %vm787, %v3378, 0
    %v3883 = vsel %vm787, %v3379, 0
    %v3886 = vsel %vm787, %v3534, 0
    %v3889 = vsel %vm787, %v3535, 0
    %3891 = vmatpush.xpose.msra.mxu0 0.0
    %3892 = vmatpush.xpose.msra.mxu0 0.0
    %3893 = vmatpush.xpose.msra.mxu0 0.0
    %3894 = vmatpush.xpose.msra.mxu0 0.0
    %3895 = vmatpush.xpose.msra.mxu0 0.0
    %3896 = vmatpush.xpose.msra.mxu0 0.0
    %3897 = vmatpush.xpose.msra.mxu0 0.0
    %3898 = vmatpush.xpose.msra.mxu0 0.0
    %3899 = vmatpush.xpose.msra.mxu0 0.0
    %3900 = vmatpush.xpose.msra.mxu0 0.0
    %3901 = vmatpush.xpose.msra.mxu0 0.0
    %3902 = vmatpush.xpose.msra.mxu0 0.0
    %3903 = vmatpush.xpose.msra.mxu0 0.0
    %3904 = vmatpush.xpose.msra.mxu0 0.0
    %3905 = vmatpush.xpose.msra.mxu0 %v3889
    %3906 = vmatpush.xpose.msra.mxu0 %v3886
    %3907 = vmatmul.f32.gmra.mxu0 %v3880
    %v3908 = vpop.f32.mrf.mxu0
    %v3909 = vadd.f32 0.0, %v3908
    %3910 = vmatmul.f32.gmra.mxu0 %v3883
    %v3911 = vpop.f32.mrf.mxu0
    %v3912 = vadd.f32 0.0, %v3911
    %3913 = vdwg.mxu0
    %v3915 = vsel %vm787, %v3412, 0
    %v3918 = vsel %vm787, %v3413, 0
    %v3921 = vsel %vm787, %v3576, 0
    %v3924 = vsel %vm787, %v3577, 0
    %3926 = vmatpush.xpose.msra.mxu0 0.0
    %3927 = vmatpush.xpose.msra.mxu0 0.0
    %3928 = vmatpush.xpose.msra.mxu0 0.0
    %3929 = vmatpush.xpose.msra.mxu0 0.0
    %3930 = vmatpush.xpose.msra.mxu0 0.0
    %3931 = vmatpush.xpose.msra.mxu0 0.0
    %3932 = vmatpush.xpose.msra.mxu0 0.0
    %3933 = vmatpush.xpose.msra.mxu0 0.0
    %3934 = vmatpush.xpose.msra.mxu0 0.0
    %3935 = vmatpush.xpose.msra.mxu0 0.0
    %3936 = vmatpush.xpose.msra.mxu0 0.0
    %3937 = vmatpush.xpose.msra.mxu0 0.0
    %3938 = vmatpush.xpose.msra.mxu0 0.0
    %3939 = vmatpush.xpose.msra.mxu0 0.0
    %3940 = vmatpush.xpose.msra.mxu0 %v3924
    %3941 = vmatpush.xpose.msra.mxu0 %v3921
    %3942 = vmatmul.f32.gmra.mxu0 %v3915
    %v3943 = vpop.f32.mrf.mxu0
    %v3944 = vadd.f32 0.0, %v3943
    %3945 = vmatmul.f32.gmra.mxu0 %v3918
    %v3946 = vpop.f32.mrf.mxu0
    %v3947 = vadd.f32 0.0, %v3946
    %3948 = vdwg.mxu0
    %v3950 = vsel %vm787, %v3414, 0
    %v3953 = vsel %vm787, %v3415, 0
    %v3956 = vsel %vm787, %v3578, 0
    %v3959 = vsel %vm787, %v3579, 0
    %3961 = vmatpush.xpose.msra.mxu0 0.0
    %3962 = vmatpush.xpose.msra.mxu0 0.0
    %3963 = vmatpush.xpose.msra.mxu0 0.0
    %3964 = vmatpush.xpose.msra.mxu0 0.0
    %3965 = vmatpush.xpose.msra.mxu0 0.0
    %3966 = vmatpush.xpose.msra.mxu0 0.0
    %3967 = vmatpush.xpose.msra.mxu0 0.0
    %3968 = vmatpush.xpose.msra.mxu0 0.0
    %3969 = vmatpush.xpose.msra.mxu0 0.0
    %3970 = vmatpush.xpose.msra.mxu0 0.0
    %3971 = vmatpush.xpose.msra.mxu0 0.0
    %3972 = vmatpush.xpose.msra.mxu0 0.0
    %3973 = vmatpush.xpose.msra.mxu0 0.0
    %3974 = vmatpush.xpose.msra.mxu0 0.0
    %3975 = vmatpush.xpose.msra.mxu0 %v3959
    %3976 = vmatpush.xpose.msra.mxu0 %v3956
    %3977 = vmatmul.f32.gmra.mxu0 %v3950
    %v3978 = vpop.f32.mrf.mxu0
    %v3979 = vadd.f32 0.0, %v3978
    %3980 = vmatmul.f32.gmra.mxu0 %v3953
    %v3981 = vpop.f32.mrf.mxu0
    %v3982 = vadd.f32 0.0, %v3981
    %3983 = vdwg.mxu0
    %v3985 = vsel %vm787, %v3444, 0
    %v3988 = vsel %vm787, %v3445, 0
    %v3991 = vsel %vm787, %v3620, 0
    %v3994 = vsel %vm787, %v3621, 0
    %3996 = vmatpush.xpose.msra.mxu0 0.0
    %3997 = vmatpush.xpose.msra.mxu0 0.0
    %3998 = vmatpush.xpose.msra.mxu0 0.0
    %3999 = vmatpush.xpose.msra.mxu0 0.0
    %4000 = vmatpush.xpose.msra.mxu0 0.0
    %4001 = vmatpush.xpose.msra.mxu0 0.0
    %4002 = vmatpush.xpose.msra.mxu0 0.0
    %4003 = vmatpush.xpose.msra.mxu0 0.0
    %4004 = vmatpush.xpose.msra.mxu0 0.0
    %4005 = vmatpush.xpose.msra.mxu0 0.0
    %4006 = vmatpush.xpose.msra.mxu0 0.0
    %4007 = vmatpush.xpose.msra.mxu0 0.0
    %4008 = vmatpush.xpose.msra.mxu0 0.0
    %4009 = vmatpush.xpose.msra.mxu0 0.0
    %4010 = vmatpush.xpose.msra.mxu0 %v3994
    %4011 = vmatpush.xpose.msra.mxu0 %v3991
    %4012 = vmatmul.f32.gmra.mxu0 %v3985
    %v4013 = vpop.f32.mrf.mxu0
    %v4014 = vadd.f32 0.0, %v4013
    %4015 = vmatmul.f32.gmra.mxu0 %v3988
    %v4016 = vpop.f32.mrf.mxu0
    %v4017 = vadd.f32 0.0, %v4016
    %4018 = vdwg.mxu0
    %v4020 = vsel %vm787, %v3446, 0
    %v4023 = vsel %vm787, %v3447, 0
    %v4026 = vsel %vm787, %v3622, 0
    %v4029 = vsel %vm787, %v3623, 0
    %4031 = vmatpush.xpose.msra.mxu0 0.0
    %4032 = vmatpush.xpose.msra.mxu0 0.0
    %4033 = vmatpush.xpose.msra.mxu0 0.0
    %4034 = vmatpush.xpose.msra.mxu0 0.0
    %4035 = vmatpush.xpose.msra.mxu0 0.0
    %4036 = vmatpush.xpose.msra.mxu0 0.0
    %4037 = vmatpush.xpose.msra.mxu0 0.0
    %4038 = vmatpush.xpose.msra.mxu0 0.0
    %4039 = vmatpush.xpose.msra.mxu0 0.0
    %4040 = vmatpush.xpose.msra.mxu0 0.0
    %4041 = vmatpush.xpose.msra.mxu0 0.0
    %4042 = vmatpush.xpose.msra.mxu0 0.0
    %4043 = vmatpush.xpose.msra.mxu0 0.0
    %4044 = vmatpush.xpose.msra.mxu0 0.0
    %4045 = vmatpush.xpose.msra.mxu0 %v4029
    %4046 = vmatpush.xpose.msra.mxu0 %v4026
    %4047 = vmatmul.f32.gmra.mxu0 %v4020
    %v4048 = vpop.f32.mrf.mxu0
    %v4049 = vadd.f32 0.0, %v4048
    %4050 = vmatmul.f32.gmra.mxu0 %v4023
    %v4051 = vpop.f32.mrf.mxu0
    %v4052 = vadd.f32 0.0, %v4051
    %4053 = vdwg.mxu0
    %v4055 = vsel %vm787, %v3488, 0
    %v4058 = vsel %vm787, %v3489, 0
    %v4061 = vsel %vm787, %v3664, 0
    %v4064 = vsel %vm787, %v3665, 0
    %4066 = vmatpush.xpose.msra.mxu0 0.0
    %4067 = vmatpush.xpose.msra.mxu0 0.0
    %4068 = vmatpush.xpose.msra.mxu0 0.0
    %4069 = vmatpush.xpose.msra.mxu0 0.0
    %4070 = vmatpush.xpose.msra.mxu0 0.0
    %4071 = vmatpush.xpose.msra.mxu0 0.0
    %4072 = vmatpush.xpose.msra.mxu0 0.0
    %4073 = vmatpush.xpose.msra.mxu0 0.0
    %4074 = vmatpush.xpose.msra.mxu0 0.0
    %4075 = vmatpush.xpose.msra.mxu0 0.0
    %4076 = vmatpush.xpose.msra.mxu0 0.0
    %4077 = vmatpush.xpose.msra.mxu0 0.0
    %4078 = vmatpush.xpose.msra.mxu0 0.0
    %4079 = vmatpush.xpose.msra.mxu0 0.0
    %4080 = vmatpush.xpose.msra.mxu0 %v4064
    %4081 = vmatpush.xpose.msra.mxu0 %v4061
    %4082 = vmatmul.f32.gmra.mxu0 %v4055
    %v4083 = vpop.f32.mrf.mxu0
    %v4084 = vadd.f32 0.0, %v4083
    %4085 = vmatmul.f32.gmra.mxu0 %v4058
    %v4086 = vpop.f32.mrf.mxu0
    %v4087 = vadd.f32 0.0, %v4086
    %4088 = vdwg.mxu0
    %v4090 = vsel %vm787, %v3490, 0
    %v4093 = vsel %vm787, %v3491, 0
    %v4096 = vsel %vm787, %v3666, 0
    %v4099 = vsel %vm787, %v3667, 0
    %4101 = vmatpush.xpose.msra.mxu0 0.0
    %4102 = vmatpush.xpose.msra.mxu0 0.0
    %4103 = vmatpush.xpose.msra.mxu0 0.0
    %4104 = vmatpush.xpose.msra.mxu0 0.0
    %4105 = vmatpush.xpose.msra.mxu0 0.0
    %4106 = vmatpush.xpose.msra.mxu0 0.0
    %4107 = vmatpush.xpose.msra.mxu0 0.0
    %4108 = vmatpush.xpose.msra.mxu0 0.0
    %4109 = vmatpush.xpose.msra.mxu0 0.0
    %4110 = vmatpush.xpose.msra.mxu0 0.0
    %4111 = vmatpush.xpose.msra.mxu0 0.0
    %4112 = vmatpush.xpose.msra.mxu0 0.0
    %4113 = vmatpush.xpose.msra.mxu0 0.0
    %4114 = vmatpush.xpose.msra.mxu0 0.0
    %4115 = vmatpush.xpose.msra.mxu0 %v4099
    %4116 = vmatpush.xpose.msra.mxu0 %v4096
    %4117 = vmatmul.f32.gmra.mxu0 %v4090
    %v4118 = vpop.f32.mrf.mxu0
    %v4119 = vadd.f32 0.0, %v4118
    %4120 = vmatmul.f32.gmra.mxu0 %v4093
    %v4121 = vpop.f32.mrf.mxu0
    %v4122 = vadd.f32 0.0, %v4121
    %4123 = vdwg.mxu0
    %v4124 = vmul.f32 %v3874, 0.20412415
    %v4125 = vmul.f32 %v3877, 0.20412415
    %v4126 = vmul.f32 %v3909, 0.20412415
    %v4127 = vmul.f32 %v3912, 0.20412415
    %v4128 = vmul.f32 %v3944, 0.20412415
    %v4129 = vmul.f32 %v3947, 0.20412415
    %v4130 = vmul.f32 %v3979, 0.20412415
    %v4131 = vmul.f32 %v3982, 0.20412415
    %v4132 = vmul.f32 %v4014, 0.20412415
    %v4133 = vmul.f32 %v4017, 0.20412415
    %v4134 = vmul.f32 %v4049, 0.20412415
    %v4135 = vmul.f32 %v4052, 0.20412415
    %v4136 = vmul.f32 %v4084, 0.20412415
    %v4137 = vmul.f32 %v4087, 0.20412415
    %v4138 = vmul.f32 %v4119, 0.20412415
    %v4139 = vmul.f32 %v4122, 0.20412415
    %v4140 = vsel %vm318, %v4124, -inf
    %4141 = vmax.xlane.f32.xlu0 %v4140
    %v4142 = vpop.xlane.xlu0 %4141
    %v4143 = vsel %vm318, %v4125, -inf
    %4144 = vmax.xlane.f32.xlu0 %v4143
    %v4145 = vpop.xlane.xlu0 %4144
    %v4146 = vsel %vm318, %v4126, -inf
    %4147 = vmax.xlane.f32.xlu0 %v4146
    %v4148 = vpop.xlane.xlu0 %4147
    %v4149 = vsel %vm318, %v4127, -inf
    %4150 = vmax.xlane.f32.xlu0 %v4149
    %v4151 = vpop.xlane.xlu0 %4150
    %v4152 = vsel %vm318, %v4128, -inf
    %4153 = vmax.xlane.f32.xlu0 %v4152
    %v4154 = vpop.xlane.xlu0 %4153
    %v4155 = vsel %vm318, %v4129, -inf
    %4156 = vmax.xlane.f32.xlu0 %v4155
    %v4157 = vpop.xlane.xlu0 %4156
    %v4158 = vsel %vm318, %v4130, -inf
    %4159 = vmax.xlane.f32.xlu0 %v4158
    %v4160 = vpop.xlane.xlu0 %4159
    %v4161 = vsel %vm318, %v4131, -inf
    %4162 = vmax.xlane.f32.xlu0 %v4161
    %v4163 = vpop.xlane.xlu0 %4162
    %v4164 = vsel %vm318, %v4132, -inf
    %4165 = vmax.xlane.f32.xlu0 %v4164
    %v4166 = vpop.xlane.xlu0 %4165
    %v4167 = vsel %vm318, %v4133, -inf
    %4168 = vmax.xlane.f32.xlu0 %v4167
    %v4169 = vpop.xlane.xlu0 %4168
    %v4170 = vsel %vm318, %v4134, -inf
    %4171 = vmax.xlane.f32.xlu0 %v4170
    %v4172 = vpop.xlane.xlu0 %4171
    %v4173 = vsel %vm318, %v4135, -inf
    %4174 = vmax.xlane.f32.xlu0 %v4173
    %v4175 = vpop.xlane.xlu0 %4174
    %v4176 = vsel %vm318, %v4136, -inf
    %4177 = vmax.xlane.f32.xlu0 %v4176
    %v4178 = vpop.xlane.xlu0 %4177
    %v4179 = vsel %vm318, %v4137, -inf
    %4180 = vmax.xlane.f32.xlu0 %v4179
    %v4181 = vpop.xlane.xlu0 %4180
    %v4182 = vsel %vm318, %v4138, -inf
    %4183 = vmax.xlane.f32.xlu0 %v4182
    %v4184 = vpop.xlane.xlu0 %4183
    %v4185 = vsel %vm318, %v4139, -inf
    %4186 = vmax.xlane.f32.xlu0 %v4185
    %v4187 = vpop.xlane.xlu0 %4186
    %v4188 = vsub.f32 %v4124, %v4142
    %v4189 = vsub.f32 %v4125, %v4145
    %v4190 = vsub.f32 %v4126, %v4148
    %v4191 = vsub.f32 %v4127, %v4151
    %v4192 = vsub.f32 %v4128, %v4154
    %v4193 = vsub.f32 %v4129, %v4157
    %v4194 = vsub.f32 %v4130, %v4160
    %v4195 = vsub.f32 %v4131, %v4163
    %v4196 = vsub.f32 %v4132, %v4166
    %v4197 = vsub.f32 %v4133, %v4169
    %v4198 = vsub.f32 %v4134, %v4172
    %v4199 = vsub.f32 %v4135, %v4175
    %v4200 = vsub.f32 %v4136, %v4178
    %v4201 = vsub.f32 %v4137, %v4181
    %v4202 = vsub.f32 %v4138, %v4184
    %v4203 = vsub.f32 %v4139, %v4187
    %v4204 = vmul.f32 %v4188, 1.442695
    %v4205 = vpow.pop %v4204
    %v4206 = vmul.f32 %v4189, 1.442695
    %v4207 = vpow.pop %v4206
    %v4208 = vmul.f32 %v4190, 1.442695
    %v4209 = vpow.pop %v4208
    %v4210 = vmul.f32 %v4191, 1.442695
    %v4211 = vpow.pop %v4210
    %v4212 = vmul.f32 %v4192, 1.442695
    %v4213 = vpow.pop %v4212
    %v4214 = vmul.f32 %v4193, 1.442695
    %v4215 = vpow.pop %v4214
    %v4216 = vmul.f32 %v4194, 1.442695
    %v4217 = vpow.pop %v4216
    %v4218 = vmul.f32 %v4195, 1.442695
    %v4219 = vpow.pop %v4218
    %v4220 = vmul.f32 %v4196, 1.442695
    %v4221 = vpow.pop %v4220
    %v4222 = vmul.f32 %v4197, 1.442695
    %v4223 = vpow.pop %v4222
    %v4224 = vmul.f32 %v4198, 1.442695
    %v4225 = vpow.pop %v4224
    %v4226 = vmul.f32 %v4199, 1.442695
    %v4227 = vpow.pop %v4226
    %v4228 = vmul.f32 %v4200, 1.442695
    %v4229 = vpow.pop %v4228
    %v4230 = vmul.f32 %v4201, 1.442695
    %v4231 = vpow.pop %v4230
    %v4232 = vmul.f32 %v4202, 1.442695
    %v4233 = vpow.pop %v4232
    %v4234 = vmul.f32 %v4203, 1.442695
    %v4235 = vpow.pop %v4234
    %v4236 = vsel %vm318, %v4205, 0.0
    %4237 = vadd.xlane.f32.xlu0 %v4236
    %v4238 = vpop.xlane.xlu0 %4237
    %v4239 = vsel %vm318, %v4207, 0.0
    %4240 = vadd.xlane.f32.xlu0 %v4239
    %v4241 = vpop.xlane.xlu0 %4240
    %v4242 = vsel %vm318, %v4209, 0.0
    %4243 = vadd.xlane.f32.xlu0 %v4242
    %v4244 = vpop.xlane.xlu0 %4243
    %v4245 = vsel %vm318, %v4211, 0.0
    %4246 = vadd.xlane.f32.xlu0 %v4245
    %v4247 = vpop.xlane.xlu0 %4246
    %v4248 = vsel %vm318, %v4213, 0.0
    %4249 = vadd.xlane.f32.xlu0 %v4248
    %v4250 = vpop.xlane.xlu0 %4249
    %v4251 = vsel %vm318, %v4215, 0.0
    %4252 = vadd.xlane.f32.xlu0 %v4251
    %v4253 = vpop.xlane.xlu0 %4252
    %v4254 = vsel %vm318, %v4217, 0.0
    %4255 = vadd.xlane.f32.xlu0 %v4254
    %v4256 = vpop.xlane.xlu0 %4255
    %v4257 = vsel %vm318, %v4219, 0.0
    %4258 = vadd.xlane.f32.xlu0 %v4257
    %v4259 = vpop.xlane.xlu0 %4258
    %v4260 = vsel %vm318, %v4221, 0.0
    %4261 = vadd.xlane.f32.xlu0 %v4260
    %v4262 = vpop.xlane.xlu0 %4261
    %v4263 = vsel %vm318, %v4223, 0.0
    %4264 = vadd.xlane.f32.xlu0 %v4263
    %v4265 = vpop.xlane.xlu0 %4264
    %v4266 = vsel %vm318, %v4225, 0.0
    %4267 = vadd.xlane.f32.xlu0 %v4266
    %v4268 = vpop.xlane.xlu0 %4267
    %v4269 = vsel %vm318, %v4227, 0.0
    %4270 = vadd.xlane.f32.xlu0 %v4269
    %v4271 = vpop.xlane.xlu0 %4270
    %v4272 = vsel %vm318, %v4229, 0.0
    %4273 = vadd.xlane.f32.xlu0 %v4272
    %v4274 = vpop.xlane.xlu0 %4273
    %v4275 = vsel %vm318, %v4231, 0.0
    %4276 = vadd.xlane.f32.xlu0 %v4275
    %v4277 = vpop.xlane.xlu0 %4276
    %v4278 = vsel %vm318, %v4233, 0.0
    %4279 = vadd.xlane.f32.xlu0 %v4278
    %v4280 = vpop.xlane.xlu0 %4279
    %v4281 = vsel %vm318, %v4235, 0.0
    %4282 = vadd.xlane.f32.xlu0 %v4281
    %v4283 = vpop.xlane.xlu0 %4282
    %v4284 = vrcp.pop %v4238
    %v4285 = vmul.f32 %v4238, %v4284
    %v4286 = vsub.f32 1.0, %v4285
    %v4287 = vmul.f32 %v4284, %v4286
    %v4288 = vadd.f32 %v4284, %v4287
    %vm4289 = vweird.f32 %v4238
    %vm4290 = vweird.f32 %v4284
    %vm4291 = vmor %vm4289, %vm4290
    %v4292 = vsel %vm4291, %v4284, %v4288
    %v4293 = vand.u32 2147483647, %v4238
    %vm4294 = vcmp.eq.f32.partialorder %v4293, 8.507059e+37
    %v4295 = vand.u32 %v4238, 2147483648
    %v4296 = vor.u32 1.1754944e-38, %v4295
    %v4297 = vsel %vm4294, %v4296, %v4292
    %v4298 = vmul.f32 %v4205, %v4297
    %v4299 = vrcp.pop %v4241
    %v4300 = vmul.f32 %v4241, %v4299
    %v4301 = vsub.f32 1.0, %v4300
    %v4302 = vmul.f32 %v4299, %v4301
    %v4303 = vadd.f32 %v4299, %v4302
    %vm4304 = vweird.f32 %v4241
    %vm4305 = vweird.f32 %v4299
    %vm4306 = vmor %vm4304, %vm4305
    %v4307 = vsel %vm4306, %v4299, %v4303
    %v4308 = vand.u32 2147483647, %v4241
    %vm4309 = vcmp.eq.f32.partialorder %v4308, 8.507059e+37
    %v4310 = vand.u32 %v4241, 2147483648
    %v4311 = vor.u32 1.1754944e-38, %v4310
    %v4312 = vsel %vm4309, %v4311, %v4307
    %v4313 = vmul.f32 %v4207, %v4312
    %v4314 = vrcp.pop %v4244
    %v4315 = vmul.f32 %v4244, %v4314
    %v4316 = vsub.f32 1.0, %v4315
    %v4317 = vmul.f32 %v4314, %v4316
    %v4318 = vadd.f32 %v4314, %v4317
    %vm4319 = vweird.f32 %v4244
    %vm4320 = vweird.f32 %v4314
    %vm4321 = vmor %vm4319, %vm4320
    %v4322 = vsel %vm4321, %v4314, %v4318
    %v4323 = vand.u32 2147483647, %v4244
    %vm4324 = vcmp.eq.f32.partialorder %v4323, 8.507059e+37
    %v4325 = vand.u32 %v4244, 2147483648
    %v4326 = vor.u32 1.1754944e-38, %v4325
    %v4327 = vsel %vm4324, %v4326, %v4322
    %v4328 = vmul.f32 %v4209, %v4327
    %v4329 = vrcp.pop %v4247
    %v4330 = vmul.f32 %v4247, %v4329
    %v4331 = vsub.f32 1.0, %v4330
    %v4332 = vmul.f32 %v4329, %v4331
    %v4333 = vadd.f32 %v4329, %v4332
    %vm4334 = vweird.f32 %v4247
    %vm4335 = vweird.f32 %v4329
    %vm4336 = vmor %vm4334, %vm4335
    %v4337 = vsel %vm4336, %v4329, %v4333
    %v4338 = vand.u32 2147483647, %v4247
    %vm4339 = vcmp.eq.f32.partialorder %v4338, 8.507059e+37
    %v4340 = vand.u32 %v4247, 2147483648
    %v4341 = vor.u32 1.1754944e-38, %v4340
    %v4342 = vsel %vm4339, %v4341, %v4337
    %v4343 = vmul.f32 %v4211, %v4342
    %v4344 = vrcp.pop %v4250
    %v4345 = vmul.f32 %v4250, %v4344
    %v4346 = vsub.f32 1.0, %v4345
    %v4347 = vmul.f32 %v4344, %v4346
    %v4348 = vadd.f32 %v4344, %v4347
    %vm4349 = vweird.f32 %v4250
    %vm4350 = vweird.f32 %v4344
    %vm4351 = vmor %vm4349, %vm4350
    %v4352 = vsel %vm4351, %v4344, %v4348
    %v4353 = vand.u32 2147483647, %v4250
    %vm4354 = vcmp.eq.f32.partialorder %v4353, 8.507059e+37
    %v4355 = vand.u32 %v4250, 2147483648
    %v4356 = vor.u32 1.1754944e-38, %v4355
    %v4357 = vsel %vm4354, %v4356, %v4352
    %v4358 = vmul.f32 %v4213, %v4357
    %v4359 = vrcp.pop %v4253
    %v4360 = vmul.f32 %v4253, %v4359
    %v4361 = vsub.f32 1.0, %v4360
    %v4362 = vmul.f32 %v4359, %v4361
    %v4363 = vadd.f32 %v4359, %v4362
    %vm4364 = vweird.f32 %v4253
    %vm4365 = vweird.f32 %v4359
    %vm4366 = vmor %vm4364, %vm4365
    %v4367 = vsel %vm4366, %v4359, %v4363
    %v4368 = vand.u32 2147483647, %v4253
    %vm4369 = vcmp.eq.f32.partialorder %v4368, 8.507059e+37
    %v4370 = vand.u32 %v4253, 2147483648
    %v4371 = vor.u32 1.1754944e-38, %v4370
    %v4372 = vsel %vm4369, %v4371, %v4367
    %v4373 = vmul.f32 %v4215, %v4372
    %v4374 = vrcp.pop %v4256
    %v4375 = vmul.f32 %v4256, %v4374
    %v4376 = vsub.f32 1.0, %v4375
    %v4377 = vmul.f32 %v4374, %v4376
    %v4378 = vadd.f32 %v4374, %v4377
    %vm4379 = vweird.f32 %v4256
    %vm4380 = vweird.f32 %v4374
    %vm4381 = vmor %vm4379, %vm4380
    %v4382 = vsel %vm4381, %v4374, %v4378
    %v4383 = vand.u32 2147483647, %v4256
    %vm4384 = vcmp.eq.f32.partialorder %v4383, 8.507059e+37
    %v4385 = vand.u32 %v4256, 2147483648
    %v4386 = vor.u32 1.1754944e-38, %v4385
    %v4387 = vsel %vm4384, %v4386, %v4382
    %v4388 = vmul.f32 %v4217, %v4387
    %v4389 = vrcp.pop %v4259
    %v4390 = vmul.f32 %v4259, %v4389
    %v4391 = vsub.f32 1.0, %v4390
    %v4392 = vmul.f32 %v4389, %v4391
    %v4393 = vadd.f32 %v4389, %v4392
    %vm4394 = vweird.f32 %v4259
    %vm4395 = vweird.f32 %v4389
    %vm4396 = vmor %vm4394, %vm4395
    %v4397 = vsel %vm4396, %v4389, %v4393
    %v4398 = vand.u32 2147483647, %v4259
    %vm4399 = vcmp.eq.f32.partialorder %v4398, 8.507059e+37
    %v4400 = vand.u32 %v4259, 2147483648
    %v4401 = vor.u32 1.1754944e-38, %v4400
    %v4402 = vsel %vm4399, %v4401, %v4397
    %v4403 = vmul.f32 %v4219, %v4402
    %v4404 = vrcp.pop %v4262
    %v4405 = vmul.f32 %v4262, %v4404
    %v4406 = vsub.f32 1.0, %v4405
    %v4407 = vmul.f32 %v4404, %v4406
    %v4408 = vadd.f32 %v4404, %v4407
    %vm4409 = vweird.f32 %v4262
    %vm4410 = vweird.f32 %v4404
    %vm4411 = vmor %vm4409, %vm4410
    %v4412 = vsel %vm4411, %v4404, %v4408
    %v4413 = vand.u32 2147483647, %v4262
    %vm4414 = vcmp.eq.f32.partialorder %v4413, 8.507059e+37
    %v4415 = vand.u32 %v4262, 2147483648
    %v4416 = vor.u32 1.1754944e-38, %v4415
    %v4417 = vsel %vm4414, %v4416, %v4412
    %v4418 = vmul.f32 %v4221, %v4417
    %v4419 = vrcp.pop %v4265
    %v4420 = vmul.f32 %v4265, %v4419
    %v4421 = vsub.f32 1.0, %v4420
    %v4422 = vmul.f32 %v4419, %v4421
    %v4423 = vadd.f32 %v4419, %v4422
    %vm4424 = vweird.f32 %v4265
    %vm4425 = vweird.f32 %v4419
    %vm4426 = vmor %vm4424, %vm4425
    %v4427 = vsel %vm4426, %v4419, %v4423
    %v4428 = vand.u32 2147483647, %v4265
    %vm4429 = vcmp.eq.f32.partialorder %v4428, 8.507059e+37
    %v4430 = vand.u32 %v4265, 2147483648
    %v4431 = vor.u32 1.1754944e-38, %v4430
    %v4432 = vsel %vm4429, %v4431, %v4427
    %v4433 = vmul.f32 %v4223, %v4432
    %v4434 = vrcp.pop %v4268
    %v4435 = vmul.f32 %v4268, %v4434
    %v4436 = vsub.f32 1.0, %v4435
    %v4437 = vmul.f32 %v4434, %v4436
    %v4438 = vadd.f32 %v4434, %v4437
    %vm4439 = vweird.f32 %v4268
    %vm4440 = vweird.f32 %v4434
    %vm4441 = vmor %vm4439, %vm4440
    %v4442 = vsel %vm4441, %v4434, %v4438
    %v4443 = vand.u32 2147483647, %v4268
    %vm4444 = vcmp.eq.f32.partialorder %v4443, 8.507059e+37
    %v4445 = vand.u32 %v4268, 2147483648
    %v4446 = vor.u32 1.1754944e-38, %v4445
    %v4447 = vsel %vm4444, %v4446, %v4442
    %v4448 = vmul.f32 %v4225, %v4447
    %v4449 = vrcp.pop %v4271
    %v4450 = vmul.f32 %v4271, %v4449
    %v4451 = vsub.f32 1.0, %v4450
    %v4452 = vmul.f32 %v4449, %v4451
    %v4453 = vadd.f32 %v4449, %v4452
    %vm4454 = vweird.f32 %v4271
    %vm4455 = vweird.f32 %v4449
    %vm4456 = vmor %vm4454, %vm4455
    %v4457 = vsel %vm4456, %v4449, %v4453
    %v4458 = vand.u32 2147483647, %v4271
    %vm4459 = vcmp.eq.f32.partialorder %v4458, 8.507059e+37
    %v4460 = vand.u32 %v4271, 2147483648
    %v4461 = vor.u32 1.1754944e-38, %v4460
    %v4462 = vsel %vm4459, %v4461, %v4457
    %v4463 = vmul.f32 %v4227, %v4462
    %v4464 = vrcp.pop %v4274
    %v4465 = vmul.f32 %v4274, %v4464
    %v4466 = vsub.f32 1.0, %v4465
    %v4467 = vmul.f32 %v4464, %v4466
    %v4468 = vadd.f32 %v4464, %v4467
    %vm4469 = vweird.f32 %v4274
    %vm4470 = vweird.f32 %v4464
    %vm4471 = vmor %vm4469, %vm4470
    %v4472 = vsel %vm4471, %v4464, %v4468
    %v4473 = vand.u32 2147483647, %v4274
    %vm4474 = vcmp.eq.f32.partialorder %v4473, 8.507059e+37
    %v4475 = vand.u32 %v4274, 2147483648
    %v4476 = vor.u32 1.1754944e-38, %v4475
    %v4477 = vsel %vm4474, %v4476, %v4472
    %v4478 = vmul.f32 %v4229, %v4477
    %v4479 = vrcp.pop %v4277
    %v4480 = vmul.f32 %v4277, %v4479
    %v4481 = vsub.f32 1.0, %v4480
    %v4482 = vmul.f32 %v4479, %v4481
    %v4483 = vadd.f32 %v4479, %v4482
    %vm4484 = vweird.f32 %v4277
    %vm4485 = vweird.f32 %v4479
    %vm4486 = vmor %vm4484, %vm4485
    %v4487 = vsel %vm4486, %v4479, %v4483
    %v4488 = vand.u32 2147483647, %v4277
    %vm4489 = vcmp.eq.f32.partialorder %v4488, 8.507059e+37
    %v4490 = vand.u32 %v4277, 2147483648
    %v4491 = vor.u32 1.1754944e-38, %v4490
    %v4492 = vsel %vm4489, %v4491, %v4487
    %v4493 = vmul.f32 %v4231, %v4492
    %v4494 = vrcp.pop %v4280
    %v4495 = vmul.f32 %v4280, %v4494
    %v4496 = vsub.f32 1.0, %v4495
    %v4497 = vmul.f32 %v4494, %v4496
    %v4498 = vadd.f32 %v4494, %v4497
    %vm4499 = vweird.f32 %v4280
    %vm4500 = vweird.f32 %v4494
    %vm4501 = vmor %vm4499, %vm4500
    %v4502 = vsel %vm4501, %v4494, %v4498
    %v4503 = vand.u32 2147483647, %v4280
    %vm4504 = vcmp.eq.f32.partialorder %v4503, 8.507059e+37
    %v4505 = vand.u32 %v4280, 2147483648
    %v4506 = vor.u32 1.1754944e-38, %v4505
    %v4507 = vsel %vm4504, %v4506, %v4502
    %v4508 = vmul.f32 %v4233, %v4507
    %v4509 = vrcp.pop %v4283
    %v4510 = vmul.f32 %v4283, %v4509
    %v4511 = vsub.f32 1.0, %v4510
    %v4512 = vmul.f32 %v4509, %v4511
    %v4513 = vadd.f32 %v4509, %v4512
    %vm4514 = vweird.f32 %v4283
    %vm4515 = vweird.f32 %v4509
    %vm4516 = vmor %vm4514, %vm4515
    %v4517 = vsel %vm4516, %v4509, %v4513
    %v4518 = vand.u32 2147483647, %v4283
    %vm4519 = vcmp.eq.f32.partialorder %v4518, 8.507059e+37
    %v4520 = vand.u32 %v4283, 2147483648
    %v4521 = vor.u32 1.1754944e-38, %v4520
    %v4522 = vsel %vm4519, %v4521, %v4517
    %v4523 = vmul.f32 %v4235, %v4522
    %v4525 = vsel %vm318, %v4298, 0
    %v4528 = vsel %vm318, %v4313, 0
    %4530 = vmatpush.msra.mxu0 0.0
    %4531 = vmatpush.msra.mxu0 0.0
    %4532 = vmatpush.msra.mxu0 0.0
    %4533 = vmatpush.msra.mxu0 0.0
    %4534 = vmatpush.msra.mxu0 0.0
    %4535 = vmatpush.msra.mxu0 0.0
    %4536 = vmatpush.msra.mxu0 0.0
    %4537 = vmatpush.msra.mxu0 0.0
    %4538 = vmatpush.msra.mxu0 0.0
    %4539 = vmatpush.msra.mxu0 0.0
    %4540 = vmatpush.msra.mxu0 0.0
    %4541 = vmatpush.msra.mxu0 0.0
    %4542 = vmatpush.msra.mxu0 0.0
    %4543 = vmatpush.msra.mxu0 0.0
    %4544 = vmatpush.msra.mxu0 %v3709
    %4545 = vmatpush.msra.mxu0 %v3708
    %4546 = vmatmul.f32.gmra.mxu0 %v4525
    %v4547 = vpop.f32.mrf.mxu0
    %v4548 = vadd.f32 0.0, %v4547
    %4549 = vmatmul.f32.gmra.mxu0 %v4528
    %v4550 = vpop.f32.mrf.mxu0
    %v4551 = vadd.f32 0.0, %v4550
    %4552 = vdwg.mxu0
    %v4554 = vsel %vm318, %v4328, 0
    %v4557 = vsel %vm318, %v4343, 0
    %4559 = vmatpush.msra.mxu0 0.0
    %4560 = vmatpush.msra.mxu0 0.0
    %4561 = vmatpush.msra.mxu0 0.0
    %4562 = vmatpush.msra.mxu0 0.0
    %4563 = vmatpush.msra.mxu0 0.0
    %4564 = vmatpush.msra.mxu0 0.0
    %4565 = vmatpush.msra.mxu0 0.0
    %4566 = vmatpush.msra.mxu0 0.0
    %4567 = vmatpush.msra.mxu0 0.0
    %4568 = vmatpush.msra.mxu0 0.0
    %4569 = vmatpush.msra.mxu0 0.0
    %4570 = vmatpush.msra.mxu0 0.0
    %4571 = vmatpush.msra.mxu0 0.0
    %4572 = vmatpush.msra.mxu0 0.0
    %4573 = vmatpush.msra.mxu0 %v3711
    %4574 = vmatpush.msra.mxu0 %v3710
    %4575 = vmatmul.f32.gmra.mxu0 %v4554
    %v4576 = vpop.f32.mrf.mxu0
    %v4577 = vadd.f32 0.0, %v4576
    %4578 = vmatmul.f32.gmra.mxu0 %v4557
    %v4579 = vpop.f32.mrf.mxu0
    %v4580 = vadd.f32 0.0, %v4579
    %4581 = vdwg.mxu0
    %v4583 = vsel %vm318, %v4358, 0
    %v4586 = vsel %vm318, %v4373, 0
    %4588 = vmatpush.msra.mxu0 0.0
    %4589 = vmatpush.msra.mxu0 0.0
    %4590 = vmatpush.msra.mxu0 0.0
    %4591 = vmatpush.msra.mxu0 0.0
    %4592 = vmatpush.msra.mxu0 0.0
    %4593 = vmatpush.msra.mxu0 0.0
    %4594 = vmatpush.msra.mxu0 0.0
    %4595 = vmatpush.msra.mxu0 0.0
    %4596 = vmatpush.msra.mxu0 0.0
    %4597 = vmatpush.msra.mxu0 0.0
    %4598 = vmatpush.msra.mxu0 0.0
    %4599 = vmatpush.msra.mxu0 0.0
    %4600 = vmatpush.msra.mxu0 0.0
    %4601 = vmatpush.msra.mxu0 0.0
    %4602 = vmatpush.msra.mxu0 %v3753
    %4603 = vmatpush.msra.mxu0 %v3752
    %4604 = vmatmul.f32.gmra.mxu0 %v4583
    %v4605 = vpop.f32.mrf.mxu0
    %v4606 = vadd.f32 0.0, %v4605
    %4607 = vmatmul.f32.gmra.mxu0 %v4586
    %v4608 = vpop.f32.mrf.mxu0
    %v4609 = vadd.f32 0.0, %v4608
    %4610 = vdwg.mxu0
    %v4612 = vsel %vm318, %v4388, 0
    %v4615 = vsel %vm318, %v4403, 0
    %4617 = vmatpush.msra.mxu0 0.0
    %4618 = vmatpush.msra.mxu0 0.0
    %4619 = vmatpush.msra.mxu0 0.0
    %4620 = vmatpush.msra.mxu0 0.0
    %4621 = vmatpush.msra.mxu0 0.0
    %4622 = vmatpush.msra.mxu0 0.0
    %4623 = vmatpush.msra.mxu0 0.0
    %4624 = vmatpush.msra.mxu0 0.0
    %4625 = vmatpush.msra.mxu0 0.0
    %4626 = vmatpush.msra.mxu0 0.0
    %4627 = vmatpush.msra.mxu0 0.0
    %4628 = vmatpush.msra.mxu0 0.0
    %4629 = vmatpush.msra.mxu0 0.0
    %4630 = vmatpush.msra.mxu0 0.0
    %4631 = vmatpush.msra.mxu0 %v3755
    %4632 = vmatpush.msra.mxu0 %v3754
    %4633 = vmatmul.f32.gmra.mxu0 %v4612
    %v4634 = vpop.f32.mrf.mxu0
    %v4635 = vadd.f32 0.0, %v4634
    %4636 = vmatmul.f32.gmra.mxu0 %v4615
    %v4637 = vpop.f32.mrf.mxu0
    %v4638 = vadd.f32 0.0, %v4637
    %4639 = vdwg.mxu0
    %v4641 = vsel %vm318, %v4418, 0
    %v4644 = vsel %vm318, %v4433, 0
    %4646 = vmatpush.msra.mxu0 0.0
    %4647 = vmatpush.msra.mxu0 0.0
    %4648 = vmatpush.msra.mxu0 0.0
    %4649 = vmatpush.msra.mxu0 0.0
    %4650 = vmatpush.msra.mxu0 0.0
    %4651 = vmatpush.msra.mxu0 0.0
    %4652 = vmatpush.msra.mxu0 0.0
    %4653 = vmatpush.msra.mxu0 0.0
    %4654 = vmatpush.msra.mxu0 0.0
    %4655 = vmatpush.msra.mxu0 0.0
    %4656 = vmatpush.msra.mxu0 0.0
    %4657 = vmatpush.msra.mxu0 0.0
    %4658 = vmatpush.msra.mxu0 0.0
    %4659 = vmatpush.msra.mxu0 0.0
    %4660 = vmatpush.msra.mxu0 %v3797
    %4661 = vmatpush.msra.mxu0 %v3796
    %4662 = vmatmul.f32.gmra.mxu0 %v4641
    %v4663 = vpop.f32.mrf.mxu0
    %v4664 = vadd.f32 0.0, %v4663
    %4665 = vmatmul.f32.gmra.mxu0 %v4644
    %v4666 = vpop.f32.mrf.mxu0
    %v4667 = vadd.f32 0.0, %v4666
    %4668 = vdwg.mxu0
    %v4670 = vsel %vm318, %v4448, 0
    %v4673 = vsel %vm318, %v4463, 0
    %4675 = vmatpush.msra.mxu0 0.0
    %4676 = vmatpush.msra.mxu0 0.0
    %4677 = vmatpush.msra.mxu0 0.0
    %4678 = vmatpush.msra.mxu0 0.0
    %4679 = vmatpush.msra.mxu0 0.0
    %4680 = vmatpush.msra.mxu0 0.0
    %4681 = vmatpush.msra.mxu0 0.0
    %4682 = vmatpush.msra.mxu0 0.0
    %4683 = vmatpush.msra.mxu0 0.0
    %4684 = vmatpush.msra.mxu0 0.0
    %4685 = vmatpush.msra.mxu0 0.0
    %4686 = vmatpush.msra.mxu0 0.0
    %4687 = vmatpush.msra.mxu0 0.0
    %4688 = vmatpush.msra.mxu0 0.0
    %4689 = vmatpush.msra.mxu0 %v3799
    %4690 = vmatpush.msra.mxu0 %v3798
    %4691 = vmatmul.f32.gmra.mxu0 %v4670
    %v4692 = vpop.f32.mrf.mxu0
    %v4693 = vadd.f32 0.0, %v4692
    %4694 = vmatmul.f32.gmra.mxu0 %v4673
    %v4695 = vpop.f32.mrf.mxu0
    %v4696 = vadd.f32 0.0, %v4695
    %4697 = vdwg.mxu0
    %v4699 = vsel %vm318, %v4478, 0
    %v4702 = vsel %vm318, %v4493, 0
    %4704 = vmatpush.msra.mxu0 0.0
    %4705 = vmatpush.msra.mxu0 0.0
    %4706 = vmatpush.msra.mxu0 0.0
    %4707 = vmatpush.msra.mxu0 0.0
    %4708 = vmatpush.msra.mxu0 0.0
    %4709 = vmatpush.msra.mxu0 0.0
    %4710 = vmatpush.msra.mxu0 0.0
    %4711 = vmatpush.msra.mxu0 0.0
    %4712 = vmatpush.msra.mxu0 0.0
    %4713 = vmatpush.msra.mxu0 0.0
    %4714 = vmatpush.msra.mxu0 0.0
    %4715 = vmatpush.msra.mxu0 0.0
    %4716 = vmatpush.msra.mxu0 0.0
    %4717 = vmatpush.msra.mxu0 0.0
    %4718 = vmatpush.msra.mxu0 %v3841
    %4719 = vmatpush.msra.mxu0 %v3840
    %4720 = vmatmul.f32.gmra.mxu0 %v4699
    %v4721 = vpop.f32.mrf.mxu0
    %v4722 = vadd.f32 0.0, %v4721
    %4723 = vmatmul.f32.gmra.mxu0 %v4702
    %v4724 = vpop.f32.mrf.mxu0
    %v4725 = vadd.f32 0.0, %v4724
    %4726 = vdwg.mxu0
    %v4728 = vsel %vm318, %v4508, 0
    %v4731 = vsel %vm318, %v4523, 0
    %4733 = vmatpush.msra.mxu0 0.0
    %4734 = vmatpush.msra.mxu0 0.0
    %4735 = vmatpush.msra.mxu0 0.0
    %4736 = vmatpush.msra.mxu0 0.0
    %4737 = vmatpush.msra.mxu0 0.0
    %4738 = vmatpush.msra.mxu0 0.0
    %4739 = vmatpush.msra.mxu0 0.0
    %4740 = vmatpush.msra.mxu0 0.0
    %4741 = vmatpush.msra.mxu0 0.0
    %4742 = vmatpush.msra.mxu0 0.0
    %4743 = vmatpush.msra.mxu0 0.0
    %4744 = vmatpush.msra.mxu0 0.0
    %4745 = vmatpush.msra.mxu0 0.0
    %4746 = vmatpush.msra.mxu0 0.0
    %4747 = vmatpush.msra.mxu0 %v3843
    %4748 = vmatpush.msra.mxu0 %v3842
    %4749 = vmatmul.f32.gmra.mxu0 %v4728
    %v4750 = vpop.f32.mrf.mxu0
    %v4751 = vadd.f32 0.0, %v4750
    %4752 = vmatmul.f32.gmra.mxu0 %v4731
    %v4753 = vpop.f32.mrf.mxu0
    %v4754 = vadd.f32 0.0, %v4753
    %4755 = vdwg.mxu0
    %4760 = vrot.lane.b32.xlu0 %v4606, 8
    %v4761 = vpop.permute.xlu0 %4760
    %4762 = vrot.lane.b32.xlu0 %v4609, 8
    %v4763 = vpop.permute.xlu0 %4762
    %4764 = vrot.lane.b32.xlu0 %v4635, 8
    %v4765 = vpop.permute.xlu0 %4764
    %4766 = vrot.lane.b32.xlu0 %v4638, 8
    %v4767 = vpop.permute.xlu0 %4766
    %4776 = vrot.lane.b32.xlu0 %v4664, 16
    %v4777 = vpop.permute.xlu0 %4776
    %4778 = vrot.lane.b32.xlu0 %v4667, 16
    %v4779 = vpop.permute.xlu0 %4778
    %4780 = vrot.lane.b32.xlu0 %v4693, 16
    %v4781 = vpop.permute.xlu0 %4780
    %4782 = vrot.lane.b32.xlu0 %v4696, 16
    %v4783 = vpop.permute.xlu0 %4782
    %4792 = vrot.lane.b32.xlu0 %v4722, 24
    %v4793 = vpop.permute.xlu0 %4792
    %4794 = vrot.lane.b32.xlu0 %v4725, 24
    %v4795 = vpop.permute.xlu0 %4794
    %4796 = vrot.lane.b32.xlu0 %v4751, 24
    %v4797 = vpop.permute.xlu0 %4796
    %4798 = vrot.lane.b32.xlu0 %v4754, 24
    %v4799 = vpop.permute.xlu0 %4798
    %v4804 = vsel %vm82, %v4548, %v4761
    %v4805 = vsel %vm82, %v4551, %v4763
    %v4806 = vsel %vm82, %v4577, %v4765
    %v4807 = vsel %vm82, %v4580, %v4767
    %v4808 = vsel %vm318, %v4804, %v4777
    %v4809 = vsel %vm318, %v4805, %v4779
    %v4810 = vsel %vm318, %v4806, %v4781
    %v4811 = vsel %vm318, %v4807, %v4783
    %v4812 = vsel %vm787, %v4808, %v4793
    %v4813 = vsel %vm787, %v4809, %v4795
    %v4814 = vsel %vm787, %v4810, %v4797
    %v4815 = vsel %vm787, %v4811, %v4799
    %4820 = vrot.lane.b32.xlu0 %v4548, 120
    %v4821 = vpop.permute.xlu0 %4820
    %4822 = vrot.lane.b32.xlu0 %v4551, 120
    %v4823 = vpop.permute.xlu0 %4822
    %4824 = vrot.lane.b32.xlu0 %v4577, 120
    %v4825 = vpop.permute.xlu0 %4824
    %4826 = vrot.lane.b32.xlu0 %v4580, 120
    %v4827 = vpop.permute.xlu0 %4826
    %4832 = vrot.lane.b32.xlu0 %v4664, 8
    %v4833 = vpop.permute.xlu0 %4832
    %4834 = vrot.lane.b32.xlu0 %v4667, 8
    %v4835 = vpop.permute.xlu0 %4834
    %4836 = vrot.lane.b32.xlu0 %v4693, 8
    %v4837 = vpop.permute.xlu0 %4836
    %4838 = vrot.lane.b32.xlu0 %v4696, 8
    %v4839 = vpop.permute.xlu0 %4838
    %4844 = vrot.lane.b32.xlu0 %v4722, 16
    %v4845 = vpop.permute.xlu0 %4844
    %4846 = vrot.lane.b32.xlu0 %v4725, 16
    %v4847 = vpop.permute.xlu0 %4846
    %4848 = vrot.lane.b32.xlu0 %v4751, 16
    %v4849 = vpop.permute.xlu0 %4848
    %4850 = vrot.lane.b32.xlu0 %v4754, 16
    %v4851 = vpop.permute.xlu0 %4850
    %v4856 = vsel %vm82, %v4821, %v4606
    %v4857 = vsel %vm82, %v4823, %v4609
    %v4858 = vsel %vm82, %v4825, %v4635
    %v4859 = vsel %vm82, %v4827, %v4638
    %v4860 = vsel %vm318, %v4856, %v4833
    %v4861 = vsel %vm318, %v4857, %v4835
    %v4862 = vsel %vm318, %v4858, %v4837
    %v4863 = vsel %vm318, %v4859, %v4839
    %v4864 = vsel %vm787, %v4860, %v4845
    %v4865 = vsel %vm787, %v4861, %v4847
    %v4866 = vsel %vm787, %v4862, %v4849
    %v4867 = vsel %vm787, %v4863, %v4851
    %4868 = vrot.lane.b32.xlu0 %v4548, 112
    %v4869 = vpop.permute.xlu0 %4868
    %4870 = vrot.lane.b32.xlu0 %v4551, 112
    %v4871 = vpop.permute.xlu0 %4870
    %4872 = vrot.lane.b32.xlu0 %v4577, 112
    %v4873 = vpop.permute.xlu0 %4872
    %4874 = vrot.lane.b32.xlu0 %v4580, 112
    %v4875 = vpop.permute.xlu0 %4874
    %4880 = vrot.lane.b32.xlu0 %v4606, 120
    %v4881 = vpop.permute.xlu0 %4880
    %4882 = vrot.lane.b32.xlu0 %v4609, 120
    %v4883 = vpop.permute.xlu0 %4882
    %4884 = vrot.lane.b32.xlu0 %v4635, 120
    %v4885 = vpop.permute.xlu0 %4884
    %4886 = vrot.lane.b32.xlu0 %v4638, 120
    %v4887 = vpop.permute.xlu0 %4886
    %4892 = vrot.lane.b32.xlu0 %v4722, 8
    %v4893 = vpop.permute.xlu0 %4892
    %4894 = vrot.lane.b32.xlu0 %v4725, 8
    %v4895 = vpop.permute.xlu0 %4894
    %4896 = vrot.lane.b32.xlu0 %v4751, 8
    %v4897 = vpop.permute.xlu0 %4896
    %4898 = vrot.lane.b32.xlu0 %v4754, 8
    %v4899 = vpop.permute.xlu0 %4898
    %v4904 = vsel %vm82, %v4869, %v4881
    %v4905 = vsel %vm82, %v4871, %v4883
    %v4906 = vsel %vm82, %v4873, %v4885
    %v4907 = vsel %vm82, %v4875, %v4887
    %v4908 = vsel %vm318, %v4904, %v4664
    %v4909 = vsel %vm318, %v4905, %v4667
    %v4910 = vsel %vm318, %v4906, %v4693
    %v4911 = vsel %vm318, %v4907, %v4696
    %v4912 = vsel %vm787, %v4908, %v4893
    %v4913 = vsel %vm787, %v4909, %v4895
    %v4914 = vsel %vm787, %v4910, %v4897
    %v4915 = vsel %vm787, %v4911, %v4899
    %v4917 = vsel %vm192, %v4812, 0
    %v4920 = vsel %vm192, %v4813, 0
    %v4923 = vsel %vm192, %v4814, 0
    %v4926 = vsel %vm192, %v4815, 0
    %v4929 = vsel %vm192, %v4864, 0
    %v4932 = vsel %vm192, %v4865, 0
    %v4935 = vsel %vm192, %v4866, 0
    %v4938 = vsel %vm192, %v4867, 0
    %v4941 = vsel %vm192, %v4912, 0
    %v4944 = vsel %vm192, %v4913, 0
    %v4947 = vsel %vm192, %v4914, 0
    %v4950 = vsel %vm192, %v4915, 0
    %4952 = vmatpush.msra.mxu0 0.0
    %4953 = vmatpush.msra.mxu0 0.0
    %4954 = vmatpush.msra.mxu0 0.0
    %4955 = vmatpush.msra.mxu0 0.0
    %4956 = vmatpush.msra.mxu0 0.0
    %4957 = vmatpush.msra.mxu0 0.0
    %4958 = vmatpush.msra.mxu0 0.0
    %4959 = vmatpush.msra.mxu0 0.0
    %4960 = vmatpush.msra.mxu0 0.0
    %4961 = vmatpush.msra.mxu0 0.0
    %4962 = vmatpush.msra.mxu0 0.0
    %4963 = vmatpush.msra.mxu0 0.0
    %4964 = vmatpush.msra.mxu0 %v3238
    %4965 = vmatpush.msra.mxu0 %v3237
    %4966 = vmatpush.msra.mxu0 %v3236
    %4967 = vmatpush.msra.mxu0 %v3235
    %4968 = vmatmul.f32.gmra.mxu0 %v4917
    %v4969 = vpop.f32.mrf.mxu0
    %v4970 = vadd.f32 0.0, %v4969
    %4971 = vmatmul.f32.gmra.mxu0 %v4920
    %v4972 = vpop.f32.mrf.mxu0
    %v4973 = vadd.f32 0.0, %v4972
    %4974 = vmatmul.f32.gmra.mxu0 %v4923
    %v4975 = vpop.f32.mrf.mxu0
    %v4976 = vadd.f32 0.0, %v4975
    %4977 = vmatmul.f32.gmra.mxu0 %v4926
    %v4978 = vpop.f32.mrf.mxu0
    %v4979 = vadd.f32 0.0, %v4978
    %4980 = vmatmul.f32.gmra.mxu0 %v4929
    %v4981 = vpop.f32.mrf.mxu0
    %v4982 = vadd.f32 0.0, %v4981
    %4983 = vmatmul.f32.gmra.mxu0 %v4932
    %v4984 = vpop.f32.mrf.mxu0
    %v4985 = vadd.f32 0.0, %v4984
    %4986 = vmatmul.f32.gmra.mxu0 %v4935
    %v4987 = vpop.f32.mrf.mxu0
    %v4988 = vadd.f32 0.0, %v4987
    %4989 = vmatmul.f32.gmra.mxu0 %v4938
    %v4990 = vpop.f32.mrf.mxu0
    %v4991 = vadd.f32 0.0, %v4990
    %4992 = vmatmul.f32.gmra.mxu0 %v4941
    %v4993 = vpop.f32.mrf.mxu0
    %v4994 = vadd.f32 0.0, %v4993
    %4995 = vmatmul.f32.gmra.mxu0 %v4944
    %v4996 = vpop.f32.mrf.mxu0
    %v4997 = vadd.f32 0.0, %v4996
    %4998 = vmatmul.f32.gmra.mxu0 %v4947
    %v4999 = vpop.f32.mrf.mxu0
    %v5000 = vadd.f32 0.0, %v4999
    %5001 = vmatmul.f32.gmra.mxu0 %v4950
    %v5002 = vpop.f32.mrf.mxu0
    %v5003 = vadd.f32 0.0, %v5002
    %5004 = vdwg.mxu0
    %v5005 = vadd.f32 %v3219, %v4970
    %v5006 = vadd.f32 %v3220, %v4973
    %v5007 = vadd.f32 %v3221, %v4976
    %v5008 = vadd.f32 %v3222, %v4979
    %v5009 = vadd.f32 %v3223, %v4982
    %v5010 = vadd.f32 %v3224, %v4985
    %v5011 = vadd.f32 %v3225, %v4988
    %v5012 = vadd.f32 %v3226, %v4991
    %v5013 = vadd.f32 %v3227, %v4994
    %v5014 = vadd.f32 %v3228, %v4997
    %v5015 = vadd.f32 %v3229, %v5000
    %v5016 = vadd.f32 %v3230, %v5003
    %v5018 = vsel %vm192, %v5005, 0
    %v5021 = vsel %vm192, %v5006, 0
    %v5024 = vsel %vm192, %v5007, 0
    %v5027 = vsel %vm192, %v5008, 0
    %v5030 = vsel %vm192, %v5009, 0
    %v5033 = vsel %vm192, %v5010, 0
    %v5036 = vsel %vm192, %v5011, 0
    %v5039 = vsel %vm192, %v5012, 0
    %v5042 = vsel %vm192, %v5013, 0
    %v5045 = vsel %vm192, %v5014, 0
    %v5048 = vsel %vm192, %v5015, 0
    %v5051 = vsel %vm192, %v5016, 0
    %5053 = vmatpush.msra.mxu0 0.0
    %5054 = vmatpush.msra.mxu0 0.0
    %5055 = vmatpush.msra.mxu0 0.0
    %5056 = vmatpush.msra.mxu0 0.0
    %5057 = vmatpush.msra.mxu0 0.0
    %5058 = vmatpush.msra.mxu0 0.0
    %5059 = vmatpush.msra.mxu0 0.0
    %5060 = vmatpush.msra.mxu0 0.0
    %5061 = vmatpush.msra.mxu0 0.0
    %5062 = vmatpush.msra.mxu0 0.0
    %5063 = vmatpush.msra.mxu0 0.0
    %5064 = vmatpush.msra.mxu0 0.0
    %5065 = vmatpush.msra.mxu0 %v3242
    %5066 = vmatpush.msra.mxu0 %v3241
    %5067 = vmatpush.msra.mxu0 %v3240
    %5068 = vmatpush.msra.mxu0 %v3239
    %5069 = vmatmul.f32.gmra.mxu0 %v5018
    %v5070 = vpop.f32.mrf.mxu0
    %v5071 = vadd.f32 0.0, %v5070
    %5072 = vmatmul.f32.gmra.mxu0 %v5021
    %v5073 = vpop.f32.mrf.mxu0
    %v5074 = vadd.f32 0.0, %v5073
    %5075 = vmatmul.f32.gmra.mxu0 %v5024
    %v5076 = vpop.f32.mrf.mxu0
    %v5077 = vadd.f32 0.0, %v5076
    %5078 = vmatmul.f32.gmra.mxu0 %v5027
    %v5079 = vpop.f32.mrf.mxu0
    %v5080 = vadd.f32 0.0, %v5079
    %5081 = vmatmul.f32.gmra.mxu0 %v5030
    %v5082 = vpop.f32.mrf.mxu0
    %v5083 = vadd.f32 0.0, %v5082
    %5084 = vmatmul.f32.gmra.mxu0 %v5033
    %v5085 = vpop.f32.mrf.mxu0
    %v5086 = vadd.f32 0.0, %v5085
    %5087 = vmatmul.f32.gmra.mxu0 %v5036
    %v5088 = vpop.f32.mrf.mxu0
    %v5089 = vadd.f32 0.0, %v5088
    %5090 = vmatmul.f32.gmra.mxu0 %v5039
    %v5091 = vpop.f32.mrf.mxu0
    %v5092 = vadd.f32 0.0, %v5091
    %5093 = vmatmul.f32.gmra.mxu0 %v5042
    %v5094 = vpop.f32.mrf.mxu0
    %v5095 = vadd.f32 0.0, %v5094
    %5096 = vmatmul.f32.gmra.mxu0 %v5045
    %v5097 = vpop.f32.mrf.mxu0
    %v5098 = vadd.f32 0.0, %v5097
    %5099 = vmatmul.f32.gmra.mxu0 %v5048
    %v5100 = vpop.f32.mrf.mxu0
    %v5101 = vadd.f32 0.0, %v5100
    %5102 = vmatmul.f32.gmra.mxu0 %v5051
    %v5103 = vpop.f32.mrf.mxu0
    %v5104 = vadd.f32 0.0, %v5103
    %5105 = vdwg.mxu0
    %v5106 = vmul.f32 %v5071, %v5071
    %v5107 = vmul.f32 %v5074, %v5074
    %v5108 = vmul.f32 %v5077, %v5077
    %v5109 = vmul.f32 %v5080, %v5080
    %v5110 = vmul.f32 %v5083, %v5083
    %v5111 = vmul.f32 %v5086, %v5086
    %v5112 = vmul.f32 %v5089, %v5089
    %v5113 = vmul.f32 %v5092, %v5092
    %v5114 = vmul.f32 %v5095, %v5095
    %v5115 = vmul.f32 %v5098, %v5098
    %v5116 = vmul.f32 %v5101, %v5101
    %v5117 = vmul.f32 %v5104, %v5104
    %v5118 = vsel %vm192, %v5106, 0.0
    %v5119 = vsel %vm192, %v5110, 0.0
    %v5120 = vadd.f32 %v5118, %v5119
    %v5121 = vsel %vm192, %v5114, 0.0
    %v5122 = vadd.f32 %v5120, %v5121
    %v5123 = vsel %vm192, %v5107, 0.0
    %v5124 = vsel %vm192, %v5111, 0.0
    %v5125 = vadd.f32 %v5123, %v5124
    %v5126 = vsel %vm192, %v5115, 0.0
    %v5127 = vadd.f32 %v5125, %v5126
    %v5128 = vsel %vm192, %v5108, 0.0
    %v5129 = vsel %vm192, %v5112, 0.0
    %v5130 = vadd.f32 %v5128, %v5129
    %v5131 = vsel %vm192, %v5116, 0.0
    %v5132 = vadd.f32 %v5130, %v5131
    %v5133 = vsel %vm192, %v5109, 0.0
    %v5134 = vsel %vm192, %v5113, 0.0
    %v5135 = vadd.f32 %v5133, %v5134
    %v5136 = vsel %vm192, %v5117, 0.0
    %v5137 = vadd.f32 %v5135, %v5136
    %v5138 = vrsqrt.pop %v5122
    %v5139 = vmul.f32 %v5138, %v5122
    %v5140 = vmul.f32 %v5139, %v5138
    %v5141 = vmul.f32 0.5, %v5140
    %v5142 = vsub.f32 1.5, %v5141
    %v5143 = vmul.f32 %v5138, %v5142
    %v5144 = vmul.f32 %v5122, %v5143
    %vm5145 = vcmp.eq.f32.partialorder %v5122, inf
    %v5146 = vsel %vm5145, %v5122, %v5144
    %vm5147 = vcmp.eq.f32.partialorder %v5122, 0.0
    %v5148 = vand.u32 %v5122, 2147483648
    %v5149 = vsel %vm5147, %v5148, %v5146
    %v5150 = vrsqrt.pop %v5127
    %v5151 = vmul.f32 %v5150, %v5127
    %v5152 = vmul.f32 %v5151, %v5150
    %v5153 = vmul.f32 0.5, %v5152
    %v5154 = vsub.f32 1.5, %v5153
    %v5155 = vmul.f32 %v5150, %v5154
    %v5156 = vmul.f32 %v5127, %v5155
    %vm5157 = vcmp.eq.f32.partialorder %v5127, inf
    %v5158 = vsel %vm5157, %v5127, %v5156
    %vm5159 = vcmp.eq.f32.partialorder %v5127, 0.0
    %v5160 = vand.u32 %v5127, 2147483648
    %v5161 = vsel %vm5159, %v5160, %v5158
    %v5162 = vrsqrt.pop %v5132
    %v5163 = vmul.f32 %v5162, %v5132
    %v5164 = vmul.f32 %v5163, %v5162
    %v5165 = vmul.f32 0.5, %v5164
    %v5166 = vsub.f32 1.5, %v5165
    %v5167 = vmul.f32 %v5162, %v5166
    %v5168 = vmul.f32 %v5132, %v5167
    %vm5169 = vcmp.eq.f32.partialorder %v5132, inf
    %v5170 = vsel %vm5169, %v5132, %v5168
    %vm5171 = vcmp.eq.f32.partialorder %v5132, 0.0
    %v5172 = vand.u32 %v5132, 2147483648
    %v5173 = vsel %vm5171, %v5172, %v5170
    %v5174 = vrsqrt.pop %v5137
    %v5175 = vmul.f32 %v5174, %v5137
    %v5176 = vmul.f32 %v5175, %v5174
    %v5177 = vmul.f32 0.5, %v5176
    %v5178 = vsub.f32 1.5, %v5177
    %v5179 = vmul.f32 %v5174, %v5178
    %v5180 = vmul.f32 %v5137, %v5179
    %vm5181 = vcmp.eq.f32.partialorder %v5137, inf
    %v5182 = vsel %vm5181, %v5137, %v5180
    %vm5183 = vcmp.eq.f32.partialorder %v5137, 0.0
    %v5184 = vand.u32 %v5137, 2147483648
    %v5185 = vsel %vm5183, %v5184, %v5182
    %v5186 = vadd.f32 %v5149, 1e-06
    %v5187 = vadd.f32 %v5161, 1e-06
    %v5188 = vadd.f32 %v5173, 1e-06
    %v5189 = vadd.f32 %v5185, 1e-06
    %v5190 = vsel %vm192, %v5186, 0.0
    %v5191 = vsel %vm192, %v5187, 0.0
    %v5192 = vadd.f32 %v5190, %v5191
    %v5193 = vsel %vm192, %v5188, 0.0
    %v5194 = vadd.f32 %v5192, %v5193
    %v5195 = vsel %vm192, %v5189, 0.0
    %v5196 = vadd.f32 %v5194, %v5195
    %v5197 = vrot.slane %v5196, 4
    %v5198 = vadd.f32 %v5196, %v5197
    %v5199 = vrot.slane %v5198, 2
    %v5200 = vadd.f32 %v5198, %v5199
    %v5201 = vrot.slane %v5200, 1
    %v5202 = vadd.f32 %v5200, %v5201
    %v5203 = vmul.f32 %v5202, %v2153
    %v5204 = vsub.f32 %v5186, %v5203
    %v5205 = vsub.f32 %v5187, %v5203
    %v5206 = vsub.f32 %v5188, %v5203
    %v5207 = vsub.f32 %v5189, %v5203
    %v5208 = vmul.f32 %v5204, %v5204
    %v5209 = vmul.f32 %v5205, %v5205
    %v5210 = vmul.f32 %v5206, %v5206
    %v5211 = vmul.f32 %v5207, %v5207
    %v5212 = vsel %vm192, %v5208, 0.0
    %v5213 = vsel %vm192, %v5209, 0.0
    %v5214 = vadd.f32 %v5212, %v5213
    %v5215 = vsel %vm192, %v5210, 0.0
    %v5216 = vadd.f32 %v5214, %v5215
    %v5217 = vsel %vm192, %v5211, 0.0
    %v5218 = vadd.f32 %v5216, %v5217
    %v5219 = vrot.slane %v5218, 4
    %v5220 = vadd.f32 %v5218, %v5219
    %v5221 = vrot.slane %v5220, 2
    %v5222 = vadd.f32 %v5220, %v5221
    %v5223 = vrot.slane %v5222, 1
    %v5224 = vadd.f32 %v5222, %v5223
    %v5225 = vmul.f32 %v5224, %v2153
    %v5226 = vadd.f32 %v5225, 1e-05
    %v5227 = vrsqrt.pop %v5226
    %v5228 = vmul.f32 %v5227, %v5226
    %v5229 = vmul.f32 %v5228, %v5227
    %v5230 = vmul.f32 0.5, %v5229
    %v5231 = vsub.f32 1.5, %v5230
    %v5232 = vmul.f32 %v5227, %v5231
    %v5233 = vmul.f32 %v5226, %v5232
    %vm5234 = vcmp.eq.f32.partialorder %v5226, inf
    %v5235 = vsel %vm5234, %v5226, %v5233
    %vm5236 = vcmp.eq.f32.partialorder %v5226, 0.0
    %v5237 = vand.u32 %v5226, 2147483648
    %v5238 = vsel %vm5236, %v5237, %v5235
    %v5239 = vrcp.pop %v5238
    %v5240 = vmul.f32 %v5238, %v5239
    %v5241 = vsub.f32 1.0, %v5240
    %v5242 = vmul.f32 %v5239, %v5241
    %v5243 = vadd.f32 %v5239, %v5242
    %vm5244 = vweird.f32 %v5238
    %vm5245 = vweird.f32 %v5239
    %vm5246 = vmor %vm5244, %vm5245
    %v5247 = vsel %vm5246, %v5239, %v5243
    %v5248 = vand.u32 2147483647, %v5238
    %vm5249 = vcmp.eq.f32.partialorder %v5248, 8.507059e+37
    %v5250 = vand.u32 %v5238, 2147483648
    %v5251 = vor.u32 1.1754944e-38, %v5250
    %v5252 = vsel %vm5249, %v5251, %v5247
    %v5253 = vmul.f32 %v5204, %v5252
    %v5254 = vmul.f32 %v5205, %v5252
    %v5255 = vmul.f32 %v5206, %v5252
    %v5256 = vmul.f32 %v5207, %v5252
    %v5257 = vrcp.pop %v5186
    %v5258 = vmul.f32 %v5186, %v5257
    %v5259 = vsub.f32 1.0, %v5258
    %v5260 = vmul.f32 %v5257, %v5259
    %v5261 = vadd.f32 %v5257, %v5260
    %vm5262 = vweird.f32 %v5186
    %vm5263 = vweird.f32 %v5257
    %vm5264 = vmor %vm5262, %vm5263
    %v5265 = vsel %vm5264, %v5257, %v5261
    %v5266 = vand.u32 2147483647, %v5186
    %vm5267 = vcmp.eq.f32.partialorder %v5266, 8.507059e+37
    %v5268 = vand.u32 %v5186, 2147483648
    %v5269 = vor.u32 1.1754944e-38, %v5268
    %v5270 = vsel %vm5267, %v5269, %v5265
    %v5271 = vmul.f32 %v5253, %v5270
    %v5272 = vrcp.pop %v5187
    %v5273 = vmul.f32 %v5187, %v5272
    %v5274 = vsub.f32 1.0, %v5273
    %v5275 = vmul.f32 %v5272, %v5274
    %v5276 = vadd.f32 %v5272, %v5275
    %vm5277 = vweird.f32 %v5187
    %vm5278 = vweird.f32 %v5272
    %vm5279 = vmor %vm5277, %vm5278
    %v5280 = vsel %vm5279, %v5272, %v5276
    %v5281 = vand.u32 2147483647, %v5187
    %vm5282 = vcmp.eq.f32.partialorder %v5281, 8.507059e+37
    %v5283 = vand.u32 %v5187, 2147483648
    %v5284 = vor.u32 1.1754944e-38, %v5283
    %v5285 = vsel %vm5282, %v5284, %v5280
    %v5286 = vmul.f32 %v5254, %v5285
    %v5287 = vrcp.pop %v5188
    %v5288 = vmul.f32 %v5188, %v5287
    %v5289 = vsub.f32 1.0, %v5288
    %v5290 = vmul.f32 %v5287, %v5289
    %v5291 = vadd.f32 %v5287, %v5290
    %vm5292 = vweird.f32 %v5188
    %vm5293 = vweird.f32 %v5287
    %vm5294 = vmor %vm5292, %vm5293
    %v5295 = vsel %vm5294, %v5287, %v5291
    %v5296 = vand.u32 2147483647, %v5188
    %vm5297 = vcmp.eq.f32.partialorder %v5296, 8.507059e+37
    %v5298 = vand.u32 %v5188, 2147483648
    %v5299 = vor.u32 1.1754944e-38, %v5298
    %v5300 = vsel %vm5297, %v5299, %v5295
    %v5301 = vmul.f32 %v5255, %v5300
    %v5302 = vrcp.pop %v5189
    %v5303 = vmul.f32 %v5189, %v5302
    %v5304 = vsub.f32 1.0, %v5303
    %v5305 = vmul.f32 %v5302, %v5304
    %v5306 = vadd.f32 %v5302, %v5305
    %vm5307 = vweird.f32 %v5189
    %vm5308 = vweird.f32 %v5302
    %vm5309 = vmor %vm5307, %vm5308
    %v5310 = vsel %vm5309, %v5302, %v5306
    %v5311 = vand.u32 2147483647, %v5189
    %vm5312 = vcmp.eq.f32.partialorder %v5311, 8.507059e+37
    %v5313 = vand.u32 %v5189, 2147483648
    %v5314 = vor.u32 1.1754944e-38, %v5313
    %v5315 = vsel %vm5312, %v5314, %v5310
    %v5316 = vmul.f32 %v5256, %v5315
    %v5317 = vmul.f32 %v5071, %v5271
    %v5318 = vmul.f32 %v5074, %v5286
    %v5319 = vmul.f32 %v5077, %v5301
    %v5320 = vmul.f32 %v5080, %v5316
    %v5321 = vmul.f32 %v5083, %v5271
    %v5322 = vmul.f32 %v5086, %v5286
    %v5323 = vmul.f32 %v5089, %v5301
    %v5324 = vmul.f32 %v5092, %v5316
    %v5325 = vmul.f32 %v5095, %v5271
    %v5326 = vmul.f32 %v5098, %v5286
    %v5327 = vmul.f32 %v5101, %v5301
    %v5328 = vmul.f32 %v5104, %v5316
    %5329 = vmatpush.msra.mxu0 0.0
    %5330 = vmatpush.msra.mxu0 0.0
    %5331 = vmatpush.msra.mxu0 0.0
    %5332 = vmatpush.msra.mxu0 0.0
    %5333 = vmatpush.msra.mxu0 0.0
    %5334 = vmatpush.msra.mxu0 0.0
    %5335 = vmatpush.msra.mxu0 0.0
    %5336 = vmatpush.msra.mxu0 0.0
    %5337 = vmatpush.msra.mxu0 0.0
    %5338 = vmatpush.msra.mxu0 0.0
    %5339 = vmatpush.msra.mxu0 0.0
    %5340 = vmatpush.msra.mxu0 0.0
    %5341 = vmatpush.msra.mxu0 %v3246
    %5342 = vmatpush.msra.mxu0 %v3245
    %5343 = vmatpush.msra.mxu0 %v3244
    %5344 = vmatpush.msra.mxu0 %v3243
    %5345 = vmatmul.f32.gmra.mxu0 %v5018
    %v5346 = vpop.f32.mrf.mxu0
    %v5347 = vadd.f32 0.0, %v5346
    %5348 = vmatmul.f32.gmra.mxu0 %v5021
    %v5349 = vpop.f32.mrf.mxu0
    %v5350 = vadd.f32 0.0, %v5349
    %5351 = vmatmul.f32.gmra.mxu0 %v5024
    %v5352 = vpop.f32.mrf.mxu0
    %v5353 = vadd.f32 0.0, %v5352
    %5354 = vmatmul.f32.gmra.mxu0 %v5027
    %v5355 = vpop.f32.mrf.mxu0
    %v5356 = vadd.f32 0.0, %v5355
    %5357 = vmatmul.f32.gmra.mxu0 %v5030
    %v5358 = vpop.f32.mrf.mxu0
    %v5359 = vadd.f32 0.0, %v5358
    %5360 = vmatmul.f32.gmra.mxu0 %v5033
    %v5361 = vpop.f32.mrf.mxu0
    %v5362 = vadd.f32 0.0, %v5361
    %5363 = vmatmul.f32.gmra.mxu0 %v5036
    %v5364 = vpop.f32.mrf.mxu0
    %v5365 = vadd.f32 0.0, %v5364
    %5366 = vmatmul.f32.gmra.mxu0 %v5039
    %v5367 = vpop.f32.mrf.mxu0
    %v5368 = vadd.f32 0.0, %v5367
    %5369 = vmatmul.f32.gmra.mxu0 %v5042
    %v5370 = vpop.f32.mrf.mxu0
    %v5371 = vadd.f32 0.0, %v5370
    %5372 = vmatmul.f32.gmra.mxu0 %v5045
    %v5373 = vpop.f32.mrf.mxu0
    %v5374 = vadd.f32 0.0, %v5373
    %5375 = vmatmul.f32.gmra.mxu0 %v5048
    %v5376 = vpop.f32.mrf.mxu0
    %v5377 = vadd.f32 0.0, %v5376
    %5378 = vmatmul.f32.gmra.mxu0 %v5051
    %v5379 = vpop.f32.mrf.mxu0
    %v5380 = vadd.f32 0.0, %v5379
    %5381 = vdwg.mxu0
    %v5382 = vmul.f32 %v5317, %v5347
    %v5383 = vmul.f32 %v5318, %v5350
    %v5384 = vmul.f32 %v5319, %v5353
    %v5385 = vmul.f32 %v5320, %v5356
    %v5386 = vmul.f32 %v5321, %v5359
    %v5387 = vmul.f32 %v5322, %v5362
    %v5388 = vmul.f32 %v5323, %v5365
    %v5389 = vmul.f32 %v5324, %v5368
    %v5390 = vmul.f32 %v5325, %v5371
    %v5391 = vmul.f32 %v5326, %v5374
    %v5392 = vmul.f32 %v5327, %v5377
    %v5393 = vmul.f32 %v5328, %v5380
    %v5394 = vsel %vm192, %v5382, 0.0
    %v5395 = vsel %vm192, %v5386, 0.0
    %v5396 = vadd.f32 %v5394, %v5395
    %v5397 = vsel %vm192, %v5390, 0.0
    %v5398 = vadd.f32 %v5396, %v5397
    %v5399 = vsel %vm192, %v5383, 0.0
    %v5400 = vsel %vm192, %v5387, 0.0
    %v5401 = vadd.f32 %v5399, %v5400
    %v5402 = vsel %vm192, %v5391, 0.0
    %v5403 = vadd.f32 %v5401, %v5402
    %v5404 = vsel %vm192, %v5384, 0.0
    %v5405 = vsel %vm192, %v5388, 0.0
    %v5406 = vadd.f32 %v5404, %v5405
    %v5407 = vsel %vm192, %v5392, 0.0
    %v5408 = vadd.f32 %v5406, %v5407
    %v5409 = vsel %vm192, %v5385, 0.0
    %v5410 = vsel %vm192, %v5389, 0.0
    %v5411 = vadd.f32 %v5409, %v5410
    %v5412 = vsel %vm192, %v5393, 0.0
    %v5413 = vadd.f32 %v5411, %v5412
    %v5414 = vmul.f32 %v5347, %v5347
    %v5415 = vmul.f32 %v5350, %v5350
    %v5416 = vmul.f32 %v5353, %v5353
    %v5417 = vmul.f32 %v5356, %v5356
    %v5418 = vmul.f32 %v5359, %v5359
    %v5419 = vmul.f32 %v5362, %v5362
    %v5420 = vmul.f32 %v5365, %v5365
    %v5421 = vmul.f32 %v5368, %v5368
    %v5422 = vmul.f32 %v5371, %v5371
    %v5423 = vmul.f32 %v5374, %v5374
    %v5424 = vmul.f32 %v5377, %v5377
    %v5425 = vmul.f32 %v5380, %v5380
    %v5426 = vsel %vm192, %v5414, 0.0
    %v5427 = vsel %vm192, %v5418, 0.0
    %v5428 = vadd.f32 %v5426, %v5427
    %v5429 = vsel %vm192, %v5422, 0.0
    %v5430 = vadd.f32 %v5428, %v5429
    %v5431 = vsel %vm192, %v5415, 0.0
    %v5432 = vsel %vm192, %v5419, 0.0
    %v5433 = vadd.f32 %v5431, %v5432
    %v5434 = vsel %vm192, %v5423, 0.0
    %v5435 = vadd.f32 %v5433, %v5434
    %v5436 = vsel %vm192, %v5416, 0.0
    %v5437 = vsel %vm192, %v5420, 0.0
    %v5438 = vadd.f32 %v5436, %v5437
    %v5439 = vsel %vm192, %v5424, 0.0
    %v5440 = vadd.f32 %v5438, %v5439
    %v5441 = vsel %vm192, %v5417, 0.0
    %v5442 = vsel %vm192, %v5421, 0.0
    %v5443 = vadd.f32 %v5441, %v5442
    %v5444 = vsel %vm192, %v5425, 0.0
    %v5445 = vadd.f32 %v5443, %v5444
    %v5446 = vadd.f32 %v5430, 1e-06
    %v5447 = vadd.f32 %v5435, 1e-06
    %v5448 = vadd.f32 %v5440, 1e-06
    %v5449 = vadd.f32 %v5445, 1e-06
    %v5450 = vrcp.pop %v5446
    %v5451 = vmul.f32 %v5446, %v5450
    %v5452 = vsub.f32 1.0, %v5451
    %v5453 = vmul.f32 %v5450, %v5452
    %v5454 = vadd.f32 %v5450, %v5453
    %vm5455 = vweird.f32 %v5446
    %vm5456 = vweird.f32 %v5450
    %vm5457 = vmor %vm5455, %vm5456
    %v5458 = vsel %vm5457, %v5450, %v5454
    %v5459 = vand.u32 2147483647, %v5446
    %vm5460 = vcmp.eq.f32.partialorder %v5459, 8.507059e+37
    %v5461 = vand.u32 %v5446, 2147483648
    %v5462 = vor.u32 1.1754944e-38, %v5461
    %v5463 = vsel %vm5460, %v5462, %v5458
    %v5464 = vmul.f32 %v5398, %v5463
    %v5465 = vrcp.pop %v5447
    %v5466 = vmul.f32 %v5447, %v5465
    %v5467 = vsub.f32 1.0, %v5466
    %v5468 = vmul.f32 %v5465, %v5467
    %v5469 = vadd.f32 %v5465, %v5468
    %vm5470 = vweird.f32 %v5447
    %vm5471 = vweird.f32 %v5465
    %vm5472 = vmor %vm5470, %vm5471
    %v5473 = vsel %vm5472, %v5465, %v5469
    %v5474 = vand.u32 2147483647, %v5447
    %vm5475 = vcmp.eq.f32.partialorder %v5474, 8.507059e+37
    %v5476 = vand.u32 %v5447, 2147483648
    %v5477 = vor.u32 1.1754944e-38, %v5476
    %v5478 = vsel %vm5475, %v5477, %v5473
    %v5479 = vmul.f32 %v5403, %v5478
    %v5480 = vrcp.pop %v5448
    %v5481 = vmul.f32 %v5448, %v5480
    %v5482 = vsub.f32 1.0, %v5481
    %v5483 = vmul.f32 %v5480, %v5482
    %v5484 = vadd.f32 %v5480, %v5483
    %vm5485 = vweird.f32 %v5448
    %vm5486 = vweird.f32 %v5480
    %vm5487 = vmor %vm5485, %vm5486
    %v5488 = vsel %vm5487, %v5480, %v5484
    %v5489 = vand.u32 2147483647, %v5448
    %vm5490 = vcmp.eq.f32.partialorder %v5489, 8.507059e+37
    %v5491 = vand.u32 %v5448, 2147483648
    %v5492 = vor.u32 1.1754944e-38, %v5491
    %v5493 = vsel %vm5490, %v5492, %v5488
    %v5494 = vmul.f32 %v5408, %v5493
    %v5495 = vrcp.pop %v5449
    %v5496 = vmul.f32 %v5449, %v5495
    %v5497 = vsub.f32 1.0, %v5496
    %v5498 = vmul.f32 %v5495, %v5497
    %v5499 = vadd.f32 %v5495, %v5498
    %vm5500 = vweird.f32 %v5449
    %vm5501 = vweird.f32 %v5495
    %vm5502 = vmor %vm5500, %vm5501
    %v5503 = vsel %vm5502, %v5495, %v5499
    %v5504 = vand.u32 2147483647, %v5449
    %vm5505 = vcmp.eq.f32.partialorder %v5504, 8.507059e+37
    %v5506 = vand.u32 %v5449, 2147483648
    %v5507 = vor.u32 1.1754944e-38, %v5506
    %v5508 = vsel %vm5505, %v5507, %v5503
    %v5509 = vmul.f32 %v5413, %v5508
    %v5510 = vmul.f32 %v5464, %v5347
    %v5511 = vmul.f32 %v5479, %v5350
    %v5512 = vmul.f32 %v5494, %v5353
    %v5513 = vmul.f32 %v5509, %v5356
    %v5514 = vmul.f32 %v5464, %v5359
    %v5515 = vmul.f32 %v5479, %v5362
    %v5516 = vmul.f32 %v5494, %v5365
    %v5517 = vmul.f32 %v5509, %v5368
    %v5518 = vmul.f32 %v5464, %v5371
    %v5519 = vmul.f32 %v5479, %v5374
    %v5520 = vmul.f32 %v5494, %v5377
    %v5521 = vmul.f32 %v5509, %v5380
    %v5522 = vsub.f32 %v5317, %v5510
    %v5523 = vsub.f32 %v5318, %v5511
    %v5524 = vsub.f32 %v5319, %v5512
    %v5525 = vsub.f32 %v5320, %v5513
    %v5526 = vsub.f32 %v5321, %v5514
    %v5527 = vsub.f32 %v5322, %v5515
    %v5528 = vsub.f32 %v5323, %v5516
    %v5529 = vsub.f32 %v5324, %v5517
    %v5530 = vsub.f32 %v5325, %v5518
    %v5531 = vsub.f32 %v5326, %v5519
    %v5532 = vsub.f32 %v5327, %v5520
    %v5533 = vsub.f32 %v5328, %v5521
    %vm5534 = vcmp.ge.f32.partialorder %v5398, 0.0
    %vm5535 = vcmp.ge.f32.partialorder %v5403, 0.0
    %vm5536 = vcmp.ge.f32.partialorder %v5408, 0.0
    %vm5537 = vcmp.ge.f32.partialorder %v5413, 0.0
    %v5538 = vmul.f32 %v5317, 0.2
    %v5539 = vmul.f32 %v5318, 0.2
    %v5540 = vmul.f32 %v5319, 0.2
    %v5541 = vmul.f32 %v5320, 0.2
    %v5542 = vmul.f32 %v5321, 0.2
    %v5543 = vmul.f32 %v5322, 0.2
    %v5544 = vmul.f32 %v5323, 0.2
    %v5545 = vmul.f32 %v5324, 0.2
    %v5546 = vmul.f32 %v5325, 0.2
    %v5547 = vmul.f32 %v5326, 0.2
    %v5548 = vmul.f32 %v5327, 0.2
    %v5549 = vmul.f32 %v5328, 0.2
    %v5550 = vmul.f32 %v5522, 0.8
    %v5551 = vmul.f32 %v5523, 0.8
    %v5552 = vmul.f32 %v5524, 0.8
    %v5553 = vmul.f32 %v5525, 0.8
    %v5554 = vmul.f32 %v5526, 0.8
    %v5555 = vmul.f32 %v5527, 0.8
    %v5556 = vmul.f32 %v5528, 0.8
    %v5557 = vmul.f32 %v5529, 0.8
    %v5558 = vmul.f32 %v5530, 0.8
    %v5559 = vmul.f32 %v5531, 0.8
    %v5560 = vmul.f32 %v5532, 0.8
    %v5561 = vmul.f32 %v5533, 0.8
    %v5562 = vadd.f32 %v5538, %v5550
    %v5563 = vadd.f32 %v5539, %v5551
    %v5564 = vadd.f32 %v5540, %v5552
    %v5565 = vadd.f32 %v5541, %v5553
    %v5566 = vadd.f32 %v5542, %v5554
    %v5567 = vadd.f32 %v5543, %v5555
    %v5568 = vadd.f32 %v5544, %v5556
    %v5569 = vadd.f32 %v5545, %v5557
    %v5570 = vadd.f32 %v5546, %v5558
    %v5571 = vadd.f32 %v5547, %v5559
    %v5572 = vadd.f32 %v5548, %v5560
    %v5573 = vadd.f32 %v5549, %v5561
    %v5574 = vsel %vm5534, 1, 0
    %v5575 = vsel %vm5535, 1, 0
    %v5576 = vsel %vm5536, 1, 0
    %v5577 = vsel %vm5537, 1, 0
    %vm5578 = vcmp.eq.s32.totalorder %v5574, 1
    %vm5579 = vcmp.eq.s32.totalorder %v5575, 1
    %vm5580 = vcmp.eq.s32.totalorder %v5576, 1
    %vm5581 = vcmp.eq.s32.totalorder %v5577, 1
    %v5582 = vsel %vm5578, %v5317, %v5562
    %v5583 = vsel %vm5579, %v5318, %v5563
    %v5584 = vsel %vm5580, %v5319, %v5564
    %v5585 = vsel %vm5581, %v5320, %v5565
    %v5586 = vsel %vm5578, %v5321, %v5566
    %v5587 = vsel %vm5579, %v5322, %v5567
    %v5588 = vsel %vm5580, %v5323, %v5568
    %v5589 = vsel %vm5581, %v5324, %v5569
    %v5590 = vsel %vm5578, %v5325, %v5570
    %v5591 = vsel %vm5579, %v5326, %v5571
    %v5592 = vsel %vm5580, %v5327, %v5572
    %v5593 = vsel %vm5581, %v5328, %v5573
    %v5595 = vsel %vm192, %v5582, 0
    %v5598 = vsel %vm192, %v5583, 0
    %v5601 = vsel %vm192, %v5584, 0
    %v5604 = vsel %vm192, %v5585, 0
    %v5607 = vsel %vm192, %v5586, 0
    %v5610 = vsel %vm192, %v5587, 0
    %v5613 = vsel %vm192, %v5588, 0
    %v5616 = vsel %vm192, %v5589, 0
    %v5619 = vsel %vm192, %v5590, 0
    %v5622 = vsel %vm192, %v5591, 0
    %v5625 = vsel %vm192, %v5592, 0
    %v5628 = vsel %vm192, %v5593, 0
    %5630 = vmatpush.msra.mxu0 0.0
    %5631 = vmatpush.msra.mxu0 0.0
    %5632 = vmatpush.msra.mxu0 0.0
    %5633 = vmatpush.msra.mxu0 0.0
    %5634 = vmatpush.msra.mxu0 0.0
    %5635 = vmatpush.msra.mxu0 0.0
    %5636 = vmatpush.msra.mxu0 0.0
    %5637 = vmatpush.msra.mxu0 0.0
    %5638 = vmatpush.msra.mxu0 0.0
    %5639 = vmatpush.msra.mxu0 0.0
    %5640 = vmatpush.msra.mxu0 0.0
    %5641 = vmatpush.msra.mxu0 0.0
    %5642 = vmatpush.msra.mxu0 %v3250
    %5643 = vmatpush.msra.mxu0 %v3249
    %5644 = vmatpush.msra.mxu0 %v3248
    %5645 = vmatpush.msra.mxu0 %v3247
    %5646 = vmatmul.f32.gmra.mxu0 %v5595
    %v5647 = vpop.f32.mrf.mxu0
    %v5648 = vadd.f32 0.0, %v5647
    %5649 = vmatmul.f32.gmra.mxu0 %v5598
    %v5650 = vpop.f32.mrf.mxu0
    %v5651 = vadd.f32 0.0, %v5650
    %5652 = vmatmul.f32.gmra.mxu0 %v5601
    %v5653 = vpop.f32.mrf.mxu0
    %v5654 = vadd.f32 0.0, %v5653
    %5655 = vmatmul.f32.gmra.mxu0 %v5604
    %v5656 = vpop.f32.mrf.mxu0
    %v5657 = vadd.f32 0.0, %v5656
    %5658 = vmatmul.f32.gmra.mxu0 %v5607
    %v5659 = vpop.f32.mrf.mxu0
    %v5660 = vadd.f32 0.0, %v5659
    %5661 = vmatmul.f32.gmra.mxu0 %v5610
    %v5662 = vpop.f32.mrf.mxu0
    %v5663 = vadd.f32 0.0, %v5662
    %5664 = vmatmul.f32.gmra.mxu0 %v5613
    %v5665 = vpop.f32.mrf.mxu0
    %v5666 = vadd.f32 0.0, %v5665
    %5667 = vmatmul.f32.gmra.mxu0 %v5616
    %v5668 = vpop.f32.mrf.mxu0
    %v5669 = vadd.f32 0.0, %v5668
    %5670 = vmatmul.f32.gmra.mxu0 %v5619
    %v5671 = vpop.f32.mrf.mxu0
    %v5672 = vadd.f32 0.0, %v5671
    %5673 = vmatmul.f32.gmra.mxu0 %v5622
    %v5674 = vpop.f32.mrf.mxu0
    %v5675 = vadd.f32 0.0, %v5674
    %5676 = vmatmul.f32.gmra.mxu0 %v5625
    %v5677 = vpop.f32.mrf.mxu0
    %v5678 = vadd.f32 0.0, %v5677
    %5679 = vmatmul.f32.gmra.mxu0 %v5628
    %v5680 = vpop.f32.mrf.mxu0
    %v5681 = vadd.f32 0.0, %v5680
    %5682 = vdwg.mxu0
    %v5683 = vadd.f32 %v5005, %v5648
    %v5684 = vadd.f32 %v5006, %v5651
    %v5685 = vadd.f32 %v5007, %v5654
    %v5686 = vadd.f32 %v5008, %v5657
    %v5687 = vadd.f32 %v5009, %v5660
    %v5688 = vadd.f32 %v5010, %v5663
    %v5689 = vadd.f32 %v5011, %v5666
    %v5690 = vadd.f32 %v5012, %v5669
    %v5691 = vadd.f32 %v5013, %v5672
    %v5692 = vadd.f32 %v5014, %v5675
    %v5693 = vadd.f32 %v5015, %v5678
    %v5694 = vadd.f32 %v5016, %v5681
    %v5695 = vld [vmem:[%s14] sm:$0xff]
    %v5696 = vld [vmem:[%s14 + $0x8] sm:$0xff]
    %v5697 = vld [vmem:[%s14 + $0x10] sm:$0xff]
    %v5698 = vld [vmem:[%s14 + $0x18] sm:$0xff]
    %v5699 = vld [vmem:[%s15] sm:$0xff]
    %v5700 = vld [vmem:[%s15 + $0x8] sm:$0xff]
    %v5701 = vld [vmem:[%s15 + $0x10] sm:$0xff]
    %v5702 = vld [vmem:[%s15 + $0x18] sm:$0xff]
    %v5703 = vld [vmem:[%s16] sm:$0xff]
    %v5704 = vld [vmem:[%s16 + $0x8] sm:$0xff]
    %v5705 = vld [vmem:[%s16 + $0x10] sm:$0xff]
    %v5706 = vld [vmem:[%s16 + $0x18] sm:$0xff]
    %v5708 = vsel %vm192, %v5683, 0
    %v5711 = vsel %vm192, %v5684, 0
    %v5714 = vsel %vm192, %v5685, 0
    %v5717 = vsel %vm192, %v5686, 0
    %v5720 = vsel %vm192, %v5687, 0
    %v5723 = vsel %vm192, %v5688, 0
    %v5726 = vsel %vm192, %v5689, 0
    %v5729 = vsel %vm192, %v5690, 0
    %v5732 = vsel %vm192, %v5691, 0
    %v5735 = vsel %vm192, %v5692, 0
    %v5738 = vsel %vm192, %v5693, 0
    %v5741 = vsel %vm192, %v5694, 0
    %5743 = vmatpush.msra.mxu0 0.0
    %5744 = vmatpush.msra.mxu0 0.0
    %5745 = vmatpush.msra.mxu0 0.0
    %5746 = vmatpush.msra.mxu0 0.0
    %5747 = vmatpush.msra.mxu0 0.0
    %5748 = vmatpush.msra.mxu0 0.0
    %5749 = vmatpush.msra.mxu0 0.0
    %5750 = vmatpush.msra.mxu0 0.0
    %5751 = vmatpush.msra.mxu0 0.0
    %5752 = vmatpush.msra.mxu0 0.0
    %5753 = vmatpush.msra.mxu0 0.0
    %5754 = vmatpush.msra.mxu0 0.0
    %5755 = vmatpush.msra.mxu0 %v5698
    %5756 = vmatpush.msra.mxu0 %v5697
    %5757 = vmatpush.msra.mxu0 %v5696
    %5758 = vmatpush.msra.mxu0 %v5695
    %5759 = vmatmul.f32.gmra.mxu0 %v5708
    %v5760 = vpop.f32.mrf.mxu0
    %v5761 = vadd.f32 0.0, %v5760
    %5762 = vmatmul.f32.gmra.mxu0 %v5711
    %v5763 = vpop.f32.mrf.mxu0
    %v5764 = vadd.f32 0.0, %v5763
    %5765 = vmatmul.f32.gmra.mxu0 %v5714
    %v5766 = vpop.f32.mrf.mxu0
    %v5767 = vadd.f32 0.0, %v5766
    %5768 = vmatmul.f32.gmra.mxu0 %v5717
    %v5769 = vpop.f32.mrf.mxu0
    %v5770 = vadd.f32 0.0, %v5769
    %5771 = vmatmul.f32.gmra.mxu0 %v5720
    %v5772 = vpop.f32.mrf.mxu0
    %v5773 = vadd.f32 0.0, %v5772
    %5774 = vmatmul.f32.gmra.mxu0 %v5723
    %v5775 = vpop.f32.mrf.mxu0
    %v5776 = vadd.f32 0.0, %v5775
    %5777 = vmatmul.f32.gmra.mxu0 %v5726
    %v5778 = vpop.f32.mrf.mxu0
    %v5779 = vadd.f32 0.0, %v5778
    %5780 = vmatmul.f32.gmra.mxu0 %v5729
    %v5781 = vpop.f32.mrf.mxu0
    %v5782 = vadd.f32 0.0, %v5781
    %5783 = vmatmul.f32.gmra.mxu0 %v5732
    %v5784 = vpop.f32.mrf.mxu0
    %v5785 = vadd.f32 0.0, %v5784
    %5786 = vmatmul.f32.gmra.mxu0 %v5735
    %v5787 = vpop.f32.mrf.mxu0
    %v5788 = vadd.f32 0.0, %v5787
    %5789 = vmatmul.f32.gmra.mxu0 %v5738
    %v5790 = vpop.f32.mrf.mxu0
    %v5791 = vadd.f32 0.0, %v5790
    %5792 = vmatmul.f32.gmra.mxu0 %v5741
    %v5793 = vpop.f32.mrf.mxu0
    %v5794 = vadd.f32 0.0, %v5793
    %5795 = vdwg.mxu0
    %v5796 = vmul.f32 %v5761, %v5761
    %v5797 = vmul.f32 %v5764, %v5764
    %v5798 = vmul.f32 %v5767, %v5767
    %v5799 = vmul.f32 %v5770, %v5770
    %v5800 = vmul.f32 %v5773, %v5773
    %v5801 = vmul.f32 %v5776, %v5776
    %v5802 = vmul.f32 %v5779, %v5779
    %v5803 = vmul.f32 %v5782, %v5782
    %v5804 = vmul.f32 %v5785, %v5785
    %v5805 = vmul.f32 %v5788, %v5788
    %v5806 = vmul.f32 %v5791, %v5791
    %v5807 = vmul.f32 %v5794, %v5794
    %v5808 = vsel %vm192, %v5796, 0.0
    %v5809 = vsel %vm192, %v5800, 0.0
    %v5810 = vadd.f32 %v5808, %v5809
    %v5811 = vsel %vm192, %v5804, 0.0
    %v5812 = vadd.f32 %v5810, %v5811
    %v5813 = vsel %vm192, %v5797, 0.0
    %v5814 = vsel %vm192, %v5801, 0.0
    %v5815 = vadd.f32 %v5813, %v5814
    %v5816 = vsel %vm192, %v5805, 0.0
    %v5817 = vadd.f32 %v5815, %v5816
    %v5818 = vsel %vm192, %v5798, 0.0
    %v5819 = vsel %vm192, %v5802, 0.0
    %v5820 = vadd.f32 %v5818, %v5819
    %v5821 = vsel %vm192, %v5806, 0.0
    %v5822 = vadd.f32 %v5820, %v5821
    %v5823 = vsel %vm192, %v5799, 0.0
    %v5824 = vsel %vm192, %v5803, 0.0
    %v5825 = vadd.f32 %v5823, %v5824
    %v5826 = vsel %vm192, %v5807, 0.0
    %v5827 = vadd.f32 %v5825, %v5826
    %v5828 = vrsqrt.pop %v5812
    %v5829 = vmul.f32 %v5828, %v5812
    %v5830 = vmul.f32 %v5829, %v5828
    %v5831 = vmul.f32 0.5, %v5830
    %v5832 = vsub.f32 1.5, %v5831
    %v5833 = vmul.f32 %v5828, %v5832
    %v5834 = vmul.f32 %v5812, %v5833
    %vm5835 = vcmp.eq.f32.partialorder %v5812, inf
    %v5836 = vsel %vm5835, %v5812, %v5834
    %vm5837 = vcmp.eq.f32.partialorder %v5812, 0.0
    %v5838 = vand.u32 %v5812, 2147483648
    %v5839 = vsel %vm5837, %v5838, %v5836
    %v5840 = vrsqrt.pop %v5817
    %v5841 = vmul.f32 %v5840, %v5817
    %v5842 = vmul.f32 %v5841, %v5840
    %v5843 = vmul.f32 0.5, %v5842
    %v5844 = vsub.f32 1.5, %v5843
    %v5845 = vmul.f32 %v5840, %v5844
    %v5846 = vmul.f32 %v5817, %v5845
    %vm5847 = vcmp.eq.f32.partialorder %v5817, inf
    %v5848 = vsel %vm5847, %v5817, %v5846
    %vm5849 = vcmp.eq.f32.partialorder %v5817, 0.0
    %v5850 = vand.u32 %v5817, 2147483648
    %v5851 = vsel %vm5849, %v5850, %v5848
    %v5852 = vrsqrt.pop %v5822
    %v5853 = vmul.f32 %v5852, %v5822
    %v5854 = vmul.f32 %v5853, %v5852
    %v5855 = vmul.f32 0.5, %v5854
    %v5856 = vsub.f32 1.5, %v5855
    %v5857 = vmul.f32 %v5852, %v5856
    %v5858 = vmul.f32 %v5822, %v5857
    %vm5859 = vcmp.eq.f32.partialorder %v5822, inf
    %v5860 = vsel %vm5859, %v5822, %v5858
    %vm5861 = vcmp.eq.f32.partialorder %v5822, 0.0
    %v5862 = vand.u32 %v5822, 2147483648
    %v5863 = vsel %vm5861, %v5862, %v5860
    %v5864 = vrsqrt.pop %v5827
    %v5865 = vmul.f32 %v5864, %v5827
    %v5866 = vmul.f32 %v5865, %v5864
    %v5867 = vmul.f32 0.5, %v5866
    %v5868 = vsub.f32 1.5, %v5867
    %v5869 = vmul.f32 %v5864, %v5868
    %v5870 = vmul.f32 %v5827, %v5869
    %vm5871 = vcmp.eq.f32.partialorder %v5827, inf
    %v5872 = vsel %vm5871, %v5827, %v5870
    %vm5873 = vcmp.eq.f32.partialorder %v5827, 0.0
    %v5874 = vand.u32 %v5827, 2147483648
    %v5875 = vsel %vm5873, %v5874, %v5872
    %v5876 = vadd.f32 %v5839, 1e-06
    %v5877 = vadd.f32 %v5851, 1e-06
    %v5878 = vadd.f32 %v5863, 1e-06
    %v5879 = vadd.f32 %v5875, 1e-06
    %v5880 = vsel %vm192, %v5876, 0.0
    %v5881 = vsel %vm192, %v5877, 0.0
    %v5882 = vadd.f32 %v5880, %v5881
    %v5883 = vsel %vm192, %v5878, 0.0
    %v5884 = vadd.f32 %v5882, %v5883
    %v5885 = vsel %vm192, %v5879, 0.0
    %v5886 = vadd.f32 %v5884, %v5885
    %v5887 = vrot.slane %v5886, 4
    %v5888 = vadd.f32 %v5886, %v5887
    %v5889 = vrot.slane %v5888, 2
    %v5890 = vadd.f32 %v5888, %v5889
    %v5891 = vrot.slane %v5890, 1
    %v5892 = vadd.f32 %v5890, %v5891
    %v5893 = vmul.f32 %v5892, %v2153
    %v5894 = vsub.f32 %v5876, %v5893
    %v5895 = vsub.f32 %v5877, %v5893
    %v5896 = vsub.f32 %v5878, %v5893
    %v5897 = vsub.f32 %v5879, %v5893
    %v5898 = vmul.f32 %v5894, %v5894
    %v5899 = vmul.f32 %v5895, %v5895
    %v5900 = vmul.f32 %v5896, %v5896
    %v5901 = vmul.f32 %v5897, %v5897
    %v5902 = vsel %vm192, %v5898, 0.0
    %v5903 = vsel %vm192, %v5899, 0.0
    %v5904 = vadd.f32 %v5902, %v5903
    %v5905 = vsel %vm192, %v5900, 0.0
    %v5906 = vadd.f32 %v5904, %v5905
    %v5907 = vsel %vm192, %v5901, 0.0
    %v5908 = vadd.f32 %v5906, %v5907
    %v5909 = vrot.slane %v5908, 4
    %v5910 = vadd.f32 %v5908, %v5909
    %v5911 = vrot.slane %v5910, 2
    %v5912 = vadd.f32 %v5910, %v5911
    %v5913 = vrot.slane %v5912, 1
    %v5914 = vadd.f32 %v5912, %v5913
    %v5915 = vmul.f32 %v5914, %v2153
    %v5916 = vadd.f32 %v5915, 1e-05
    %v5917 = vrsqrt.pop %v5916
    %v5918 = vmul.f32 %v5917, %v5916
    %v5919 = vmul.f32 %v5918, %v5917
    %v5920 = vmul.f32 0.5, %v5919
    %v5921 = vsub.f32 1.5, %v5920
    %v5922 = vmul.f32 %v5917, %v5921
    %v5923 = vmul.f32 %v5916, %v5922
    %vm5924 = vcmp.eq.f32.partialorder %v5916, inf
    %v5925 = vsel %vm5924, %v5916, %v5923
    %vm5926 = vcmp.eq.f32.partialorder %v5916, 0.0
    %v5927 = vand.u32 %v5916, 2147483648
    %v5928 = vsel %vm5926, %v5927, %v5925
    %v5929 = vrcp.pop %v5928
    %v5930 = vmul.f32 %v5928, %v5929
    %v5931 = vsub.f32 1.0, %v5930
    %v5932 = vmul.f32 %v5929, %v5931
    %v5933 = vadd.f32 %v5929, %v5932
    %vm5934 = vweird.f32 %v5928
    %vm5935 = vweird.f32 %v5929
    %vm5936 = vmor %vm5934, %vm5935
    %v5937 = vsel %vm5936, %v5929, %v5933
    %v5938 = vand.u32 2147483647, %v5928
    %vm5939 = vcmp.eq.f32.partialorder %v5938, 8.507059e+37
    %v5940 = vand.u32 %v5928, 2147483648
    %v5941 = vor.u32 1.1754944e-38, %v5940
    %v5942 = vsel %vm5939, %v5941, %v5937
    %v5943 = vmul.f32 %v5894, %v5942
    %v5944 = vmul.f32 %v5895, %v5942
    %v5945 = vmul.f32 %v5896, %v5942
    %v5946 = vmul.f32 %v5897, %v5942
    %v5947 = vrcp.pop %v5876
    %v5948 = vmul.f32 %v5876, %v5947
    %v5949 = vsub.f32 1.0, %v5948
    %v5950 = vmul.f32 %v5947, %v5949
    %v5951 = vadd.f32 %v5947, %v5950
    %vm5952 = vweird.f32 %v5876
    %vm5953 = vweird.f32 %v5947
    %vm5954 = vmor %vm5952, %vm5953
    %v5955 = vsel %vm5954, %v5947, %v5951
    %v5956 = vand.u32 2147483647, %v5876
    %vm5957 = vcmp.eq.f32.partialorder %v5956, 8.507059e+37
    %v5958 = vand.u32 %v5876, 2147483648
    %v5959 = vor.u32 1.1754944e-38, %v5958
    %v5960 = vsel %vm5957, %v5959, %v5955
    %v5961 = vmul.f32 %v5943, %v5960
    %v5962 = vrcp.pop %v5877
    %v5963 = vmul.f32 %v5877, %v5962
    %v5964 = vsub.f32 1.0, %v5963
    %v5965 = vmul.f32 %v5962, %v5964
    %v5966 = vadd.f32 %v5962, %v5965
    %vm5967 = vweird.f32 %v5877
    %vm5968 = vweird.f32 %v5962
    %vm5969 = vmor %vm5967, %vm5968
    %v5970 = vsel %vm5969, %v5962, %v5966
    %v5971 = vand.u32 2147483647, %v5877
    %vm5972 = vcmp.eq.f32.partialorder %v5971, 8.507059e+37
    %v5973 = vand.u32 %v5877, 2147483648
    %v5974 = vor.u32 1.1754944e-38, %v5973
    %v5975 = vsel %vm5972, %v5974, %v5970
    %v5976 = vmul.f32 %v5944, %v5975
    %v5977 = vrcp.pop %v5878
    %v5978 = vmul.f32 %v5878, %v5977
    %v5979 = vsub.f32 1.0, %v5978
    %v5980 = vmul.f32 %v5977, %v5979
    %v5981 = vadd.f32 %v5977, %v5980
    %vm5982 = vweird.f32 %v5878
    %vm5983 = vweird.f32 %v5977
    %vm5984 = vmor %vm5982, %vm5983
    %v5985 = vsel %vm5984, %v5977, %v5981
    %v5986 = vand.u32 2147483647, %v5878
    %vm5987 = vcmp.eq.f32.partialorder %v5986, 8.507059e+37
    %v5988 = vand.u32 %v5878, 2147483648
    %v5989 = vor.u32 1.1754944e-38, %v5988
    %v5990 = vsel %vm5987, %v5989, %v5985
    %v5991 = vmul.f32 %v5945, %v5990
    %v5992 = vrcp.pop %v5879
    %v5993 = vmul.f32 %v5879, %v5992
    %v5994 = vsub.f32 1.0, %v5993
    %v5995 = vmul.f32 %v5992, %v5994
    %v5996 = vadd.f32 %v5992, %v5995
    %vm5997 = vweird.f32 %v5879
    %vm5998 = vweird.f32 %v5992
    %vm5999 = vmor %vm5997, %vm5998
    %v6000 = vsel %vm5999, %v5992, %v5996
    %v6001 = vand.u32 2147483647, %v5879
    %vm6002 = vcmp.eq.f32.partialorder %v6001, 8.507059e+37
    %v6003 = vand.u32 %v5879, 2147483648
    %v6004 = vor.u32 1.1754944e-38, %v6003
    %v6005 = vsel %vm6002, %v6004, %v6000
    %v6006 = vmul.f32 %v5946, %v6005
    %v6007 = vmul.f32 %v5761, %v5961
    %v6008 = vmul.f32 %v5764, %v5976
    %v6009 = vmul.f32 %v5767, %v5991
    %v6010 = vmul.f32 %v5770, %v6006
    %v6011 = vmul.f32 %v5773, %v5961
    %v6012 = vmul.f32 %v5776, %v5976
    %v6013 = vmul.f32 %v5779, %v5991
    %v6014 = vmul.f32 %v5782, %v6006
    %v6015 = vmul.f32 %v5785, %v5961
    %v6016 = vmul.f32 %v5788, %v5976
    %v6017 = vmul.f32 %v5791, %v5991
    %v6018 = vmul.f32 %v5794, %v6006
    %v6020 = vsel %vm192, %v6007, 0
    %v6023 = vsel %vm192, %v6008, 0
    %v6026 = vsel %vm192, %v6009, 0
    %v6029 = vsel %vm192, %v6010, 0
    %v6032 = vsel %vm192, %v6011, 0
    %v6035 = vsel %vm192, %v6012, 0
    %v6038 = vsel %vm192, %v6013, 0
    %v6041 = vsel %vm192, %v6014, 0
    %v6044 = vsel %vm192, %v6015, 0
    %v6047 = vsel %vm192, %v6016, 0
    %v6050 = vsel %vm192, %v6017, 0
    %v6053 = vsel %vm192, %v6018, 0
    %6055 = vmatpush.msra.mxu0 0.0
    %6056 = vmatpush.msra.mxu0 0.0
    %6057 = vmatpush.msra.mxu0 0.0
    %6058 = vmatpush.msra.mxu0 0.0
    %6059 = vmatpush.msra.mxu0 0.0
    %6060 = vmatpush.msra.mxu0 0.0
    %6061 = vmatpush.msra.mxu0 0.0
    %6062 = vmatpush.msra.mxu0 0.0
    %6063 = vmatpush.msra.mxu0 0.0
    %6064 = vmatpush.msra.mxu0 0.0
    %6065 = vmatpush.msra.mxu0 0.0
    %6066 = vmatpush.msra.mxu0 0.0
    %6067 = vmatpush.msra.mxu0 %v5702
    %6068 = vmatpush.msra.mxu0 %v5701
    %6069 = vmatpush.msra.mxu0 %v5700
    %6070 = vmatpush.msra.mxu0 %v5699
    %6071 = vmatmul.f32.gmra.mxu0 %v6020
    %v6072 = vpop.f32.mrf.mxu0
    %v6073 = vadd.f32 0.0, %v6072
    %6074 = vmatmul.f32.gmra.mxu0 %v6023
    %v6075 = vpop.f32.mrf.mxu0
    %v6076 = vadd.f32 0.0, %v6075
    %6077 = vmatmul.f32.gmra.mxu0 %v6026
    %v6078 = vpop.f32.mrf.mxu0
    %v6079 = vadd.f32 0.0, %v6078
    %6080 = vmatmul.f32.gmra.mxu0 %v6029
    %v6081 = vpop.f32.mrf.mxu0
    %v6082 = vadd.f32 0.0, %v6081
    %6083 = vmatmul.f32.gmra.mxu0 %v6032
    %v6084 = vpop.f32.mrf.mxu0
    %v6085 = vadd.f32 0.0, %v6084
    %6086 = vmatmul.f32.gmra.mxu0 %v6035
    %v6087 = vpop.f32.mrf.mxu0
    %v6088 = vadd.f32 0.0, %v6087
    %6089 = vmatmul.f32.gmra.mxu0 %v6038
    %v6090 = vpop.f32.mrf.mxu0
    %v6091 = vadd.f32 0.0, %v6090
    %6092 = vmatmul.f32.gmra.mxu0 %v6041
    %v6093 = vpop.f32.mrf.mxu0
    %v6094 = vadd.f32 0.0, %v6093
    %6095 = vmatmul.f32.gmra.mxu0 %v6044
    %v6096 = vpop.f32.mrf.mxu0
    %v6097 = vadd.f32 0.0, %v6096
    %6098 = vmatmul.f32.gmra.mxu0 %v6047
    %v6099 = vpop.f32.mrf.mxu0
    %v6100 = vadd.f32 0.0, %v6099
    %6101 = vmatmul.f32.gmra.mxu0 %v6050
    %v6102 = vpop.f32.mrf.mxu0
    %v6103 = vadd.f32 0.0, %v6102
    %6104 = vmatmul.f32.gmra.mxu0 %v6053
    %v6105 = vpop.f32.mrf.mxu0
    %v6106 = vadd.f32 0.0, %v6105
    %6107 = vdwg.mxu0
    %v6108 = vmul.f32 %v6007, %v6073
    %v6109 = vmul.f32 %v6008, %v6076
    %v6110 = vmul.f32 %v6009, %v6079
    %v6111 = vmul.f32 %v6010, %v6082
    %v6112 = vmul.f32 %v6011, %v6085
    %v6113 = vmul.f32 %v6012, %v6088
    %v6114 = vmul.f32 %v6013, %v6091
    %v6115 = vmul.f32 %v6014, %v6094
    %v6116 = vmul.f32 %v6015, %v6097
    %v6117 = vmul.f32 %v6016, %v6100
    %v6118 = vmul.f32 %v6017, %v6103
    %v6119 = vmul.f32 %v6018, %v6106
    %v6120 = vsel %vm192, %v6108, 0.0
    %v6121 = vsel %vm192, %v6112, 0.0
    %v6122 = vadd.f32 %v6120, %v6121
    %v6123 = vsel %vm192, %v6116, 0.0
    %v6124 = vadd.f32 %v6122, %v6123
    %v6125 = vsel %vm192, %v6109, 0.0
    %v6126 = vsel %vm192, %v6113, 0.0
    %v6127 = vadd.f32 %v6125, %v6126
    %v6128 = vsel %vm192, %v6117, 0.0
    %v6129 = vadd.f32 %v6127, %v6128
    %v6130 = vsel %vm192, %v6110, 0.0
    %v6131 = vsel %vm192, %v6114, 0.0
    %v6132 = vadd.f32 %v6130, %v6131
    %v6133 = vsel %vm192, %v6118, 0.0
    %v6134 = vadd.f32 %v6132, %v6133
    %v6135 = vsel %vm192, %v6111, 0.0
    %v6136 = vsel %vm192, %v6115, 0.0
    %v6137 = vadd.f32 %v6135, %v6136
    %v6138 = vsel %vm192, %v6119, 0.0
    %v6139 = vadd.f32 %v6137, %v6138
    %v6140 = vmul.f32 %v6073, %v6073
    %v6141 = vmul.f32 %v6076, %v6076
    %v6142 = vmul.f32 %v6079, %v6079
    %v6143 = vmul.f32 %v6082, %v6082
    %v6144 = vmul.f32 %v6085, %v6085
    %v6145 = vmul.f32 %v6088, %v6088
    %v6146 = vmul.f32 %v6091, %v6091
    %v6147 = vmul.f32 %v6094, %v6094
    %v6148 = vmul.f32 %v6097, %v6097
    %v6149 = vmul.f32 %v6100, %v6100
    %v6150 = vmul.f32 %v6103, %v6103
    %v6151 = vmul.f32 %v6106, %v6106
    %v6152 = vsel %vm192, %v6140, 0.0
    %v6153 = vsel %vm192, %v6144, 0.0
    %v6154 = vadd.f32 %v6152, %v6153
    %v6155 = vsel %vm192, %v6148, 0.0
    %v6156 = vadd.f32 %v6154, %v6155
    %v6157 = vsel %vm192, %v6141, 0.0
    %v6158 = vsel %vm192, %v6145, 0.0
    %v6159 = vadd.f32 %v6157, %v6158
    %v6160 = vsel %vm192, %v6149, 0.0
    %v6161 = vadd.f32 %v6159, %v6160
    %v6162 = vsel %vm192, %v6142, 0.0
    %v6163 = vsel %vm192, %v6146, 0.0
    %v6164 = vadd.f32 %v6162, %v6163
    %v6165 = vsel %vm192, %v6150, 0.0
    %v6166 = vadd.f32 %v6164, %v6165
    %v6167 = vsel %vm192, %v6143, 0.0
    %v6168 = vsel %vm192, %v6147, 0.0
    %v6169 = vadd.f32 %v6167, %v6168
    %v6170 = vsel %vm192, %v6151, 0.0
    %v6171 = vadd.f32 %v6169, %v6170
    %v6172 = vadd.f32 %v6156, 1e-06
    %v6173 = vadd.f32 %v6161, 1e-06
    %v6174 = vadd.f32 %v6166, 1e-06
    %v6175 = vadd.f32 %v6171, 1e-06
    %v6176 = vrcp.pop %v6172
    %v6177 = vmul.f32 %v6172, %v6176
    %v6178 = vsub.f32 1.0, %v6177
    %v6179 = vmul.f32 %v6176, %v6178
    %v6180 = vadd.f32 %v6176, %v6179
    %vm6181 = vweird.f32 %v6172
    %vm6182 = vweird.f32 %v6176
    %vm6183 = vmor %vm6181, %vm6182
    %v6184 = vsel %vm6183, %v6176, %v6180
    %v6185 = vand.u32 2147483647, %v6172
    %vm6186 = vcmp.eq.f32.partialorder %v6185, 8.507059e+37
    %v6187 = vand.u32 %v6172, 2147483648
    %v6188 = vor.u32 1.1754944e-38, %v6187
    %v6189 = vsel %vm6186, %v6188, %v6184
    %v6190 = vmul.f32 %v6124, %v6189
    %v6191 = vrcp.pop %v6173
    %v6192 = vmul.f32 %v6173, %v6191
    %v6193 = vsub.f32 1.0, %v6192
    %v6194 = vmul.f32 %v6191, %v6193
    %v6195 = vadd.f32 %v6191, %v6194
    %vm6196 = vweird.f32 %v6173
    %vm6197 = vweird.f32 %v6191
    %vm6198 = vmor %vm6196, %vm6197
    %v6199 = vsel %vm6198, %v6191, %v6195
    %v6200 = vand.u32 2147483647, %v6173
    %vm6201 = vcmp.eq.f32.partialorder %v6200, 8.507059e+37
    %v6202 = vand.u32 %v6173, 2147483648
    %v6203 = vor.u32 1.1754944e-38, %v6202
    %v6204 = vsel %vm6201, %v6203, %v6199
    %v6205 = vmul.f32 %v6129, %v6204
    %v6206 = vrcp.pop %v6174
    %v6207 = vmul.f32 %v6174, %v6206
    %v6208 = vsub.f32 1.0, %v6207
    %v6209 = vmul.f32 %v6206, %v6208
    %v6210 = vadd.f32 %v6206, %v6209
    %vm6211 = vweird.f32 %v6174
    %vm6212 = vweird.f32 %v6206
    %vm6213 = vmor %vm6211, %vm6212
    %v6214 = vsel %vm6213, %v6206, %v6210
    %v6215 = vand.u32 2147483647, %v6174
    %vm6216 = vcmp.eq.f32.partialorder %v6215, 8.507059e+37
    %v6217 = vand.u32 %v6174, 2147483648
    %v6218 = vor.u32 1.1754944e-38, %v6217
    %v6219 = vsel %vm6216, %v6218, %v6214
    %v6220 = vmul.f32 %v6134, %v6219
    %v6221 = vrcp.pop %v6175
    %v6222 = vmul.f32 %v6175, %v6221
    %v6223 = vsub.f32 1.0, %v6222
    %v6224 = vmul.f32 %v6221, %v6223
    %v6225 = vadd.f32 %v6221, %v6224
    %vm6226 = vweird.f32 %v6175
    %vm6227 = vweird.f32 %v6221
    %vm6228 = vmor %vm6226, %vm6227
    %v6229 = vsel %vm6228, %v6221, %v6225
    %v6230 = vand.u32 2147483647, %v6175
    %vm6231 = vcmp.eq.f32.partialorder %v6230, 8.507059e+37
    %v6232 = vand.u32 %v6175, 2147483648
    %v6233 = vor.u32 1.1754944e-38, %v6232
    %v6234 = vsel %vm6231, %v6233, %v6229
    %v6235 = vmul.f32 %v6139, %v6234
    %v6236 = vmul.f32 %v6190, %v6073
    %v6237 = vmul.f32 %v6205, %v6076
    %v6238 = vmul.f32 %v6220, %v6079
    %v6239 = vmul.f32 %v6235, %v6082
    %v6240 = vmul.f32 %v6190, %v6085
    %v6241 = vmul.f32 %v6205, %v6088
    %v6242 = vmul.f32 %v6220, %v6091
    %v6243 = vmul.f32 %v6235, %v6094
    %v6244 = vmul.f32 %v6190, %v6097
    %v6245 = vmul.f32 %v6205, %v6100
    %v6246 = vmul.f32 %v6220, %v6103
    %v6247 = vmul.f32 %v6235, %v6106
    %v6248 = vsub.f32 %v6007, %v6236
    %v6249 = vsub.f32 %v6008, %v6237
    %v6250 = vsub.f32 %v6009, %v6238
    %v6251 = vsub.f32 %v6010, %v6239
    %v6252 = vsub.f32 %v6011, %v6240
    %v6253 = vsub.f32 %v6012, %v6241
    %v6254 = vsub.f32 %v6013, %v6242
    %v6255 = vsub.f32 %v6014, %v6243
    %v6256 = vsub.f32 %v6015, %v6244
    %v6257 = vsub.f32 %v6016, %v6245
    %v6258 = vsub.f32 %v6017, %v6246
    %v6259 = vsub.f32 %v6018, %v6247
    %vm6260 = vcmp.ge.f32.partialorder %v6124, 0.0
    %vm6261 = vcmp.ge.f32.partialorder %v6129, 0.0
    %vm6262 = vcmp.ge.f32.partialorder %v6134, 0.0
    %vm6263 = vcmp.ge.f32.partialorder %v6139, 0.0
    %v6264 = vmul.f32 %v6007, 0.2
    %v6265 = vmul.f32 %v6008, 0.2
    %v6266 = vmul.f32 %v6009, 0.2
    %v6267 = vmul.f32 %v6010, 0.2
    %v6268 = vmul.f32 %v6011, 0.2
    %v6269 = vmul.f32 %v6012, 0.2
    %v6270 = vmul.f32 %v6013, 0.2
    %v6271 = vmul.f32 %v6014, 0.2
    %v6272 = vmul.f32 %v6015, 0.2
    %v6273 = vmul.f32 %v6016, 0.2
    %v6274 = vmul.f32 %v6017, 0.2
    %v6275 = vmul.f32 %v6018, 0.2
    %v6276 = vmul.f32 %v6248, 0.8
    %v6277 = vmul.f32 %v6249, 0.8
    %v6278 = vmul.f32 %v6250, 0.8
    %v6279 = vmul.f32 %v6251, 0.8
    %v6280 = vmul.f32 %v6252, 0.8
    %v6281 = vmul.f32 %v6253, 0.8
    %v6282 = vmul.f32 %v6254, 0.8
    %v6283 = vmul.f32 %v6255, 0.8
    %v6284 = vmul.f32 %v6256, 0.8
    %v6285 = vmul.f32 %v6257, 0.8
    %v6286 = vmul.f32 %v6258, 0.8
    %v6287 = vmul.f32 %v6259, 0.8
    %v6288 = vadd.f32 %v6264, %v6276
    %v6289 = vadd.f32 %v6265, %v6277
    %v6290 = vadd.f32 %v6266, %v6278
    %v6291 = vadd.f32 %v6267, %v6279
    %v6292 = vadd.f32 %v6268, %v6280
    %v6293 = vadd.f32 %v6269, %v6281
    %v6294 = vadd.f32 %v6270, %v6282
    %v6295 = vadd.f32 %v6271, %v6283
    %v6296 = vadd.f32 %v6272, %v6284
    %v6297 = vadd.f32 %v6273, %v6285
    %v6298 = vadd.f32 %v6274, %v6286
    %v6299 = vadd.f32 %v6275, %v6287
    %v6300 = vsel %vm6260, 1, 0
    %v6301 = vsel %vm6261, 1, 0
    %v6302 = vsel %vm6262, 1, 0
    %v6303 = vsel %vm6263, 1, 0
    %vm6304 = vcmp.eq.s32.totalorder %v6300, 1
    %vm6305 = vcmp.eq.s32.totalorder %v6301, 1
    %vm6306 = vcmp.eq.s32.totalorder %v6302, 1
    %vm6307 = vcmp.eq.s32.totalorder %v6303, 1
    %v6308 = vsel %vm6304, %v6007, %v6288
    %v6309 = vsel %vm6305, %v6008, %v6289
    %v6310 = vsel %vm6306, %v6009, %v6290
    %v6311 = vsel %vm6307, %v6010, %v6291
    %v6312 = vsel %vm6304, %v6011, %v6292
    %v6313 = vsel %vm6305, %v6012, %v6293
    %v6314 = vsel %vm6306, %v6013, %v6294
    %v6315 = vsel %vm6307, %v6014, %v6295
    %v6316 = vsel %vm6304, %v6015, %v6296
    %v6317 = vsel %vm6305, %v6016, %v6297
    %v6318 = vsel %vm6306, %v6017, %v6298
    %v6319 = vsel %vm6307, %v6018, %v6299
    %v6321 = vsel %vm192, %v6308, 0
    %v6324 = vsel %vm192, %v6309, 0
    %v6327 = vsel %vm192, %v6310, 0
    %v6330 = vsel %vm192, %v6311, 0
    %v6333 = vsel %vm192, %v6312, 0
    %v6336 = vsel %vm192, %v6313, 0
    %v6339 = vsel %vm192, %v6314, 0
    %v6342 = vsel %vm192, %v6315, 0
    %v6345 = vsel %vm192, %v6316, 0
    %v6348 = vsel %vm192, %v6317, 0
    %v6351 = vsel %vm192, %v6318, 0
    %v6354 = vsel %vm192, %v6319, 0
    %6356 = vmatpush.msra.mxu0 0.0
    %6357 = vmatpush.msra.mxu0 0.0
    %6358 = vmatpush.msra.mxu0 0.0
    %6359 = vmatpush.msra.mxu0 0.0
    %6360 = vmatpush.msra.mxu0 0.0
    %6361 = vmatpush.msra.mxu0 0.0
    %6362 = vmatpush.msra.mxu0 0.0
    %6363 = vmatpush.msra.mxu0 0.0
    %6364 = vmatpush.msra.mxu0 0.0
    %6365 = vmatpush.msra.mxu0 0.0
    %6366 = vmatpush.msra.mxu0 0.0
    %6367 = vmatpush.msra.mxu0 0.0
    %6368 = vmatpush.msra.mxu0 %v5706
    %6369 = vmatpush.msra.mxu0 %v5705
    %6370 = vmatpush.msra.mxu0 %v5704
    %6371 = vmatpush.msra.mxu0 %v5703
    %6372 = vmatmul.f32.gmra.mxu0 %v6321
    %v6373 = vpop.f32.mrf.mxu0
    %v6374 = vadd.f32 0.0, %v6373
    %6375 = vmatmul.f32.gmra.mxu0 %v6324
    %v6376 = vpop.f32.mrf.mxu0
    %v6377 = vadd.f32 0.0, %v6376
    %6378 = vmatmul.f32.gmra.mxu0 %v6327
    %v6379 = vpop.f32.mrf.mxu0
    %v6380 = vadd.f32 0.0, %v6379
    %6381 = vmatmul.f32.gmra.mxu0 %v6330
    %v6382 = vpop.f32.mrf.mxu0
    %v6383 = vadd.f32 0.0, %v6382
    %6384 = vmatmul.f32.gmra.mxu0 %v6333
    %v6385 = vpop.f32.mrf.mxu0
    %v6386 = vadd.f32 0.0, %v6385
    %6387 = vmatmul.f32.gmra.mxu0 %v6336
    %v6388 = vpop.f32.mrf.mxu0
    %v6389 = vadd.f32 0.0, %v6388
    %6390 = vmatmul.f32.gmra.mxu0 %v6339
    %v6391 = vpop.f32.mrf.mxu0
    %v6392 = vadd.f32 0.0, %v6391
    %6393 = vmatmul.f32.gmra.mxu0 %v6342
    %v6394 = vpop.f32.mrf.mxu0
    %v6395 = vadd.f32 0.0, %v6394
    %6396 = vmatmul.f32.gmra.mxu0 %v6345
    %v6397 = vpop.f32.mrf.mxu0
    %v6398 = vadd.f32 0.0, %v6397
    %6399 = vmatmul.f32.gmra.mxu0 %v6348
    %v6400 = vpop.f32.mrf.mxu0
    %v6401 = vadd.f32 0.0, %v6400
    %6402 = vmatmul.f32.gmra.mxu0 %v6351
    %v6403 = vpop.f32.mrf.mxu0
    %v6404 = vadd.f32 0.0, %v6403
    %6405 = vmatmul.f32.gmra.mxu0 %v6354
    %v6406 = vpop.f32.mrf.mxu0
    %v6407 = vadd.f32 0.0, %v6406
    %6408 = vdwg.mxu0
    %6410 = vset.pattern.permute.xlu0 0
    %6411 = vperm.xlu0 %6410, %v6374
    %v6412 = vpop.permute.xlu0 %6411
    %6415 = vset.pattern.permute.xlu0 0
    %6416 = vperm.xlu0 %6415, %v6377
    %v6417 = vpop.permute.xlu0 %6416
    %6420 = vset.pattern.permute.xlu0 0
    %6421 = vperm.xlu0 %6420, %v6380
    %v6422 = vpop.permute.xlu0 %6421
    %6425 = vset.pattern.permute.xlu0 0
    %6426 = vperm.xlu0 %6425, %v6383
    %v6427 = vpop.permute.xlu0 %6426
    %v6429 = vmul.f32 %v5683, %v6412
    %v6430 = vmul.f32 %v5684, %v6417
    %v6431 = vmul.f32 %v5685, %v6422
    %v6432 = vmul.f32 %v5686, %v6427
    %6434 = vset.pattern.permute.xlu0 0
    %6435 = vperm.xlu0 %6434, %v6386
    %v6436 = vpop.permute.xlu0 %6435
    %6439 = vset.pattern.permute.xlu0 0
    %6440 = vperm.xlu0 %6439, %v6389
    %v6441 = vpop.permute.xlu0 %6440
    %6444 = vset.pattern.permute.xlu0 0
    %6445 = vperm.xlu0 %6444, %v6392
    %v6446 = vpop.permute.xlu0 %6445
    %6449 = vset.pattern.permute.xlu0 0
    %6450 = vperm.xlu0 %6449, %v6395
    %v6451 = vpop.permute.xlu0 %6450
    %v6453 = vmul.f32 %v5687, %v6436
    %v6454 = vmul.f32 %v5688, %v6441
    %v6455 = vmul.f32 %v5689, %v6446
    %v6456 = vmul.f32 %v5690, %v6451
    %v6457 = vadd.f32 %v6429, %v6453
    %v6458 = vadd.f32 %v6430, %v6454
    %v6459 = vadd.f32 %v6431, %v6455
    %v6460 = vadd.f32 %v6432, %v6456
    %6462 = vset.pattern.permute.xlu0 0
    %6463 = vperm.xlu0 %6462, %v6398
    %v6464 = vpop.permute.xlu0 %6463
    %6467 = vset.pattern.permute.xlu0 0
    %6468 = vperm.xlu0 %6467, %v6401
    %v6469 = vpop.permute.xlu0 %6468
    %6472 = vset.pattern.permute.xlu0 0
    %6473 = vperm.xlu0 %6472, %v6404
    %v6474 = vpop.permute.xlu0 %6473
    %6477 = vset.pattern.permute.xlu0 0
    %6478 = vperm.xlu0 %6477, %v6407
    %v6479 = vpop.permute.xlu0 %6478
    %v6481 = vmul.f32 %v5691, %v6464
    %v6482 = vmul.f32 %v5692, %v6469
    %v6483 = vmul.f32 %v5693, %v6474
    %v6484 = vmul.f32 %v5694, %v6479
    %v6485 = vadd.f32 %v6457, %v6481
    %v6486 = vadd.f32 %v6458, %v6482
    %v6487 = vadd.f32 %v6459, %v6483
    %v6488 = vadd.f32 %v6460, %v6484
    %v6489 = vsel %vm192, %v6485, 0.0
    %v6490 = vsel %vm192, %v6486, 0.0
    %v6491 = vadd.f32 %v6489, %v6490
    %v6492 = vrot.slane %v6491, 4
    %v6493 = vadd.f32 %v6491, %v6492
    %v6494 = vrot.slane %v6493, 2
    %v6495 = vadd.f32 %v6493, %v6494
    %v6496 = vrot.slane %v6495, 1
    %v6497 = vadd.f32 %v6495, %v6496
    %v6498 = vsel %vm192, %v6487, 0.0
    %v6499 = vsel %vm192, %v6488, 0.0
    %v6500 = vadd.f32 %v6498, %v6499
    %v6501 = vrot.slane %v6500, 4
    %v6502 = vadd.f32 %v6500, %v6501
    %v6503 = vrot.slane %v6502, 2
    %v6504 = vadd.f32 %v6502, %v6503
    %v6505 = vrot.slane %v6504, 1
    %v6506 = vadd.f32 %v6504, %v6505
    %v6507 = vrcp.pop 16.0
    %v6508 = vmul.f32 16.0, %v6507
    %v6509 = vsub.f32 1.0, %v6508
    %v6510 = vmul.f32 %v6507, %v6509
    %v6511 = vadd.f32 %v6507, %v6510
    %vm6512 = vweird.f32 %v6507
    %v6513 = vsel %vm6512, %v6507, %v6511
    %v6514 = vmul.f32 %v6497, %v6513
    %v6515 = vmul.f32 %v6506, %v6513
    %6516 = vset.pattern.permute.xlu0 1
    %6517 = vperm.xlu0 %6516, %v6374
    %v6518 = vpop.permute.xlu0 %6517
    %6520 = vset.pattern.permute.xlu0 1
    %6521 = vperm.xlu0 %6520, %v6377
    %v6522 = vpop.permute.xlu0 %6521
    %6524 = vset.pattern.permute.xlu0 1
    %6525 = vperm.xlu0 %6524, %v6380
    %v6526 = vpop.permute.xlu0 %6525
    %6528 = vset.pattern.permute.xlu0 1
    %6529 = vperm.xlu0 %6528, %v6383
    %v6530 = vpop.permute.xlu0 %6529
    %v6532 = vmul.f32 %v5683, %v6518
    %v6533 = vmul.f32 %v5684, %v6522
    %v6534 = vmul.f32 %v5685, %v6526
    %v6535 = vmul.f32 %v5686, %v6530
    %6536 = vset.pattern.permute.xlu0 1
    %6537 = vperm.xlu0 %6536, %v6386
    %v6538 = vpop.permute.xlu0 %6537
    %6540 = vset.pattern.permute.xlu0 1
    %6541 = vperm.xlu0 %6540, %v6389
    %v6542 = vpop.permute.xlu0 %6541
    %6544 = vset.pattern.permute.xlu0 1
    %6545 = vperm.xlu0 %6544, %v6392
    %v6546 = vpop.permute.xlu0 %6545
    %6548 = vset.pattern.permute.xlu0 1
    %6549 = vperm.xlu0 %6548, %v6395
    %v6550 = vpop.permute.xlu0 %6549
    %v6552 = vmul.f32 %v5687, %v6538
    %v6553 = vmul.f32 %v5688, %v6542
    %v6554 = vmul.f32 %v5689, %v6546
    %v6555 = vmul.f32 %v5690, %v6550
    %v6556 = vadd.f32 %v6532, %v6552
    %v6557 = vadd.f32 %v6533, %v6553
    %v6558 = vadd.f32 %v6534, %v6554
    %v6559 = vadd.f32 %v6535, %v6555
    %6560 = vset.pattern.permute.xlu0 1
    %6561 = vperm.xlu0 %6560, %v6398
    %v6562 = vpop.permute.xlu0 %6561
    %6564 = vset.pattern.permute.xlu0 1
    %6565 = vperm.xlu0 %6564, %v6401
    %v6566 = vpop.permute.xlu0 %6565
    %6568 = vset.pattern.permute.xlu0 1
    %6569 = vperm.xlu0 %6568, %v6404
    %v6570 = vpop.permute.xlu0 %6569
    %6572 = vset.pattern.permute.xlu0 1
    %6573 = vperm.xlu0 %6572, %v6407
    %v6574 = vpop.permute.xlu0 %6573
    %v6576 = vmul.f32 %v5691, %v6562
    %v6577 = vmul.f32 %v5692, %v6566
    %v6578 = vmul.f32 %v5693, %v6570
    %v6579 = vmul.f32 %v5694, %v6574
    %v6580 = vadd.f32 %v6556, %v6576
    %v6581 = vadd.f32 %v6557, %v6577
    %v6582 = vadd.f32 %v6558, %v6578
    %v6583 = vadd.f32 %v6559, %v6579
    %v6584 = vsel %vm192, %v6580, 0.0
    %v6585 = vsel %vm192, %v6581, 0.0
    %v6586 = vadd.f32 %v6584, %v6585
    %v6587 = vrot.slane %v6586, 4
    %v6588 = vadd.f32 %v6586, %v6587
    %v6589 = vrot.slane %v6588, 2
    %v6590 = vadd.f32 %v6588, %v6589
    %v6591 = vrot.slane %v6590, 1
    %v6592 = vadd.f32 %v6590, %v6591
    %v6593 = vsel %vm192, %v6582, 0.0
    %v6594 = vsel %vm192, %v6583, 0.0
    %v6595 = vadd.f32 %v6593, %v6594
    %v6596 = vrot.slane %v6595, 4
    %v6597 = vadd.f32 %v6595, %v6596
    %v6598 = vrot.slane %v6597, 2
    %v6599 = vadd.f32 %v6597, %v6598
    %v6600 = vrot.slane %v6599, 1
    %v6601 = vadd.f32 %v6599, %v6600
    %v6602 = vmul.f32 %v6592, %v6513
    %v6603 = vmul.f32 %v6601, %v6513
    %6604 = vset.pattern.permute.xlu0 2
    %6605 = vperm.xlu0 %6604, %v6374
    %v6606 = vpop.permute.xlu0 %6605
    %6608 = vset.pattern.permute.xlu0 2
    %6609 = vperm.xlu0 %6608, %v6377
    %v6610 = vpop.permute.xlu0 %6609
    %6612 = vset.pattern.permute.xlu0 2
    %6613 = vperm.xlu0 %6612, %v6380
    %v6614 = vpop.permute.xlu0 %6613
    %6616 = vset.pattern.permute.xlu0 2
    %6617 = vperm.xlu0 %6616, %v6383
    %v6618 = vpop.permute.xlu0 %6617
    %v6620 = vmul.f32 %v5683, %v6606
    %v6621 = vmul.f32 %v5684, %v6610
    %v6622 = vmul.f32 %v5685, %v6614
    %v6623 = vmul.f32 %v5686, %v6618
    %6624 = vset.pattern.permute.xlu0 2
    %6625 = vperm.xlu0 %6624, %v6386
    %v6626 = vpop.permute.xlu0 %6625
    %6628 = vset.pattern.permute.xlu0 2
    %6629 = vperm.xlu0 %6628, %v6389
    %v6630 = vpop.permute.xlu0 %6629
    %6632 = vset.pattern.permute.xlu0 2
    %6633 = vperm.xlu0 %6632, %v6392
    %v6634 = vpop.permute.xlu0 %6633
    %6636 = vset.pattern.permute.xlu0 2
    %6637 = vperm.xlu0 %6636, %v6395
    %v6638 = vpop.permute.xlu0 %6637
    %v6640 = vmul.f32 %v5687, %v6626
    %v6641 = vmul.f32 %v5688, %v6630
    %v6642 = vmul.f32 %v5689, %v6634
    %v6643 = vmul.f32 %v5690, %v6638
    %v6644 = vadd.f32 %v6620, %v6640
    %v6645 = vadd.f32 %v6621, %v6641
    %v6646 = vadd.f32 %v6622, %v6642
    %v6647 = vadd.f32 %v6623, %v6643
    %6648 = vset.pattern.permute.xlu0 2
    %6649 = vperm.xlu0 %6648, %v6398
    %v6650 = vpop.permute.xlu0 %6649
    %6652 = vset.pattern.permute.xlu0 2
    %6653 = vperm.xlu0 %6652, %v6401
    %v6654 = vpop.permute.xlu0 %6653
    %6656 = vset.pattern.permute.xlu0 2
    %6657 = vperm.xlu0 %6656, %v6404
    %v6658 = vpop.permute.xlu0 %6657
    %6660 = vset.pattern.permute.xlu0 2
    %6661 = vperm.xlu0 %6660, %v6407
    %v6662 = vpop.permute.xlu0 %6661
    %v6664 = vmul.f32 %v5691, %v6650
    %v6665 = vmul.f32 %v5692, %v6654
    %v6666 = vmul.f32 %v5693, %v6658
    %v6667 = vmul.f32 %v5694, %v6662
    %v6668 = vadd.f32 %v6644, %v6664
    %v6669 = vadd.f32 %v6645, %v6665
    %v6670 = vadd.f32 %v6646, %v6666
    %v6671 = vadd.f32 %v6647, %v6667
    %v6672 = vsel %vm192, %v6668, 0.0
    %v6673 = vsel %vm192, %v6669, 0.0
    %v6674 = vadd.f32 %v6672, %v6673
    %v6675 = vrot.slane %v6674, 4
    %v6676 = vadd.f32 %v6674, %v6675
    %v6677 = vrot.slane %v6676, 2
    %v6678 = vadd.f32 %v6676, %v6677
    %v6679 = vrot.slane %v6678, 1
    %v6680 = vadd.f32 %v6678, %v6679
    %v6681 = vsel %vm192, %v6670, 0.0
    %v6682 = vsel %vm192, %v6671, 0.0
    %v6683 = vadd.f32 %v6681, %v6682
    %v6684 = vrot.slane %v6683, 4
    %v6685 = vadd.f32 %v6683, %v6684
    %v6686 = vrot.slane %v6685, 2
    %v6687 = vadd.f32 %v6685, %v6686
    %v6688 = vrot.slane %v6687, 1
    %v6689 = vadd.f32 %v6687, %v6688
    %v6690 = vmul.f32 %v6680, %v6513
    %v6691 = vmul.f32 %v6689, %v6513
    %vm6694 = vcmask 1041409
    %v6695 = vsel %vm6694, %v6515, %v6514
    %v6699 = vsel %vm6694, %v6603, %v6602
    %6700 = vrot.lane.b32.xlu0 %v6699, 32
    %v6701 = vpop.permute.xlu0 %6700
    %v6705 = vsel %vm6694, %v6691, %v6690
    %6706 = vrot.lane.b32.xlu0 %v6705, 64
    %v6707 = vpop.permute.xlu0 %6706
    %v6709 = vsel %vm192, %v6695, %v6701
    %vm6710 = vcmask 523264
    %v6711 = vsel %vm6710, %v6709, %v6707
    %v6712 = vld [vmem:[%s17] sm:$0xff]
    %v6713 = vld [vmem:[%s17 + $0x8] sm:$0xff]
    %v6714 = vld [vmem:[%s17 + $0x10] sm:$0xff]
    %v6715 = vld [vmem:[%s17 + $0x18] sm:$0xff]
    %v6716 = vld [vmem:[%s17 + $0x20] sm:$0xff]
    %v6717 = vld [vmem:[%s17 + $0x28] sm:$0xff]
    %v6718 = vld [vmem:[%s17 + $0x30] sm:$0xff]
    %v6719 = vld [vmem:[%s17 + $0x38] sm:$0xff]
    %v6720 = vld [vmem:[%s17 + $0x40] sm:$0xff]
    %v6721 = vld [vmem:[%s17 + $0x48] sm:$0xff]
    %v6722 = vld [vmem:[%s17 + $0x50] sm:$0xff]
    %v6723 = vld [vmem:[%s17 + $0x58] sm:$0xff]
    %v6724 = vld [vmem:[%s18] sm:$0x1]
    %v6725 = vld [vmem:[%s19] sm:$0xff]
    %v6726 = vld [vmem:[%s19 + $0x8] sm:$0xff]
    %v6727 = vld [vmem:[%s19 + $0x10] sm:$0xff]
    %v6728 = vld [vmem:[%s19 + $0x18] sm:$0xff]
    %v6729 = vld [vmem:[%s20] sm:$0x1]
    %v6731 = vperm.slane %v6724, 0
    %vm6733 = vcmask 785408
    %v6735 = vsel %vm6733, %v6711, 0
    %6737 = vmatpush.msra.mxu0 0.0
    %6738 = vmatpush.msra.mxu0 0.0
    %6739 = vmatpush.msra.mxu0 0.0
    %6740 = vmatpush.msra.mxu0 0.0
    %6741 = vmatpush.msra.mxu0 %v6723
    %6742 = vmatpush.msra.mxu0 %v6722
    %6743 = vmatpush.msra.mxu0 %v6721
    %6744 = vmatpush.msra.mxu0 %v6720
    %6745 = vmatpush.msra.mxu0 %v6719
    %6746 = vmatpush.msra.mxu0 %v6718
    %6747 = vmatpush.msra.mxu0 %v6717
    %6748 = vmatpush.msra.mxu0 %v6716
    %6749 = vmatpush.msra.mxu0 %v6715
    %6750 = vmatpush.msra.mxu0 %v6714
    %6751 = vmatpush.msra.mxu0 %v6713
    %6752 = vmatpush.msra.mxu0 %v6712
    %6753 = vmatmul.f32.gmra.mxu0 %v6735
    %v6754 = vpop.f32.mrf.mxu0
    %v6755 = vadd.f32 %v6731, %v6754
    %6756 = vdwg.mxu0
    %v6757 = vmax.f32 %v6755, 0.0
    %vm6758 = vcmask 254976
    %v6759 = vsel %vm6758, %v6757, 0.0
    %v6760 = vrot.slane %v6759, 4
    %v6761 = vadd.f32 %v6759, %v6760
    %v6762 = vrot.slane %v6761, 2
    %v6763 = vadd.f32 %v6761, %v6762
    %v6764 = vrot.slane %v6763, 1
    %v6765 = vadd.f32 %v6763, %v6764
    %v6766 = vrcp.pop 2.0
    %v6767 = vmul.f32 2.0, %v6766
    %v6768 = vsub.f32 1.0, %v6767
    %v6769 = vmul.f32 %v6766, %v6768
    %v6770 = vadd.f32 %v6766, %v6769
    %vm6771 = vweird.f32 %v6766
    %v6772 = vsel %vm6771, %v6766, %v6770
    %v6773 = vmul.f32 %v6765, %v6772
    %v6774 = vsub.f32 %v6757, %v6773
    %v6775 = vmul.f32 %v6774, %v6774
    %v6776 = vsel %vm6758, %v6775, 0.0
    %v6777 = vrot.slane %v6776, 4
    %v6778 = vadd.f32 %v6776, %v6777
    %v6779 = vrot.slane %v6778, 2
    %v6780 = vadd.f32 %v6778, %v6779
    %v6781 = vrot.slane %v6780, 1
    %v6782 = vadd.f32 %v6780, %v6781
    %v6783 = vmul.f32 %v6782, %v6772
    %v6784 = vadd.f32 %v6783, 1e-05
    %v6785 = vrsqrt.pop %v6784
    %v6786 = vmul.f32 %v6785, %v6784
    %v6787 = vmul.f32 %v6786, %v6785
    %v6788 = vmul.f32 0.5, %v6787
    %v6789 = vsub.f32 1.5, %v6788
    %v6790 = vmul.f32 %v6785, %v6789
    %v6791 = vmul.f32 %v6784, %v6790
    %vm6792 = vcmp.eq.f32.partialorder %v6784, inf
    %v6793 = vsel %vm6792, %v6784, %v6791
    %vm6794 = vcmp.eq.f32.partialorder %v6784, 0.0
    %v6795 = vand.u32 %v6784, 2147483648
    %v6796 = vsel %vm6794, %v6795, %v6793
    %v6797 = vrcp.pop %v6796
    %v6798 = vmul.f32 %v6796, %v6797
    %v6799 = vsub.f32 1.0, %v6798
    %v6800 = vmul.f32 %v6797, %v6799
    %v6801 = vadd.f32 %v6797, %v6800
    %vm6802 = vweird.f32 %v6796
    %vm6803 = vweird.f32 %v6797
    %vm6804 = vmor %vm6802, %vm6803
    %v6805 = vsel %vm6804, %v6797, %v6801
    %v6806 = vand.u32 2147483647, %v6796
    %vm6807 = vcmp.eq.f32.partialorder %v6806, 8.507059e+37
    %v6808 = vand.u32 %v6796, 2147483648
    %v6809 = vor.u32 1.1754944e-38, %v6808
    %v6810 = vsel %vm6807, %v6809, %v6805
    %v6811 = vmul.f32 %v6774, %v6810
    %v6813 = vperm.slane %v6729, 0
    %v6816 = vsel %vm192, %v6811, 0
    %6818 = vmatpush.msra.mxu0 0.0
    %6819 = vmatpush.msra.mxu0 0.0
    %6820 = vmatpush.msra.mxu0 0.0
    %6821 = vmatpush.msra.mxu0 0.0
    %6822 = vmatpush.msra.mxu0 0.0
    %6823 = vmatpush.msra.mxu0 0.0
    %6824 = vmatpush.msra.mxu0 0.0
    %6825 = vmatpush.msra.mxu0 0.0
    %6826 = vmatpush.msra.mxu0 0.0
    %6827 = vmatpush.msra.mxu0 0.0
    %6828 = vmatpush.msra.mxu0 0.0
    %6829 = vmatpush.msra.mxu0 0.0
    %6830 = vmatpush.msra.mxu0 %v6728
    %6831 = vmatpush.msra.mxu0 %v6727
    %6832 = vmatpush.msra.mxu0 %v6726
    %6833 = vmatpush.msra.mxu0 %v6725
    %6834 = vmatmul.f32.gmra.mxu0 %v6816
    %v6835 = vpop.f32.mrf.mxu0
    %v6836 = vadd.f32 %v6813, %v6835
    %6837 = vdwg.mxu0
    %vm6838 = vcmask 320512
    %6839 = vst.msk [vmem:[#allocation2] sm:$0x3] %vm6838, %v6836
    // Predicated region
    $region86: #{vn_transformer_cls_forward.1} parent=1 // pred_check
      _
    $region87: #{vn_transformer_cls_forward.1} parent=1 // pred_check_branch
      %6841 = sbr.rel (0) target = $region89
    $region88: #{vn_transformer_cls_forward.1} parent=1 // pred_region
      %6843 = vsyncadd [#allocation3], 0
      %s6845 = sshll.u32 [#allocation2], 4
      %s6846 = int_to_ptr.vmem [resolvable:$true] %s6845
      %s6847 = sshll.u32 %s21, 4
      %s6848 = int_to_ptr.hbm [resolvable:$true] %s6847
      %6850 = dma.vmem_to_hbm [thread:$0]  %s6846, 32, %s6848, [#allocation3]
    $region89: #{vn_transformer_cls_forward.1} parent=1 // pred_fallthru
      _
    // Predicated region
    $region90: #{vn_transformer_cls_forward.1} parent=1 // pred_check
      _
    $region91: #{vn_transformer_cls_forward.1} parent=1 // pred_check_branch
      %6852 = sbr.rel (0) target = $region93
    $region92: #{vn_transformer_cls_forward.1} parent=1 // pred_region
      %6854 = dma.done [#allocation3], 32
    $region93: #{vn_transformer_cls_forward.1} parent=1 // pred_fallthru
      _
    %6855 = vsyncpa [#allocation3], 1

</llo_original>
